<compile_context>
chip_gen: v7x
topology: tpu7x:2x2x1
jax: 0.10.0
libtpu: 0.0.40
codegen_flags: <defaults>
</compile_context>

<pallas_src>
import numpy as np
import jax
import jax.numpy as jnp
from jax.experimental import pallas as pl
from jax.experimental.pallas import tpu as pltpu  # noqa: F401  (TPU backend)


# -------------------------------------------------------------------------
# Layer geometry of the PyTorch module.
#   encoder Conv2d(k=3,s=2,p=1):            28 -> 14 -> 7 -> 4 -> 2, C: 1,3,6,12,24
#   decoder ConvTranspose2d(k=3,s=2,p=1,op=1): 2 -> 4 -> 8 -> 16 -> 32, C: 24,12,6,3,1
# -------------------------------------------------------------------------
_LAYER_DEFS = [
    # (H,  W,  Cin, Cout, transposed, w_name, b_name, bn_prefix)
    (28, 28,  1,  3, False, 'w1', 'b1', 'bn1'),
    (14, 14,  3,  6, False, 'w2', 'b2', 'bn2'),
    ( 7,  7,  6, 12, False, 'w3', 'b3', 'bn3'),
    ( 4,  4, 12, 24, False, 'w4', 'b4', 'bn4'),
    ( 2,  2, 24, 12, True,  'w5', 'b5', 'bn5'),
    ( 4,  4, 12,  6, True,  'w6', 'b6', 'bn6'),
    ( 8,  8,  6,  3, True,  'w7', 'b7', 'bn7'),
    (16, 16,  3,  1, True,  'w8', 'b8', None),
]


# ---------------------- host-side constant builders (numpy) ----------------------

def _sel_matrix(out_size, in_size, k, transposed):
    """Spatial selection matrix S (out, in): S[o,i]=1 iff input index i feeds output
    index o at kernel tap k.  Forward: Conv2d(k=3, s=2, p=1).  Transposed:
    ConvTranspose2d(k=3, s=2, p=1, output_padding=1) in its direct-conv form
    (tap k already refers to the flipped kernel)."""
    S = np.zeros((out_size, in_size), np.float32)
    for o in range(out_size):
        if not transposed:
            i = 2 * o + k - 1                      # stride 2, pad 1
            if 0 <= i < in_size:
                S[o, i] = 1.0
        else:
            r = o + k - 1                          # position in the (virtual) dilated input
            if r >= 0 and r % 2 == 0 and r // 2 < in_size:
                S[o, r // 2] = 1.0
    return S


def _bilinear_matrix(out_size, in_size):
    """1-D bilinear interpolation matrix, align_corners=False (PyTorch semantics)."""
    R = np.zeros((out_size, in_size), np.float32)
    scale = in_size / out_size
    for i in range(out_size):
        src = max((i + 0.5) * scale - 0.5, 0.0)
        i0 = min(int(np.floor(src)), in_size - 1)
        i1 = min(i0 + 1, in_size - 1)
        w = src - i0
        R[i, i0] += 1.0 - w
        R[i, i1] += w
    return R


def prepare_constants(params, B):
    """One-time (outside jit) preparation of every kernel operand: selection
    matrices, folded 3x3 weights, tiled bias/BN params, bottleneck permutation
    matrices, bilinear matrices.  Returns a flat tuple of f32 device arrays in the
    exact order the kernel consumes them."""
    layer_consts = []
    for (H, W, Cin, Cout, tr, wn, bn, bnp) in _LAYER_DEFS:
        OH, OW = (2 * H, 2 * W) if tr else ((H - 1) // 2 + 1, (W - 1) // 2 + 1)
        w = np.asarray(params[wn], np.float32)      # conv: (Cout,Cin,3,3); convT: (Cin,Cout,3,3)
        bias = np.asarray(params[bn], np.float32)

        # Row-selection matrices, block-diagonal over the batch: (3, B*OH, B*H)
        A = np.stack([np.kron(np.eye(B, dtype=np.float32), _sel_matrix(OH, H, ki, tr))
                      for ki in range(3)])

        # Column-selection x weight matrices, pre-summed over kj: (3, W*Cin, OW*Cout)
        M = []
        for ki in range(3):
            acc = np.zeros((W * Cin, OW * Cout), np.float32)
            for kj in range(3):
                if tr:   # direct-conv equivalent of ConvTranspose2d: flip + channel swap
                    weq = w[:, :, 2 - ki, 2 - kj]          # (Cin, Cout)
                else:
                    weq = w[:, :, ki, kj].T                # (Cin, Cout)
                acc += np.kron(_sel_matrix(OW, W, kj, tr).T, weq)
            M.append(acc)
        M = np.stack(M)

        cur = [A, M, np.tile(bias, OW)[None, :]]           # bias tiled to (1, OW*Cout)
        if bnp is not None:
            g = np.asarray(params[bnp + '_g'], np.float32)
            be = np.asarray(params[bnp + '_b'], np.float32)
            # per-channel pooling + broadcast-back matrix (includes the 1/N factor)
            P = np.kron(np.ones((OW, 1), np.float32), np.eye(Cout, dtype=np.float32))
            Q = ((P @ P.T) / np.float32(B * OH * OW)).astype(np.float32)
            cur += [Q, np.tile(g, OW)[None, :], np.tile(be, OW)[None, :]]
        layer_consts.append(cur)

    # ---- bottleneck: fc1 -> fc2 -> BatchNorm1d -> ReLU.  PyTorch flattens x4 in
    # NCHW order (o = c*4 + h*2 + w); tiny permutation matrices map between that
    # order and our (row=b*2+h, col=w*24+c) layout. ----
    fc1_w = np.asarray(params['fc1_w'], np.float32)      # (2, 96)  torch (out, in)
    fc1_b = np.asarray(params['fc1_b'], np.float32)
    fc2_w = np.asarray(params['fc2_w'], np.float32)      # (96, 2)
    fc2_b = np.asarray(params['fc2_b'], np.float32)
    gfc = np.asarray(params['bn_fc_g'], np.float32)
    bfc = np.asarray(params['bn_fc_b'], np.float32)
    C4, HS, WS = 24, 2, 2
    Sh = np.zeros((HS, B, B * HS), np.float32)           # picks rows with height h
    ShT = np.zeros((HS, B * HS, B), np.float32)
    Wfc1 = np.zeros((HS, WS * C4, 2), np.float32)        # fc1 weight in (w,c)-column order
    G = np.zeros((HS, C4 * HS * WS, WS * C4), np.float32)   # torch-flat -> (w,c) layout
    for h in range(HS):
        for b in range(B):
            Sh[h, b, b * HS + h] = 1.0
            ShT[h, b * HS + h, b] = 1.0
        for w_ in range(WS):
            for c in range(C4):
                o = c * (HS * WS) + h * WS + w_          # PyTorch x4.view(B,-1) feature index
                m = w_ * C4 + c                          # our (w,c) column index
                Wfc1[h, m, :] = fc1_w[:, o]
                G[h, o, m] = 1.0
    bneck = [Sh, Wfc1, fc1_b[None, :], np.ascontiguousarray(fc2_w.T), fc2_b[None, :],
             gfc[None, :], bfc[None, :], ShT, G]

    # ---- tail: bilinear 32 -> 28 (align_corners=False) ----
    Rh = _bilinear_matrix(28, 32)
    tail = [np.kron(np.eye(B, dtype=np.float32), Rh),    # (B*28, B*32), block-diag rows
            np.ascontiguousarray(Rh.T)]                  # (32, 28), columns

    flat = []
    for L in layer_consts[:4]:
        flat += L
    flat += bneck
    for L in layer_consts[4:]:
        flat += L
    flat += tail
    return tuple(jnp.asarray(a) for a in flat)


# ------------------------------- the single kernel -------------------------------

def _autoencoder_kernel(*refs):
    """Whole AutoEncoderModel.forward in one kernel.
    refs = (x, <56 prepared constant refs>, out)."""
    in_refs, o_ref = refs[:-1], refs[-1]
    it = iter(in_refs)
    x_ref = next(it)

    def take(n):
        return [next(it) for _ in range(n)]

    def dot(a, b):
        return jnp.dot(a, b, preferred_element_type=jnp.float32)

    def conv(X, a_ref, m_ref, b_ref):
        # sum_ki (A_ki @ X) @ M_ki + bias.  A/M fold stride, padding, kernel flip
        # (for convT) and the 3x3 weights into tiny precomputed matrices.
        Y = None
        for ki in range(3):
            term = dot(dot(a_ref[ki], X), m_ref[ki])
            Y = term if Y is None else Y + term
        return Y + b_ref[...]

    def bn_relu(Y, q_ref, g_ref, bt_ref):
        # train-mode BatchNorm2d: per-channel batch stats, biased variance, eps=1e-5.
        mean = dot(jnp.sum(Y, axis=0, keepdims=True), q_ref[...])
        cent = Y - mean
        var = dot(jnp.sum(cent * cent, axis=0, keepdims=True), q_ref[...])
        return jnp.maximum(cent * jax.lax.rsqrt(var + 1e-5) * g_ref[...] + bt_ref[...],
                           0.0)

    def conv_bn_relu(X):
        a, m, b, q, g, bt = take(6)
        return bn_relu(conv(X, a, m, b), q, g, bt)

    # ---------------- encoder ----------------
    X = x_ref[...]                                    # (B*28, 28)
    for _ in range(4):
        X = conv_bn_relu(X)                           # -> (B*2, 2*24)

    # ------------- bottleneck: Linear(96->2) -> Linear(2->96) -> BN1d -> ReLU -------------
    sh, wfc1, b1, w2t, b2, gfc, btfc, sht, gmat = take(9)
    code = dot(dot(sh[0], X), wfc1[0]) + dot(dot(sh[1], X), wfc1[1]) + b1[...]   # (B, 2)
    y = dot(code, w2t[...]) + b2[...]                                            # (B, 96)
    mean = jnp.mean(y, axis=0, keepdims=True)
    cent = y - mean
    var = jnp.mean(cent * cent, axis=0, keepdims=True)
    y = jnp.maximum(cent * jax.lax.rsqrt(var + 1e-5) * gfc[...] + btfc[...], 0.0)
    X = dot(sht[0], dot(y, gmat[0])) + dot(sht[1], dot(y, gmat[1]))              # (B*2, 2*24)

    # ---------------- decoder ----------------
    for _ in range(3):
        X = conv_bn_relu(X)                           # -> (B*16, 16*3)
    a, m, b = take(3)
    Z = conv(X, a, m, b)                              # (B*32, 32), pre-sigmoid

    # -------- tail: sigmoid -> bilinear 32->28 (two matmuls) -> clamp, single store --------
    rh, rwt = take(2)
    S = jax.nn.sigmoid(Z)
    T = dot(dot(rh[...], S), rwt[...])                # (B*28, 28)
    o_ref[...] = jnp.clip(T, 0.0, 1.0)


# ----------------------------------- wrapper -----------------------------------

def autoencoder_forward(consts, x_nchw):
    """x_nchw: (B, 1, 28, 28) f32 -> (B, 1, 28, 28) f32.  One pallas_call total."""
    B = x_nchw.shape[0]
    x2d = x_nchw.astype(jnp.float32).reshape(B * 28, 28)      # rows b*28+h, cols w
    out2d = pl.pallas_call(
        _autoencoder_kernel,
        out_shape=jax.ShapeDtypeStruct((B * 28, 28), jnp.float32),
    )(x2d, *consts)
    return out2d.reshape(B, 1, 28, 28)


# ------------------------------------ params ------------------------------------

def init_params(key):
    ks = jax.random.split(key, 18)
    p = {}

    def cw(k, co, ci):
        return jax.random.normal(k, (co, ci, 3, 3), jnp.float32) * 0.1

    def tw(k, ci, co):
        return jax.random.normal(k, (ci, co, 3, 3), jnp.float32) * 0.1

    def cb(k, co):
        return jax.random.normal(k, (co,), jnp.float32) * 0.01

    p['w1'], p['b1'] = cw(ks[0], 3, 1), cb(ks[1], 3)
    p['w2'], p['b2'] = cw(ks[2], 6, 3), cb(ks[3], 6)
    p['w3'], p['b3'] = cw(ks[4], 12, 6), cb(ks[5], 12)
    p['w4'], p['b4'] = cw(ks[6], 24, 12), cb(ks[7], 24)
    p['fc1_w'] = jax.random.normal(ks[8], (2, 96), jnp.float32) * 0.1   # (out, in)
    p['fc1_b'] = jnp.zeros((2,), jnp.float32)
    p['fc2_w'] = jax.random.normal(ks[9], (96, 2), jnp.float32) * 0.1
    p['fc2_b'] = jnp.zeros((96,), jnp.float32)
    p['w5'], p['b5'] = tw(ks[10], 24, 12), cb(ks[11], 12)
    p['w6'], p['b6'] = tw(ks[12], 12, 6), cb(ks[13], 6)
    p['w7'], p['b7'] = tw(ks[14], 6, 3), cb(ks[15], 3)
    p['w8'], p['b8'] = tw(ks[16], 3, 1), cb(ks[17], 1)
    # BatchNorm affine params: PyTorch default init (gamma=1, beta=0)
    for name, c in [('bn1', 3), ('bn2', 6), ('bn3', 12), ('bn4', 24),
                    ('bn_fc', 96), ('bn5', 12), ('bn6', 6), ('bn7', 3)]:
        p[name + '_g'] = jnp.ones((c,), jnp.float32)
        p[name + '_b'] = jnp.zeros((c,), jnp.float32)
    return p


if __name__ == "__main__":
    key = jax.random.PRNGKey(0)
    pk, xk = jax.random.split(key)
    params = init_params(pk)
    x = jax.random.uniform(xk, (2, 1, 28, 28), dtype=jnp.float32)   # MNIST-like input

    consts = prepare_constants(params, B=2)     # one-time weight/constant preparation
    fwd = jax.jit(autoencoder_forward)
    out = jax.block_until_ready(fwd(consts, x))

    assert out.shape == (2, 1, 28, 28), out.shape
    assert out.dtype == jnp.float32
    assert bool(jnp.all(jnp.isfinite(out)))
    assert bool(jnp.all((out >= 0.0) & (out <= 1.0)))
    print("KERNEL_OK")
</pallas_src>

<mosaic_0001>
module attributes {stable_mosaic.version = 11 : i64} {
  func.func @_autoencoder_kernel(%arg0: memref<56x28xf32, #tpu.memory_space<vmem>>, %arg1: memref<3x28x56xf32, #tpu.memory_space<vmem>>, %arg2: memref<3x28x42xf32, #tpu.memory_space<vmem>>, %arg3: memref<1x42xf32, #tpu.memory_space<vmem>>, %arg4: memref<42x42xf32, #tpu.memory_space<vmem>>, %arg5: memref<1x42xf32, #tpu.memory_space<vmem>>, %arg6: memref<1x42xf32, #tpu.memory_space<vmem>>, %arg7: memref<3x14x28xf32, #tpu.memory_space<vmem>>, %arg8: memref<3x42x42xf32, #tpu.memory_space<vmem>>, %arg9: memref<1x42xf32, #tpu.memory_space<vmem>>, %arg10: memref<42x42xf32, #tpu.memory_space<vmem>>, %arg11: memref<1x42xf32, #tpu.memory_space<vmem>>, %arg12: memref<1x42xf32, #tpu.memory_space<vmem>>, %arg13: memref<3x8x14xf32, #tpu.memory_space<vmem>>, %arg14: memref<3x42x48xf32, #tpu.memory_space<vmem>>, %arg15: memref<1x48xf32, #tpu.memory_space<vmem>>, %arg16: memref<48x48xf32, #tpu.memory_space<vmem>>, %arg17: memref<1x48xf32, #tpu.memory_space<vmem>>, %arg18: memref<1x48xf32, #tpu.memory_space<vmem>>, %arg19: memref<3x4x8xf32, #tpu.memory_space<vmem>>, %arg20: memref<3x48x48xf32, #tpu.memory_space<vmem>>, %arg21: memref<1x48xf32, #tpu.memory_space<vmem>>, %arg22: memref<48x48xf32, #tpu.memory_space<vmem>>, %arg23: memref<1x48xf32, #tpu.memory_space<vmem>>, %arg24: memref<1x48xf32, #tpu.memory_space<vmem>>, %arg25: memref<2x2x4xf32, #tpu.memory_space<vmem>>, %arg26: memref<2x48x2xf32, #tpu.memory_space<vmem>>, %arg27: memref<1x2xf32, #tpu.memory_space<vmem>>, %arg28: memref<2x96xf32, #tpu.memory_space<vmem>>, %arg29: memref<1x96xf32, #tpu.memory_space<vmem>>, %arg30: memref<1x96xf32, #tpu.memory_space<vmem>>, %arg31: memref<1x96xf32, #tpu.memory_space<vmem>>, %arg32: memref<2x4x2xf32, #tpu.memory_space<vmem>>, %arg33: memref<2x96x48xf32, #tpu.memory_space<vmem>>, %arg34: memref<3x8x4xf32, #tpu.memory_space<vmem>>, %arg35: memref<3x48x48xf32, #tpu.memory_space<vmem>>, %arg36: memref<1x48xf32, #tpu.memory_space<vmem>>, %arg37: memref<48x48xf32, #tpu.memory_space<vmem>>, %arg38: memref<1x48xf32, #tpu.memory_space<vmem>>, %arg39: memref<1x48xf32, #tpu.memory_space<vmem>>, %arg40: memref<3x16x8xf32, #tpu.memory_space<vmem>>, %arg41: memref<3x48x48xf32, #tpu.memory_space<vmem>>, %arg42: memref<1x48xf32, #tpu.memory_space<vmem>>, %arg43: memref<48x48xf32, #tpu.memory_space<vmem>>, %arg44: memref<1x48xf32, #tpu.memory_space<vmem>>, %arg45: memref<1x48xf32, #tpu.memory_space<vmem>>, %arg46: memref<3x32x16xf32, #tpu.memory_space<vmem>>, %arg47: memref<3x48x48xf32, #tpu.memory_space<vmem>>, %arg48: memref<1x48xf32, #tpu.memory_space<vmem>>, %arg49: memref<48x48xf32, #tpu.memory_space<vmem>>, %arg50: memref<1x48xf32, #tpu.memory_space<vmem>>, %arg51: memref<1x48xf32, #tpu.memory_space<vmem>>, %arg52: memref<3x64x32xf32, #tpu.memory_space<vmem>>, %arg53: memref<3x48x32xf32, #tpu.memory_space<vmem>>, %arg54: memref<1x32xf32, #tpu.memory_space<vmem>>, %arg55: memref<56x64xf32, #tpu.memory_space<vmem>>, %arg56: memref<32x28xf32, #tpu.memory_space<vmem>>, %arg57: memref<56x28xf32, #tpu.memory_space<vmem>>) attributes {dimension_semantics = [], scalar_prefetch = 0 : i64, scratch_operands = 0 : i64, tpu.core_type = #tpu.core_type<tc>} {
    %c0 = arith.constant 0 : index
    %c0_0 = arith.constant 0 : index
    %0 = vector.load %arg0[%c0, %c0_0] : memref<56x28xf32, #tpu.memory_space<vmem>>, vector<56x28xf32>
    %c0_1 = arith.constant 0 : index
    %c0_2 = arith.constant 0 : index
    %c0_3 = arith.constant 0 : index
    %1 = vector.load %arg1[%c0_1, %c0_2, %c0_3] : memref<3x28x56xf32, #tpu.memory_space<vmem>>, vector<1x28x56xf32>
    %2 = vector.shape_cast %1 : vector<1x28x56xf32> to vector<28x56xf32>
    %cst = arith.constant dense<0.000000e+00> : vector<28x28xf32>
    %3 = tpu.matmul %2, %0, %cst {dimension_numbers = #tpu.dot_dimension_numbers<[1], [0], [0], [1], [0, 0, 1, 1], [], []>} : vector<28x56xf32>, vector<56x28xf32>, vector<28x28xf32> -> vector<28x28xf32>
    %c0_4 = arith.constant 0 : index
    %c0_5 = arith.constant 0 : index
    %c0_6 = arith.constant 0 : index
    %4 = vector.load %arg2[%c0_4, %c0_5, %c0_6] : memref<3x28x42xf32, #tpu.memory_space<vmem>>, vector<1x28x42xf32>
    %5 = vector.shape_cast %4 : vector<1x28x42xf32> to vector<28x42xf32>
    %cst_7 = arith.constant dense<0.000000e+00> : vector<28x42xf32>
    %6 = tpu.matmul %3, %5, %cst_7 {dimension_numbers = #tpu.dot_dimension_numbers<[1], [0], [0], [1], [0, 0, 1, 1], [], []>} : vector<28x28xf32>, vector<28x42xf32>, vector<28x42xf32> -> vector<28x42xf32>
    %c1 = arith.constant 1 : index
    %c0_8 = arith.constant 0 : index
    %c0_9 = arith.constant 0 : index
    %7 = vector.load %arg1[%c1, %c0_8, %c0_9] : memref<3x28x56xf32, #tpu.memory_space<vmem>>, vector<1x28x56xf32>
    %8 = vector.shape_cast %7 : vector<1x28x56xf32> to vector<28x56xf32>
    %cst_10 = arith.constant dense<0.000000e+00> : vector<28x28xf32>
    %9 = tpu.matmul %8, %0, %cst_10 {dimension_numbers = #tpu.dot_dimension_numbers<[1], [0], [0], [1], [0, 0, 1, 1], [], []>} : vector<28x56xf32>, vector<56x28xf32>, vector<28x28xf32> -> vector<28x28xf32>
    %c1_11 = arith.constant 1 : index
    %c0_12 = arith.constant 0 : index
    %c0_13 = arith.constant 0 : index
    %10 = vector.load %arg2[%c1_11, %c0_12, %c0_13] : memref<3x28x42xf32, #tpu.memory_space<vmem>>, vector<1x28x42xf32>
    %11 = vector.shape_cast %10 : vector<1x28x42xf32> to vector<28x42xf32>
    %cst_14 = arith.constant dense<0.000000e+00> : vector<28x42xf32>
    %12 = tpu.matmul %9, %11, %cst_14 {dimension_numbers = #tpu.dot_dimension_numbers<[1], [0], [0], [1], [0, 0, 1, 1], [], []>} : vector<28x28xf32>, vector<28x42xf32>, vector<28x42xf32> -> vector<28x42xf32>
    %13 = arith.addf %6, %12 : vector<28x42xf32>
    %c2 = arith.constant 2 : index
    %c0_15 = arith.constant 0 : index
    %c0_16 = arith.constant 0 : index
    %14 = vector.load %arg1[%c2, %c0_15, %c0_16] : memref<3x28x56xf32, #tpu.memory_space<vmem>>, vector<1x28x56xf32>
    %15 = vector.shape_cast %14 : vector<1x28x56xf32> to vector<28x56xf32>
    %cst_17 = arith.constant dense<0.000000e+00> : vector<28x28xf32>
    %16 = tpu.matmul %15, %0, %cst_17 {dimension_numbers = #tpu.dot_dimension_numbers<[1], [0], [0], [1], [0, 0, 1, 1], [], []>} : vector<28x56xf32>, vector<56x28xf32>, vector<28x28xf32> -> vector<28x28xf32>
    %c2_18 = arith.constant 2 : index
    %c0_19 = arith.constant 0 : index
    %c0_20 = arith.constant 0 : index
    %17 = vector.load %arg2[%c2_18, %c0_19, %c0_20] : memref<3x28x42xf32, #tpu.memory_space<vmem>>, vector<1x28x42xf32>
    %18 = vector.shape_cast %17 : vector<1x28x42xf32> to vector<28x42xf32>
    %cst_21 = arith.constant dense<0.000000e+00> : vector<28x42xf32>
    %19 = tpu.matmul %16, %18, %cst_21 {dimension_numbers = #tpu.dot_dimension_numbers<[1], [0], [0], [1], [0, 0, 1, 1], [], []>} : vector<28x28xf32>, vector<28x42xf32>, vector<28x42xf32> -> vector<28x42xf32>
    %20 = arith.addf %13, %19 : vector<28x42xf32>
    %c0_22 = arith.constant 0 : index
    %c0_23 = arith.constant 0 : index
    %21 = vector.load %arg3[%c0_22, %c0_23] : memref<1x42xf32, #tpu.memory_space<vmem>>, vector<1x42xf32>
    %22 = vector.broadcast %21 : vector<1x42xf32> to vector<28x42xf32>
    %23 = arith.addf %20, %22 : vector<28x42xf32>
    %cst_24 = arith.constant dense<0.000000e+00> : vector<42xf32>
    %24 = vector.multi_reduction <add>, %23, %cst_24 [0] : vector<28x42xf32> to vector<42xf32>
    %25 = vector.shape_cast %24 : vector<42xf32> to vector<1x42xf32>
    %c0_25 = arith.constant 0 : index
    %c0_26 = arith.constant 0 : index
    %26 = vector.load %arg4[%c0_25, %c0_26] : memref<42x42xf32, #tpu.memory_space<vmem>>, vector<42x42xf32>
    %cst_27 = arith.constant dense<0.000000e+00> : vector<1x42xf32>
    %27 = tpu.matmul %25, %26, %cst_27 {dimension_numbers = #tpu.dot_dimension_numbers<[1], [0], [0], [1], [0, 0, 1, 1], [], []>} : vector<1x42xf32>, vector<42x42xf32>, vector<1x42xf32> -> vector<1x42xf32>
    %28 = vector.broadcast %27 : vector<1x42xf32> to vector<28x42xf32>
    %29 = arith.subf %23, %28 : vector<28x42xf32>
    %30 = arith.mulf %29, %29 : vector<28x42xf32>
    %cst_28 = arith.constant dense<0.000000e+00> : vector<42xf32>
    %31 = vector.multi_reduction <add>, %30, %cst_28 [0] : vector<28x42xf32> to vector<42xf32>
    %32 = vector.shape_cast %31 : vector<42xf32> to vector<1x42xf32>
    %c0_29 = arith.constant 0 : index
    %c0_30 = arith.constant 0 : index
    %33 = vector.load %arg4[%c0_29, %c0_30] : memref<42x42xf32, #tpu.memory_space<vmem>>, vector<42x42xf32>
    %cst_31 = arith.constant dense<0.000000e+00> : vector<1x42xf32>
    %34 = tpu.matmul %32, %33, %cst_31 {dimension_numbers = #tpu.dot_dimension_numbers<[1], [0], [0], [1], [0, 0, 1, 1], [], []>} : vector<1x42xf32>, vector<42x42xf32>, vector<1x42xf32> -> vector<1x42xf32>
    %cst_32 = arith.constant 9.99999974E-6 : f32
    %35 = vector.broadcast %cst_32 : f32 to vector<1x42xf32>
    %36 = arith.addf %34, %35 : vector<1x42xf32>
    %37 = math.rsqrt %36 : vector<1x42xf32>
    %38 = vector.broadcast %37 : vector<1x42xf32> to vector<28x42xf32>
    %39 = arith.mulf %29, %38 : vector<28x42xf32>
    %c0_33 = arith.constant 0 : index
    %c0_34 = arith.constant 0 : index
    %40 = vector.load %arg5[%c0_33, %c0_34] : memref<1x42xf32, #tpu.memory_space<vmem>>, vector<1x42xf32>
    %41 = vector.broadcast %40 : vector<1x42xf32> to vector<28x42xf32>
    %42 = arith.mulf %39, %41 : vector<28x42xf32>
    %c0_35 = arith.constant 0 : index
    %c0_36 = arith.constant 0 : index
    %43 = vector.load %arg6[%c0_35, %c0_36] : memref<1x42xf32, #tpu.memory_space<vmem>>, vector<1x42xf32>
    %44 = vector.broadcast %43 : vector<1x42xf32> to vector<28x42xf32>
    %45 = arith.addf %42, %44 : vector<28x42xf32>
    %cst_37 = arith.constant 0.000000e+00 : f32
    %46 = vector.broadcast %cst_37 : f32 to vector<28x42xf32>
    %47 = arith.maximumf %45, %46 : vector<28x42xf32>
    %c0_38 = arith.constant 0 : index
    %c0_39 = arith.constant 0 : index
    %c0_40 = arith.constant 0 : index
    %48 = vector.load %arg7[%c0_38, %c0_39, %c0_40] : memref<3x14x28xf32, #tpu.memory_space<vmem>>, vector<1x14x28xf32>
    %49 = vector.shape_cast %48 : vector<1x14x28xf32> to vector<14x28xf32>
    %cst_41 = arith.constant dense<0.000000e+00> : vector<14x42xf32>
    %50 = tpu.matmul %49, %47, %cst_41 {dimension_numbers = #tpu.dot_dimension_numbers<[1], [0], [0], [1], [0, 0, 1, 1], [], []>} : vector<14x28xf32>, vector<28x42xf32>, vector<14x42xf32> -> vector<14x42xf32>
    %c0_42 = arith.constant 0 : index
    %c0_43 = arith.constant 0 : index
    %c0_44 = arith.constant 0 : index
    %51 = vector.load %arg8[%c0_42, %c0_43, %c0_44] : memref<3x42x42xf32, #tpu.memory_space<vmem>>, vector<1x42x42xf32>
    %52 = vector.shape_cast %51 : vector<1x42x42xf32> to vector<42x42xf32>
    %cst_45 = arith.constant dense<0.000000e+00> : vector<14x42xf32>
    %53 = tpu.matmul %50, %52, %cst_45 {dimension_numbers = #tpu.dot_dimension_numbers<[1], [0], [0], [1], [0, 0, 1, 1], [], []>} : vector<14x42xf32>, vector<42x42xf32>, vector<14x42xf32> -> vector<14x42xf32>
    %c1_46 = arith.constant 1 : index
    %c0_47 = arith.constant 0 : index
    %c0_48 = arith.constant 0 : index
    %54 = vector.load %arg7[%c1_46, %c0_47, %c0_48] : memref<3x14x28xf32, #tpu.memory_space<vmem>>, vector<1x14x28xf32>
    %55 = vector.shape_cast %54 : vector<1x14x28xf32> to vector<14x28xf32>
    %cst_49 = arith.constant dense<0.000000e+00> : vector<14x42xf32>
    %56 = tpu.matmul %55, %47, %cst_49 {dimension_numbers = #tpu.dot_dimension_numbers<[1], [0], [0], [1], [0, 0, 1, 1], [], []>} : vector<14x28xf32>, vector<28x42xf32>, vector<14x42xf32> -> vector<14x42xf32>
    %c1_50 = arith.constant 1 : index
    %c0_51 = arith.constant 0 : index
    %c0_52 = arith.constant 0 : index
    %57 = vector.load %arg8[%c1_50, %c0_51, %c0_52] : memref<3x42x42xf32, #tpu.memory_space<vmem>>, vector<1x42x42xf32>
    %58 = vector.shape_cast %57 : vector<1x42x42xf32> to vector<42x42xf32>
    %cst_53 = arith.constant dense<0.000000e+00> : vector<14x42xf32>
    %59 = tpu.matmul %56, %58, %cst_53 {dimension_numbers = #tpu.dot_dimension_numbers<[1], [0], [0], [1], [0, 0, 1, 1], [], []>} : vector<14x42xf32>, vector<42x42xf32>, vector<14x42xf32> -> vector<14x42xf32>
    %60 = arith.addf %53, %59 : vector<14x42xf32>
    %c2_54 = arith.constant 2 : index
    %c0_55 = arith.constant 0 : index
    %c0_56 = arith.constant 0 : index
    %61 = vector.load %arg7[%c2_54, %c0_55, %c0_56] : memref<3x14x28xf32, #tpu.memory_space<vmem>>, vector<1x14x28xf32>
    %62 = vector.shape_cast %61 : vector<1x14x28xf32> to vector<14x28xf32>
    %cst_57 = arith.constant dense<0.000000e+00> : vector<14x42xf32>
    %63 = tpu.matmul %62, %47, %cst_57 {dimension_numbers = #tpu.dot_dimension_numbers<[1], [0], [0], [1], [0, 0, 1, 1], [], []>} : vector<14x28xf32>, vector<28x42xf32>, vector<14x42xf32> -> vector<14x42xf32>
    %c2_58 = arith.constant 2 : index
    %c0_59 = arith.constant 0 : index
    %c0_60 = arith.constant 0 : index
    %64 = vector.load %arg8[%c2_58, %c0_59, %c0_60] : memref<3x42x42xf32, #tpu.memory_space<vmem>>, vector<1x42x42xf32>
    %65 = vector.shape_cast %64 : vector<1x42x42xf32> to vector<42x42xf32>
    %cst_61 = arith.constant dense<0.000000e+00> : vector<14x42xf32>
    %66 = tpu.matmul %63, %65, %cst_61 {dimension_numbers = #tpu.dot_dimension_numbers<[1], [0], [0], [1], [0, 0, 1, 1], [], []>} : vector<14x42xf32>, vector<42x42xf32>, vector<14x42xf32> -> vector<14x42xf32>
    %67 = arith.addf %60, %66 : vector<14x42xf32>
    %c0_62 = arith.constant 0 : index
    %c0_63 = arith.constant 0 : index
    %68 = vector.load %arg9[%c0_62, %c0_63] : memref<1x42xf32, #tpu.memory_space<vmem>>, vector<1x42xf32>
    %69 = vector.broadcast %68 : vector<1x42xf32> to vector<14x42xf32>
    %70 = arith.addf %67, %69 : vector<14x42xf32>
    %cst_64 = arith.constant dense<0.000000e+00> : vector<42xf32>
    %71 = vector.multi_reduction <add>, %70, %cst_64 [0] : vector<14x42xf32> to vector<42xf32>
    %72 = vector.shape_cast %71 : vector<42xf32> to vector<1x42xf32>
    %c0_65 = arith.constant 0 : index
    %c0_66 = arith.constant 0 : index
    %73 = vector.load %arg10[%c0_65, %c0_66] : memref<42x42xf32, #tpu.memory_space<vmem>>, vector<42x42xf32>
    %cst_67 = arith.constant dense<0.000000e+00> : vector<1x42xf32>
    %74 = tpu.matmul %72, %73, %cst_67 {dimension_numbers = #tpu.dot_dimension_numbers<[1], [0], [0], [1], [0, 0, 1, 1], [], []>} : vector<1x42xf32>, vector<42x42xf32>, vector<1x42xf32> -> vector<1x42xf32>
    %75 = vector.broadcast %74 : vector<1x42xf32> to vector<14x42xf32>
    %76 = arith.subf %70, %75 : vector<14x42xf32>
    %77 = arith.mulf %76, %76 : vector<14x42xf32>
    %cst_68 = arith.constant dense<0.000000e+00> : vector<42xf32>
    %78 = vector.multi_reduction <add>, %77, %cst_68 [0] : vector<14x42xf32> to vector<42xf32>
    %79 = vector.shape_cast %78 : vector<42xf32> to vector<1x42xf32>
    %c0_69 = arith.constant 0 : index
    %c0_70 = arith.constant 0 : index
    %80 = vector.load %arg10[%c0_69, %c0_70] : memref<42x42xf32, #tpu.memory_space<vmem>>, vector<42x42xf32>
    %cst_71 = arith.constant dense<0.000000e+00> : vector<1x42xf32>
    %81 = tpu.matmul %79, %80, %cst_71 {dimension_numbers = #tpu.dot_dimension_numbers<[1], [0], [0], [1], [0, 0, 1, 1], [], []>} : vector<1x42xf32>, vector<42x42xf32>, vector<1x42xf32> -> vector<1x42xf32>
    %cst_72 = arith.constant 9.99999974E-6 : f32
    %82 = vector.broadcast %cst_72 : f32 to vector<1x42xf32>
    %83 = arith.addf %81, %82 : vector<1x42xf32>
    %84 = math.rsqrt %83 : vector<1x42xf32>
    %85 = vector.broadcast %84 : vector<1x42xf32> to vector<14x42xf32>
    %86 = arith.mulf %76, %85 : vector<14x42xf32>
    %c0_73 = arith.constant 0 : index
    %c0_74 = arith.constant 0 : index
    %87 = vector.load %arg11[%c0_73, %c0_74] : memref<1x42xf32, #tpu.memory_space<vmem>>, vector<1x42xf32>
    %88 = vector.broadcast %87 : vector<1x42xf32> to vector<14x42xf32>
    %89 = arith.mulf %86, %88 : vector<14x42xf32>
    %c0_75 = arith.constant 0 : index
    %c0_76 = arith.constant 0 : index
    %90 = vector.load %arg12[%c0_75, %c0_76] : memref<1x42xf32, #tpu.memory_space<vmem>>, vector<1x42xf32>
    %91 = vector.broadcast %90 : vector<1x42xf32> to vector<14x42xf32>
    %92 = arith.addf %89, %91 : vector<14x42xf32>
    %cst_77 = arith.constant 0.000000e+00 : f32
    %93 = vector.broadcast %cst_77 : f32 to vector<14x42xf32>
    %94 = arith.maximumf %92, %93 : vector<14x42xf32>
    %c0_78 = arith.constant 0 : index
    %c0_79 = arith.constant 0 : index
    %c0_80 = arith.constant 0 : index
    %95 = vector.load %arg13[%c0_78, %c0_79, %c0_80] : memref<3x8x14xf32, #tpu.memory_space<vmem>>, vector<1x8x14xf32>
    %96 = vector.shape_cast %95 : vector<1x8x14xf32> to vector<8x14xf32>
    %cst_81 = arith.constant dense<0.000000e+00> : vector<8x42xf32>
    %97 = tpu.matmul %96, %94, %cst_81 {dimension_numbers = #tpu.dot_dimension_numbers<[1], [0], [0], [1], [0, 0, 1, 1], [], []>} : vector<8x14xf32>, vector<14x42xf32>, vector<8x42xf32> -> vector<8x42xf32>
    %c0_82 = arith.constant 0 : index
    %c0_83 = arith.constant 0 : index
    %c0_84 = arith.constant 0 : index
    %98 = vector.load %arg14[%c0_82, %c0_83, %c0_84] : memref<3x42x48xf32, #tpu.memory_space<vmem>>, vector<1x42x48xf32>
    %99 = vector.shape_cast %98 : vector<1x42x48xf32> to vector<42x48xf32>
    %cst_85 = arith.constant dense<0.000000e+00> : vector<8x48xf32>
    %100 = tpu.matmul %97, %99, %cst_85 {dimension_numbers = #tpu.dot_dimension_numbers<[1], [0], [0], [1], [0, 0, 1, 1], [], []>} : vector<8x42xf32>, vector<42x48xf32>, vector<8x48xf32> -> vector<8x48xf32>
    %c1_86 = arith.constant 1 : index
    %c0_87 = arith.constant 0 : index
    %c0_88 = arith.constant 0 : index
    %101 = vector.load %arg13[%c1_86, %c0_87, %c0_88] : memref<3x8x14xf32, #tpu.memory_space<vmem>>, vector<1x8x14xf32>
    %102 = vector.shape_cast %101 : vector<1x8x14xf32> to vector<8x14xf32>
    %cst_89 = arith.constant dense<0.000000e+00> : vector<8x42xf32>
    %103 = tpu.matmul %102, %94, %cst_89 {dimension_numbers = #tpu.dot_dimension_numbers<[1], [0], [0], [1], [0, 0, 1, 1], [], []>} : vector<8x14xf32>, vector<14x42xf32>, vector<8x42xf32> -> vector<8x42xf32>
    %c1_90 = arith.constant 1 : index
    %c0_91 = arith.constant 0 : index
    %c0_92 = arith.constant 0 : index
    %104 = vector.load %arg14[%c1_90, %c0_91, %c0_92] : memref<3x42x48xf32, #tpu.memory_space<vmem>>, vector<1x42x48xf32>
    %105 = vector.shape_cast %104 : vector<1x42x48xf32> to vector<42x48xf32>
    %cst_93 = arith.constant dense<0.000000e+00> : vector<8x48xf32>
    %106 = tpu.matmul %103, %105, %cst_93 {dimension_numbers = #tpu.dot_dimension_numbers<[1], [0], [0], [1], [0, 0, 1, 1], [], []>} : vector<8x42xf32>, vector<42x48xf32>, vector<8x48xf32> -> vector<8x48xf32>
    %107 = arith.addf %100, %106 : vector<8x48xf32>
    %c2_94 = arith.constant 2 : index
    %c0_95 = arith.constant 0 : index
    %c0_96 = arith.constant 0 : index
    %108 = vector.load %arg13[%c2_94, %c0_95, %c0_96] : memref<3x8x14xf32, #tpu.memory_space<vmem>>, vector<1x8x14xf32>
    %109 = vector.shape_cast %108 : vector<1x8x14xf32> to vector<8x14xf32>
    %cst_97 = arith.constant dense<0.000000e+00> : vector<8x42xf32>
    %110 = tpu.matmul %109, %94, %cst_97 {dimension_numbers = #tpu.dot_dimension_numbers<[1], [0], [0], [1], [0, 0, 1, 1], [], []>} : vector<8x14xf32>, vector<14x42xf32>, vector<8x42xf32> -> vector<8x42xf32>
    %c2_98 = arith.constant 2 : index
    %c0_99 = arith.constant 0 : index
    %c0_100 = arith.constant 0 : index
    %111 = vector.load %arg14[%c2_98, %c0_99, %c0_100] : memref<3x42x48xf32, #tpu.memory_space<vmem>>, vector<1x42x48xf32>
    %112 = vector.shape_cast %111 : vector<1x42x48xf32> to vector<42x48xf32>
    %cst_101 = arith.constant dense<0.000000e+00> : vector<8x48xf32>
    %113 = tpu.matmul %110, %112, %cst_101 {dimension_numbers = #tpu.dot_dimension_numbers<[1], [0], [0], [1], [0, 0, 1, 1], [], []>} : vector<8x42xf32>, vector<42x48xf32>, vector<8x48xf32> -> vector<8x48xf32>
    %114 = arith.addf %107, %113 : vector<8x48xf32>
    %c0_102 = arith.constant 0 : index
    %c0_103 = arith.constant 0 : index
    %115 = vector.load %arg15[%c0_102, %c0_103] : memref<1x48xf32, #tpu.memory_space<vmem>>, vector<1x48xf32>
    %116 = vector.broadcast %115 : vector<1x48xf32> to vector<8x48xf32>
    %117 = arith.addf %114, %116 : vector<8x48xf32>
    %cst_104 = arith.constant dense<0.000000e+00> : vector<48xf32>
    %118 = vector.multi_reduction <add>, %117, %cst_104 [0] : vector<8x48xf32> to vector<48xf32>
    %119 = vector.shape_cast %118 : vector<48xf32> to vector<1x48xf32>
    %c0_105 = arith.constant 0 : index
    %c0_106 = arith.constant 0 : index
    %120 = vector.load %arg16[%c0_105, %c0_106] : memref<48x48xf32, #tpu.memory_space<vmem>>, vector<48x48xf32>
    %cst_107 = arith.constant dense<0.000000e+00> : vector<1x48xf32>
    %121 = tpu.matmul %119, %120, %cst_107 {dimension_numbers = #tpu.dot_dimension_numbers<[1], [0], [0], [1], [0, 0, 1, 1], [], []>} : vector<1x48xf32>, vector<48x48xf32>, vector<1x48xf32> -> vector<1x48xf32>
    %122 = vector.broadcast %121 : vector<1x48xf32> to vector<8x48xf32>
    %123 = arith.subf %117, %122 : vector<8x48xf32>
    %124 = arith.mulf %123, %123 : vector<8x48xf32>
    %cst_108 = arith.constant dense<0.000000e+00> : vector<48xf32>
    %125 = vector.multi_reduction <add>, %124, %cst_108 [0] : vector<8x48xf32> to vector<48xf32>
    %126 = vector.shape_cast %125 : vector<48xf32> to vector<1x48xf32>
    %c0_109 = arith.constant 0 : index
    %c0_110 = arith.constant 0 : index
    %127 = vector.load %arg16[%c0_109, %c0_110] : memref<48x48xf32, #tpu.memory_space<vmem>>, vector<48x48xf32>
    %cst_111 = arith.constant dense<0.000000e+00> : vector<1x48xf32>
    %128 = tpu.matmul %126, %127, %cst_111 {dimension_numbers = #tpu.dot_dimension_numbers<[1], [0], [0], [1], [0, 0, 1, 1], [], []>} : vector<1x48xf32>, vector<48x48xf32>, vector<1x48xf32> -> vector<1x48xf32>
    %cst_112 = arith.constant 9.99999974E-6 : f32
    %129 = vector.broadcast %cst_112 : f32 to vector<1x48xf32>
    %130 = arith.addf %128, %129 : vector<1x48xf32>
    %131 = math.rsqrt %130 : vector<1x48xf32>
    %132 = vector.broadcast %131 : vector<1x48xf32> to vector<8x48xf32>
    %133 = arith.mulf %123, %132 : vector<8x48xf32>
    %c0_113 = arith.constant 0 : index
    %c0_114 = arith.constant 0 : index
    %134 = vector.load %arg17[%c0_113, %c0_114] : memref<1x48xf32, #tpu.memory_space<vmem>>, vector<1x48xf32>
    %135 = vector.broadcast %134 : vector<1x48xf32> to vector<8x48xf32>
    %136 = arith.mulf %133, %135 : vector<8x48xf32>
    %c0_115 = arith.constant 0 : index
    %c0_116 = arith.constant 0 : index
    %137 = vector.load %arg18[%c0_115, %c0_116] : memref<1x48xf32, #tpu.memory_space<vmem>>, vector<1x48xf32>
    %138 = vector.broadcast %137 : vector<1x48xf32> to vector<8x48xf32>
    %139 = arith.addf %136, %138 : vector<8x48xf32>
    %cst_117 = arith.constant 0.000000e+00 : f32
    %140 = vector.broadcast %cst_117 : f32 to vector<8x48xf32>
    %141 = arith.maximumf %139, %140 : vector<8x48xf32>
    %c0_118 = arith.constant 0 : index
    %c0_119 = arith.constant 0 : index
    %c0_120 = arith.constant 0 : index
    %142 = vector.load %arg19[%c0_118, %c0_119, %c0_120] : memref<3x4x8xf32, #tpu.memory_space<vmem>>, vector<1x4x8xf32>
    %143 = vector.shape_cast %142 : vector<1x4x8xf32> to vector<4x8xf32>
    %cst_121 = arith.constant dense<0.000000e+00> : vector<4x48xf32>
    %144 = tpu.matmul %143, %141, %cst_121 {dimension_numbers = #tpu.dot_dimension_numbers<[1], [0], [0], [1], [0, 0, 1, 1], [], []>} : vector<4x8xf32>, vector<8x48xf32>, vector<4x48xf32> -> vector<4x48xf32>
    %c0_122 = arith.constant 0 : index
    %c0_123 = arith.constant 0 : index
    %c0_124 = arith.constant 0 : index
    %145 = vector.load %arg20[%c0_122, %c0_123, %c0_124] : memref<3x48x48xf32, #tpu.memory_space<vmem>>, vector<1x48x48xf32>
    %146 = vector.shape_cast %145 : vector<1x48x48xf32> to vector<48x48xf32>
    %cst_125 = arith.constant dense<0.000000e+00> : vector<4x48xf32>
    %147 = tpu.matmul %144, %146, %cst_125 {dimension_numbers = #tpu.dot_dimension_numbers<[1], [0], [0], [1], [0, 0, 1, 1], [], []>} : vector<4x48xf32>, vector<48x48xf32>, vector<4x48xf32> -> vector<4x48xf32>
    %c1_126 = arith.constant 1 : index
    %c0_127 = arith.constant 0 : index
    %c0_128 = arith.constant 0 : index
    %148 = vector.load %arg19[%c1_126, %c0_127, %c0_128] : memref<3x4x8xf32, #tpu.memory_space<vmem>>, vector<1x4x8xf32>
    %149 = vector.shape_cast %148 : vector<1x4x8xf32> to vector<4x8xf32>
    %cst_129 = arith.constant dense<0.000000e+00> : vector<4x48xf32>
    %150 = tpu.matmul %149, %141, %cst_129 {dimension_numbers = #tpu.dot_dimension_numbers<[1], [0], [0], [1], [0, 0, 1, 1], [], []>} : vector<4x8xf32>, vector<8x48xf32>, vector<4x48xf32> -> vector<4x48xf32>
    %c1_130 = arith.constant 1 : index
    %c0_131 = arith.constant 0 : index
    %c0_132 = arith.constant 0 : index
    %151 = vector.load %arg20[%c1_130, %c0_131, %c0_132] : memref<3x48x48xf32, #tpu.memory_space<vmem>>, vector<1x48x48xf32>
    %152 = vector.shape_cast %151 : vector<1x48x48xf32> to vector<48x48xf32>
    %cst_133 = arith.constant dense<0.000000e+00> : vector<4x48xf32>
    %153 = tpu.matmul %150, %152, %cst_133 {dimension_numbers = #tpu.dot_dimension_numbers<[1], [0], [0], [1], [0, 0, 1, 1], [], []>} : vector<4x48xf32>, vector<48x48xf32>, vector<4x48xf32> -> vector<4x48xf32>
    %154 = arith.addf %147, %153 : vector<4x48xf32>
    %c2_134 = arith.constant 2 : index
    %c0_135 = arith.constant 0 : index
    %c0_136 = arith.constant 0 : index
    %155 = vector.load %arg19[%c2_134, %c0_135, %c0_136] : memref<3x4x8xf32, #tpu.memory_space<vmem>>, vector<1x4x8xf32>
    %156 = vector.shape_cast %155 : vector<1x4x8xf32> to vector<4x8xf32>
    %cst_137 = arith.constant dense<0.000000e+00> : vector<4x48xf32>
    %157 = tpu.matmul %156, %141, %cst_137 {dimension_numbers = #tpu.dot_dimension_numbers<[1], [0], [0], [1], [0, 0, 1, 1], [], []>} : vector<4x8xf32>, vector<8x48xf32>, vector<4x48xf32> -> vector<4x48xf32>
    %c2_138 = arith.constant 2 : index
    %c0_139 = arith.constant 0 : index
    %c0_140 = arith.constant 0 : index
    %158 = vector.load %arg20[%c2_138, %c0_139, %c0_140] : memref<3x48x48xf32, #tpu.memory_space<vmem>>, vector<1x48x48xf32>
    %159 = vector.shape_cast %158 : vector<1x48x48xf32> to vector<48x48xf32>
    %cst_141 = arith.constant dense<0.000000e+00> : vector<4x48xf32>
    %160 = tpu.matmul %157, %159, %cst_141 {dimension_numbers = #tpu.dot_dimension_numbers<[1], [0], [0], [1], [0, 0, 1, 1], [], []>} : vector<4x48xf32>, vector<48x48xf32>, vector<4x48xf32> -> vector<4x48xf32>
    %161 = arith.addf %154, %160 : vector<4x48xf32>
    %c0_142 = arith.constant 0 : index
    %c0_143 = arith.constant 0 : index
    %162 = vector.load %arg21[%c0_142, %c0_143] : memref<1x48xf32, #tpu.memory_space<vmem>>, vector<1x48xf32>
    %163 = vector.broadcast %162 : vector<1x48xf32> to vector<4x48xf32>
    %164 = arith.addf %161, %163 : vector<4x48xf32>
    %cst_144 = arith.constant dense<0.000000e+00> : vector<48xf32>
    %165 = vector.multi_reduction <add>, %164, %cst_144 [0] : vector<4x48xf32> to vector<48xf32>
    %166 = vector.shape_cast %165 : vector<48xf32> to vector<1x48xf32>
    %c0_145 = arith.constant 0 : index
    %c0_146 = arith.constant 0 : index
    %167 = vector.load %arg22[%c0_145, %c0_146] : memref<48x48xf32, #tpu.memory_space<vmem>>, vector<48x48xf32>
    %cst_147 = arith.constant dense<0.000000e+00> : vector<1x48xf32>
    %168 = tpu.matmul %166, %167, %cst_147 {dimension_numbers = #tpu.dot_dimension_numbers<[1], [0], [0], [1], [0, 0, 1, 1], [], []>} : vector<1x48xf32>, vector<48x48xf32>, vector<1x48xf32> -> vector<1x48xf32>
    %169 = vector.broadcast %168 : vector<1x48xf32> to vector<4x48xf32>
    %170 = arith.subf %164, %169 : vector<4x48xf32>
    %171 = arith.mulf %170, %170 : vector<4x48xf32>
    %cst_148 = arith.constant dense<0.000000e+00> : vector<48xf32>
    %172 = vector.multi_reduction <add>, %171, %cst_148 [0] : vector<4x48xf32> to vector<48xf32>
    %173 = vector.shape_cast %172 : vector<48xf32> to vector<1x48xf32>
    %c0_149 = arith.constant 0 : index
    %c0_150 = arith.constant 0 : index
    %174 = vector.load %arg22[%c0_149, %c0_150] : memref<48x48xf32, #tpu.memory_space<vmem>>, vector<48x48xf32>
    %cst_151 = arith.constant dense<0.000000e+00> : vector<1x48xf32>
    %175 = tpu.matmul %173, %174, %cst_151 {dimension_numbers = #tpu.dot_dimension_numbers<[1], [0], [0], [1], [0, 0, 1, 1], [], []>} : vector<1x48xf32>, vector<48x48xf32>, vector<1x48xf32> -> vector<1x48xf32>
    %cst_152 = arith.constant 9.99999974E-6 : f32
    %176 = vector.broadcast %cst_152 : f32 to vector<1x48xf32>
    %177 = arith.addf %175, %176 : vector<1x48xf32>
    %178 = math.rsqrt %177 : vector<1x48xf32>
    %179 = vector.broadcast %178 : vector<1x48xf32> to vector<4x48xf32>
    %180 = arith.mulf %170, %179 : vector<4x48xf32>
    %c0_153 = arith.constant 0 : index
    %c0_154 = arith.constant 0 : index
    %181 = vector.load %arg23[%c0_153, %c0_154] : memref<1x48xf32, #tpu.memory_space<vmem>>, vector<1x48xf32>
    %182 = vector.broadcast %181 : vector<1x48xf32> to vector<4x48xf32>
    %183 = arith.mulf %180, %182 : vector<4x48xf32>
    %c0_155 = arith.constant 0 : index
    %c0_156 = arith.constant 0 : index
    %184 = vector.load %arg24[%c0_155, %c0_156] : memref<1x48xf32, #tpu.memory_space<vmem>>, vector<1x48xf32>
    %185 = vector.broadcast %184 : vector<1x48xf32> to vector<4x48xf32>
    %186 = arith.addf %183, %185 : vector<4x48xf32>
    %cst_157 = arith.constant 0.000000e+00 : f32
    %187 = vector.broadcast %cst_157 : f32 to vector<4x48xf32>
    %188 = arith.maximumf %186, %187 : vector<4x48xf32>
    %c0_158 = arith.constant 0 : index
    %c0_159 = arith.constant 0 : index
    %c0_160 = arith.constant 0 : index
    %189 = vector.load %arg25[%c0_158, %c0_159, %c0_160] : memref<2x2x4xf32, #tpu.memory_space<vmem>>, vector<1x2x4xf32>
    %190 = vector.shape_cast %189 : vector<1x2x4xf32> to vector<2x4xf32>
    %cst_161 = arith.constant dense<0.000000e+00> : vector<2x48xf32>
    %191 = tpu.matmul %190, %188, %cst_161 {dimension_numbers = #tpu.dot_dimension_numbers<[1], [0], [0], [1], [0, 0, 1, 1], [], []>} : vector<2x4xf32>, vector<4x48xf32>, vector<2x48xf32> -> vector<2x48xf32>
    %c0_162 = arith.constant 0 : index
    %c0_163 = arith.constant 0 : index
    %c0_164 = arith.constant 0 : index
    %192 = vector.load %arg26[%c0_162, %c0_163, %c0_164] : memref<2x48x2xf32, #tpu.memory_space<vmem>>, vector<1x48x2xf32>
    %193 = vector.shape_cast %192 : vector<1x48x2xf32> to vector<48x2xf32>
    %cst_165 = arith.constant dense<0.000000e+00> : vector<2x2xf32>
    %194 = tpu.matmul %191, %193, %cst_165 {dimension_numbers = #tpu.dot_dimension_numbers<[1], [0], [0], [1], [0, 0, 1, 1], [], []>} : vector<2x48xf32>, vector<48x2xf32>, vector<2x2xf32> -> vector<2x2xf32>
    %c1_166 = arith.constant 1 : index
    %c0_167 = arith.constant 0 : index
    %c0_168 = arith.constant 0 : index
    %195 = vector.load %arg25[%c1_166, %c0_167, %c0_168] : memref<2x2x4xf32, #tpu.memory_space<vmem>>, vector<1x2x4xf32>
    %196 = vector.shape_cast %195 : vector<1x2x4xf32> to vector<2x4xf32>
    %cst_169 = arith.constant dense<0.000000e+00> : vector<2x48xf32>
    %197 = tpu.matmul %196, %188, %cst_169 {dimension_numbers = #tpu.dot_dimension_numbers<[1], [0], [0], [1], [0, 0, 1, 1], [], []>} : vector<2x4xf32>, vector<4x48xf32>, vector<2x48xf32> -> vector<2x48xf32>
    %c1_170 = arith.constant 1 : index
    %c0_171 = arith.constant 0 : index
    %c0_172 = arith.constant 0 : index
    %198 = vector.load %arg26[%c1_170, %c0_171, %c0_172] : memref<2x48x2xf32, #tpu.memory_space<vmem>>, vector<1x48x2xf32>
    %199 = vector.shape_cast %198 : vector<1x48x2xf32> to vector<48x2xf32>
    %cst_173 = arith.constant dense<0.000000e+00> : vector<2x2xf32>
    %200 = tpu.matmul %197, %199, %cst_173 {dimension_numbers = #tpu.dot_dimension_numbers<[1], [0], [0], [1], [0, 0, 1, 1], [], []>} : vector<2x48xf32>, vector<48x2xf32>, vector<2x2xf32> -> vector<2x2xf32>
    %201 = arith.addf %194, %200 : vector<2x2xf32>
    %c0_174 = arith.constant 0 : index
    %c0_175 = arith.constant 0 : index
    %202 = vector.load %arg27[%c0_174, %c0_175] : memref<1x2xf32, #tpu.memory_space<vmem>>, vector<1x2xf32>
    %203 = vector.broadcast %202 : vector<1x2xf32> to vector<2x2xf32>
    %204 = arith.addf %201, %203 : vector<2x2xf32>
    %c0_176 = arith.constant 0 : index
    %c0_177 = arith.constant 0 : index
    %205 = vector.load %arg28[%c0_176, %c0_177] : memref<2x96xf32, #tpu.memory_space<vmem>>, vector<2x96xf32>
    %cst_178 = arith.constant dense<0.000000e+00> : vector<2x96xf32>
    %206 = tpu.matmul %204, %205, %cst_178 {dimension_numbers = #tpu.dot_dimension_numbers<[1], [0], [0], [1], [0, 0, 1, 1], [], []>} : vector<2x2xf32>, vector<2x96xf32>, vector<2x96xf32> -> vector<2x96xf32>
    %c0_179 = arith.constant 0 : index
    %c0_180 = arith.constant 0 : index
    %207 = vector.load %arg29[%c0_179, %c0_180] : memref<1x96xf32, #tpu.memory_space<vmem>>, vector<1x96xf32>
    %208 = vector.broadcast %207 : vector<1x96xf32> to vector<2x96xf32>
    %209 = arith.addf %206, %208 : vector<2x96xf32>
    %cst_181 = arith.constant dense<0.000000e+00> : vector<96xf32>
    %210 = vector.multi_reduction <add>, %209, %cst_181 [0] : vector<2x96xf32> to vector<96xf32>
    %211 = vector.shape_cast %210 : vector<96xf32> to vector<1x96xf32>
    %cst_182 = arith.constant 2.000000e+00 : f32
    %212 = vector.broadcast %cst_182 : f32 to vector<1x96xf32>
    %213 = arith.divf %211, %212 : vector<1x96xf32>
    %214 = vector.broadcast %213 : vector<1x96xf32> to vector<2x96xf32>
    %215 = arith.subf %209, %214 : vector<2x96xf32>
    %216 = arith.mulf %215, %215 : vector<2x96xf32>
    %cst_183 = arith.constant dense<0.000000e+00> : vector<96xf32>
    %217 = vector.multi_reduction <add>, %216, %cst_183 [0] : vector<2x96xf32> to vector<96xf32>
    %218 = vector.shape_cast %217 : vector<96xf32> to vector<1x96xf32>
    %cst_184 = arith.constant 2.000000e+00 : f32
    %219 = vector.broadcast %cst_184 : f32 to vector<1x96xf32>
    %220 = arith.divf %218, %219 : vector<1x96xf32>
    %cst_185 = arith.constant 9.99999974E-6 : f32
    %221 = vector.broadcast %cst_185 : f32 to vector<1x96xf32>
    %222 = arith.addf %220, %221 : vector<1x96xf32>
    %223 = math.rsqrt %222 : vector<1x96xf32>
    %224 = vector.broadcast %223 : vector<1x96xf32> to vector<2x96xf32>
    %225 = arith.mulf %215, %224 : vector<2x96xf32>
    %c0_186 = arith.constant 0 : index
    %c0_187 = arith.constant 0 : index
    %226 = vector.load %arg30[%c0_186, %c0_187] : memref<1x96xf32, #tpu.memory_space<vmem>>, vector<1x96xf32>
    %227 = vector.broadcast %226 : vector<1x96xf32> to vector<2x96xf32>
    %228 = arith.mulf %225, %227 : vector<2x96xf32>
    %c0_188 = arith.constant 0 : index
    %c0_189 = arith.constant 0 : index
    %229 = vector.load %arg31[%c0_188, %c0_189] : memref<1x96xf32, #tpu.memory_space<vmem>>, vector<1x96xf32>
    %230 = vector.broadcast %229 : vector<1x96xf32> to vector<2x96xf32>
    %231 = arith.addf %228, %230 : vector<2x96xf32>
    %cst_190 = arith.constant 0.000000e+00 : f32
    %232 = vector.broadcast %cst_190 : f32 to vector<2x96xf32>
    %233 = arith.maximumf %231, %232 : vector<2x96xf32>
    %c0_191 = arith.constant 0 : index
    %c0_192 = arith.constant 0 : index
    %c0_193 = arith.constant 0 : index
    %234 = vector.load %arg32[%c0_191, %c0_192, %c0_193] : memref<2x4x2xf32, #tpu.memory_space<vmem>>, vector<1x4x2xf32>
    %235 = vector.shape_cast %234 : vector<1x4x2xf32> to vector<4x2xf32>
    %c0_194 = arith.constant 0 : index
    %c0_195 = arith.constant 0 : index
    %c0_196 = arith.constant 0 : index
    %236 = vector.load %arg33[%c0_194, %c0_195, %c0_196] : memref<2x96x48xf32, #tpu.memory_space<vmem>>, vector<1x96x48xf32>
    %237 = vector.shape_cast %236 : vector<1x96x48xf32> to vector<96x48xf32>
    %cst_197 = arith.constant dense<0.000000e+00> : vector<2x48xf32>
    %238 = tpu.matmul %233, %237, %cst_197 {dimension_numbers = #tpu.dot_dimension_numbers<[1], [0], [0], [1], [0, 0, 1, 1], [], []>} : vector<2x96xf32>, vector<96x48xf32>, vector<2x48xf32> -> vector<2x48xf32>
    %cst_198 = arith.constant dense<0.000000e+00> : vector<4x48xf32>
    %239 = tpu.matmul %235, %238, %cst_198 {dimension_numbers = #tpu.dot_dimension_numbers<[1], [0], [0], [1], [0, 0, 1, 1], [], []>} : vector<4x2xf32>, vector<2x48xf32>, vector<4x48xf32> -> vector<4x48xf32>
    %c1_199 = arith.constant 1 : index
    %c0_200 = arith.constant 0 : index
    %c0_201 = arith.constant 0 : index
    %240 = vector.load %arg32[%c1_199, %c0_200, %c0_201] : memref<2x4x2xf32, #tpu.memory_space<vmem>>, vector<1x4x2xf32>
    %241 = vector.shape_cast %240 : vector<1x4x2xf32> to vector<4x2xf32>
    %c1_202 = arith.constant 1 : index
    %c0_203 = arith.constant 0 : index
    %c0_204 = arith.constant 0 : index
    %242 = vector.load %arg33[%c1_202, %c0_203, %c0_204] : memref<2x96x48xf32, #tpu.memory_space<vmem>>, vector<1x96x48xf32>
    %243 = vector.shape_cast %242 : vector<1x96x48xf32> to vector<96x48xf32>
    %cst_205 = arith.constant dense<0.000000e+00> : vector<2x48xf32>
    %244 = tpu.matmul %233, %243, %cst_205 {dimension_numbers = #tpu.dot_dimension_numbers<[1], [0], [0], [1], [0, 0, 1, 1], [], []>} : vector<2x96xf32>, vector<96x48xf32>, vector<2x48xf32> -> vector<2x48xf32>
    %cst_206 = arith.constant dense<0.000000e+00> : vector<4x48xf32>
    %245 = tpu.matmul %241, %244, %cst_206 {dimension_numbers = #tpu.dot_dimension_numbers<[1], [0], [0], [1], [0, 0, 1, 1], [], []>} : vector<4x2xf32>, vector<2x48xf32>, vector<4x48xf32> -> vector<4x48xf32>
    %246 = arith.addf %239, %245 : vector<4x48xf32>
    %c0_207 = arith.constant 0 : index
    %c0_208 = arith.constant 0 : index
    %c0_209 = arith.constant 0 : index
    %247 = vector.load %arg34[%c0_207, %c0_208, %c0_209] : memref<3x8x4xf32, #tpu.memory_space<vmem>>, vector<1x8x4xf32>
    %248 = vector.shape_cast %247 : vector<1x8x4xf32> to vector<8x4xf32>
    %cst_210 = arith.constant dense<0.000000e+00> : vector<8x48xf32>
    %249 = tpu.matmul %248, %246, %cst_210 {dimension_numbers = #tpu.dot_dimension_numbers<[1], [0], [0], [1], [0, 0, 1, 1], [], []>} : vector<8x4xf32>, vector<4x48xf32>, vector<8x48xf32> -> vector<8x48xf32>
    %c0_211 = arith.constant 0 : index
    %c0_212 = arith.constant 0 : index
    %c0_213 = arith.constant 0 : index
    %250 = vector.load %arg35[%c0_211, %c0_212, %c0_213] : memref<3x48x48xf32, #tpu.memory_space<vmem>>, vector<1x48x48xf32>
    %251 = vector.shape_cast %250 : vector<1x48x48xf32> to vector<48x48xf32>
    %cst_214 = arith.constant dense<0.000000e+00> : vector<8x48xf32>
    %252 = tpu.matmul %249, %251, %cst_214 {dimension_numbers = #tpu.dot_dimension_numbers<[1], [0], [0], [1], [0, 0, 1, 1], [], []>} : vector<8x48xf32>, vector<48x48xf32>, vector<8x48xf32> -> vector<8x48xf32>
    %c1_215 = arith.constant 1 : index
    %c0_216 = arith.constant 0 : index
    %c0_217 = arith.constant 0 : index
    %253 = vector.load %arg34[%c1_215, %c0_216, %c0_217] : memref<3x8x4xf32, #tpu.memory_space<vmem>>, vector<1x8x4xf32>
    %254 = vector.shape_cast %253 : vector<1x8x4xf32> to vector<8x4xf32>
    %cst_218 = arith.constant dense<0.000000e+00> : vector<8x48xf32>
    %255 = tpu.matmul %254, %246, %cst_218 {dimension_numbers = #tpu.dot_dimension_numbers<[1], [0], [0], [1], [0, 0, 1, 1], [], []>} : vector<8x4xf32>, vector<4x48xf32>, vector<8x48xf32> -> vector<8x48xf32>
    %c1_219 = arith.constant 1 : index
    %c0_220 = arith.constant 0 : index
    %c0_221 = arith.constant 0 : index
    %256 = vector.load %arg35[%c1_219, %c0_220, %c0_221] : memref<3x48x48xf32, #tpu.memory_space<vmem>>, vector<1x48x48xf32>
    %257 = vector.shape_cast %256 : vector<1x48x48xf32> to vector<48x48xf32>
    %cst_222 = arith.constant dense<0.000000e+00> : vector<8x48xf32>
    %258 = tpu.matmul %255, %257, %cst_222 {dimension_numbers = #tpu.dot_dimension_numbers<[1], [0], [0], [1], [0, 0, 1, 1], [], []>} : vector<8x48xf32>, vector<48x48xf32>, vector<8x48xf32> -> vector<8x48xf32>
    %259 = arith.addf %252, %258 : vector<8x48xf32>
    %c2_223 = arith.constant 2 : index
    %c0_224 = arith.constant 0 : index
    %c0_225 = arith.constant 0 : index
    %260 = vector.load %arg34[%c2_223, %c0_224, %c0_225] : memref<3x8x4xf32, #tpu.memory_space<vmem>>, vector<1x8x4xf32>
    %261 = vector.shape_cast %260 : vector<1x8x4xf32> to vector<8x4xf32>
    %cst_226 = arith.constant dense<0.000000e+00> : vector<8x48xf32>
    %262 = tpu.matmul %261, %246, %cst_226 {dimension_numbers = #tpu.dot_dimension_numbers<[1], [0], [0], [1], [0, 0, 1, 1], [], []>} : vector<8x4xf32>, vector<4x48xf32>, vector<8x48xf32> -> vector<8x48xf32>
    %c2_227 = arith.constant 2 : index
    %c0_228 = arith.constant 0 : index
    %c0_229 = arith.constant 0 : index
    %263 = vector.load %arg35[%c2_227, %c0_228, %c0_229] : memref<3x48x48xf32, #tpu.memory_space<vmem>>, vector<1x48x48xf32>
    %264 = vector.shape_cast %263 : vector<1x48x48xf32> to vector<48x48xf32>
    %cst_230 = arith.constant dense<0.000000e+00> : vector<8x48xf32>
    %265 = tpu.matmul %262, %264, %cst_230 {dimension_numbers = #tpu.dot_dimension_numbers<[1], [0], [0], [1], [0, 0, 1, 1], [], []>} : vector<8x48xf32>, vector<48x48xf32>, vector<8x48xf32> -> vector<8x48xf32>
    %266 = arith.addf %259, %265 : vector<8x48xf32>
    %c0_231 = arith.constant 0 : index
    %c0_232 = arith.constant 0 : index
    %267 = vector.load %arg36[%c0_231, %c0_232] : memref<1x48xf32, #tpu.memory_space<vmem>>, vector<1x48xf32>
    %268 = vector.broadcast %267 : vector<1x48xf32> to vector<8x48xf32>
    %269 = arith.addf %266, %268 : vector<8x48xf32>
    %cst_233 = arith.constant dense<0.000000e+00> : vector<48xf32>
    %270 = vector.multi_reduction <add>, %269, %cst_233 [0] : vector<8x48xf32> to vector<48xf32>
    %271 = vector.shape_cast %270 : vector<48xf32> to vector<1x48xf32>
    %c0_234 = arith.constant 0 : index
    %c0_235 = arith.constant 0 : index
    %272 = vector.load %arg37[%c0_234, %c0_235] : memref<48x48xf32, #tpu.memory_space<vmem>>, vector<48x48xf32>
    %cst_236 = arith.constant dense<0.000000e+00> : vector<1x48xf32>
    %273 = tpu.matmul %271, %272, %cst_236 {dimension_numbers = #tpu.dot_dimension_numbers<[1], [0], [0], [1], [0, 0, 1, 1], [], []>} : vector<1x48xf32>, vector<48x48xf32>, vector<1x48xf32> -> vector<1x48xf32>
    %274 = vector.broadcast %273 : vector<1x48xf32> to vector<8x48xf32>
    %275 = arith.subf %269, %274 : vector<8x48xf32>
    %276 = arith.mulf %275, %275 : vector<8x48xf32>
    %cst_237 = arith.constant dense<0.000000e+00> : vector<48xf32>
    %277 = vector.multi_reduction <add>, %276, %cst_237 [0] : vector<8x48xf32> to vector<48xf32>
    %278 = vector.shape_cast %277 : vector<48xf32> to vector<1x48xf32>
    %c0_238 = arith.constant 0 : index
    %c0_239 = arith.constant 0 : index
    %279 = vector.load %arg37[%c0_238, %c0_239] : memref<48x48xf32, #tpu.memory_space<vmem>>, vector<48x48xf32>
    %cst_240 = arith.constant dense<0.000000e+00> : vector<1x48xf32>
    %280 = tpu.matmul %278, %279, %cst_240 {dimension_numbers = #tpu.dot_dimension_numbers<[1], [0], [0], [1], [0, 0, 1, 1], [], []>} : vector<1x48xf32>, vector<48x48xf32>, vector<1x48xf32> -> vector<1x48xf32>
    %cst_241 = arith.constant 9.99999974E-6 : f32
    %281 = vector.broadcast %cst_241 : f32 to vector<1x48xf32>
    %282 = arith.addf %280, %281 : vector<1x48xf32>
    %283 = math.rsqrt %282 : vector<1x48xf32>
    %284 = vector.broadcast %283 : vector<1x48xf32> to vector<8x48xf32>
    %285 = arith.mulf %275, %284 : vector<8x48xf32>
    %c0_242 = arith.constant 0 : index
    %c0_243 = arith.constant 0 : index
    %286 = vector.load %arg38[%c0_242, %c0_243] : memref<1x48xf32, #tpu.memory_space<vmem>>, vector<1x48xf32>
    %287 = vector.broadcast %286 : vector<1x48xf32> to vector<8x48xf32>
    %288 = arith.mulf %285, %287 : vector<8x48xf32>
    %c0_244 = arith.constant 0 : index
    %c0_245 = arith.constant 0 : index
    %289 = vector.load %arg39[%c0_244, %c0_245] : memref<1x48xf32, #tpu.memory_space<vmem>>, vector<1x48xf32>
    %290 = vector.broadcast %289 : vector<1x48xf32> to vector<8x48xf32>
    %291 = arith.addf %288, %290 : vector<8x48xf32>
    %cst_246 = arith.constant 0.000000e+00 : f32
    %292 = vector.broadcast %cst_246 : f32 to vector<8x48xf32>
    %293 = arith.maximumf %291, %292 : vector<8x48xf32>
    %c0_247 = arith.constant 0 : index
    %c0_248 = arith.constant 0 : index
    %c0_249 = arith.constant 0 : index
    %294 = vector.load %arg40[%c0_247, %c0_248, %c0_249] : memref<3x16x8xf32, #tpu.memory_space<vmem>>, vector<1x16x8xf32>
    %295 = vector.shape_cast %294 : vector<1x16x8xf32> to vector<16x8xf32>
    %cst_250 = arith.constant dense<0.000000e+00> : vector<16x48xf32>
    %296 = tpu.matmul %295, %293, %cst_250 {dimension_numbers = #tpu.dot_dimension_numbers<[1], [0], [0], [1], [0, 0, 1, 1], [], []>} : vector<16x8xf32>, vector<8x48xf32>, vector<16x48xf32> -> vector<16x48xf32>
    %c0_251 = arith.constant 0 : index
    %c0_252 = arith.constant 0 : index
    %c0_253 = arith.constant 0 : index
    %297 = vector.load %arg41[%c0_251, %c0_252, %c0_253] : memref<3x48x48xf32, #tpu.memory_space<vmem>>, vector<1x48x48xf32>
    %298 = vector.shape_cast %297 : vector<1x48x48xf32> to vector<48x48xf32>
    %cst_254 = arith.constant dense<0.000000e+00> : vector<16x48xf32>
    %299 = tpu.matmul %296, %298, %cst_254 {dimension_numbers = #tpu.dot_dimension_numbers<[1], [0], [0], [1], [0, 0, 1, 1], [], []>} : vector<16x48xf32>, vector<48x48xf32>, vector<16x48xf32> -> vector<16x48xf32>
    %c1_255 = arith.constant 1 : index
    %c0_256 = arith.constant 0 : index
    %c0_257 = arith.constant 0 : index
    %300 = vector.load %arg40[%c1_255, %c0_256, %c0_257] : memref<3x16x8xf32, #tpu.memory_space<vmem>>, vector<1x16x8xf32>
    %301 = vector.shape_cast %300 : vector<1x16x8xf32> to vector<16x8xf32>
    %cst_258 = arith.constant dense<0.000000e+00> : vector<16x48xf32>
    %302 = tpu.matmul %301, %293, %cst_258 {dimension_numbers = #tpu.dot_dimension_numbers<[1], [0], [0], [1], [0, 0, 1, 1], [], []>} : vector<16x8xf32>, vector<8x48xf32>, vector<16x48xf32> -> vector<16x48xf32>
    %c1_259 = arith.constant 1 : index
    %c0_260 = arith.constant 0 : index
    %c0_261 = arith.constant 0 : index
    %303 = vector.load %arg41[%c1_259, %c0_260, %c0_261] : memref<3x48x48xf32, #tpu.memory_space<vmem>>, vector<1x48x48xf32>
    %304 = vector.shape_cast %303 : vector<1x48x48xf32> to vector<48x48xf32>
    %cst_262 = arith.constant dense<0.000000e+00> : vector<16x48xf32>
    %305 = tpu.matmul %302, %304, %cst_262 {dimension_numbers = #tpu.dot_dimension_numbers<[1], [0], [0], [1], [0, 0, 1, 1], [], []>} : vector<16x48xf32>, vector<48x48xf32>, vector<16x48xf32> -> vector<16x48xf32>
    %306 = arith.addf %299, %305 : vector<16x48xf32>
    %c2_263 = arith.constant 2 : index
    %c0_264 = arith.constant 0 : index
    %c0_265 = arith.constant 0 : index
    %307 = vector.load %arg40[%c2_263, %c0_264, %c0_265] : memref<3x16x8xf32, #tpu.memory_space<vmem>>, vector<1x16x8xf32>
    %308 = vector.shape_cast %307 : vector<1x16x8xf32> to vector<16x8xf32>
    %cst_266 = arith.constant dense<0.000000e+00> : vector<16x48xf32>
    %309 = tpu.matmul %308, %293, %cst_266 {dimension_numbers = #tpu.dot_dimension_numbers<[1], [0], [0], [1], [0, 0, 1, 1], [], []>} : vector<16x8xf32>, vector<8x48xf32>, vector<16x48xf32> -> vector<16x48xf32>
    %c2_267 = arith.constant 2 : index
    %c0_268 = arith.constant 0 : index
    %c0_269 = arith.constant 0 : index
    %310 = vector.load %arg41[%c2_267, %c0_268, %c0_269] : memref<3x48x48xf32, #tpu.memory_space<vmem>>, vector<1x48x48xf32>
    %311 = vector.shape_cast %310 : vector<1x48x48xf32> to vector<48x48xf32>
    %cst_270 = arith.constant dense<0.000000e+00> : vector<16x48xf32>
    %312 = tpu.matmul %309, %311, %cst_270 {dimension_numbers = #tpu.dot_dimension_numbers<[1], [0], [0], [1], [0, 0, 1, 1], [], []>} : vector<16x48xf32>, vector<48x48xf32>, vector<16x48xf32> -> vector<16x48xf32>
    %313 = arith.addf %306, %312 : vector<16x48xf32>
    %c0_271 = arith.constant 0 : index
    %c0_272 = arith.constant 0 : index
    %314 = vector.load %arg42[%c0_271, %c0_272] : memref<1x48xf32, #tpu.memory_space<vmem>>, vector<1x48xf32>
    %315 = vector.broadcast %314 : vector<1x48xf32> to vector<16x48xf32>
    %316 = arith.addf %313, %315 : vector<16x48xf32>
    %cst_273 = arith.constant dense<0.000000e+00> : vector<48xf32>
    %317 = vector.multi_reduction <add>, %316, %cst_273 [0] : vector<16x48xf32> to vector<48xf32>
    %318 = vector.shape_cast %317 : vector<48xf32> to vector<1x48xf32>
    %c0_274 = arith.constant 0 : index
    %c0_275 = arith.constant 0 : index
    %319 = vector.load %arg43[%c0_274, %c0_275] : memref<48x48xf32, #tpu.memory_space<vmem>>, vector<48x48xf32>
    %cst_276 = arith.constant dense<0.000000e+00> : vector<1x48xf32>
    %320 = tpu.matmul %318, %319, %cst_276 {dimension_numbers = #tpu.dot_dimension_numbers<[1], [0], [0], [1], [0, 0, 1, 1], [], []>} : vector<1x48xf32>, vector<48x48xf32>, vector<1x48xf32> -> vector<1x48xf32>
    %321 = vector.broadcast %320 : vector<1x48xf32> to vector<16x48xf32>
    %322 = arith.subf %316, %321 : vector<16x48xf32>
    %323 = arith.mulf %322, %322 : vector<16x48xf32>
    %cst_277 = arith.constant dense<0.000000e+00> : vector<48xf32>
    %324 = vector.multi_reduction <add>, %323, %cst_277 [0] : vector<16x48xf32> to vector<48xf32>
    %325 = vector.shape_cast %324 : vector<48xf32> to vector<1x48xf32>
    %c0_278 = arith.constant 0 : index
    %c0_279 = arith.constant 0 : index
    %326 = vector.load %arg43[%c0_278, %c0_279] : memref<48x48xf32, #tpu.memory_space<vmem>>, vector<48x48xf32>
    %cst_280 = arith.constant dense<0.000000e+00> : vector<1x48xf32>
    %327 = tpu.matmul %325, %326, %cst_280 {dimension_numbers = #tpu.dot_dimension_numbers<[1], [0], [0], [1], [0, 0, 1, 1], [], []>} : vector<1x48xf32>, vector<48x48xf32>, vector<1x48xf32> -> vector<1x48xf32>
    %cst_281 = arith.constant 9.99999974E-6 : f32
    %328 = vector.broadcast %cst_281 : f32 to vector<1x48xf32>
    %329 = arith.addf %327, %328 : vector<1x48xf32>
    %330 = math.rsqrt %329 : vector<1x48xf32>
    %331 = vector.broadcast %330 : vector<1x48xf32> to vector<16x48xf32>
    %332 = arith.mulf %322, %331 : vector<16x48xf32>
    %c0_282 = arith.constant 0 : index
    %c0_283 = arith.constant 0 : index
    %333 = vector.load %arg44[%c0_282, %c0_283] : memref<1x48xf32, #tpu.memory_space<vmem>>, vector<1x48xf32>
    %334 = vector.broadcast %333 : vector<1x48xf32> to vector<16x48xf32>
    %335 = arith.mulf %332, %334 : vector<16x48xf32>
    %c0_284 = arith.constant 0 : index
    %c0_285 = arith.constant 0 : index
    %336 = vector.load %arg45[%c0_284, %c0_285] : memref<1x48xf32, #tpu.memory_space<vmem>>, vector<1x48xf32>
    %337 = vector.broadcast %336 : vector<1x48xf32> to vector<16x48xf32>
    %338 = arith.addf %335, %337 : vector<16x48xf32>
    %cst_286 = arith.constant 0.000000e+00 : f32
    %339 = vector.broadcast %cst_286 : f32 to vector<16x48xf32>
    %340 = arith.maximumf %338, %339 : vector<16x48xf32>
    %c0_287 = arith.constant 0 : index
    %c0_288 = arith.constant 0 : index
    %c0_289 = arith.constant 0 : index
    %341 = vector.load %arg46[%c0_287, %c0_288, %c0_289] : memref<3x32x16xf32, #tpu.memory_space<vmem>>, vector<1x32x16xf32>
    %342 = vector.shape_cast %341 : vector<1x32x16xf32> to vector<32x16xf32>
    %cst_290 = arith.constant dense<0.000000e+00> : vector<32x48xf32>
    %343 = tpu.matmul %342, %340, %cst_290 {dimension_numbers = #tpu.dot_dimension_numbers<[1], [0], [0], [1], [0, 0, 1, 1], [], []>} : vector<32x16xf32>, vector<16x48xf32>, vector<32x48xf32> -> vector<32x48xf32>
    %c0_291 = arith.constant 0 : index
    %c0_292 = arith.constant 0 : index
    %c0_293 = arith.constant 0 : index
    %344 = vector.load %arg47[%c0_291, %c0_292, %c0_293] : memref<3x48x48xf32, #tpu.memory_space<vmem>>, vector<1x48x48xf32>
    %345 = vector.shape_cast %344 : vector<1x48x48xf32> to vector<48x48xf32>
    %cst_294 = arith.constant dense<0.000000e+00> : vector<32x48xf32>
    %346 = tpu.matmul %343, %345, %cst_294 {dimension_numbers = #tpu.dot_dimension_numbers<[1], [0], [0], [1], [0, 0, 1, 1], [], []>} : vector<32x48xf32>, vector<48x48xf32>, vector<32x48xf32> -> vector<32x48xf32>
    %c1_295 = arith.constant 1 : index
    %c0_296 = arith.constant 0 : index
    %c0_297 = arith.constant 0 : index
    %347 = vector.load %arg46[%c1_295, %c0_296, %c0_297] : memref<3x32x16xf32, #tpu.memory_space<vmem>>, vector<1x32x16xf32>
    %348 = vector.shape_cast %347 : vector<1x32x16xf32> to vector<32x16xf32>
    %cst_298 = arith.constant dense<0.000000e+00> : vector<32x48xf32>
    %349 = tpu.matmul %348, %340, %cst_298 {dimension_numbers = #tpu.dot_dimension_numbers<[1], [0], [0], [1], [0, 0, 1, 1], [], []>} : vector<32x16xf32>, vector<16x48xf32>, vector<32x48xf32> -> vector<32x48xf32>
    %c1_299 = arith.constant 1 : index
    %c0_300 = arith.constant 0 : index
    %c0_301 = arith.constant 0 : index
    %350 = vector.load %arg47[%c1_299, %c0_300, %c0_301] : memref<3x48x48xf32, #tpu.memory_space<vmem>>, vector<1x48x48xf32>
    %351 = vector.shape_cast %350 : vector<1x48x48xf32> to vector<48x48xf32>
    %cst_302 = arith.constant dense<0.000000e+00> : vector<32x48xf32>
    %352 = tpu.matmul %349, %351, %cst_302 {dimension_numbers = #tpu.dot_dimension_numbers<[1], [0], [0], [1], [0, 0, 1, 1], [], []>} : vector<32x48xf32>, vector<48x48xf32>, vector<32x48xf32> -> vector<32x48xf32>
    %353 = arith.addf %346, %352 : vector<32x48xf32>
    %c2_303 = arith.constant 2 : index
    %c0_304 = arith.constant 0 : index
    %c0_305 = arith.constant 0 : index
    %354 = vector.load %arg46[%c2_303, %c0_304, %c0_305] : memref<3x32x16xf32, #tpu.memory_space<vmem>>, vector<1x32x16xf32>
    %355 = vector.shape_cast %354 : vector<1x32x16xf32> to vector<32x16xf32>
    %cst_306 = arith.constant dense<0.000000e+00> : vector<32x48xf32>
    %356 = tpu.matmul %355, %340, %cst_306 {dimension_numbers = #tpu.dot_dimension_numbers<[1], [0], [0], [1], [0, 0, 1, 1], [], []>} : vector<32x16xf32>, vector<16x48xf32>, vector<32x48xf32> -> vector<32x48xf32>
    %c2_307 = arith.constant 2 : index
    %c0_308 = arith.constant 0 : index
    %c0_309 = arith.constant 0 : index
    %357 = vector.load %arg47[%c2_307, %c0_308, %c0_309] : memref<3x48x48xf32, #tpu.memory_space<vmem>>, vector<1x48x48xf32>
    %358 = vector.shape_cast %357 : vector<1x48x48xf32> to vector<48x48xf32>
    %cst_310 = arith.constant dense<0.000000e+00> : vector<32x48xf32>
    %359 = tpu.matmul %356, %358, %cst_310 {dimension_numbers = #tpu.dot_dimension_numbers<[1], [0], [0], [1], [0, 0, 1, 1], [], []>} : vector<32x48xf32>, vector<48x48xf32>, vector<32x48xf32> -> vector<32x48xf32>
    %360 = arith.addf %353, %359 : vector<32x48xf32>
    %c0_311 = arith.constant 0 : index
    %c0_312 = arith.constant 0 : index
    %361 = vector.load %arg48[%c0_311, %c0_312] : memref<1x48xf32, #tpu.memory_space<vmem>>, vector<1x48xf32>
    %362 = vector.broadcast %361 : vector<1x48xf32> to vector<32x48xf32>
    %363 = arith.addf %360, %362 : vector<32x48xf32>
    %cst_313 = arith.constant dense<0.000000e+00> : vector<48xf32>
    %364 = vector.multi_reduction <add>, %363, %cst_313 [0] : vector<32x48xf32> to vector<48xf32>
    %365 = vector.shape_cast %364 : vector<48xf32> to vector<1x48xf32>
    %c0_314 = arith.constant 0 : index
    %c0_315 = arith.constant 0 : index
    %366 = vector.load %arg49[%c0_314, %c0_315] : memref<48x48xf32, #tpu.memory_space<vmem>>, vector<48x48xf32>
    %cst_316 = arith.constant dense<0.000000e+00> : vector<1x48xf32>
    %367 = tpu.matmul %365, %366, %cst_316 {dimension_numbers = #tpu.dot_dimension_numbers<[1], [0], [0], [1], [0, 0, 1, 1], [], []>} : vector<1x48xf32>, vector<48x48xf32>, vector<1x48xf32> -> vector<1x48xf32>
    %368 = vector.broadcast %367 : vector<1x48xf32> to vector<32x48xf32>
    %369 = arith.subf %363, %368 : vector<32x48xf32>
    %370 = arith.mulf %369, %369 : vector<32x48xf32>
    %cst_317 = arith.constant dense<0.000000e+00> : vector<48xf32>
    %371 = vector.multi_reduction <add>, %370, %cst_317 [0] : vector<32x48xf32> to vector<48xf32>
    %372 = vector.shape_cast %371 : vector<48xf32> to vector<1x48xf32>
    %c0_318 = arith.constant 0 : index
    %c0_319 = arith.constant 0 : index
    %373 = vector.load %arg49[%c0_318, %c0_319] : memref<48x48xf32, #tpu.memory_space<vmem>>, vector<48x48xf32>
    %cst_320 = arith.constant dense<0.000000e+00> : vector<1x48xf32>
    %374 = tpu.matmul %372, %373, %cst_320 {dimension_numbers = #tpu.dot_dimension_numbers<[1], [0], [0], [1], [0, 0, 1, 1], [], []>} : vector<1x48xf32>, vector<48x48xf32>, vector<1x48xf32> -> vector<1x48xf32>
    %cst_321 = arith.constant 9.99999974E-6 : f32
    %375 = vector.broadcast %cst_321 : f32 to vector<1x48xf32>
    %376 = arith.addf %374, %375 : vector<1x48xf32>
    %377 = math.rsqrt %376 : vector<1x48xf32>
    %378 = vector.broadcast %377 : vector<1x48xf32> to vector<32x48xf32>
    %379 = arith.mulf %369, %378 : vector<32x48xf32>
    %c0_322 = arith.constant 0 : index
    %c0_323 = arith.constant 0 : index
    %380 = vector.load %arg50[%c0_322, %c0_323] : memref<1x48xf32, #tpu.memory_space<vmem>>, vector<1x48xf32>
    %381 = vector.broadcast %380 : vector<1x48xf32> to vector<32x48xf32>
    %382 = arith.mulf %379, %381 : vector<32x48xf32>
    %c0_324 = arith.constant 0 : index
    %c0_325 = arith.constant 0 : index
    %383 = vector.load %arg51[%c0_324, %c0_325] : memref<1x48xf32, #tpu.memory_space<vmem>>, vector<1x48xf32>
    %384 = vector.broadcast %383 : vector<1x48xf32> to vector<32x48xf32>
    %385 = arith.addf %382, %384 : vector<32x48xf32>
    %cst_326 = arith.constant 0.000000e+00 : f32
    %386 = vector.broadcast %cst_326 : f32 to vector<32x48xf32>
    %387 = arith.maximumf %385, %386 : vector<32x48xf32>
    %c0_327 = arith.constant 0 : index
    %c0_328 = arith.constant 0 : index
    %c0_329 = arith.constant 0 : index
    %388 = vector.load %arg52[%c0_327, %c0_328, %c0_329] : memref<3x64x32xf32, #tpu.memory_space<vmem>>, vector<1x64x32xf32>
    %389 = vector.shape_cast %388 : vector<1x64x32xf32> to vector<64x32xf32>
    %cst_330 = arith.constant dense<0.000000e+00> : vector<64x48xf32>
    %390 = tpu.matmul %389, %387, %cst_330 {dimension_numbers = #tpu.dot_dimension_numbers<[1], [0], [0], [1], [0, 0, 1, 1], [], []>} : vector<64x32xf32>, vector<32x48xf32>, vector<64x48xf32> -> vector<64x48xf32>
    %c0_331 = arith.constant 0 : index
    %c0_332 = arith.constant 0 : index
    %c0_333 = arith.constant 0 : index
    %391 = vector.load %arg53[%c0_331, %c0_332, %c0_333] : memref<3x48x32xf32, #tpu.memory_space<vmem>>, vector<1x48x32xf32>
    %392 = vector.shape_cast %391 : vector<1x48x32xf32> to vector<48x32xf32>
    %cst_334 = arith.constant dense<0.000000e+00> : vector<64x32xf32>
    %393 = tpu.matmul %390, %392, %cst_334 {dimension_numbers = #tpu.dot_dimension_numbers<[1], [0], [0], [1], [0, 0, 1, 1], [], []>} : vector<64x48xf32>, vector<48x32xf32>, vector<64x32xf32> -> vector<64x32xf32>
    %c1_335 = arith.constant 1 : index
    %c0_336 = arith.constant 0 : index
    %c0_337 = arith.constant 0 : index
    %394 = vector.load %arg52[%c1_335, %c0_336, %c0_337] : memref<3x64x32xf32, #tpu.memory_space<vmem>>, vector<1x64x32xf32>
    %395 = vector.shape_cast %394 : vector<1x64x32xf32> to vector<64x32xf32>
    %cst_338 = arith.constant dense<0.000000e+00> : vector<64x48xf32>
    %396 = tpu.matmul %395, %387, %cst_338 {dimension_numbers = #tpu.dot_dimension_numbers<[1], [0], [0], [1], [0, 0, 1, 1], [], []>} : vector<64x32xf32>, vector<32x48xf32>, vector<64x48xf32> -> vector<64x48xf32>
    %c1_339 = arith.constant 1 : index
    %c0_340 = arith.constant 0 : index
    %c0_341 = arith.constant 0 : index
    %397 = vector.load %arg53[%c1_339, %c0_340, %c0_341] : memref<3x48x32xf32, #tpu.memory_space<vmem>>, vector<1x48x32xf32>
    %398 = vector.shape_cast %397 : vector<1x48x32xf32> to vector<48x32xf32>
    %cst_342 = arith.constant dense<0.000000e+00> : vector<64x32xf32>
    %399 = tpu.matmul %396, %398, %cst_342 {dimension_numbers = #tpu.dot_dimension_numbers<[1], [0], [0], [1], [0, 0, 1, 1], [], []>} : vector<64x48xf32>, vector<48x32xf32>, vector<64x32xf32> -> vector<64x32xf32>
    %400 = arith.addf %393, %399 : vector<64x32xf32>
    %c2_343 = arith.constant 2 : index
    %c0_344 = arith.constant 0 : index
    %c0_345 = arith.constant 0 : index
    %401 = vector.load %arg52[%c2_343, %c0_344, %c0_345] : memref<3x64x32xf32, #tpu.memory_space<vmem>>, vector<1x64x32xf32>
    %402 = vector.shape_cast %401 : vector<1x64x32xf32> to vector<64x32xf32>
    %cst_346 = arith.constant dense<0.000000e+00> : vector<64x48xf32>
    %403 = tpu.matmul %402, %387, %cst_346 {dimension_numbers = #tpu.dot_dimension_numbers<[1], [0], [0], [1], [0, 0, 1, 1], [], []>} : vector<64x32xf32>, vector<32x48xf32>, vector<64x48xf32> -> vector<64x48xf32>
    %c2_347 = arith.constant 2 : index
    %c0_348 = arith.constant 0 : index
    %c0_349 = arith.constant 0 : index
    %404 = vector.load %arg53[%c2_347, %c0_348, %c0_349] : memref<3x48x32xf32, #tpu.memory_space<vmem>>, vector<1x48x32xf32>
    %405 = vector.shape_cast %404 : vector<1x48x32xf32> to vector<48x32xf32>
    %cst_350 = arith.constant dense<0.000000e+00> : vector<64x32xf32>
    %406 = tpu.matmul %403, %405, %cst_350 {dimension_numbers = #tpu.dot_dimension_numbers<[1], [0], [0], [1], [0, 0, 1, 1], [], []>} : vector<64x48xf32>, vector<48x32xf32>, vector<64x32xf32> -> vector<64x32xf32>
    %407 = arith.addf %400, %406 : vector<64x32xf32>
    %c0_351 = arith.constant 0 : index
    %c0_352 = arith.constant 0 : index
    %408 = vector.load %arg54[%c0_351, %c0_352] : memref<1x32xf32, #tpu.memory_space<vmem>>, vector<1x32xf32>
    %409 = vector.broadcast %408 : vector<1x32xf32> to vector<64x32xf32>
    %410 = arith.addf %407, %409 : vector<64x32xf32>
    %411 = arith.negf %410 : vector<64x32xf32>
    %412 = math.exp %411 : vector<64x32xf32>
    %cst_353 = arith.constant 1.000000e+00 : f32
    %413 = vector.broadcast %cst_353 : f32 to vector<64x32xf32>
    %414 = arith.addf %413, %412 : vector<64x32xf32>
    %415 = arith.divf %413, %414 : vector<64x32xf32>
    %c0_354 = arith.constant 0 : index
    %c0_355 = arith.constant 0 : index
    %416 = vector.load %arg55[%c0_354, %c0_355] : memref<56x64xf32, #tpu.memory_space<vmem>>, vector<56x64xf32>
    %cst_356 = arith.constant dense<0.000000e+00> : vector<56x32xf32>
    %417 = tpu.matmul %416, %415, %cst_356 {dimension_numbers = #tpu.dot_dimension_numbers<[1], [0], [0], [1], [0, 0, 1, 1], [], []>} : vector<56x64xf32>, vector<64x32xf32>, vector<56x32xf32> -> vector<56x32xf32>
    %c0_357 = arith.constant 0 : index
    %c0_358 = arith.constant 0 : index
    %418 = vector.load %arg56[%c0_357, %c0_358] : memref<32x28xf32, #tpu.memory_space<vmem>>, vector<32x28xf32>
    %cst_359 = arith.constant dense<0.000000e+00> : vector<56x28xf32>
    %419 = tpu.matmul %417, %418, %cst_359 {dimension_numbers = #tpu.dot_dimension_numbers<[1], [0], [0], [1], [0, 0, 1, 1], [], []>} : vector<56x32xf32>, vector<32x28xf32>, vector<56x28xf32> -> vector<56x28xf32>
    %cst_360 = arith.constant 0.000000e+00 : f32
    %cst_361 = arith.constant 1.000000e+00 : f32
    %420 = vector.broadcast %cst_360 : f32 to vector<56x28xf32>
    %421 = arith.maximumf %420, %419 : vector<56x28xf32>
    %422 = vector.broadcast %cst_361 : f32 to vector<56x28xf32>
    %423 = arith.minimumf %422, %421 : vector<56x28xf32>
    %c0_362 = arith.constant 0 : index
    %c0_363 = arith.constant 0 : index
    %424 = vector.load %arg57[%c0_362, %c0_363] : memref<56x28xf32, #tpu.memory_space<vmem>>, vector<56x28xf32>
    tpu.vector_store %arg57[%c0_362, %c0_363], %423 {strides = array<i32>} : memref<56x28xf32, #tpu.memory_space<vmem>>, vector<56x28xf32>,
    return
  }
}

</mosaic_0001>

<llo_original>
// kernel: autoencoder_forward.1
$region0: #{autoencoder_forward.1}
  #allocation0 [shape = 'u32[]', space=smem, size = 0x4, offset = 0x4, fixed_abs, tag = 'smem constant byte address 0x4 - core index']
  #allocation1 [shape = 'u32[144,128]{1,0:T(1,128)}', space=vmem, size = 0x12000, scoped, tag = 'internal scratch']
  %s0 = inlined_call_operand.smem [shape: u32[58], index: -1, kind: input, shape index: {}]
  %s1 = sld [smem:[%s0]]
  %s2 = scalar_lea.smem %s0, 1
  %s3 = sld [smem:[%s2]]
  %s4 = scalar_lea.smem %s0, 2
  %s5 = sld [smem:[%s4]]
  %s6 = scalar_lea.smem %s0, 3
  %s7 = sld [smem:[%s6]]
  %s8 = scalar_lea.smem %s0, 4
  %s9 = sld [smem:[%s8]]
  %s10 = scalar_lea.smem %s0, 5
  %s11 = sld [smem:[%s10]]
  %s12 = scalar_lea.smem %s0, 6
  %s13 = sld [smem:[%s12]]
  %s14 = scalar_lea.smem %s0, 7
  %s15 = sld [smem:[%s14]]
  %s16 = scalar_lea.smem %s0, 8
  %s17 = sld [smem:[%s16]]
  %s18 = scalar_lea.smem %s0, 9
  %s19 = sld [smem:[%s18]]
  %s20 = scalar_lea.smem %s0, 10
  %s21 = sld [smem:[%s20]]
  %s22 = scalar_lea.smem %s0, 11
  %s23 = sld [smem:[%s22]]
  %s24 = scalar_lea.smem %s0, 12
  %s25 = sld [smem:[%s24]]
  %s26 = scalar_lea.smem %s0, 13
  %s27 = sld [smem:[%s26]]
  %s28 = scalar_lea.smem %s0, 14
  %s29 = sld [smem:[%s28]]
  %s30 = scalar_lea.smem %s0, 15
  %s31 = sld [smem:[%s30]]
  %s32 = scalar_lea.smem %s0, 16
  %s33 = sld [smem:[%s32]]
  %s34 = scalar_lea.smem %s0, 17
  %s35 = sld [smem:[%s34]]
  %s36 = scalar_lea.smem %s0, 18
  %s37 = sld [smem:[%s36]]
  %s38 = scalar_lea.smem %s0, 19
  %s39 = sld [smem:[%s38]]
  %s40 = scalar_lea.smem %s0, 20
  %s41 = sld [smem:[%s40]]
  %s42 = scalar_lea.smem %s0, 21
  %s43 = sld [smem:[%s42]]
  %s44 = scalar_lea.smem %s0, 22
  %s45 = sld [smem:[%s44]]
  %s46 = scalar_lea.smem %s0, 23
  %s47 = sld [smem:[%s46]]
  %s48 = scalar_lea.smem %s0, 24
  %s49 = sld [smem:[%s48]]
  %s50 = scalar_lea.smem %s0, 25
  %s51 = sld [smem:[%s50]]
  %s52 = scalar_lea.smem %s0, 26
  %s53 = sld [smem:[%s52]]
  %s54 = scalar_lea.smem %s0, 27
  %s55 = sld [smem:[%s54]]
  %s56 = scalar_lea.smem %s0, 28
  %s57 = sld [smem:[%s56]]
  %s58 = scalar_lea.smem %s0, 29
  %s59 = sld [smem:[%s58]]
  %s60 = scalar_lea.smem %s0, 30
  %s61 = sld [smem:[%s60]]
  %s62 = scalar_lea.smem %s0, 31
  %s63 = sld [smem:[%s62]]
  %s64 = scalar_lea.smem %s0, 32
  %s65 = sld [smem:[%s64]]
  %s66 = scalar_lea.smem %s0, 33
  %s67 = sld [smem:[%s66]]
  %s68 = scalar_lea.smem %s0, 34
  %s69 = sld [smem:[%s68]]
  %s70 = scalar_lea.smem %s0, 35
  %s71 = sld [smem:[%s70]]
  %s72 = scalar_lea.smem %s0, 36
  %s73 = sld [smem:[%s72]]
  %s74 = scalar_lea.smem %s0, 37
  %s75 = sld [smem:[%s74]]
  %s76 = scalar_lea.smem %s0, 38
  %s77 = sld [smem:[%s76]]
  %s78 = scalar_lea.smem %s0, 39
  %s79 = sld [smem:[%s78]]
  %s80 = scalar_lea.smem %s0, 40
  %s81 = sld [smem:[%s80]]
  %s82 = scalar_lea.smem %s0, 41
  %s83 = sld [smem:[%s82]]
  %s84 = scalar_lea.smem %s0, 42
  %s85 = sld [smem:[%s84]]
  %s86 = scalar_lea.smem %s0, 43
  %s87 = sld [smem:[%s86]]
  %s88 = scalar_lea.smem %s0, 44
  %s89 = sld [smem:[%s88]]
  %s90 = scalar_lea.smem %s0, 45
  %s91 = sld [smem:[%s90]]
  %s92 = scalar_lea.smem %s0, 46
  %s93 = sld [smem:[%s92]]
  %s94 = scalar_lea.smem %s0, 47
  %s95 = sld [smem:[%s94]]
  %s96 = scalar_lea.smem %s0, 48
  %s97 = sld [smem:[%s96]]
  %s98 = scalar_lea.smem %s0, 49
  %s99 = sld [smem:[%s98]]
  %s100 = scalar_lea.smem %s0, 50
  %s101 = sld [smem:[%s100]]
  %s102 = scalar_lea.smem %s0, 51
  %s103 = sld [smem:[%s102]]
  %s104 = scalar_lea.smem %s0, 52
  %s105 = sld [smem:[%s104]]
  %s106 = scalar_lea.smem %s0, 53
  %s107 = sld [smem:[%s106]]
  %s108 = scalar_lea.smem %s0, 54
  %s109 = sld [smem:[%s108]]
  %s110 = scalar_lea.smem %s0, 55
  %s111 = sld [smem:[%s110]]
  %s112 = scalar_lea.smem %s0, 56
  %s113 = sld [smem:[%s112]]
  %s114 = scalar_lea.smem %s0, 57
  %s115 = sld [smem:[%s114]]
  %s116 = sld [smem:[#allocation0]]
  $region394: #{autoencoder_forward.1} parent=0
    _
  %s118 = ssub.s32 1, %s116
  %s119 = scalar_select 0, %s118, %s116
  $region1: #{autoencoder_forward.1} parent=0
    #allocation2 [shape = 'u8[28672]{0}', space=vmem, size = 0x7000, scoped, tag = 'input window, operand 0, single buffered']
    #allocation3 [shape = 's32[1]{0}', space=sflag, size = 0x4, scoped, tag = 'scoped memory for autoencoder_forward.1']
    #allocation4 [shape = 's32[1]{0}', space=sflag, size = 0x4, scoped, tag = 'scoped memory for autoencoder_forward.1']
    #allocation5 [shape = 'u8[512]{0}', space=vmem, size = 0x400, scoped, tag = 'input window, operand 3, single buffered']
    #allocation6 [shape = 's32[1]{0}', space=sflag, size = 0x4, scoped, tag = 'scoped memory for autoencoder_forward.1']
    #allocation7 [shape = 'u8[24576]{0}', space=vmem, size = 0x6000, scoped, tag = 'input window, operand 4, single buffered']
    #allocation8 [shape = 'u8[512]{0}', space=vmem, size = 0x400, scoped, tag = 'input window, operand 5, single buffered']
    #allocation9 [shape = 's32[1]{0}', space=sflag, size = 0x4, scoped, tag = 'scoped memory for autoencoder_forward.1']
    #allocation10 [shape = 'u8[512]{0}', space=vmem, size = 0x400, scoped, tag = 'input window, operand 6, single buffered']
    #allocation11 [shape = 'u8[24576]{0}', space=vmem, size = 0x6000, scoped, tag = 'input window, operand 7, single buffered']
    #allocation12 [shape = 's32[1]{0}', space=sflag, size = 0x4, scoped, tag = 'scoped memory for autoencoder_forward.1']
    #allocation13 [shape = 'u8[512]{0}', space=vmem, size = 0x400, scoped, tag = 'input window, operand 9, single buffered']
    #allocation14 [shape = 'u8[24576]{0}', space=vmem, size = 0x6000, scoped, tag = 'input window, operand 10, single buffered']
    #allocation15 [shape = 's32[1]{0}', space=sflag, size = 0x4, scoped, tag = 'scoped memory for autoencoder_forward.1']
    #allocation16 [shape = 'u8[512]{0}', space=vmem, size = 0x400, scoped, tag = 'input window, operand 11, single buffered']
    #allocation17 [shape = 'u8[512]{0}', space=vmem, size = 0x400, scoped, tag = 'input window, operand 12, single buffered']
    #allocation18 [shape = 's32[1]{0}', space=sflag, size = 0x4, scoped, tag = 'scoped memory for autoencoder_forward.1']
    #allocation19 [shape = 'u8[12288]{0}', space=vmem, size = 0x3000, scoped, tag = 'input window, operand 13, single buffered']
    #allocation20 [shape = 'u8[512]{0}', space=vmem, size = 0x400, scoped, tag = 'input window, operand 15, single buffered']
    #allocation21 [shape = 's32[1]{0}', space=sflag, size = 0x4, scoped, tag = 'scoped memory for autoencoder_forward.1']
    #allocation22 [shape = 'u8[24576]{0}', space=vmem, size = 0x6000, scoped, tag = 'input window, operand 16, single buffered']
    #allocation23 [shape = 'u8[512]{0}', space=vmem, size = 0x400, scoped, tag = 'input window, operand 17, single buffered']
    #allocation24 [shape = 's32[1]{0}', space=sflag, size = 0x4, scoped, tag = 'scoped memory for autoencoder_forward.1']
    #allocation25 [shape = 'u8[512]{0}', space=vmem, size = 0x400, scoped, tag = 'input window, operand 18, single buffered']
    #allocation26 [shape = 'u8[6144]{0}', space=vmem, size = 0x1800, scoped, tag = 'input window, operand 19, single buffered']
    #allocation27 [shape = 's32[1]{0}', space=sflag, size = 0x4, scoped, tag = 'scoped memory for autoencoder_forward.1']
    #allocation28 [shape = 'u8[512]{0}', space=vmem, size = 0x400, scoped, tag = 'input window, operand 21, single buffered']
    #allocation29 [shape = 'u8[24576]{0}', space=vmem, size = 0x6000, scoped, tag = 'input window, operand 22, single buffered']
    #allocation30 [shape = 's32[1]{0}', space=sflag, size = 0x4, scoped, tag = 'scoped memory for autoencoder_forward.1']
    #allocation31 [shape = 'u8[512]{0}', space=vmem, size = 0x400, scoped, tag = 'input window, operand 23, single buffered']
    #allocation32 [shape = 'u8[512]{0}', space=vmem, size = 0x400, scoped, tag = 'input window, operand 24, single buffered']
    #allocation33 [shape = 's32[1]{0}', space=sflag, size = 0x4, scoped, tag = 'scoped memory for autoencoder_forward.1']
    #allocation34 [shape = 'u8[512]{0}', space=vmem, size = 0x400, scoped, tag = 'input window, operand 27, single buffered']
    #allocation35 [shape = 'u8[1024]{0}', space=vmem, size = 0x400, scoped, tag = 'input window, operand 28, single buffered']
    #allocation36 [shape = 's32[1]{0}', space=sflag, size = 0x4, scoped, tag = 'scoped memory for autoencoder_forward.1']
    #allocation37 [shape = 'u8[512]{0}', space=vmem, size = 0x400, scoped, tag = 'input window, operand 29, single buffered']
    #allocation38 [shape = 'u8[512]{0}', space=vmem, size = 0x400, scoped, tag = 'input window, operand 30, single buffered']
    #allocation39 [shape = 's32[1]{0}', space=sflag, size = 0x4, scoped, tag = 'scoped memory for autoencoder_forward.1']
    #allocation40 [shape = 'u8[512]{0}', space=vmem, size = 0x400, scoped, tag = 'input window, operand 31, single buffered']
    #allocation41 [shape = 'u8[512]{0}', space=vmem, size = 0x400, scoped, tag = 'input window, operand 36, single buffered']
    #allocation42 [shape = 's32[1]{0}', space=sflag, size = 0x4, scoped, tag = 'scoped memory for autoencoder_forward.1']
    #allocation43 [shape = 'u8[24576]{0}', space=vmem, size = 0x6000, scoped, tag = 'input window, operand 37, single buffered']
    #allocation44 [shape = 'u8[512]{0}', space=vmem, size = 0x400, scoped, tag = 'input window, operand 38, single buffered']
    #allocation45 [shape = 's32[1]{0}', space=sflag, size = 0x4, scoped, tag = 'scoped memory for autoencoder_forward.1']
    #allocation46 [shape = 'u8[512]{0}', space=vmem, size = 0x400, scoped, tag = 'input window, operand 39, single buffered']
    #allocation47 [shape = 'u8[512]{0}', space=vmem, size = 0x400, scoped, tag = 'input window, operand 42, single buffered']
    #allocation48 [shape = 's32[1]{0}', space=sflag, size = 0x4, scoped, tag = 'scoped memory for autoencoder_forward.1']
    #allocation49 [shape = 'u8[24576]{0}', space=vmem, size = 0x6000, scoped, tag = 'input window, operand 43, single buffered']
    #allocation50 [shape = 'u8[512]{0}', space=vmem, size = 0x400, scoped, tag = 'input window, operand 44, single buffered']
    #allocation51 [shape = 's32[1]{0}', space=sflag, size = 0x4, scoped, tag = 'scoped memory for autoencoder_forward.1']
    #allocation52 [shape = 'u8[512]{0}', space=vmem, size = 0x400, scoped, tag = 'input window, operand 45, single buffered']
    #allocation53 [shape = 'u8[512]{0}', space=vmem, size = 0x400, scoped, tag = 'input window, operand 48, single buffered']
    #allocation54 [shape = 's32[1]{0}', space=sflag, size = 0x4, scoped, tag = 'scoped memory for autoencoder_forward.1']
    #allocation55 [shape = 'u8[24576]{0}', space=vmem, size = 0x6000, scoped, tag = 'input window, operand 49, single buffered']
    #allocation56 [shape = 'u8[512]{0}', space=vmem, size = 0x400, scoped, tag = 'input window, operand 50, single buffered']
    #allocation57 [shape = 's32[1]{0}', space=sflag, size = 0x4, scoped, tag = 'scoped memory for autoencoder_forward.1']
    #allocation58 [shape = 'u8[512]{0}', space=vmem, size = 0x400, scoped, tag = 'input window, operand 51, single buffered']
    #allocation59 [shape = 'u8[512]{0}', space=vmem, size = 0x400, scoped, tag = 'input window, operand 54, single buffered']
    #allocation60 [shape = 's32[1]{0}', space=sflag, size = 0x4, scoped, tag = 'scoped memory for autoencoder_forward.1']
    #allocation61 [shape = 'u8[28672]{0}', space=vmem, size = 0x7000, scoped, tag = 'input window, operand 55, single buffered']
    #allocation62 [shape = 'u8[28672]{0}', space=vmem, size = 0x7000, scoped, tag = 'output window, operand 0, single buffered']
    %120 = vsyncpa [#allocation3], 0
    %121 = vsyncpa [#allocation6], 0
    %122 = vsyncpa [#allocation9], 0
    %123 = vsyncpa [#allocation12], 0
    %124 = vsyncpa [#allocation15], 0
    %125 = vsyncpa [#allocation18], 0
    %126 = vsyncpa [#allocation21], 0
    %127 = vsyncpa [#allocation24], 0
    %128 = vsyncpa [#allocation27], 0
    %129 = vsyncpa [#allocation30], 0
    %130 = vsyncpa [#allocation33], 0
    %131 = vsyncpa [#allocation36], 0
    %132 = vsyncpa [#allocation39], 0
    %133 = vsyncpa [#allocation42], 0
    %134 = vsyncpa [#allocation45], 0
    %135 = vsyncpa [#allocation48], 0
    %136 = vsyncpa [#allocation51], 0
    %137 = vsyncpa [#allocation54], 0
    %138 = vsyncpa [#allocation57], 0
    %139 = vsyncpa [#allocation60], 0
    %140 = vsyncpa [#allocation4], 0
    // Predicated region
    $region2: #{autoencoder_forward.1} parent=1 // pred_check
      _
    $region3: #{autoencoder_forward.1} parent=1 // pred_check_branch
      %142 = sbr.rel (0) target = $region5
    $region4: #{autoencoder_forward.1} parent=1 // pred_region
      %s144 = ssub.s32 896, 896
      %145 = vsyncadd [#allocation3], %s144
      %s146 = sshll.u32 [#allocation2], 4
      %s147 = int_to_ptr.vmem [resolvable:$true] %s146
      %152 = dma.hbm_to_vmem [thread:$0]  %s1, 896, %s147, [#allocation3], 128, 128, 8
    $region5: #{autoencoder_forward.1} parent=1 // pred_fallthru
      _
    // Predicated region
    $region6: #{autoencoder_forward.1} parent=1 // pred_check
      _
    $region7: #{autoencoder_forward.1} parent=1 // pred_check_branch
      %154 = sbr.rel (0) target = $region9
    $region8: #{autoencoder_forward.1} parent=1 // pred_region
      _
    $region9: #{autoencoder_forward.1} parent=1 // pred_fallthru
      _
    // Predicated region
    $region10: #{autoencoder_forward.1} parent=1 // pred_check
      _
    $region11: #{autoencoder_forward.1} parent=1 // pred_check_branch
      %156 = sbr.rel (0) target = $region13
    $region12: #{autoencoder_forward.1} parent=1 // pred_region
      _
    $region13: #{autoencoder_forward.1} parent=1 // pred_fallthru
      _
    // Predicated region
    $region14: #{autoencoder_forward.1} parent=1 // pred_check
      _
    $region15: #{autoencoder_forward.1} parent=1 // pred_check_branch
      %158 = sbr.rel (0) target = $region17
    $region16: #{autoencoder_forward.1} parent=1 // pred_region
      %s160 = ssub.s32 16, 16
      %161 = vsyncadd [#allocation6], %s160
      %s163 = sshll.u32 [#allocation5], 4
      %s164 = int_to_ptr.vmem [resolvable:$true] %s163
      %166 = dma.hbm_to_vmem [thread:$0]  %s7, 16, %s164, [#allocation6]
    $region17: #{autoencoder_forward.1} parent=1 // pred_fallthru
      _
    // Predicated region
    $region18: #{autoencoder_forward.1} parent=1 // pred_check
      _
    $region19: #{autoencoder_forward.1} parent=1 // pred_check_branch
      %168 = sbr.rel (0) target = $region21
    $region20: #{autoencoder_forward.1} parent=1 // pred_region
      %s170 = ssub.s32 768, 768
      %171 = vsyncadd [#allocation6], %s170
      %s172 = sshll.u32 [#allocation7], 4
      %s173 = int_to_ptr.vmem [resolvable:$true] %s172
      %178 = dma.hbm_to_vmem [thread:$0]  %s9, 768, %s173, [#allocation6], 128, 128, 8
    $region21: #{autoencoder_forward.1} parent=1 // pred_fallthru
      _
    // Predicated region
    $region22: #{autoencoder_forward.1} parent=1 // pred_check
      _
    $region23: #{autoencoder_forward.1} parent=1 // pred_check_branch
      %180 = sbr.rel (0) target = $region25
    $region24: #{autoencoder_forward.1} parent=1 // pred_region
      %s182 = ssub.s32 16, 16
      %183 = vsyncadd [#allocation9], %s182
      %s185 = sshll.u32 [#allocation8], 4
      %s186 = int_to_ptr.vmem [resolvable:$true] %s185
      %188 = dma.hbm_to_vmem [thread:$0]  %s11, 16, %s186, [#allocation9]
    $region25: #{autoencoder_forward.1} parent=1 // pred_fallthru
      _
    // Predicated region
    $region26: #{autoencoder_forward.1} parent=1 // pred_check
      _
    $region27: #{autoencoder_forward.1} parent=1 // pred_check_branch
      %190 = sbr.rel (0) target = $region29
    $region28: #{autoencoder_forward.1} parent=1 // pred_region
      %s192 = ssub.s32 16, 16
      %193 = vsyncadd [#allocation9], %s192
      %s195 = sshll.u32 [#allocation10], 4
      %s196 = int_to_ptr.vmem [resolvable:$true] %s195
      %198 = dma.hbm_to_vmem [thread:$0]  %s13, 16, %s196, [#allocation9]
    $region29: #{autoencoder_forward.1} parent=1 // pred_fallthru
      _
    // Predicated region
    $region30: #{autoencoder_forward.1} parent=1 // pred_check
      _
    $region31: #{autoencoder_forward.1} parent=1 // pred_check_branch
      %200 = sbr.rel (0) target = $region33
    $region32: #{autoencoder_forward.1} parent=1 // pred_region
      %s202 = ssub.s32 768, 768
      %203 = vsyncadd [#allocation12], %s202
      %s204 = sshll.u32 [#allocation11], 4
      %s205 = int_to_ptr.vmem [resolvable:$true] %s204
      %210 = dma.hbm_to_vmem [thread:$0]  %s15, 768, %s205, [#allocation12], 128, 128, 8
    $region33: #{autoencoder_forward.1} parent=1 // pred_fallthru
      _
    // Predicated region
    $region34: #{autoencoder_forward.1} parent=1 // pred_check
      _
    $region35: #{autoencoder_forward.1} parent=1 // pred_check_branch
      %212 = sbr.rel (0) target = $region37
    $region36: #{autoencoder_forward.1} parent=1 // pred_region
      _
    $region37: #{autoencoder_forward.1} parent=1 // pred_fallthru
      _
    // Predicated region
    $region38: #{autoencoder_forward.1} parent=1 // pred_check
      _
    $region39: #{autoencoder_forward.1} parent=1 // pred_check_branch
      %214 = sbr.rel (0) target = $region41
    $region40: #{autoencoder_forward.1} parent=1 // pred_region
      %s216 = ssub.s32 16, 16
      %217 = vsyncadd [#allocation12], %s216
      %s219 = sshll.u32 [#allocation13], 4
      %s220 = int_to_ptr.vmem [resolvable:$true] %s219
      %222 = dma.hbm_to_vmem [thread:$0]  %s19, 16, %s220, [#allocation12]
    $region41: #{autoencoder_forward.1} parent=1 // pred_fallthru
      _
    // Predicated region
    $region42: #{autoencoder_forward.1} parent=1 // pred_check
      _
    $region43: #{autoencoder_forward.1} parent=1 // pred_check_branch
      %224 = sbr.rel (0) target = $region45
    $region44: #{autoencoder_forward.1} parent=1 // pred_region
      %s226 = ssub.s32 768, 768
      %227 = vsyncadd [#allocation15], %s226
      %s228 = sshll.u32 [#allocation14], 4
      %s229 = int_to_ptr.vmem [resolvable:$true] %s228
      %234 = dma.hbm_to_vmem [thread:$0]  %s21, 768, %s229, [#allocation15], 128, 128, 8
    $region45: #{autoencoder_forward.1} parent=1 // pred_fallthru
      _
    // Predicated region
    $region46: #{autoencoder_forward.1} parent=1 // pred_check
      _
    $region47: #{autoencoder_forward.1} parent=1 // pred_check_branch
      %236 = sbr.rel (0) target = $region49
    $region48: #{autoencoder_forward.1} parent=1 // pred_region
      %s238 = ssub.s32 16, 16
      %239 = vsyncadd [#allocation15], %s238
      %s241 = sshll.u32 [#allocation16], 4
      %s242 = int_to_ptr.vmem [resolvable:$true] %s241
      %244 = dma.hbm_to_vmem [thread:$0]  %s23, 16, %s242, [#allocation15]
    $region49: #{autoencoder_forward.1} parent=1 // pred_fallthru
      _
    // Predicated region
    $region50: #{autoencoder_forward.1} parent=1 // pred_check
      _
    $region51: #{autoencoder_forward.1} parent=1 // pred_check_branch
      %246 = sbr.rel (0) target = $region53
    $region52: #{autoencoder_forward.1} parent=1 // pred_region
      %s248 = ssub.s32 16, 16
      %249 = vsyncadd [#allocation18], %s248
      %s251 = sshll.u32 [#allocation17], 4
      %s252 = int_to_ptr.vmem [resolvable:$true] %s251
      %254 = dma.hbm_to_vmem [thread:$0]  %s25, 16, %s252, [#allocation18]
    $region53: #{autoencoder_forward.1} parent=1 // pred_fallthru
      _
    // Predicated region
    $region54: #{autoencoder_forward.1} parent=1 // pred_check
      _
    $region55: #{autoencoder_forward.1} parent=1 // pred_check_branch
      %256 = sbr.rel (0) target = $region57
    $region56: #{autoencoder_forward.1} parent=1 // pred_region
      %s258 = ssub.s32 384, 384
      %259 = vsyncadd [#allocation18], %s258
      %s260 = sshll.u32 [#allocation19], 4
      %s261 = int_to_ptr.vmem [resolvable:$true] %s260
      %266 = dma.hbm_to_vmem [thread:$0]  %s27, 384, %s261, [#allocation18], 128, 128, 8
    $region57: #{autoencoder_forward.1} parent=1 // pred_fallthru
      _
    // Predicated region
    $region58: #{autoencoder_forward.1} parent=1 // pred_check
      _
    $region59: #{autoencoder_forward.1} parent=1 // pred_check_branch
      %268 = sbr.rel (0) target = $region61
    $region60: #{autoencoder_forward.1} parent=1 // pred_region
      _
    $region61: #{autoencoder_forward.1} parent=1 // pred_fallthru
      _
    // Predicated region
    $region62: #{autoencoder_forward.1} parent=1 // pred_check
      _
    $region63: #{autoencoder_forward.1} parent=1 // pred_check_branch
      %270 = sbr.rel (0) target = $region65
    $region64: #{autoencoder_forward.1} parent=1 // pred_region
      %s272 = ssub.s32 16, 16
      %273 = vsyncadd [#allocation21], %s272
      %s275 = sshll.u32 [#allocation20], 4
      %s276 = int_to_ptr.vmem [resolvable:$true] %s275
      %278 = dma.hbm_to_vmem [thread:$0]  %s31, 16, %s276, [#allocation21]
    $region65: #{autoencoder_forward.1} parent=1 // pred_fallthru
      _
    // Predicated region
    $region66: #{autoencoder_forward.1} parent=1 // pred_check
      _
    $region67: #{autoencoder_forward.1} parent=1 // pred_check_branch
      %280 = sbr.rel (0) target = $region69
    $region68: #{autoencoder_forward.1} parent=1 // pred_region
      %s282 = ssub.s32 768, 768
      %283 = vsyncadd [#allocation21], %s282
      %s284 = sshll.u32 [#allocation22], 4
      %s285 = int_to_ptr.vmem [resolvable:$true] %s284
      %290 = dma.hbm_to_vmem [thread:$0]  %s33, 768, %s285, [#allocation21], 128, 128, 8
    $region69: #{autoencoder_forward.1} parent=1 // pred_fallthru
      _
    // Predicated region
    $region70: #{autoencoder_forward.1} parent=1 // pred_check
      _
    $region71: #{autoencoder_forward.1} parent=1 // pred_check_branch
      %292 = sbr.rel (0) target = $region73
    $region72: #{autoencoder_forward.1} parent=1 // pred_region
      %s294 = ssub.s32 16, 16
      %295 = vsyncadd [#allocation24], %s294
      %s297 = sshll.u32 [#allocation23], 4
      %s298 = int_to_ptr.vmem [resolvable:$true] %s297
      %300 = dma.hbm_to_vmem [thread:$0]  %s35, 16, %s298, [#allocation24]
    $region73: #{autoencoder_forward.1} parent=1 // pred_fallthru
      _
    // Predicated region
    $region74: #{autoencoder_forward.1} parent=1 // pred_check
      _
    $region75: #{autoencoder_forward.1} parent=1 // pred_check_branch
      %302 = sbr.rel (0) target = $region77
    $region76: #{autoencoder_forward.1} parent=1 // pred_region
      %s304 = ssub.s32 16, 16
      %305 = vsyncadd [#allocation24], %s304
      %s307 = sshll.u32 [#allocation25], 4
      %s308 = int_to_ptr.vmem [resolvable:$true] %s307
      %310 = dma.hbm_to_vmem [thread:$0]  %s37, 16, %s308, [#allocation24]
    $region77: #{autoencoder_forward.1} parent=1 // pred_fallthru
      _
    // Predicated region
    $region78: #{autoencoder_forward.1} parent=1 // pred_check
      _
    $region79: #{autoencoder_forward.1} parent=1 // pred_check_branch
      %312 = sbr.rel (0) target = $region81
    $region80: #{autoencoder_forward.1} parent=1 // pred_region
      %s314 = ssub.s32 192, 192
      %315 = vsyncadd [#allocation27], %s314
      %s316 = sshll.u32 [#allocation26], 4
      %s317 = int_to_ptr.vmem [resolvable:$true] %s316
      %322 = dma.hbm_to_vmem [thread:$0]  %s39, 192, %s317, [#allocation27], 64, 64, 4
    $region81: #{autoencoder_forward.1} parent=1 // pred_fallthru
      _
    // Predicated region
    $region82: #{autoencoder_forward.1} parent=1 // pred_check
      _
    $region83: #{autoencoder_forward.1} parent=1 // pred_check_branch
      %324 = sbr.rel (0) target = $region85
    $region84: #{autoencoder_forward.1} parent=1 // pred_region
      _
    $region85: #{autoencoder_forward.1} parent=1 // pred_fallthru
      _
    // Predicated region
    $region86: #{autoencoder_forward.1} parent=1 // pred_check
      _
    $region87: #{autoencoder_forward.1} parent=1 // pred_check_branch
      %326 = sbr.rel (0) target = $region89
    $region88: #{autoencoder_forward.1} parent=1 // pred_region
      %s328 = ssub.s32 16, 16
      %329 = vsyncadd [#allocation27], %s328
      %s331 = sshll.u32 [#allocation28], 4
      %s332 = int_to_ptr.vmem [resolvable:$true] %s331
      %334 = dma.hbm_to_vmem [thread:$0]  %s43, 16, %s332, [#allocation27]
    $region89: #{autoencoder_forward.1} parent=1 // pred_fallthru
      _
    // Predicated region
    $region90: #{autoencoder_forward.1} parent=1 // pred_check
      _
    $region91: #{autoencoder_forward.1} parent=1 // pred_check_branch
      %336 = sbr.rel (0) target = $region93
    $region92: #{autoencoder_forward.1} parent=1 // pred_region
      %s338 = ssub.s32 768, 768
      %339 = vsyncadd [#allocation30], %s338
      %s340 = sshll.u32 [#allocation29], 4
      %s341 = int_to_ptr.vmem [resolvable:$true] %s340
      %346 = dma.hbm_to_vmem [thread:$0]  %s45, 768, %s341, [#allocation30], 128, 128, 8
    $region93: #{autoencoder_forward.1} parent=1 // pred_fallthru
      _
    // Predicated region
    $region94: #{autoencoder_forward.1} parent=1 // pred_check
      _
    $region95: #{autoencoder_forward.1} parent=1 // pred_check_branch
      %348 = sbr.rel (0) target = $region97
    $region96: #{autoencoder_forward.1} parent=1 // pred_region
      %s350 = ssub.s32 16, 16
      %351 = vsyncadd [#allocation30], %s350
      %s353 = sshll.u32 [#allocation31], 4
      %s354 = int_to_ptr.vmem [resolvable:$true] %s353
      %356 = dma.hbm_to_vmem [thread:$0]  %s47, 16, %s354, [#allocation30]
    $region97: #{autoencoder_forward.1} parent=1 // pred_fallthru
      _
    // Predicated region
    $region98: #{autoencoder_forward.1} parent=1 // pred_check
      _
    $region99: #{autoencoder_forward.1} parent=1 // pred_check_branch
      %358 = sbr.rel (0) target = $region101
    $region100: #{autoencoder_forward.1} parent=1 // pred_region
      %s360 = ssub.s32 16, 16
      %361 = vsyncadd [#allocation33], %s360
      %s363 = sshll.u32 [#allocation32], 4
      %s364 = int_to_ptr.vmem [resolvable:$true] %s363
      %366 = dma.hbm_to_vmem [thread:$0]  %s49, 16, %s364, [#allocation33]
    $region101: #{autoencoder_forward.1} parent=1 // pred_fallthru
      _
    // Predicated region
    $region102: #{autoencoder_forward.1} parent=1 // pred_check
      _
    $region103: #{autoencoder_forward.1} parent=1 // pred_check_branch
      %368 = sbr.rel (0) target = $region105
    $region104: #{autoencoder_forward.1} parent=1 // pred_region
      _
    $region105: #{autoencoder_forward.1} parent=1 // pred_fallthru
      _
    // Predicated region
    $region106: #{autoencoder_forward.1} parent=1 // pred_check
      _
    $region107: #{autoencoder_forward.1} parent=1 // pred_check_branch
      %370 = sbr.rel (0) target = $region109
    $region108: #{autoencoder_forward.1} parent=1 // pred_region
      _
    $region109: #{autoencoder_forward.1} parent=1 // pred_fallthru
      _
    // Predicated region
    $region110: #{autoencoder_forward.1} parent=1 // pred_check
      _
    $region111: #{autoencoder_forward.1} parent=1 // pred_check_branch
      %372 = sbr.rel (0) target = $region113
    $region112: #{autoencoder_forward.1} parent=1 // pred_region
      %s374 = ssub.s32 16, 16
      %375 = vsyncadd [#allocation33], %s374
      %s377 = sshll.u32 [#allocation34], 4
      %s378 = int_to_ptr.vmem [resolvable:$true] %s377
      %380 = dma.hbm_to_vmem [thread:$0]  %s55, 16, %s378, [#allocation33]
    $region113: #{autoencoder_forward.1} parent=1 // pred_fallthru
      _
    // Predicated region
    $region114: #{autoencoder_forward.1} parent=1 // pred_check
      _
    $region115: #{autoencoder_forward.1} parent=1 // pred_check_branch
      %382 = sbr.rel (0) target = $region117
    $region116: #{autoencoder_forward.1} parent=1 // pred_region
      %s384 = ssub.s32 32, 32
      %385 = vsyncadd [#allocation36], %s384
      %s387 = sshll.u32 [#allocation35], 4
      %s388 = int_to_ptr.vmem [resolvable:$true] %s387
      %390 = dma.hbm_to_vmem [thread:$0]  %s57, 32, %s388, [#allocation36]
    $region117: #{autoencoder_forward.1} parent=1 // pred_fallthru
      _
    // Predicated region
    $region118: #{autoencoder_forward.1} parent=1 // pred_check
      _
    $region119: #{autoencoder_forward.1} parent=1 // pred_check_branch
      %392 = sbr.rel (0) target = $region121
    $region120: #{autoencoder_forward.1} parent=1 // pred_region
      %s394 = ssub.s32 16, 16
      %395 = vsyncadd [#allocation36], %s394
      %s397 = sshll.u32 [#allocation37], 4
      %s398 = int_to_ptr.vmem [resolvable:$true] %s397
      %400 = dma.hbm_to_vmem [thread:$0]  %s59, 16, %s398, [#allocation36]
    $region121: #{autoencoder_forward.1} parent=1 // pred_fallthru
      _
    // Predicated region
    $region122: #{autoencoder_forward.1} parent=1 // pred_check
      _
    $region123: #{autoencoder_forward.1} parent=1 // pred_check_branch
      %402 = sbr.rel (0) target = $region125
    $region124: #{autoencoder_forward.1} parent=1 // pred_region
      %s404 = ssub.s32 16, 16
      %405 = vsyncadd [#allocation39], %s404
      %s407 = sshll.u32 [#allocation38], 4
      %s408 = int_to_ptr.vmem [resolvable:$true] %s407
      %410 = dma.hbm_to_vmem [thread:$0]  %s61, 16, %s408, [#allocation39]
    $region125: #{autoencoder_forward.1} parent=1 // pred_fallthru
      _
    // Predicated region
    $region126: #{autoencoder_forward.1} parent=1 // pred_check
      _
    $region127: #{autoencoder_forward.1} parent=1 // pred_check_branch
      %412 = sbr.rel (0) target = $region129
    $region128: #{autoencoder_forward.1} parent=1 // pred_region
      %s414 = ssub.s32 16, 16
      %415 = vsyncadd [#allocation39], %s414
      %s417 = sshll.u32 [#allocation40], 4
      %s418 = int_to_ptr.vmem [resolvable:$true] %s417
      %420 = dma.hbm_to_vmem [thread:$0]  %s63, 16, %s418, [#allocation39]
    $region129: #{autoencoder_forward.1} parent=1 // pred_fallthru
      _
    // Predicated region
    $region130: #{autoencoder_forward.1} parent=1 // pred_check
      _
    $region131: #{autoencoder_forward.1} parent=1 // pred_check_branch
      %422 = sbr.rel (0) target = $region133
    $region132: #{autoencoder_forward.1} parent=1 // pred_region
      _
    $region133: #{autoencoder_forward.1} parent=1 // pred_fallthru
      _
    // Predicated region
    $region134: #{autoencoder_forward.1} parent=1 // pred_check
      _
    $region135: #{autoencoder_forward.1} parent=1 // pred_check_branch
      %424 = sbr.rel (0) target = $region137
    $region136: #{autoencoder_forward.1} parent=1 // pred_region
      _
    $region137: #{autoencoder_forward.1} parent=1 // pred_fallthru
      _
    // Predicated region
    $region138: #{autoencoder_forward.1} parent=1 // pred_check
      _
    $region139: #{autoencoder_forward.1} parent=1 // pred_check_branch
      %426 = sbr.rel (0) target = $region141
    $region140: #{autoencoder_forward.1} parent=1 // pred_region
      _
    $region141: #{autoencoder_forward.1} parent=1 // pred_fallthru
      _
    // Predicated region
    $region142: #{autoencoder_forward.1} parent=1 // pred_check
      _
    $region143: #{autoencoder_forward.1} parent=1 // pred_check_branch
      %428 = sbr.rel (0) target = $region145
    $region144: #{autoencoder_forward.1} parent=1 // pred_region
      _
    $region145: #{autoencoder_forward.1} parent=1 // pred_fallthru
      _
    // Predicated region
    $region146: #{autoencoder_forward.1} parent=1 // pred_check
      _
    $region147: #{autoencoder_forward.1} parent=1 // pred_check_branch
      %430 = sbr.rel (0) target = $region149
    $region148: #{autoencoder_forward.1} parent=1 // pred_region
      %s432 = ssub.s32 16, 16
      %433 = vsyncadd [#allocation42], %s432
      %s435 = sshll.u32 [#allocation41], 4
      %s436 = int_to_ptr.vmem [resolvable:$true] %s435
      %438 = dma.hbm_to_vmem [thread:$0]  %s73, 16, %s436, [#allocation42]
    $region149: #{autoencoder_forward.1} parent=1 // pred_fallthru
      _
    // Predicated region
    $region150: #{autoencoder_forward.1} parent=1 // pred_check
      _
    $region151: #{autoencoder_forward.1} parent=1 // pred_check_branch
      %440 = sbr.rel (0) target = $region153
    $region152: #{autoencoder_forward.1} parent=1 // pred_region
      %s442 = ssub.s32 768, 768
      %443 = vsyncadd [#allocation42], %s442
      %s444 = sshll.u32 [#allocation43], 4
      %s445 = int_to_ptr.vmem [resolvable:$true] %s444
      %450 = dma.hbm_to_vmem [thread:$0]  %s75, 768, %s445, [#allocation42], 128, 128, 8
    $region153: #{autoencoder_forward.1} parent=1 // pred_fallthru
      _
    // Predicated region
    $region154: #{autoencoder_forward.1} parent=1 // pred_check
      _
    $region155: #{autoencoder_forward.1} parent=1 // pred_check_branch
      %452 = sbr.rel (0) target = $region157
    $region156: #{autoencoder_forward.1} parent=1 // pred_region
      %s454 = ssub.s32 16, 16
      %455 = vsyncadd [#allocation45], %s454
      %s457 = sshll.u32 [#allocation44], 4
      %s458 = int_to_ptr.vmem [resolvable:$true] %s457
      %460 = dma.hbm_to_vmem [thread:$0]  %s77, 16, %s458, [#allocation45]
    $region157: #{autoencoder_forward.1} parent=1 // pred_fallthru
      _
    // Predicated region
    $region158: #{autoencoder_forward.1} parent=1 // pred_check
      _
    $region159: #{autoencoder_forward.1} parent=1 // pred_check_branch
      %462 = sbr.rel (0) target = $region161
    $region160: #{autoencoder_forward.1} parent=1 // pred_region
      %s464 = ssub.s32 16, 16
      %465 = vsyncadd [#allocation45], %s464
      %s467 = sshll.u32 [#allocation46], 4
      %s468 = int_to_ptr.vmem [resolvable:$true] %s467
      %470 = dma.hbm_to_vmem [thread:$0]  %s79, 16, %s468, [#allocation45]
    $region161: #{autoencoder_forward.1} parent=1 // pred_fallthru
      _
    // Predicated region
    $region162: #{autoencoder_forward.1} parent=1 // pred_check
      _
    $region163: #{autoencoder_forward.1} parent=1 // pred_check_branch
      %472 = sbr.rel (0) target = $region165
    $region164: #{autoencoder_forward.1} parent=1 // pred_region
      _
    $region165: #{autoencoder_forward.1} parent=1 // pred_fallthru
      _
    // Predicated region
    $region166: #{autoencoder_forward.1} parent=1 // pred_check
      _
    $region167: #{autoencoder_forward.1} parent=1 // pred_check_branch
      %474 = sbr.rel (0) target = $region169
    $region168: #{autoencoder_forward.1} parent=1 // pred_region
      _
    $region169: #{autoencoder_forward.1} parent=1 // pred_fallthru
      _
    // Predicated region
    $region170: #{autoencoder_forward.1} parent=1 // pred_check
      _
    $region171: #{autoencoder_forward.1} parent=1 // pred_check_branch
      %476 = sbr.rel (0) target = $region173
    $region172: #{autoencoder_forward.1} parent=1 // pred_region
      %s478 = ssub.s32 16, 16
      %479 = vsyncadd [#allocation48], %s478
      %s481 = sshll.u32 [#allocation47], 4
      %s482 = int_to_ptr.vmem [resolvable:$true] %s481
      %484 = dma.hbm_to_vmem [thread:$0]  %s85, 16, %s482, [#allocation48]
    $region173: #{autoencoder_forward.1} parent=1 // pred_fallthru
      _
    // Predicated region
    $region174: #{autoencoder_forward.1} parent=1 // pred_check
      _
    $region175: #{autoencoder_forward.1} parent=1 // pred_check_branch
      %486 = sbr.rel (0) target = $region177
    $region176: #{autoencoder_forward.1} parent=1 // pred_region
      %s488 = ssub.s32 768, 768
      %489 = vsyncadd [#allocation48], %s488
      %s490 = sshll.u32 [#allocation49], 4
      %s491 = int_to_ptr.vmem [resolvable:$true] %s490
      %496 = dma.hbm_to_vmem [thread:$0]  %s87, 768, %s491, [#allocation48], 128, 128, 8
    $region177: #{autoencoder_forward.1} parent=1 // pred_fallthru
      _
    // Predicated region
    $region178: #{autoencoder_forward.1} parent=1 // pred_check
      _
    $region179: #{autoencoder_forward.1} parent=1 // pred_check_branch
      %498 = sbr.rel (0) target = $region181
    $region180: #{autoencoder_forward.1} parent=1 // pred_region
      %s500 = ssub.s32 16, 16
      %501 = vsyncadd [#allocation51], %s500
      %s503 = sshll.u32 [#allocation50], 4
      %s504 = int_to_ptr.vmem [resolvable:$true] %s503
      %506 = dma.hbm_to_vmem [thread:$0]  %s89, 16, %s504, [#allocation51]
    $region181: #{autoencoder_forward.1} parent=1 // pred_fallthru
      _
    // Predicated region
    $region182: #{autoencoder_forward.1} parent=1 // pred_check
      _
    $region183: #{autoencoder_forward.1} parent=1 // pred_check_branch
      %508 = sbr.rel (0) target = $region185
    $region184: #{autoencoder_forward.1} parent=1 // pred_region
      %s510 = ssub.s32 16, 16
      %511 = vsyncadd [#allocation51], %s510
      %s513 = sshll.u32 [#allocation52], 4
      %s514 = int_to_ptr.vmem [resolvable:$true] %s513
      %516 = dma.hbm_to_vmem [thread:$0]  %s91, 16, %s514, [#allocation51]
    $region185: #{autoencoder_forward.1} parent=1 // pred_fallthru
      _
    // Predicated region
    $region186: #{autoencoder_forward.1} parent=1 // pred_check
      _
    $region187: #{autoencoder_forward.1} parent=1 // pred_check_branch
      %518 = sbr.rel (0) target = $region189
    $region188: #{autoencoder_forward.1} parent=1 // pred_region
      _
    $region189: #{autoencoder_forward.1} parent=1 // pred_fallthru
      _
    // Predicated region
    $region190: #{autoencoder_forward.1} parent=1 // pred_check
      _
    $region191: #{autoencoder_forward.1} parent=1 // pred_check_branch
      %520 = sbr.rel (0) target = $region193
    $region192: #{autoencoder_forward.1} parent=1 // pred_region
      _
    $region193: #{autoencoder_forward.1} parent=1 // pred_fallthru
      _
    // Predicated region
    $region194: #{autoencoder_forward.1} parent=1 // pred_check
      _
    $region195: #{autoencoder_forward.1} parent=1 // pred_check_branch
      %522 = sbr.rel (0) target = $region197
    $region196: #{autoencoder_forward.1} parent=1 // pred_region
      %s524 = ssub.s32 16, 16
      %525 = vsyncadd [#allocation54], %s524
      %s527 = sshll.u32 [#allocation53], 4
      %s528 = int_to_ptr.vmem [resolvable:$true] %s527
      %530 = dma.hbm_to_vmem [thread:$0]  %s97, 16, %s528, [#allocation54]
    $region197: #{autoencoder_forward.1} parent=1 // pred_fallthru
      _
    // Predicated region
    $region198: #{autoencoder_forward.1} parent=1 // pred_check
      _
    $region199: #{autoencoder_forward.1} parent=1 // pred_check_branch
      %532 = sbr.rel (0) target = $region201
    $region200: #{autoencoder_forward.1} parent=1 // pred_region
      %s534 = ssub.s32 768, 768
      %535 = vsyncadd [#allocation54], %s534
      %s536 = sshll.u32 [#allocation55], 4
      %s537 = int_to_ptr.vmem [resolvable:$true] %s536
      %542 = dma.hbm_to_vmem [thread:$0]  %s99, 768, %s537, [#allocation54], 128, 128, 8
    $region201: #{autoencoder_forward.1} parent=1 // pred_fallthru
      _
    // Predicated region
    $region202: #{autoencoder_forward.1} parent=1 // pred_check
      _
    $region203: #{autoencoder_forward.1} parent=1 // pred_check_branch
      %544 = sbr.rel (0) target = $region205
    $region204: #{autoencoder_forward.1} parent=1 // pred_region
      %s546 = ssub.s32 16, 16
      %547 = vsyncadd [#allocation57], %s546
      %s549 = sshll.u32 [#allocation56], 4
      %s550 = int_to_ptr.vmem [resolvable:$true] %s549
      %552 = dma.hbm_to_vmem [thread:$0]  %s101, 16, %s550, [#allocation57]
    $region205: #{autoencoder_forward.1} parent=1 // pred_fallthru
      _
    // Predicated region
    $region206: #{autoencoder_forward.1} parent=1 // pred_check
      _
    $region207: #{autoencoder_forward.1} parent=1 // pred_check_branch
      %554 = sbr.rel (0) target = $region209
    $region208: #{autoencoder_forward.1} parent=1 // pred_region
      %s556 = ssub.s32 16, 16
      %557 = vsyncadd [#allocation57], %s556
      %s559 = sshll.u32 [#allocation58], 4
      %s560 = int_to_ptr.vmem [resolvable:$true] %s559
      %562 = dma.hbm_to_vmem [thread:$0]  %s103, 16, %s560, [#allocation57]
    $region209: #{autoencoder_forward.1} parent=1 // pred_fallthru
      _
    // Predicated region
    $region210: #{autoencoder_forward.1} parent=1 // pred_check
      _
    $region211: #{autoencoder_forward.1} parent=1 // pred_check_branch
      %564 = sbr.rel (0) target = $region213
    $region212: #{autoencoder_forward.1} parent=1 // pred_region
      _
    $region213: #{autoencoder_forward.1} parent=1 // pred_fallthru
      _
    // Predicated region
    $region214: #{autoencoder_forward.1} parent=1 // pred_check
      _
    $region215: #{autoencoder_forward.1} parent=1 // pred_check_branch
      %566 = sbr.rel (0) target = $region217
    $region216: #{autoencoder_forward.1} parent=1 // pred_region
      _
    $region217: #{autoencoder_forward.1} parent=1 // pred_fallthru
      _
    // Predicated region
    $region218: #{autoencoder_forward.1} parent=1 // pred_check
      _
    $region219: #{autoencoder_forward.1} parent=1 // pred_check_branch
      %568 = sbr.rel (0) target = $region221
    $region220: #{autoencoder_forward.1} parent=1 // pred_region
      %s570 = ssub.s32 16, 16
      %571 = vsyncadd [#allocation60], %s570
      %s573 = sshll.u32 [#allocation59], 4
      %s574 = int_to_ptr.vmem [resolvable:$true] %s573
      %576 = dma.hbm_to_vmem [thread:$0]  %s109, 16, %s574, [#allocation60]
    $region221: #{autoencoder_forward.1} parent=1 // pred_fallthru
      _
    // Predicated region
    $region222: #{autoencoder_forward.1} parent=1 // pred_check
      _
    $region223: #{autoencoder_forward.1} parent=1 // pred_check_branch
      %578 = sbr.rel (0) target = $region225
    $region224: #{autoencoder_forward.1} parent=1 // pred_region
      %s580 = ssub.s32 896, 896
      %581 = vsyncadd [#allocation60], %s580
      %s582 = sshll.u32 [#allocation61], 4
      %s583 = int_to_ptr.vmem [resolvable:$true] %s582
      %588 = dma.hbm_to_vmem [thread:$0]  %s111, 896, %s583, [#allocation60], 128, 128, 8
    $region225: #{autoencoder_forward.1} parent=1 // pred_fallthru
      _
    // Predicated region
    $region226: #{autoencoder_forward.1} parent=1 // pred_check
      _
    $region227: #{autoencoder_forward.1} parent=1 // pred_check_branch
      %590 = sbr.rel (0) target = $region229
    $region228: #{autoencoder_forward.1} parent=1 // pred_region
      _
    $region229: #{autoencoder_forward.1} parent=1 // pred_fallthru
      _
    // Predicated region
    $region230: #{autoencoder_forward.1} parent=1 // pred_check
      _
    $region231: #{autoencoder_forward.1} parent=1 // pred_check_branch
      %592 = sbr.rel (0) target = $region233
    $region232: #{autoencoder_forward.1} parent=1 // pred_region
      %593 = dma.done [#allocation3], 896
    $region233: #{autoencoder_forward.1} parent=1 // pred_fallthru
      _
    // Predicated region
    $region234: #{autoencoder_forward.1} parent=1 // pred_check
      _
    $region235: #{autoencoder_forward.1} parent=1 // pred_check_branch
      %595 = sbr.rel (0) target = $region237
    $region236: #{autoencoder_forward.1} parent=1 // pred_region
      %596 = dma.done [#allocation6], 16
    $region237: #{autoencoder_forward.1} parent=1 // pred_fallthru
      _
    // Predicated region
    $region238: #{autoencoder_forward.1} parent=1 // pred_check
      _
    $region239: #{autoencoder_forward.1} parent=1 // pred_check_branch
      %598 = sbr.rel (0) target = $region241
    $region240: #{autoencoder_forward.1} parent=1 // pred_region
      %599 = dma.done [#allocation6], 768
    $region241: #{autoencoder_forward.1} parent=1 // pred_fallthru
      _
    // Predicated region
    $region242: #{autoencoder_forward.1} parent=1 // pred_check
      _
    $region243: #{autoencoder_forward.1} parent=1 // pred_check_branch
      %601 = sbr.rel (0) target = $region245
    $region244: #{autoencoder_forward.1} parent=1 // pred_region
      %602 = dma.done [#allocation9], 16
    $region245: #{autoencoder_forward.1} parent=1 // pred_fallthru
      _
    // Predicated region
    $region246: #{autoencoder_forward.1} parent=1 // pred_check
      _
    $region247: #{autoencoder_forward.1} parent=1 // pred_check_branch
      %604 = sbr.rel (0) target = $region249
    $region248: #{autoencoder_forward.1} parent=1 // pred_region
      %605 = dma.done [#allocation9], 16
    $region249: #{autoencoder_forward.1} parent=1 // pred_fallthru
      _
    // Predicated region
    $region250: #{autoencoder_forward.1} parent=1 // pred_check
      _
    $region251: #{autoencoder_forward.1} parent=1 // pred_check_branch
      %607 = sbr.rel (0) target = $region253
    $region252: #{autoencoder_forward.1} parent=1 // pred_region
      %608 = dma.done [#allocation12], 768
    $region253: #{autoencoder_forward.1} parent=1 // pred_fallthru
      _
    // Predicated region
    $region254: #{autoencoder_forward.1} parent=1 // pred_check
      _
    $region255: #{autoencoder_forward.1} parent=1 // pred_check_branch
      %610 = sbr.rel (0) target = $region257
    $region256: #{autoencoder_forward.1} parent=1 // pred_region
      %611 = dma.done [#allocation12], 16
    $region257: #{autoencoder_forward.1} parent=1 // pred_fallthru
      _
    // Predicated region
    $region258: #{autoencoder_forward.1} parent=1 // pred_check
      _
    $region259: #{autoencoder_forward.1} parent=1 // pred_check_branch
      %613 = sbr.rel (0) target = $region261
    $region260: #{autoencoder_forward.1} parent=1 // pred_region
      %614 = dma.done [#allocation15], 768
    $region261: #{autoencoder_forward.1} parent=1 // pred_fallthru
      _
    // Predicated region
    $region262: #{autoencoder_forward.1} parent=1 // pred_check
      _
    $region263: #{autoencoder_forward.1} parent=1 // pred_check_branch
      %616 = sbr.rel (0) target = $region265
    $region264: #{autoencoder_forward.1} parent=1 // pred_region
      %617 = dma.done [#allocation15], 16
    $region265: #{autoencoder_forward.1} parent=1 // pred_fallthru
      _
    // Predicated region
    $region266: #{autoencoder_forward.1} parent=1 // pred_check
      _
    $region267: #{autoencoder_forward.1} parent=1 // pred_check_branch
      %619 = sbr.rel (0) target = $region269
    $region268: #{autoencoder_forward.1} parent=1 // pred_region
      %620 = dma.done [#allocation18], 16
    $region269: #{autoencoder_forward.1} parent=1 // pred_fallthru
      _
    // Predicated region
    $region270: #{autoencoder_forward.1} parent=1 // pred_check
      _
    $region271: #{autoencoder_forward.1} parent=1 // pred_check_branch
      %622 = sbr.rel (0) target = $region273
    $region272: #{autoencoder_forward.1} parent=1 // pred_region
      %623 = dma.done [#allocation18], 384
    $region273: #{autoencoder_forward.1} parent=1 // pred_fallthru
      _
    // Predicated region
    $region274: #{autoencoder_forward.1} parent=1 // pred_check
      _
    $region275: #{autoencoder_forward.1} parent=1 // pred_check_branch
      %625 = sbr.rel (0) target = $region277
    $region276: #{autoencoder_forward.1} parent=1 // pred_region
      %626 = dma.done [#allocation21], 16
    $region277: #{autoencoder_forward.1} parent=1 // pred_fallthru
      _
    // Predicated region
    $region278: #{autoencoder_forward.1} parent=1 // pred_check
      _
    $region279: #{autoencoder_forward.1} parent=1 // pred_check_branch
      %628 = sbr.rel (0) target = $region281
    $region280: #{autoencoder_forward.1} parent=1 // pred_region
      %629 = dma.done [#allocation21], 768
    $region281: #{autoencoder_forward.1} parent=1 // pred_fallthru
      _
    // Predicated region
    $region282: #{autoencoder_forward.1} parent=1 // pred_check
      _
    $region283: #{autoencoder_forward.1} parent=1 // pred_check_branch
      %631 = sbr.rel (0) target = $region285
    $region284: #{autoencoder_forward.1} parent=1 // pred_region
      %632 = dma.done [#allocation24], 16
    $region285: #{autoencoder_forward.1} parent=1 // pred_fallthru
      _
    // Predicated region
    $region286: #{autoencoder_forward.1} parent=1 // pred_check
      _
    $region287: #{autoencoder_forward.1} parent=1 // pred_check_branch
      %634 = sbr.rel (0) target = $region289
    $region288: #{autoencoder_forward.1} parent=1 // pred_region
      %635 = dma.done [#allocation24], 16
    $region289: #{autoencoder_forward.1} parent=1 // pred_fallthru
      _
    // Predicated region
    $region290: #{autoencoder_forward.1} parent=1 // pred_check
      _
    $region291: #{autoencoder_forward.1} parent=1 // pred_check_branch
      %637 = sbr.rel (0) target = $region293
    $region292: #{autoencoder_forward.1} parent=1 // pred_region
      %638 = dma.done [#allocation27], 192
    $region293: #{autoencoder_forward.1} parent=1 // pred_fallthru
      _
    // Predicated region
    $region294: #{autoencoder_forward.1} parent=1 // pred_check
      _
    $region295: #{autoencoder_forward.1} parent=1 // pred_check_branch
      %640 = sbr.rel (0) target = $region297
    $region296: #{autoencoder_forward.1} parent=1 // pred_region
      %641 = dma.done [#allocation27], 16
    $region297: #{autoencoder_forward.1} parent=1 // pred_fallthru
      _
    // Predicated region
    $region298: #{autoencoder_forward.1} parent=1 // pred_check
      _
    $region299: #{autoencoder_forward.1} parent=1 // pred_check_branch
      %643 = sbr.rel (0) target = $region301
    $region300: #{autoencoder_forward.1} parent=1 // pred_region
      %644 = dma.done [#allocation30], 768
    $region301: #{autoencoder_forward.1} parent=1 // pred_fallthru
      _
    // Predicated region
    $region302: #{autoencoder_forward.1} parent=1 // pred_check
      _
    $region303: #{autoencoder_forward.1} parent=1 // pred_check_branch
      %646 = sbr.rel (0) target = $region305
    $region304: #{autoencoder_forward.1} parent=1 // pred_region
      %647 = dma.done [#allocation30], 16
    $region305: #{autoencoder_forward.1} parent=1 // pred_fallthru
      _
    // Predicated region
    $region306: #{autoencoder_forward.1} parent=1 // pred_check
      _
    $region307: #{autoencoder_forward.1} parent=1 // pred_check_branch
      %649 = sbr.rel (0) target = $region309
    $region308: #{autoencoder_forward.1} parent=1 // pred_region
      %650 = dma.done [#allocation33], 16
    $region309: #{autoencoder_forward.1} parent=1 // pred_fallthru
      _
    // Predicated region
    $region310: #{autoencoder_forward.1} parent=1 // pred_check
      _
    $region311: #{autoencoder_forward.1} parent=1 // pred_check_branch
      %652 = sbr.rel (0) target = $region313
    $region312: #{autoencoder_forward.1} parent=1 // pred_region
      %653 = dma.done [#allocation33], 16
    $region313: #{autoencoder_forward.1} parent=1 // pred_fallthru
      _
    // Predicated region
    $region314: #{autoencoder_forward.1} parent=1 // pred_check
      _
    $region315: #{autoencoder_forward.1} parent=1 // pred_check_branch
      %655 = sbr.rel (0) target = $region317
    $region316: #{autoencoder_forward.1} parent=1 // pred_region
      %656 = dma.done [#allocation36], 32
    $region317: #{autoencoder_forward.1} parent=1 // pred_fallthru
      _
    // Predicated region
    $region318: #{autoencoder_forward.1} parent=1 // pred_check
      _
    $region319: #{autoencoder_forward.1} parent=1 // pred_check_branch
      %658 = sbr.rel (0) target = $region321
    $region320: #{autoencoder_forward.1} parent=1 // pred_region
      %659 = dma.done [#allocation36], 16
    $region321: #{autoencoder_forward.1} parent=1 // pred_fallthru
      _
    // Predicated region
    $region322: #{autoencoder_forward.1} parent=1 // pred_check
      _
    $region323: #{autoencoder_forward.1} parent=1 // pred_check_branch
      %661 = sbr.rel (0) target = $region325
    $region324: #{autoencoder_forward.1} parent=1 // pred_region
      %662 = dma.done [#allocation39], 16
    $region325: #{autoencoder_forward.1} parent=1 // pred_fallthru
      _
    // Predicated region
    $region326: #{autoencoder_forward.1} parent=1 // pred_check
      _
    $region327: #{autoencoder_forward.1} parent=1 // pred_check_branch
      %664 = sbr.rel (0) target = $region329
    $region328: #{autoencoder_forward.1} parent=1 // pred_region
      %665 = dma.done [#allocation39], 16
    $region329: #{autoencoder_forward.1} parent=1 // pred_fallthru
      _
    // Predicated region
    $region330: #{autoencoder_forward.1} parent=1 // pred_check
      _
    $region331: #{autoencoder_forward.1} parent=1 // pred_check_branch
      %667 = sbr.rel (0) target = $region333
    $region332: #{autoencoder_forward.1} parent=1 // pred_region
      %668 = dma.done [#allocation42], 16
    $region333: #{autoencoder_forward.1} parent=1 // pred_fallthru
      _
    // Predicated region
    $region334: #{autoencoder_forward.1} parent=1 // pred_check
      _
    $region335: #{autoencoder_forward.1} parent=1 // pred_check_branch
      %670 = sbr.rel (0) target = $region337
    $region336: #{autoencoder_forward.1} parent=1 // pred_region
      %671 = dma.done [#allocation42], 768
    $region337: #{autoencoder_forward.1} parent=1 // pred_fallthru
      _
    // Predicated region
    $region338: #{autoencoder_forward.1} parent=1 // pred_check
      _
    $region339: #{autoencoder_forward.1} parent=1 // pred_check_branch
      %673 = sbr.rel (0) target = $region341
    $region340: #{autoencoder_forward.1} parent=1 // pred_region
      %674 = dma.done [#allocation45], 16
    $region341: #{autoencoder_forward.1} parent=1 // pred_fallthru
      _
    // Predicated region
    $region342: #{autoencoder_forward.1} parent=1 // pred_check
      _
    $region343: #{autoencoder_forward.1} parent=1 // pred_check_branch
      %676 = sbr.rel (0) target = $region345
    $region344: #{autoencoder_forward.1} parent=1 // pred_region
      %677 = dma.done [#allocation45], 16
    $region345: #{autoencoder_forward.1} parent=1 // pred_fallthru
      _
    // Predicated region
    $region346: #{autoencoder_forward.1} parent=1 // pred_check
      _
    $region347: #{autoencoder_forward.1} parent=1 // pred_check_branch
      %679 = sbr.rel (0) target = $region349
    $region348: #{autoencoder_forward.1} parent=1 // pred_region
      %680 = dma.done [#allocation48], 16
    $region349: #{autoencoder_forward.1} parent=1 // pred_fallthru
      _
    // Predicated region
    $region350: #{autoencoder_forward.1} parent=1 // pred_check
      _
    $region351: #{autoencoder_forward.1} parent=1 // pred_check_branch
      %682 = sbr.rel (0) target = $region353
    $region352: #{autoencoder_forward.1} parent=1 // pred_region
      %683 = dma.done [#allocation48], 768
    $region353: #{autoencoder_forward.1} parent=1 // pred_fallthru
      _
    // Predicated region
    $region354: #{autoencoder_forward.1} parent=1 // pred_check
      _
    $region355: #{autoencoder_forward.1} parent=1 // pred_check_branch
      %685 = sbr.rel (0) target = $region357
    $region356: #{autoencoder_forward.1} parent=1 // pred_region
      %686 = dma.done [#allocation51], 16
    $region357: #{autoencoder_forward.1} parent=1 // pred_fallthru
      _
    // Predicated region
    $region358: #{autoencoder_forward.1} parent=1 // pred_check
      _
    $region359: #{autoencoder_forward.1} parent=1 // pred_check_branch
      %688 = sbr.rel (0) target = $region361
    $region360: #{autoencoder_forward.1} parent=1 // pred_region
      %689 = dma.done [#allocation51], 16
    $region361: #{autoencoder_forward.1} parent=1 // pred_fallthru
      _
    // Predicated region
    $region362: #{autoencoder_forward.1} parent=1 // pred_check
      _
    $region363: #{autoencoder_forward.1} parent=1 // pred_check_branch
      %691 = sbr.rel (0) target = $region365
    $region364: #{autoencoder_forward.1} parent=1 // pred_region
      %692 = dma.done [#allocation54], 16
    $region365: #{autoencoder_forward.1} parent=1 // pred_fallthru
      _
    // Predicated region
    $region366: #{autoencoder_forward.1} parent=1 // pred_check
      _
    $region367: #{autoencoder_forward.1} parent=1 // pred_check_branch
      %694 = sbr.rel (0) target = $region369
    $region368: #{autoencoder_forward.1} parent=1 // pred_region
      %695 = dma.done [#allocation54], 768
    $region369: #{autoencoder_forward.1} parent=1 // pred_fallthru
      _
    // Predicated region
    $region370: #{autoencoder_forward.1} parent=1 // pred_check
      _
    $region371: #{autoencoder_forward.1} parent=1 // pred_check_branch
      %697 = sbr.rel (0) target = $region373
    $region372: #{autoencoder_forward.1} parent=1 // pred_region
      %698 = dma.done [#allocation57], 16
    $region373: #{autoencoder_forward.1} parent=1 // pred_fallthru
      _
    // Predicated region
    $region374: #{autoencoder_forward.1} parent=1 // pred_check
      _
    $region375: #{autoencoder_forward.1} parent=1 // pred_check_branch
      %700 = sbr.rel (0) target = $region377
    $region376: #{autoencoder_forward.1} parent=1 // pred_region
      %701 = dma.done [#allocation57], 16
    $region377: #{autoencoder_forward.1} parent=1 // pred_fallthru
      _
    // Predicated region
    $region378: #{autoencoder_forward.1} parent=1 // pred_check
      _
    $region379: #{autoencoder_forward.1} parent=1 // pred_check_branch
      %703 = sbr.rel (0) target = $region381
    $region380: #{autoencoder_forward.1} parent=1 // pred_region
      %704 = dma.done [#allocation60], 16
    $region381: #{autoencoder_forward.1} parent=1 // pred_fallthru
      _
    // Predicated region
    $region382: #{autoencoder_forward.1} parent=1 // pred_check
      _
    $region383: #{autoencoder_forward.1} parent=1 // pred_check_branch
      %706 = sbr.rel (0) target = $region385
    $region384: #{autoencoder_forward.1} parent=1 // pred_region
      %707 = dma.done [#allocation60], 896
    $region385: #{autoencoder_forward.1} parent=1 // pred_fallthru
      _
    %v708 = vld [vmem:[#allocation2] sm:$0xff]
    %v709 = vld [vmem:[#allocation2 + $0x8] sm:$0xff]
    %v710 = vld [vmem:[#allocation2 + $0x10] sm:$0xff]
    %v711 = vld [vmem:[#allocation2 + $0x18] sm:$0xff]
    %v712 = vld [vmem:[#allocation2 + $0x20] sm:$0xff]
    %v713 = vld [vmem:[#allocation2 + $0x28] sm:$0xff]
    %v714 = vld [vmem:[#allocation2 + $0x30] sm:$0xff]
    %v715 = vld [vmem:[%s3] sm:$0xff]
    %v716 = vld [vmem:[%s3 + $0x8] sm:$0xff]
    %v717 = vld [vmem:[%s3 + $0x10] sm:$0xff]
    %v718 = vld [vmem:[%s3 + $0x18] sm:$0xf]
    %vm719 = vcmask 457728
    %v721 = vsel %vm719, %v715, 0
    %v724 = vsel %vm719, %v716, 0
    %v727 = vsel %vm719, %v717, 0
    %v730 = vsel %vm719, %v718, 0
    %732 = vmatprep.subr.mxu0 0.0
    %733 = vmatpush1.msra.mxu0 %v708
    %734 = vmatprep.subr.mxu0 0.0
    %735 = vmatpush1.msra.mxu0 %v709
    %736 = vmatprep.subr.mxu0 0.0
    %737 = vmatpush1.msra.mxu0 %v710
    %738 = vmatprep.subr.mxu0 0.0
    %739 = vmatpush1.msra.mxu0 %v711
    %740 = vmatprep.subr.mxu0 0.0
    %741 = vmatpush1.msra.mxu0 %v712
    %742 = vmatprep.subr.mxu0 0.0
    %743 = vmatpush1.msra.mxu0 %v713
    %744 = vmatprep.subr.mxu0 0.0
    %745 = vmatpush1.msra.mxu0 %v714
    %746 = vmatprep.subr.mxu0 0.0
    %747 = vmatpush1.msra.mxu0 0.0
    %748 = vmatprep.subr.mxu0 0.0
    %749 = vmatpush1.msra.mxu0 0.0
    %750 = vmatprep.subr.mxu0 0.0
    %751 = vmatpush1.msra.mxu0 0.0
    %752 = vmatprep.subr.mxu0 0.0
    %753 = vmatpush1.msra.mxu0 0.0
    %754 = vmatprep.subr.mxu0 0.0
    %755 = vmatpush1.msra.mxu0 0.0
    %756 = vmatprep.subr.mxu0 0.0
    %757 = vmatpush1.msra.mxu0 0.0
    %758 = vmatprep.subr.mxu0 0.0
    %759 = vmatpush1.msra.mxu0 0.0
    %760 = vmatprep.subr.mxu0 0.0
    %761 = vmatpush1.msra.mxu0 0.0
    %762 = vmatprep.subr.mxu0 0.0
    %763 = vmatpush1.msra.mxu0 0.0
    %764 = vmatprep.subr.mxu0 0.0
    %765 = vmatpush1.msra.mxu0 0.0
    %766 = vmatprep.subr.mxu0 0.0
    %767 = vmatpush1.msra.mxu0 0.0
    %768 = vmatprep.subr.mxu0 0.0
    %769 = vmatpush1.msra.mxu0 0.0
    %770 = vmatprep.subr.mxu0 0.0
    %771 = vmatpush1.msra.mxu0 0.0
    %772 = vmatprep.subr.mxu0 0.0
    %773 = vmatpush1.msra.mxu0 0.0
    %774 = vmatprep.subr.mxu0 0.0
    %775 = vmatpush1.msra.mxu0 0.0
    %776 = vmatprep.subr.mxu0 0.0
    %777 = vmatpush1.msra.mxu0 0.0
    %778 = vmatprep.subr.mxu0 0.0
    %779 = vmatpush1.msra.mxu0 0.0
    %780 = vmatprep.subr.mxu0 0.0
    %781 = vmatpush1.msra.mxu0 0.0
    %782 = vmatprep.subr.mxu0 0.0
    %783 = vmatpush1.msra.mxu0 0.0
    %784 = vmatprep.subr.mxu0 0.0
    %785 = vmatpush1.msra.mxu0 0.0
    %786 = vmatprep.subr.mxu0 0.0
    %787 = vmatpush1.msra.mxu0 0.0
    %788 = vmatprep.subr.mxu0 0.0
    %789 = vmatpush1.msra.mxu0 0.0
    %790 = vmatprep.subr.mxu0 0.0
    %791 = vmatpush1.msra.mxu0 0.0
    %792 = vmatprep.subr.mxu0 0.0
    %793 = vmatpush1.msra.mxu0 0.0
    %794 = vmatprep.subr.mxu0 0.0
    %795 = vmatpush1.msra.mxu0 0.0
    %796 = vmatprep.mubr.f32.mxu0 0.0
    %797 = vmatmul.mubr.f32.gmra.mrb[0].mxu0 %v721
    %v798 = vpop.f32.mrb[0].mxu0
    %v799 = vadd.f32 0.0, %v798
    %v800 = vpop.f32.mrb[0].mxu0
    %801 = vmatprep.mubr.f32.mxu0 0.0
    %802 = vmatmul.mubr.f32.gmra.mrb[0].mxu0 %v724
    %v803 = vpop.f32.mrb[0].mxu0
    %v804 = vadd.f32 0.0, %v803
    %v805 = vpop.f32.mrb[0].mxu0
    %806 = vmatprep.mubr.f32.mxu0 0.0
    %807 = vmatmul.mubr.f32.gmra.mrb[0].mxu0 %v727
    %v808 = vpop.f32.mrb[0].mxu0
    %v809 = vadd.f32 0.0, %v808
    %v810 = vpop.f32.mrb[0].mxu0
    %811 = vmatprep.mubr.f32.mxu0 0.0
    %812 = vmatmul.mubr.f32.gmra.mrb[0].mxu0 %v730
    %v813 = vpop.f32.mrb[0].mxu0
    %v814 = vadd.f32 0.0, %v813
    %v815 = vpop.f32.mrb[0].mxu0
    %816 = vdwg.mxu0
    %v817 = vld [vmem:[%s5] sm:$0xff]
    %v818 = vld [vmem:[%s5 + $0x8] sm:$0xff]
    %v819 = vld [vmem:[%s5 + $0x10] sm:$0xff]
    %v820 = vld [vmem:[%s5 + $0x18] sm:$0xf]
    %s821 = scalar_lea.vmem %s3, 32
    %v822 = vld [vmem:[%s821] sm:$0xff]
    %v823 = vld [vmem:[%s821 + $0x8] sm:$0xff]
    %v824 = vld [vmem:[%s821 + $0x10] sm:$0xff]
    %v825 = vld [vmem:[%s821 + $0x18] sm:$0xf]
    %v827 = vsel %vm719, %v822, 0
    %v830 = vsel %vm719, %v823, 0
    %v833 = vsel %vm719, %v824, 0
    %v836 = vsel %vm719, %v825, 0
    %838 = vmatprep.subr.mxu0 0.0
    %839 = vmatpush1.msra.mxu0 %v708
    %840 = vmatprep.subr.mxu0 0.0
    %841 = vmatpush1.msra.mxu0 %v709
    %842 = vmatprep.subr.mxu0 0.0
    %843 = vmatpush1.msra.mxu0 %v710
    %844 = vmatprep.subr.mxu0 0.0
    %845 = vmatpush1.msra.mxu0 %v711
    %846 = vmatprep.subr.mxu0 0.0
    %847 = vmatpush1.msra.mxu0 %v712
    %848 = vmatprep.subr.mxu0 0.0
    %849 = vmatpush1.msra.mxu0 %v713
    %850 = vmatprep.subr.mxu0 0.0
    %851 = vmatpush1.msra.mxu0 %v714
    %852 = vmatprep.subr.mxu0 0.0
    %853 = vmatpush1.msra.mxu0 0.0
    %854 = vmatprep.subr.mxu0 0.0
    %855 = vmatpush1.msra.mxu0 0.0
    %856 = vmatprep.subr.mxu0 0.0
    %857 = vmatpush1.msra.mxu0 0.0
    %858 = vmatprep.subr.mxu0 0.0
    %859 = vmatpush1.msra.mxu0 0.0
    %860 = vmatprep.subr.mxu0 0.0
    %861 = vmatpush1.msra.mxu0 0.0
    %862 = vmatprep.subr.mxu0 0.0
    %863 = vmatpush1.msra.mxu0 0.0
    %864 = vmatprep.subr.mxu0 0.0
    %865 = vmatpush1.msra.mxu0 0.0
    %866 = vmatprep.subr.mxu0 0.0
    %867 = vmatpush1.msra.mxu0 0.0
    %868 = vmatprep.subr.mxu0 0.0
    %869 = vmatpush1.msra.mxu0 0.0
    %870 = vmatprep.subr.mxu0 0.0
    %871 = vmatpush1.msra.mxu0 0.0
    %872 = vmatprep.subr.mxu0 0.0
    %873 = vmatpush1.msra.mxu0 0.0
    %874 = vmatprep.subr.mxu0 0.0
    %875 = vmatpush1.msra.mxu0 0.0
    %876 = vmatprep.subr.mxu0 0.0
    %877 = vmatpush1.msra.mxu0 0.0
    %878 = vmatprep.subr.mxu0 0.0
    %879 = vmatpush1.msra.mxu0 0.0
    %880 = vmatprep.subr.mxu0 0.0
    %881 = vmatpush1.msra.mxu0 0.0
    %882 = vmatprep.subr.mxu0 0.0
    %883 = vmatpush1.msra.mxu0 0.0
    %884 = vmatprep.subr.mxu0 0.0
    %885 = vmatpush1.msra.mxu0 0.0
    %886 = vmatprep.subr.mxu0 0.0
    %887 = vmatpush1.msra.mxu0 0.0
    %888 = vmatprep.subr.mxu0 0.0
    %889 = vmatpush1.msra.mxu0 0.0
    %890 = vmatprep.subr.mxu0 0.0
    %891 = vmatpush1.msra.mxu0 0.0
    %892 = vmatprep.subr.mxu0 0.0
    %893 = vmatpush1.msra.mxu0 0.0
    %894 = vmatprep.subr.mxu0 0.0
    %895 = vmatpush1.msra.mxu0 0.0
    %896 = vmatprep.subr.mxu0 0.0
    %897 = vmatpush1.msra.mxu0 0.0
    %898 = vmatprep.subr.mxu0 0.0
    %899 = vmatpush1.msra.mxu0 0.0
    %900 = vmatprep.subr.mxu0 0.0
    %901 = vmatpush1.msra.mxu0 0.0
    %902 = vmatprep.mubr.f32.mxu0 0.0
    %903 = vmatmul.mubr.f32.gmra.mrb[0].mxu0 %v827
    %v904 = vpop.f32.mrb[0].mxu0
    %v905 = vadd.f32 0.0, %v904
    %v906 = vpop.f32.mrb[0].mxu0
    %907 = vmatprep.mubr.f32.mxu0 0.0
    %908 = vmatmul.mubr.f32.gmra.mrb[0].mxu0 %v830
    %v909 = vpop.f32.mrb[0].mxu0
    %v910 = vadd.f32 0.0, %v909
    %v911 = vpop.f32.mrb[0].mxu0
    %912 = vmatprep.mubr.f32.mxu0 0.0
    %913 = vmatmul.mubr.f32.gmra.mrb[0].mxu0 %v833
    %v914 = vpop.f32.mrb[0].mxu0
    %v915 = vadd.f32 0.0, %v914
    %v916 = vpop.f32.mrb[0].mxu0
    %917 = vmatprep.mubr.f32.mxu0 0.0
    %918 = vmatmul.mubr.f32.gmra.mrb[0].mxu0 %v836
    %v919 = vpop.f32.mrb[0].mxu0
    %v920 = vadd.f32 0.0, %v919
    %v921 = vpop.f32.mrb[0].mxu0
    %922 = vdwg.mxu0
    %s923 = scalar_lea.vmem %s5, 32
    %v924 = vld [vmem:[%s923] sm:$0xff]
    %v925 = vld [vmem:[%s923 + $0x8] sm:$0xff]
    %v926 = vld [vmem:[%s923 + $0x10] sm:$0xff]
    %v927 = vld [vmem:[%s923 + $0x18] sm:$0xf]
    %vm928 = vcmask 228352
    %v930 = vsel %vm928, %v905, 0
    %v933 = vsel %vm928, %v910, 0
    %v936 = vsel %vm928, %v915, 0
    %v939 = vsel %vm928, %v920, 0
    %vm941 = vcmask 1043456
    %v943 = vsel %vm941, %v927, 0
    %945 = vmatprep.subr.mxu0 0.0
    %946 = vmatpush1.msra.mxu0 %v924
    %947 = vmatprep.subr.mxu0 0.0
    %948 = vmatpush1.msra.mxu0 %v925
    %949 = vmatprep.subr.mxu0 0.0
    %950 = vmatpush1.msra.mxu0 %v926
    %951 = vmatprep.subr.mxu0 0.0
    %952 = vmatpush1.msra.mxu0 %v943
    %953 = vmatprep.subr.mxu0 0.0
    %954 = vmatpush1.msra.mxu0 0.0
    %955 = vmatprep.subr.mxu0 0.0
    %956 = vmatpush1.msra.mxu0 0.0
    %957 = vmatprep.subr.mxu0 0.0
    %958 = vmatpush1.msra.mxu0 0.0
    %959 = vmatprep.subr.mxu0 0.0
    %960 = vmatpush1.msra.mxu0 0.0
    %961 = vmatprep.subr.mxu0 0.0
    %962 = vmatpush1.msra.mxu0 0.0
    %963 = vmatprep.subr.mxu0 0.0
    %964 = vmatpush1.msra.mxu0 0.0
    %965 = vmatprep.subr.mxu0 0.0
    %966 = vmatpush1.msra.mxu0 0.0
    %967 = vmatprep.subr.mxu0 0.0
    %968 = vmatpush1.msra.mxu0 0.0
    %969 = vmatprep.subr.mxu0 0.0
    %970 = vmatpush1.msra.mxu0 0.0
    %971 = vmatprep.subr.mxu0 0.0
    %972 = vmatpush1.msra.mxu0 0.0
    %973 = vmatprep.subr.mxu0 0.0
    %974 = vmatpush1.msra.mxu0 0.0
    %975 = vmatprep.subr.mxu0 0.0
    %976 = vmatpush1.msra.mxu0 0.0
    %977 = vmatprep.subr.mxu0 0.0
    %978 = vmatpush1.msra.mxu0 0.0
    %979 = vmatprep.subr.mxu0 0.0
    %980 = vmatpush1.msra.mxu0 0.0
    %981 = vmatprep.subr.mxu0 0.0
    %982 = vmatpush1.msra.mxu0 0.0
    %983 = vmatprep.subr.mxu0 0.0
    %984 = vmatpush1.msra.mxu0 0.0
    %985 = vmatprep.subr.mxu0 0.0
    %986 = vmatpush1.msra.mxu0 0.0
    %987 = vmatprep.subr.mxu0 0.0
    %988 = vmatpush1.msra.mxu0 0.0
    %989 = vmatprep.subr.mxu0 0.0
    %990 = vmatpush1.msra.mxu0 0.0
    %991 = vmatprep.subr.mxu0 0.0
    %992 = vmatpush1.msra.mxu0 0.0
    %993 = vmatprep.subr.mxu0 0.0
    %994 = vmatpush1.msra.mxu0 0.0
    %995 = vmatprep.subr.mxu0 0.0
    %996 = vmatpush1.msra.mxu0 0.0
    %997 = vmatprep.subr.mxu0 0.0
    %998 = vmatpush1.msra.mxu0 0.0
    %999 = vmatprep.subr.mxu0 0.0
    %1000 = vmatpush1.msra.mxu0 0.0
    %1001 = vmatprep.subr.mxu0 0.0
    %1002 = vmatpush1.msra.mxu0 0.0
    %1003 = vmatprep.subr.mxu0 0.0
    %1004 = vmatpush1.msra.mxu0 0.0
    %1005 = vmatprep.subr.mxu0 0.0
    %1006 = vmatpush1.msra.mxu0 0.0
    %1007 = vmatprep.subr.mxu0 0.0
    %1008 = vmatpush1.msra.mxu0 0.0
    %1009 = vmatprep.mubr.f32.mxu0 0.0
    %1010 = vmatmul.mubr.f32.gmra.mrb[0].mxu0 %v930
    %v1011 = vpop.f32.mrb[0].mxu0
    %v1012 = vadd.f32 0.0, %v1011
    %v1013 = vpop.f32.mrb[0].mxu0
    %1014 = vmatprep.mubr.f32.mxu0 0.0
    %1015 = vmatmul.mubr.f32.gmra.mrb[0].mxu0 %v933
    %v1016 = vpop.f32.mrb[0].mxu0
    %v1017 = vadd.f32 0.0, %v1016
    %v1018 = vpop.f32.mrb[0].mxu0
    %1019 = vmatprep.mubr.f32.mxu0 0.0
    %1020 = vmatmul.mubr.f32.gmra.mrb[0].mxu0 %v936
    %v1021 = vpop.f32.mrb[0].mxu0
    %v1022 = vadd.f32 0.0, %v1021
    %v1023 = vpop.f32.mrb[0].mxu0
    %1024 = vmatprep.mubr.f32.mxu0 0.0
    %1025 = vmatmul.mubr.f32.gmra.mrb[0].mxu0 %v939
    %v1026 = vpop.f32.mrb[0].mxu0
    %v1027 = vadd.f32 0.0, %v1026
    %v1028 = vpop.f32.mrb[0].mxu0
    %1029 = vdwg.mxu0
    %v1031 = vsel %vm928, %v799, 0
    %v1034 = vsel %vm928, %v804, 0
    %v1037 = vsel %vm928, %v809, 0
    %v1040 = vsel %vm928, %v814, 0
    %v1043 = vsel %vm941, %v820, 0
    %1045 = vmatprep.subr.mxu0 0.0
    %1046 = vmatpush1.msra.mxu0 %v817
    %1047 = vmatprep.subr.mxu0 0.0
    %1048 = vmatpush1.msra.mxu0 %v818
    %1049 = vmatprep.subr.mxu0 0.0
    %1050 = vmatpush1.msra.mxu0 %v819
    %1051 = vmatprep.subr.mxu0 0.0
    %1052 = vmatpush1.msra.mxu0 %v1043
    %1053 = vmatprep.subr.mxu0 0.0
    %1054 = vmatpush1.msra.mxu0 0.0
    %1055 = vmatprep.subr.mxu0 0.0
    %1056 = vmatpush1.msra.mxu0 0.0
    %1057 = vmatprep.subr.mxu0 0.0
    %1058 = vmatpush1.msra.mxu0 0.0
    %1059 = vmatprep.subr.mxu0 0.0
    %1060 = vmatpush1.msra.mxu0 0.0
    %1061 = vmatprep.subr.mxu0 0.0
    %1062 = vmatpush1.msra.mxu0 0.0
    %1063 = vmatprep.subr.mxu0 0.0
    %1064 = vmatpush1.msra.mxu0 0.0
    %1065 = vmatprep.subr.mxu0 0.0
    %1066 = vmatpush1.msra.mxu0 0.0
    %1067 = vmatprep.subr.mxu0 0.0
    %1068 = vmatpush1.msra.mxu0 0.0
    %1069 = vmatprep.subr.mxu0 0.0
    %1070 = vmatpush1.msra.mxu0 0.0
    %1071 = vmatprep.subr.mxu0 0.0
    %1072 = vmatpush1.msra.mxu0 0.0
    %1073 = vmatprep.subr.mxu0 0.0
    %1074 = vmatpush1.msra.mxu0 0.0
    %1075 = vmatprep.subr.mxu0 0.0
    %1076 = vmatpush1.msra.mxu0 0.0
    %1077 = vmatprep.subr.mxu0 0.0
    %1078 = vmatpush1.msra.mxu0 0.0
    %1079 = vmatprep.subr.mxu0 0.0
    %1080 = vmatpush1.msra.mxu0 0.0
    %1081 = vmatprep.subr.mxu0 0.0
    %1082 = vmatpush1.msra.mxu0 0.0
    %1083 = vmatprep.subr.mxu0 0.0
    %1084 = vmatpush1.msra.mxu0 0.0
    %1085 = vmatprep.subr.mxu0 0.0
    %1086 = vmatpush1.msra.mxu0 0.0
    %1087 = vmatprep.subr.mxu0 0.0
    %1088 = vmatpush1.msra.mxu0 0.0
    %1089 = vmatprep.subr.mxu0 0.0
    %1090 = vmatpush1.msra.mxu0 0.0
    %1091 = vmatprep.subr.mxu0 0.0
    %1092 = vmatpush1.msra.mxu0 0.0
    %1093 = vmatprep.subr.mxu0 0.0
    %1094 = vmatpush1.msra.mxu0 0.0
    %1095 = vmatprep.subr.mxu0 0.0
    %1096 = vmatpush1.msra.mxu0 0.0
    %1097 = vmatprep.subr.mxu0 0.0
    %1098 = vmatpush1.msra.mxu0 0.0
    %1099 = vmatprep.subr.mxu0 0.0
    %1100 = vmatpush1.msra.mxu0 0.0
    %1101 = vmatprep.subr.mxu0 0.0
    %1102 = vmatpush1.msra.mxu0 0.0
    %1103 = vmatprep.subr.mxu0 0.0
    %1104 = vmatpush1.msra.mxu0 0.0
    %1105 = vmatprep.subr.mxu0 0.0
    %1106 = vmatpush1.msra.mxu0 0.0
    %1107 = vmatprep.subr.mxu0 0.0
    %1108 = vmatpush1.msra.mxu0 0.0
    %1109 = vmatprep.mubr.f32.mxu0 0.0
    %1110 = vmatmul.mubr.f32.gmra.mrb[0].mxu0 %v1031
    %v1111 = vpop.f32.mrb[0].mxu0
    %v1112 = vadd.f32 %v1012, %v1111
    %v1113 = vpop.f32.mrb[0].mxu0
    %1114 = vmatprep.mubr.f32.mxu0 0.0
    %1115 = vmatmul.mubr.f32.gmra.mrb[0].mxu0 %v1034
    %v1116 = vpop.f32.mrb[0].mxu0
    %v1117 = vadd.f32 %v1017, %v1116
    %v1118 = vpop.f32.mrb[0].mxu0
    %1119 = vmatprep.mubr.f32.mxu0 0.0
    %1120 = vmatmul.mubr.f32.gmra.mrb[0].mxu0 %v1037
    %v1121 = vpop.f32.mrb[0].mxu0
    %v1122 = vadd.f32 %v1022, %v1121
    %v1123 = vpop.f32.mrb[0].mxu0
    %1124 = vmatprep.mubr.f32.mxu0 0.0
    %1125 = vmatmul.mubr.f32.gmra.mrb[0].mxu0 %v1040
    %v1126 = vpop.f32.mrb[0].mxu0
    %v1127 = vadd.f32 %v1027, %v1126
    %v1128 = vpop.f32.mrb[0].mxu0
    %1129 = vdwg.mxu0
    %s1130 = scalar_lea.vmem %s3, 64
    %v1131 = vld [vmem:[%s1130] sm:$0xff]
    %v1132 = vld [vmem:[%s1130 + $0x8] sm:$0xff]
    %v1133 = vld [vmem:[%s1130 + $0x10] sm:$0xff]
    %v1134 = vld [vmem:[%s1130 + $0x18] sm:$0xf]
    %v1136 = vsel %vm719, %v1131, 0
    %v1139 = vsel %vm719, %v1132, 0
    %v1142 = vsel %vm719, %v1133, 0
    %v1145 = vsel %vm719, %v1134, 0
    %1147 = vmatprep.subr.mxu0 0.0
    %1148 = vmatpush1.msra.mxu0 %v708
    %1149 = vmatprep.subr.mxu0 0.0
    %1150 = vmatpush1.msra.mxu0 %v709
    %1151 = vmatprep.subr.mxu0 0.0
    %1152 = vmatpush1.msra.mxu0 %v710
    %1153 = vmatprep.subr.mxu0 0.0
    %1154 = vmatpush1.msra.mxu0 %v711
    %1155 = vmatprep.subr.mxu0 0.0
    %1156 = vmatpush1.msra.mxu0 %v712
    %1157 = vmatprep.subr.mxu0 0.0
    %1158 = vmatpush1.msra.mxu0 %v713
    %1159 = vmatprep.subr.mxu0 0.0
    %1160 = vmatpush1.msra.mxu0 %v714
    %1161 = vmatprep.subr.mxu0 0.0
    %1162 = vmatpush1.msra.mxu0 0.0
    %1163 = vmatprep.subr.mxu0 0.0
    %1164 = vmatpush1.msra.mxu0 0.0
    %1165 = vmatprep.subr.mxu0 0.0
    %1166 = vmatpush1.msra.mxu0 0.0
    %1167 = vmatprep.subr.mxu0 0.0
    %1168 = vmatpush1.msra.mxu0 0.0
    %1169 = vmatprep.subr.mxu0 0.0
    %1170 = vmatpush1.msra.mxu0 0.0
    %1171 = vmatprep.subr.mxu0 0.0
    %1172 = vmatpush1.msra.mxu0 0.0
    %1173 = vmatprep.subr.mxu0 0.0
    %1174 = vmatpush1.msra.mxu0 0.0
    %1175 = vmatprep.subr.mxu0 0.0
    %1176 = vmatpush1.msra.mxu0 0.0
    %1177 = vmatprep.subr.mxu0 0.0
    %1178 = vmatpush1.msra.mxu0 0.0
    %1179 = vmatprep.subr.mxu0 0.0
    %1180 = vmatpush1.msra.mxu0 0.0
    %1181 = vmatprep.subr.mxu0 0.0
    %1182 = vmatpush1.msra.mxu0 0.0
    %1183 = vmatprep.subr.mxu0 0.0
    %1184 = vmatpush1.msra.mxu0 0.0
    %1185 = vmatprep.subr.mxu0 0.0
    %1186 = vmatpush1.msra.mxu0 0.0
    %1187 = vmatprep.subr.mxu0 0.0
    %1188 = vmatpush1.msra.mxu0 0.0
    %1189 = vmatprep.subr.mxu0 0.0
    %1190 = vmatpush1.msra.mxu0 0.0
    %1191 = vmatprep.subr.mxu0 0.0
    %1192 = vmatpush1.msra.mxu0 0.0
    %1193 = vmatprep.subr.mxu0 0.0
    %1194 = vmatpush1.msra.mxu0 0.0
    %1195 = vmatprep.subr.mxu0 0.0
    %1196 = vmatpush1.msra.mxu0 0.0
    %1197 = vmatprep.subr.mxu0 0.0
    %1198 = vmatpush1.msra.mxu0 0.0
    %1199 = vmatprep.subr.mxu0 0.0
    %1200 = vmatpush1.msra.mxu0 0.0
    %1201 = vmatprep.subr.mxu0 0.0
    %1202 = vmatpush1.msra.mxu0 0.0
    %1203 = vmatprep.subr.mxu0 0.0
    %1204 = vmatpush1.msra.mxu0 0.0
    %1205 = vmatprep.subr.mxu0 0.0
    %1206 = vmatpush1.msra.mxu0 0.0
    %1207 = vmatprep.subr.mxu0 0.0
    %1208 = vmatpush1.msra.mxu0 0.0
    %1209 = vmatprep.subr.mxu0 0.0
    %1210 = vmatpush1.msra.mxu0 0.0
    %1211 = vmatprep.mubr.f32.mxu0 0.0
    %1212 = vmatmul.mubr.f32.gmra.mrb[0].mxu0 %v1136
    %v1213 = vpop.f32.mrb[0].mxu0
    %v1214 = vadd.f32 0.0, %v1213
    %v1215 = vpop.f32.mrb[0].mxu0
    %1216 = vmatprep.mubr.f32.mxu0 0.0
    %1217 = vmatmul.mubr.f32.gmra.mrb[0].mxu0 %v1139
    %v1218 = vpop.f32.mrb[0].mxu0
    %v1219 = vadd.f32 0.0, %v1218
    %v1220 = vpop.f32.mrb[0].mxu0
    %1221 = vmatprep.mubr.f32.mxu0 0.0
    %1222 = vmatmul.mubr.f32.gmra.mrb[0].mxu0 %v1142
    %v1223 = vpop.f32.mrb[0].mxu0
    %v1224 = vadd.f32 0.0, %v1223
    %v1225 = vpop.f32.mrb[0].mxu0
    %1226 = vmatprep.mubr.f32.mxu0 0.0
    %1227 = vmatmul.mubr.f32.gmra.mrb[0].mxu0 %v1145
    %v1228 = vpop.f32.mrb[0].mxu0
    %v1229 = vadd.f32 0.0, %v1228
    %v1230 = vpop.f32.mrb[0].mxu0
    %1231 = vdwg.mxu0
    %s1232 = scalar_lea.vmem %s5, 64
    %v1233 = vld [vmem:[%s1232] sm:$0xff]
    %v1234 = vld [vmem:[%s1232 + $0x8] sm:$0xff]
    %v1235 = vld [vmem:[%s1232 + $0x10] sm:$0xff]
    %v1236 = vld [vmem:[%s1232 + $0x18] sm:$0xf]
    %v1238 = vsel %vm928, %v1214, 0
    %v1241 = vsel %vm928, %v1219, 0
    %v1244 = vsel %vm928, %v1224, 0
    %v1247 = vsel %vm928, %v1229, 0
    %v1250 = vsel %vm941, %v1236, 0
    %1252 = vmatprep.subr.mxu0 0.0
    %1253 = vmatpush1.msra.mxu0 %v1233
    %1254 = vmatprep.subr.mxu0 0.0
    %1255 = vmatpush1.msra.mxu0 %v1234
    %1256 = vmatprep.subr.mxu0 0.0
    %1257 = vmatpush1.msra.mxu0 %v1235
    %1258 = vmatprep.subr.mxu0 0.0
    %1259 = vmatpush1.msra.mxu0 %v1250
    %1260 = vmatprep.subr.mxu0 0.0
    %1261 = vmatpush1.msra.mxu0 0.0
    %1262 = vmatprep.subr.mxu0 0.0
    %1263 = vmatpush1.msra.mxu0 0.0
    %1264 = vmatprep.subr.mxu0 0.0
    %1265 = vmatpush1.msra.mxu0 0.0
    %1266 = vmatprep.subr.mxu0 0.0
    %1267 = vmatpush1.msra.mxu0 0.0
    %1268 = vmatprep.subr.mxu0 0.0
    %1269 = vmatpush1.msra.mxu0 0.0
    %1270 = vmatprep.subr.mxu0 0.0
    %1271 = vmatpush1.msra.mxu0 0.0
    %1272 = vmatprep.subr.mxu0 0.0
    %1273 = vmatpush1.msra.mxu0 0.0
    %1274 = vmatprep.subr.mxu0 0.0
    %1275 = vmatpush1.msra.mxu0 0.0
    %1276 = vmatprep.subr.mxu0 0.0
    %1277 = vmatpush1.msra.mxu0 0.0
    %1278 = vmatprep.subr.mxu0 0.0
    %1279 = vmatpush1.msra.mxu0 0.0
    %1280 = vmatprep.subr.mxu0 0.0
    %1281 = vmatpush1.msra.mxu0 0.0
    %1282 = vmatprep.subr.mxu0 0.0
    %1283 = vmatpush1.msra.mxu0 0.0
    %1284 = vmatprep.subr.mxu0 0.0
    %1285 = vmatpush1.msra.mxu0 0.0
    %1286 = vmatprep.subr.mxu0 0.0
    %1287 = vmatpush1.msra.mxu0 0.0
    %1288 = vmatprep.subr.mxu0 0.0
    %1289 = vmatpush1.msra.mxu0 0.0
    %1290 = vmatprep.subr.mxu0 0.0
    %1291 = vmatpush1.msra.mxu0 0.0
    %1292 = vmatprep.subr.mxu0 0.0
    %1293 = vmatpush1.msra.mxu0 0.0
    %1294 = vmatprep.subr.mxu0 0.0
    %1295 = vmatpush1.msra.mxu0 0.0
    %1296 = vmatprep.subr.mxu0 0.0
    %1297 = vmatpush1.msra.mxu0 0.0
    %1298 = vmatprep.subr.mxu0 0.0
    %1299 = vmatpush1.msra.mxu0 0.0
    %1300 = vmatprep.subr.mxu0 0.0
    %1301 = vmatpush1.msra.mxu0 0.0
    %1302 = vmatprep.subr.mxu0 0.0
    %1303 = vmatpush1.msra.mxu0 0.0
    %1304 = vmatprep.subr.mxu0 0.0
    %1305 = vmatpush1.msra.mxu0 0.0
    %1306 = vmatprep.subr.mxu0 0.0
    %1307 = vmatpush1.msra.mxu0 0.0
    %1308 = vmatprep.subr.mxu0 0.0
    %1309 = vmatpush1.msra.mxu0 0.0
    %1310 = vmatprep.subr.mxu0 0.0
    %1311 = vmatpush1.msra.mxu0 0.0
    %1312 = vmatprep.subr.mxu0 0.0
    %1313 = vmatpush1.msra.mxu0 0.0
    %1314 = vmatprep.subr.mxu0 0.0
    %1315 = vmatpush1.msra.mxu0 0.0
    %1316 = vmatprep.mubr.f32.mxu0 0.0
    %1317 = vmatmul.mubr.f32.gmra.mrb[0].mxu0 %v1238
    %v1318 = vpop.f32.mrb[0].mxu0
    %v1319 = vadd.f32 0.0, %v1318
    %v1320 = vpop.f32.mrb[0].mxu0
    %1321 = vmatprep.mubr.f32.mxu0 0.0
    %1322 = vmatmul.mubr.f32.gmra.mrb[0].mxu0 %v1241
    %v1323 = vpop.f32.mrb[0].mxu0
    %v1324 = vadd.f32 0.0, %v1323
    %v1325 = vpop.f32.mrb[0].mxu0
    %1326 = vmatprep.mubr.f32.mxu0 0.0
    %1327 = vmatmul.mubr.f32.gmra.mrb[0].mxu0 %v1244
    %v1328 = vpop.f32.mrb[0].mxu0
    %v1329 = vadd.f32 0.0, %v1328
    %v1330 = vpop.f32.mrb[0].mxu0
    %1331 = vmatprep.mubr.f32.mxu0 0.0
    %1332 = vmatmul.mubr.f32.gmra.mrb[0].mxu0 %v1247
    %v1333 = vpop.f32.mrb[0].mxu0
    %v1334 = vadd.f32 0.0, %v1333
    %v1335 = vpop.f32.mrb[0].mxu0
    %1336 = vdwg.mxu0
    %v1337 = vadd.f32 %v1112, %v1319
    %v1338 = vadd.f32 %v1117, %v1324
    %v1339 = vadd.f32 %v1122, %v1329
    %v1340 = vadd.f32 %v1127, %v1334
    %v1341 = vld [vmem:[#allocation5] sm:$0x1]
    %v1343 = vlaneseq
    %v1344 = vshrl.u32 %v1343, 7
    %v1345 = vsub.s32 0, %v1344
    %v1346 = vrot.slane %v1341, %v1345
    %v1348 = vadd.f32 %v1337, %v1346
    %v1349 = vadd.f32 %v1338, %v1346
    %v1350 = vadd.f32 %v1339, %v1346
    %v1351 = vadd.f32 %v1340, %v1346
    %vm1352 = vcmask 343040
    %v1353 = vsel %vm1352, %v1348, 0.0
    %v1354 = vsel %vm1352, %v1349, 0.0
    %v1355 = vadd.f32 %v1353, %v1354
    %v1356 = vsel %vm1352, %v1350, 0.0
    %v1357 = vadd.f32 %v1355, %v1356
    %vm1358 = vcmask 338944
    %v1359 = vsel %vm1358, %v1351, 0.0
    %v1360 = vadd.f32 %v1357, %v1359
    %v1361 = vrot.slane %v1360, 4
    %v1362 = vadd.f32 %v1360, %v1361
    %v1363 = vrot.slane %v1362, 2
    %v1364 = vadd.f32 %v1362, %v1363
    %v1365 = vrot.slane %v1364, 1
    %v1366 = vadd.f32 %v1364, %v1365
    %v1367 = vld [vmem:[#allocation7] sm:$0xff]
    %v1368 = vld [vmem:[#allocation7 + $0x8] sm:$0xff]
    %v1369 = vld [vmem:[#allocation7 + $0x10] sm:$0xff]
    %v1370 = vld [vmem:[#allocation7 + $0x18] sm:$0xff]
    %v1371 = vld [vmem:[#allocation7 + $0x20] sm:$0xff]
    %v1372 = vld [vmem:[#allocation7 + $0x28] sm:$0x3]
    %v1374 = vsel %vm1352, %v1366, 0
    %vm1376 = vcmask 1041408
    %v1378 = vsel %vm1376, %v1372, 0
    %1380 = vmatprep.subr.mxu0 0.0
    %1381 = vmatpush1.msra.mxu0 %v1367
    %1382 = vmatprep.subr.mxu0 0.0
    %1383 = vmatpush1.msra.mxu0 %v1368
    %1384 = vmatprep.subr.mxu0 0.0
    %1385 = vmatpush1.msra.mxu0 %v1369
    %1386 = vmatprep.subr.mxu0 0.0
    %1387 = vmatpush1.msra.mxu0 %v1370
    %1388 = vmatprep.subr.mxu0 0.0
    %1389 = vmatpush1.msra.mxu0 %v1371
    %1390 = vmatprep.subr.mxu0 0.0
    %1391 = vmatpush1.msra.mxu0 %v1378
    %1392 = vmatprep.subr.mxu0 0.0
    %1393 = vmatpush1.msra.mxu0 0.0
    %1394 = vmatprep.subr.mxu0 0.0
    %1395 = vmatpush1.msra.mxu0 0.0
    %1396 = vmatprep.subr.mxu0 0.0
    %1397 = vmatpush1.msra.mxu0 0.0
    %1398 = vmatprep.subr.mxu0 0.0
    %1399 = vmatpush1.msra.mxu0 0.0
    %1400 = vmatprep.subr.mxu0 0.0
    %1401 = vmatpush1.msra.mxu0 0.0
    %1402 = vmatprep.subr.mxu0 0.0
    %1403 = vmatpush1.msra.mxu0 0.0
    %1404 = vmatprep.subr.mxu0 0.0
    %1405 = vmatpush1.msra.mxu0 0.0
    %1406 = vmatprep.subr.mxu0 0.0
    %1407 = vmatpush1.msra.mxu0 0.0
    %1408 = vmatprep.subr.mxu0 0.0
    %1409 = vmatpush1.msra.mxu0 0.0
    %1410 = vmatprep.subr.mxu0 0.0
    %1411 = vmatpush1.msra.mxu0 0.0
    %1412 = vmatprep.subr.mxu0 0.0
    %1413 = vmatpush1.msra.mxu0 0.0
    %1414 = vmatprep.subr.mxu0 0.0
    %1415 = vmatpush1.msra.mxu0 0.0
    %1416 = vmatprep.subr.mxu0 0.0
    %1417 = vmatpush1.msra.mxu0 0.0
    %1418 = vmatprep.subr.mxu0 0.0
    %1419 = vmatpush1.msra.mxu0 0.0
    %1420 = vmatprep.subr.mxu0 0.0
    %1421 = vmatpush1.msra.mxu0 0.0
    %1422 = vmatprep.subr.mxu0 0.0
    %1423 = vmatpush1.msra.mxu0 0.0
    %1424 = vmatprep.subr.mxu0 0.0
    %1425 = vmatpush1.msra.mxu0 0.0
    %1426 = vmatprep.subr.mxu0 0.0
    %1427 = vmatpush1.msra.mxu0 0.0
    %1428 = vmatprep.subr.mxu0 0.0
    %1429 = vmatpush1.msra.mxu0 0.0
    %1430 = vmatprep.subr.mxu0 0.0
    %1431 = vmatpush1.msra.mxu0 0.0
    %1432 = vmatprep.subr.mxu0 0.0
    %1433 = vmatpush1.msra.mxu0 0.0
    %1434 = vmatprep.subr.mxu0 0.0
    %1435 = vmatpush1.msra.mxu0 0.0
    %1436 = vmatprep.subr.mxu0 0.0
    %1437 = vmatpush1.msra.mxu0 0.0
    %1438 = vmatprep.subr.mxu0 0.0
    %1439 = vmatpush1.msra.mxu0 0.0
    %1440 = vmatprep.subr.mxu0 0.0
    %1441 = vmatpush1.msra.mxu0 0.0
    %1442 = vmatprep.subr.mxu0 0.0
    %1443 = vmatpush1.msra.mxu0 0.0
    %1444 = vmatprep.mubr.f32.mxu0 0.0
    %1445 = vmatmul.mubr.f32.gmra.mrb[0].mxu0 %v1374
    %v1446 = vpop.f32.mrb[0].mxu0
    %v1447 = vadd.f32 0.0, %v1446
    %v1448 = vpop.f32.mrb[0].mxu0
    %1449 = vdwg.mxu0
    %v1450 = vlaneseq
    %v1451 = vshrl.u32 %v1450, 7
    %v1452 = vsub.s32 0, %v1451
    %v1453 = vrot.slane %v1447, %v1452
    %v1454 = vsub.f32 %v1348, %v1453
    %v1455 = vsub.f32 %v1349, %v1453
    %v1456 = vsub.f32 %v1350, %v1453
    %v1457 = vsub.f32 %v1351, %v1453
    %v1458 = vmul.f32 %v1454, %v1454
    %v1459 = vmul.f32 %v1455, %v1455
    %v1460 = vmul.f32 %v1456, %v1456
    %v1461 = vmul.f32 %v1457, %v1457
    %v1462 = vsel %vm1352, %v1458, 0.0
    %v1463 = vsel %vm1352, %v1459, 0.0
    %v1464 = vadd.f32 %v1462, %v1463
    %v1465 = vsel %vm1352, %v1460, 0.0
    %v1466 = vadd.f32 %v1464, %v1465
    %v1467 = vsel %vm1358, %v1461, 0.0
    %v1468 = vadd.f32 %v1466, %v1467
    %v1469 = vrot.slane %v1468, 4
    %v1470 = vadd.f32 %v1468, %v1469
    %v1471 = vrot.slane %v1470, 2
    %v1472 = vadd.f32 %v1470, %v1471
    %v1473 = vrot.slane %v1472, 1
    %v1474 = vadd.f32 %v1472, %v1473
    %v1476 = vsel %vm1352, %v1474, 0
    %1478 = vmatprep.subr.mxu0 0.0
    %1479 = vmatpush1.msra.mxu0 %v1367
    %1480 = vmatprep.subr.mxu0 0.0
    %1481 = vmatpush1.msra.mxu0 %v1368
    %1482 = vmatprep.subr.mxu0 0.0
    %1483 = vmatpush1.msra.mxu0 %v1369
    %1484 = vmatprep.subr.mxu0 0.0
    %1485 = vmatpush1.msra.mxu0 %v1370
    %1486 = vmatprep.subr.mxu0 0.0
    %1487 = vmatpush1.msra.mxu0 %v1371
    %1488 = vmatprep.subr.mxu0 0.0
    %1489 = vmatpush1.msra.mxu0 %v1378
    %1490 = vmatprep.subr.mxu0 0.0
    %1491 = vmatpush1.msra.mxu0 0.0
    %1492 = vmatprep.subr.mxu0 0.0
    %1493 = vmatpush1.msra.mxu0 0.0
    %1494 = vmatprep.subr.mxu0 0.0
    %1495 = vmatpush1.msra.mxu0 0.0
    %1496 = vmatprep.subr.mxu0 0.0
    %1497 = vmatpush1.msra.mxu0 0.0
    %1498 = vmatprep.subr.mxu0 0.0
    %1499 = vmatpush1.msra.mxu0 0.0
    %1500 = vmatprep.subr.mxu0 0.0
    %1501 = vmatpush1.msra.mxu0 0.0
    %1502 = vmatprep.subr.mxu0 0.0
    %1503 = vmatpush1.msra.mxu0 0.0
    %1504 = vmatprep.subr.mxu0 0.0
    %1505 = vmatpush1.msra.mxu0 0.0
    %1506 = vmatprep.subr.mxu0 0.0
    %1507 = vmatpush1.msra.mxu0 0.0
    %1508 = vmatprep.subr.mxu0 0.0
    %1509 = vmatpush1.msra.mxu0 0.0
    %1510 = vmatprep.subr.mxu0 0.0
    %1511 = vmatpush1.msra.mxu0 0.0
    %1512 = vmatprep.subr.mxu0 0.0
    %1513 = vmatpush1.msra.mxu0 0.0
    %1514 = vmatprep.subr.mxu0 0.0
    %1515 = vmatpush1.msra.mxu0 0.0
    %1516 = vmatprep.subr.mxu0 0.0
    %1517 = vmatpush1.msra.mxu0 0.0
    %1518 = vmatprep.subr.mxu0 0.0
    %1519 = vmatpush1.msra.mxu0 0.0
    %1520 = vmatprep.subr.mxu0 0.0
    %1521 = vmatpush1.msra.mxu0 0.0
    %1522 = vmatprep.subr.mxu0 0.0
    %1523 = vmatpush1.msra.mxu0 0.0
    %1524 = vmatprep.subr.mxu0 0.0
    %1525 = vmatpush1.msra.mxu0 0.0
    %1526 = vmatprep.subr.mxu0 0.0
    %1527 = vmatpush1.msra.mxu0 0.0
    %1528 = vmatprep.subr.mxu0 0.0
    %1529 = vmatpush1.msra.mxu0 0.0
    %1530 = vmatprep.subr.mxu0 0.0
    %1531 = vmatpush1.msra.mxu0 0.0
    %1532 = vmatprep.subr.mxu0 0.0
    %1533 = vmatpush1.msra.mxu0 0.0
    %1534 = vmatprep.subr.mxu0 0.0
    %1535 = vmatpush1.msra.mxu0 0.0
    %1536 = vmatprep.subr.mxu0 0.0
    %1537 = vmatpush1.msra.mxu0 0.0
    %1538 = vmatprep.subr.mxu0 0.0
    %1539 = vmatpush1.msra.mxu0 0.0
    %1540 = vmatprep.subr.mxu0 0.0
    %1541 = vmatpush1.msra.mxu0 0.0
    %1542 = vmatprep.mubr.f32.mxu0 0.0
    %1543 = vmatmul.mubr.f32.gmra.mrb[0].mxu0 %v1476
    %v1544 = vpop.f32.mrb[0].mxu0
    %v1545 = vadd.f32 1e-05, %v1544
    %v1546 = vpop.f32.mrb[0].mxu0
    %1547 = vdwg.mxu0
    %v1548 = vrsqrt.pop %v1545
    %v1549 = vlaneseq
    %v1550 = vshrl.u32 %v1549, 7
    %v1551 = vsub.s32 0, %v1550
    %v1552 = vrot.slane %v1548, %v1551
    %v1553 = vmul.f32 %v1454, %v1552
    %v1554 = vmul.f32 %v1455, %v1552
    %v1555 = vmul.f32 %v1456, %v1552
    %v1556 = vmul.f32 %v1457, %v1552
    %v1557 = vld [vmem:[#allocation8] sm:$0x1]
    %v1559 = vlaneseq
    %v1560 = vshrl.u32 %v1559, 7
    %v1561 = vsub.s32 0, %v1560
    %v1562 = vrot.slane %v1557, %v1561
    %v1564 = vmul.f32 %v1553, %v1562
    %v1565 = vmul.f32 %v1554, %v1562
    %v1566 = vmul.f32 %v1555, %v1562
    %v1567 = vmul.f32 %v1556, %v1562
    %v1568 = vld [vmem:[#allocation10] sm:$0x1]
    %v1570 = vlaneseq
    %v1571 = vshrl.u32 %v1570, 7
    %v1572 = vsub.s32 0, %v1571
    %v1573 = vrot.slane %v1568, %v1572
    %v1575 = vadd.f32 %v1564, %v1573
    %v1576 = vadd.f32 %v1565, %v1573
    %v1577 = vadd.f32 %v1566, %v1573
    %v1578 = vadd.f32 %v1567, %v1573
    %v1579 = vmax.f32 %v1575, 0.0
    %v1580 = vmax.f32 %v1576, 0.0
    %v1581 = vmax.f32 %v1577, 0.0
    %v1582 = vmax.f32 %v1578, 0.0
    %v1583 = vld [vmem:[#allocation11] sm:$0xff]
    %v1584 = vld [vmem:[#allocation11 + $0x8] sm:$0x3f]
    %v1586 = vsel %vm928, %v1583, 0
    %v1589 = vsel %vm928, %v1584, 0
    %v1592 = vsel %vm941, %v1582, 0
    %1594 = vmatprep.subr.mxu0 0.0
    %1595 = vmatpush1.msra.mxu0 %v1579
    %1596 = vmatprep.subr.mxu0 0.0
    %1597 = vmatpush1.msra.mxu0 %v1580
    %1598 = vmatprep.subr.mxu0 0.0
    %1599 = vmatpush1.msra.mxu0 %v1581
    %1600 = vmatprep.subr.mxu0 0.0
    %1601 = vmatpush1.msra.mxu0 %v1592
    %1602 = vmatprep.subr.mxu0 0.0
    %1603 = vmatpush1.msra.mxu0 0.0
    %1604 = vmatprep.subr.mxu0 0.0
    %1605 = vmatpush1.msra.mxu0 0.0
    %1606 = vmatprep.subr.mxu0 0.0
    %1607 = vmatpush1.msra.mxu0 0.0
    %1608 = vmatprep.subr.mxu0 0.0
    %1609 = vmatpush1.msra.mxu0 0.0
    %1610 = vmatprep.subr.mxu0 0.0
    %1611 = vmatpush1.msra.mxu0 0.0
    %1612 = vmatprep.subr.mxu0 0.0
    %1613 = vmatpush1.msra.mxu0 0.0
    %1614 = vmatprep.subr.mxu0 0.0
    %1615 = vmatpush1.msra.mxu0 0.0
    %1616 = vmatprep.subr.mxu0 0.0
    %1617 = vmatpush1.msra.mxu0 0.0
    %1618 = vmatprep.subr.mxu0 0.0
    %1619 = vmatpush1.msra.mxu0 0.0
    %1620 = vmatprep.subr.mxu0 0.0
    %1621 = vmatpush1.msra.mxu0 0.0
    %1622 = vmatprep.subr.mxu0 0.0
    %1623 = vmatpush1.msra.mxu0 0.0
    %1624 = vmatprep.subr.mxu0 0.0
    %1625 = vmatpush1.msra.mxu0 0.0
    %1626 = vmatprep.subr.mxu0 0.0
    %1627 = vmatpush1.msra.mxu0 0.0
    %1628 = vmatprep.subr.mxu0 0.0
    %1629 = vmatpush1.msra.mxu0 0.0
    %1630 = vmatprep.subr.mxu0 0.0
    %1631 = vmatpush1.msra.mxu0 0.0
    %1632 = vmatprep.subr.mxu0 0.0
    %1633 = vmatpush1.msra.mxu0 0.0
    %1634 = vmatprep.subr.mxu0 0.0
    %1635 = vmatpush1.msra.mxu0 0.0
    %1636 = vmatprep.subr.mxu0 0.0
    %1637 = vmatpush1.msra.mxu0 0.0
    %1638 = vmatprep.subr.mxu0 0.0
    %1639 = vmatpush1.msra.mxu0 0.0
    %1640 = vmatprep.subr.mxu0 0.0
    %1641 = vmatpush1.msra.mxu0 0.0
    %1642 = vmatprep.subr.mxu0 0.0
    %1643 = vmatpush1.msra.mxu0 0.0
    %1644 = vmatprep.subr.mxu0 0.0
    %1645 = vmatpush1.msra.mxu0 0.0
    %1646 = vmatprep.subr.mxu0 0.0
    %1647 = vmatpush1.msra.mxu0 0.0
    %1648 = vmatprep.subr.mxu0 0.0
    %1649 = vmatpush1.msra.mxu0 0.0
    %1650 = vmatprep.subr.mxu0 0.0
    %1651 = vmatpush1.msra.mxu0 0.0
    %1652 = vmatprep.subr.mxu0 0.0
    %1653 = vmatpush1.msra.mxu0 0.0
    %1654 = vmatprep.subr.mxu0 0.0
    %1655 = vmatpush1.msra.mxu0 0.0
    %1656 = vmatprep.subr.mxu0 0.0
    %1657 = vmatpush1.msra.mxu0 0.0
    %1658 = vmatprep.mubr.f32.mxu0 0.0
    %1659 = vmatmul.mubr.f32.gmra.mrb[0].mxu0 %v1586
    %v1660 = vpop.f32.mrb[0].mxu0
    %v1661 = vadd.f32 0.0, %v1660
    %v1662 = vpop.f32.mrb[0].mxu0
    %1663 = vmatprep.mubr.f32.mxu0 0.0
    %1664 = vmatmul.mubr.f32.gmra.mrb[0].mxu0 %v1589
    %v1665 = vpop.f32.mrb[0].mxu0
    %v1666 = vadd.f32 0.0, %v1665
    %v1667 = vpop.f32.mrb[0].mxu0
    %1668 = vdwg.mxu0
    %v1669 = vld [vmem:[%s17] sm:$0xff]
    %v1670 = vld [vmem:[%s17 + $0x8] sm:$0xff]
    %v1671 = vld [vmem:[%s17 + $0x10] sm:$0xff]
    %v1672 = vld [vmem:[%s17 + $0x18] sm:$0xff]
    %v1673 = vld [vmem:[%s17 + $0x20] sm:$0xff]
    %v1674 = vld [vmem:[%s17 + $0x28] sm:$0x3]
    %s1675 = scalar_lea.vmem [#allocation11], 16
    %v1676 = vld [vmem:[%s1675] sm:$0xff]
    %v1677 = vld [vmem:[%s1675 + $0x8] sm:$0x3f]
    %v1679 = vsel %vm928, %v1676, 0
    %v1682 = vsel %vm928, %v1677, 0
    %1684 = vmatprep.subr.mxu0 0.0
    %1685 = vmatpush1.msra.mxu0 %v1579
    %1686 = vmatprep.subr.mxu0 0.0
    %1687 = vmatpush1.msra.mxu0 %v1580
    %1688 = vmatprep.subr.mxu0 0.0
    %1689 = vmatpush1.msra.mxu0 %v1581
    %1690 = vmatprep.subr.mxu0 0.0
    %1691 = vmatpush1.msra.mxu0 %v1592
    %1692 = vmatprep.subr.mxu0 0.0
    %1693 = vmatpush1.msra.mxu0 0.0
    %1694 = vmatprep.subr.mxu0 0.0
    %1695 = vmatpush1.msra.mxu0 0.0
    %1696 = vmatprep.subr.mxu0 0.0
    %1697 = vmatpush1.msra.mxu0 0.0
    %1698 = vmatprep.subr.mxu0 0.0
    %1699 = vmatpush1.msra.mxu0 0.0
    %1700 = vmatprep.subr.mxu0 0.0
    %1701 = vmatpush1.msra.mxu0 0.0
    %1702 = vmatprep.subr.mxu0 0.0
    %1703 = vmatpush1.msra.mxu0 0.0
    %1704 = vmatprep.subr.mxu0 0.0
    %1705 = vmatpush1.msra.mxu0 0.0
    %1706 = vmatprep.subr.mxu0 0.0
    %1707 = vmatpush1.msra.mxu0 0.0
    %1708 = vmatprep.subr.mxu0 0.0
    %1709 = vmatpush1.msra.mxu0 0.0
    %1710 = vmatprep.subr.mxu0 0.0
    %1711 = vmatpush1.msra.mxu0 0.0
    %1712 = vmatprep.subr.mxu0 0.0
    %1713 = vmatpush1.msra.mxu0 0.0
    %1714 = vmatprep.subr.mxu0 0.0
    %1715 = vmatpush1.msra.mxu0 0.0
    %1716 = vmatprep.subr.mxu0 0.0
    %1717 = vmatpush1.msra.mxu0 0.0
    %1718 = vmatprep.subr.mxu0 0.0
    %1719 = vmatpush1.msra.mxu0 0.0
    %1720 = vmatprep.subr.mxu0 0.0
    %1721 = vmatpush1.msra.mxu0 0.0
    %1722 = vmatprep.subr.mxu0 0.0
    %1723 = vmatpush1.msra.mxu0 0.0
    %1724 = vmatprep.subr.mxu0 0.0
    %1725 = vmatpush1.msra.mxu0 0.0
    %1726 = vmatprep.subr.mxu0 0.0
    %1727 = vmatpush1.msra.mxu0 0.0
    %1728 = vmatprep.subr.mxu0 0.0
    %1729 = vmatpush1.msra.mxu0 0.0
    %1730 = vmatprep.subr.mxu0 0.0
    %1731 = vmatpush1.msra.mxu0 0.0
    %1732 = vmatprep.subr.mxu0 0.0
    %1733 = vmatpush1.msra.mxu0 0.0
    %1734 = vmatprep.subr.mxu0 0.0
    %1735 = vmatpush1.msra.mxu0 0.0
    %1736 = vmatprep.subr.mxu0 0.0
    %1737 = vmatpush1.msra.mxu0 0.0
    %1738 = vmatprep.subr.mxu0 0.0
    %1739 = vmatpush1.msra.mxu0 0.0
    %1740 = vmatprep.subr.mxu0 0.0
    %1741 = vmatpush1.msra.mxu0 0.0
    %1742 = vmatprep.subr.mxu0 0.0
    %1743 = vmatpush1.msra.mxu0 0.0
    %1744 = vmatprep.subr.mxu0 0.0
    %1745 = vmatpush1.msra.mxu0 0.0
    %1746 = vmatprep.subr.mxu0 0.0
    %1747 = vmatpush1.msra.mxu0 0.0
    %1748 = vmatprep.mubr.f32.mxu0 0.0
    %1749 = vmatmul.mubr.f32.gmra.mrb[0].mxu0 %v1679
    %v1750 = vpop.f32.mrb[0].mxu0
    %v1751 = vadd.f32 0.0, %v1750
    %v1752 = vpop.f32.mrb[0].mxu0
    %1753 = vmatprep.mubr.f32.mxu0 0.0
    %1754 = vmatmul.mubr.f32.gmra.mrb[0].mxu0 %v1682
    %v1755 = vpop.f32.mrb[0].mxu0
    %v1756 = vadd.f32 0.0, %v1755
    %v1757 = vpop.f32.mrb[0].mxu0
    %1758 = vdwg.mxu0
    %s1759 = scalar_lea.vmem %s17, 48
    %v1760 = vld [vmem:[%s1759] sm:$0xff]
    %v1761 = vld [vmem:[%s1759 + $0x8] sm:$0xff]
    %v1762 = vld [vmem:[%s1759 + $0x10] sm:$0xff]
    %v1763 = vld [vmem:[%s1759 + $0x18] sm:$0xff]
    %v1764 = vld [vmem:[%s1759 + $0x20] sm:$0xff]
    %v1765 = vld [vmem:[%s1759 + $0x28] sm:$0x3]
    %v1767 = vsel %vm1352, %v1751, 0
    %v1770 = vsel %vm1352, %v1756, 0
    %v1773 = vsel %vm1376, %v1765, 0
    %1775 = vmatprep.subr.mxu0 0.0
    %1776 = vmatpush1.msra.mxu0 %v1760
    %1777 = vmatprep.subr.mxu0 0.0
    %1778 = vmatpush1.msra.mxu0 %v1761
    %1779 = vmatprep.subr.mxu0 0.0
    %1780 = vmatpush1.msra.mxu0 %v1762
    %1781 = vmatprep.subr.mxu0 0.0
    %1782 = vmatpush1.msra.mxu0 %v1763
    %1783 = vmatprep.subr.mxu0 0.0
    %1784 = vmatpush1.msra.mxu0 %v1764
    %1785 = vmatprep.subr.mxu0 0.0
    %1786 = vmatpush1.msra.mxu0 %v1773
    %1787 = vmatprep.subr.mxu0 0.0
    %1788 = vmatpush1.msra.mxu0 0.0
    %1789 = vmatprep.subr.mxu0 0.0
    %1790 = vmatpush1.msra.mxu0 0.0
    %1791 = vmatprep.subr.mxu0 0.0
    %1792 = vmatpush1.msra.mxu0 0.0
    %1793 = vmatprep.subr.mxu0 0.0
    %1794 = vmatpush1.msra.mxu0 0.0
    %1795 = vmatprep.subr.mxu0 0.0
    %1796 = vmatpush1.msra.mxu0 0.0
    %1797 = vmatprep.subr.mxu0 0.0
    %1798 = vmatpush1.msra.mxu0 0.0
    %1799 = vmatprep.subr.mxu0 0.0
    %1800 = vmatpush1.msra.mxu0 0.0
    %1801 = vmatprep.subr.mxu0 0.0
    %1802 = vmatpush1.msra.mxu0 0.0
    %1803 = vmatprep.subr.mxu0 0.0
    %1804 = vmatpush1.msra.mxu0 0.0
    %1805 = vmatprep.subr.mxu0 0.0
    %1806 = vmatpush1.msra.mxu0 0.0
    %1807 = vmatprep.subr.mxu0 0.0
    %1808 = vmatpush1.msra.mxu0 0.0
    %1809 = vmatprep.subr.mxu0 0.0
    %1810 = vmatpush1.msra.mxu0 0.0
    %1811 = vmatprep.subr.mxu0 0.0
    %1812 = vmatpush1.msra.mxu0 0.0
    %1813 = vmatprep.subr.mxu0 0.0
    %1814 = vmatpush1.msra.mxu0 0.0
    %1815 = vmatprep.subr.mxu0 0.0
    %1816 = vmatpush1.msra.mxu0 0.0
    %1817 = vmatprep.subr.mxu0 0.0
    %1818 = vmatpush1.msra.mxu0 0.0
    %1819 = vmatprep.subr.mxu0 0.0
    %1820 = vmatpush1.msra.mxu0 0.0
    %1821 = vmatprep.subr.mxu0 0.0
    %1822 = vmatpush1.msra.mxu0 0.0
    %1823 = vmatprep.subr.mxu0 0.0
    %1824 = vmatpush1.msra.mxu0 0.0
    %1825 = vmatprep.subr.mxu0 0.0
    %1826 = vmatpush1.msra.mxu0 0.0
    %1827 = vmatprep.subr.mxu0 0.0
    %1828 = vmatpush1.msra.mxu0 0.0
    %1829 = vmatprep.subr.mxu0 0.0
    %1830 = vmatpush1.msra.mxu0 0.0
    %1831 = vmatprep.subr.mxu0 0.0
    %1832 = vmatpush1.msra.mxu0 0.0
    %1833 = vmatprep.subr.mxu0 0.0
    %1834 = vmatpush1.msra.mxu0 0.0
    %1835 = vmatprep.subr.mxu0 0.0
    %1836 = vmatpush1.msra.mxu0 0.0
    %1837 = vmatprep.subr.mxu0 0.0
    %1838 = vmatpush1.msra.mxu0 0.0
    %1839 = vmatprep.mubr.f32.mxu0 0.0
    %1840 = vmatmul.mubr.f32.gmra.mrb[0].mxu0 %v1767
    %v1841 = vpop.f32.mrb[0].mxu0
    %v1842 = vadd.f32 0.0, %v1841
    %v1843 = vpop.f32.mrb[0].mxu0
    %1844 = vmatprep.mubr.f32.mxu0 0.0
    %1845 = vmatmul.mubr.f32.gmra.mrb[0].mxu0 %v1770
    %v1846 = vpop.f32.mrb[0].mxu0
    %v1847 = vadd.f32 0.0, %v1846
    %v1848 = vpop.f32.mrb[0].mxu0
    %1849 = vdwg.mxu0
    %v1851 = vsel %vm1352, %v1661, 0
    %v1854 = vsel %vm1352, %v1666, 0
    %v1857 = vsel %vm1376, %v1674, 0
    %1859 = vmatprep.subr.mxu0 0.0
    %1860 = vmatpush1.msra.mxu0 %v1669
    %1861 = vmatprep.subr.mxu0 0.0
    %1862 = vmatpush1.msra.mxu0 %v1670
    %1863 = vmatprep.subr.mxu0 0.0
    %1864 = vmatpush1.msra.mxu0 %v1671
    %1865 = vmatprep.subr.mxu0 0.0
    %1866 = vmatpush1.msra.mxu0 %v1672
    %1867 = vmatprep.subr.mxu0 0.0
    %1868 = vmatpush1.msra.mxu0 %v1673
    %1869 = vmatprep.subr.mxu0 0.0
    %1870 = vmatpush1.msra.mxu0 %v1857
    %1871 = vmatprep.subr.mxu0 0.0
    %1872 = vmatpush1.msra.mxu0 0.0
    %1873 = vmatprep.subr.mxu0 0.0
    %1874 = vmatpush1.msra.mxu0 0.0
    %1875 = vmatprep.subr.mxu0 0.0
    %1876 = vmatpush1.msra.mxu0 0.0
    %1877 = vmatprep.subr.mxu0 0.0
    %1878 = vmatpush1.msra.mxu0 0.0
    %1879 = vmatprep.subr.mxu0 0.0
    %1880 = vmatpush1.msra.mxu0 0.0
    %1881 = vmatprep.subr.mxu0 0.0
    %1882 = vmatpush1.msra.mxu0 0.0
    %1883 = vmatprep.subr.mxu0 0.0
    %1884 = vmatpush1.msra.mxu0 0.0
    %1885 = vmatprep.subr.mxu0 0.0
    %1886 = vmatpush1.msra.mxu0 0.0
    %1887 = vmatprep.subr.mxu0 0.0
    %1888 = vmatpush1.msra.mxu0 0.0
    %1889 = vmatprep.subr.mxu0 0.0
    %1890 = vmatpush1.msra.mxu0 0.0
    %1891 = vmatprep.subr.mxu0 0.0
    %1892 = vmatpush1.msra.mxu0 0.0
    %1893 = vmatprep.subr.mxu0 0.0
    %1894 = vmatpush1.msra.mxu0 0.0
    %1895 = vmatprep.subr.mxu0 0.0
    %1896 = vmatpush1.msra.mxu0 0.0
    %1897 = vmatprep.subr.mxu0 0.0
    %1898 = vmatpush1.msra.mxu0 0.0
    %1899 = vmatprep.subr.mxu0 0.0
    %1900 = vmatpush1.msra.mxu0 0.0
    %1901 = vmatprep.subr.mxu0 0.0
    %1902 = vmatpush1.msra.mxu0 0.0
    %1903 = vmatprep.subr.mxu0 0.0
    %1904 = vmatpush1.msra.mxu0 0.0
    %1905 = vmatprep.subr.mxu0 0.0
    %1906 = vmatpush1.msra.mxu0 0.0
    %1907 = vmatprep.subr.mxu0 0.0
    %1908 = vmatpush1.msra.mxu0 0.0
    %1909 = vmatprep.subr.mxu0 0.0
    %1910 = vmatpush1.msra.mxu0 0.0
    %1911 = vmatprep.subr.mxu0 0.0
    %1912 = vmatpush1.msra.mxu0 0.0
    %1913 = vmatprep.subr.mxu0 0.0
    %1914 = vmatpush1.msra.mxu0 0.0
    %1915 = vmatprep.subr.mxu0 0.0
    %1916 = vmatpush1.msra.mxu0 0.0
    %1917 = vmatprep.subr.mxu0 0.0
    %1918 = vmatpush1.msra.mxu0 0.0
    %1919 = vmatprep.subr.mxu0 0.0
    %1920 = vmatpush1.msra.mxu0 0.0
    %1921 = vmatprep.subr.mxu0 0.0
    %1922 = vmatpush1.msra.mxu0 0.0
    %1923 = vmatprep.mubr.f32.mxu0 0.0
    %1924 = vmatmul.mubr.f32.gmra.mrb[0].mxu0 %v1851
    %v1925 = vpop.f32.mrb[0].mxu0
    %v1926 = vadd.f32 %v1842, %v1925
    %v1927 = vpop.f32.mrb[0].mxu0
    %1928 = vmatprep.mubr.f32.mxu0 0.0
    %1929 = vmatmul.mubr.f32.gmra.mrb[0].mxu0 %v1854
    %v1930 = vpop.f32.mrb[0].mxu0
    %v1931 = vadd.f32 %v1847, %v1930
    %v1932 = vpop.f32.mrb[0].mxu0
    %1933 = vdwg.mxu0
    %s1934 = scalar_lea.vmem [#allocation11], 32
    %v1935 = vld [vmem:[%s1934] sm:$0xff]
    %v1936 = vld [vmem:[%s1934 + $0x8] sm:$0x3f]
    %v1938 = vsel %vm928, %v1935, 0
    %v1941 = vsel %vm928, %v1936, 0
    %1943 = vmatprep.subr.mxu0 0.0
    %1944 = vmatpush1.msra.mxu0 %v1579
    %1945 = vmatprep.subr.mxu0 0.0
    %1946 = vmatpush1.msra.mxu0 %v1580
    %1947 = vmatprep.subr.mxu0 0.0
    %1948 = vmatpush1.msra.mxu0 %v1581
    %1949 = vmatprep.subr.mxu0 0.0
    %1950 = vmatpush1.msra.mxu0 %v1592
    %1951 = vmatprep.subr.mxu0 0.0
    %1952 = vmatpush1.msra.mxu0 0.0
    %1953 = vmatprep.subr.mxu0 0.0
    %1954 = vmatpush1.msra.mxu0 0.0
    %1955 = vmatprep.subr.mxu0 0.0
    %1956 = vmatpush1.msra.mxu0 0.0
    %1957 = vmatprep.subr.mxu0 0.0
    %1958 = vmatpush1.msra.mxu0 0.0
    %1959 = vmatprep.subr.mxu0 0.0
    %1960 = vmatpush1.msra.mxu0 0.0
    %1961 = vmatprep.subr.mxu0 0.0
    %1962 = vmatpush1.msra.mxu0 0.0
    %1963 = vmatprep.subr.mxu0 0.0
    %1964 = vmatpush1.msra.mxu0 0.0
    %1965 = vmatprep.subr.mxu0 0.0
    %1966 = vmatpush1.msra.mxu0 0.0
    %1967 = vmatprep.subr.mxu0 0.0
    %1968 = vmatpush1.msra.mxu0 0.0
    %1969 = vmatprep.subr.mxu0 0.0
    %1970 = vmatpush1.msra.mxu0 0.0
    %1971 = vmatprep.subr.mxu0 0.0
    %1972 = vmatpush1.msra.mxu0 0.0
    %1973 = vmatprep.subr.mxu0 0.0
    %1974 = vmatpush1.msra.mxu0 0.0
    %1975 = vmatprep.subr.mxu0 0.0
    %1976 = vmatpush1.msra.mxu0 0.0
    %1977 = vmatprep.subr.mxu0 0.0
    %1978 = vmatpush1.msra.mxu0 0.0
    %1979 = vmatprep.subr.mxu0 0.0
    %1980 = vmatpush1.msra.mxu0 0.0
    %1981 = vmatprep.subr.mxu0 0.0
    %1982 = vmatpush1.msra.mxu0 0.0
    %1983 = vmatprep.subr.mxu0 0.0
    %1984 = vmatpush1.msra.mxu0 0.0
    %1985 = vmatprep.subr.mxu0 0.0
    %1986 = vmatpush1.msra.mxu0 0.0
    %1987 = vmatprep.subr.mxu0 0.0
    %1988 = vmatpush1.msra.mxu0 0.0
    %1989 = vmatprep.subr.mxu0 0.0
    %1990 = vmatpush1.msra.mxu0 0.0
    %1991 = vmatprep.subr.mxu0 0.0
    %1992 = vmatpush1.msra.mxu0 0.0
    %1993 = vmatprep.subr.mxu0 0.0
    %1994 = vmatpush1.msra.mxu0 0.0
    %1995 = vmatprep.subr.mxu0 0.0
    %1996 = vmatpush1.msra.mxu0 0.0
    %1997 = vmatprep.subr.mxu0 0.0
    %1998 = vmatpush1.msra.mxu0 0.0
    %1999 = vmatprep.subr.mxu0 0.0
    %2000 = vmatpush1.msra.mxu0 0.0
    %2001 = vmatprep.subr.mxu0 0.0
    %2002 = vmatpush1.msra.mxu0 0.0
    %2003 = vmatprep.subr.mxu0 0.0
    %2004 = vmatpush1.msra.mxu0 0.0
    %2005 = vmatprep.subr.mxu0 0.0
    %2006 = vmatpush1.msra.mxu0 0.0
    %2007 = vmatprep.mubr.f32.mxu0 0.0
    %2008 = vmatmul.mubr.f32.gmra.mrb[0].mxu0 %v1938
    %v2009 = vpop.f32.mrb[0].mxu0
    %v2010 = vadd.f32 0.0, %v2009
    %v2011 = vpop.f32.mrb[0].mxu0
    %2012 = vmatprep.mubr.f32.mxu0 0.0
    %2013 = vmatmul.mubr.f32.gmra.mrb[0].mxu0 %v1941
    %v2014 = vpop.f32.mrb[0].mxu0
    %v2015 = vadd.f32 0.0, %v2014
    %v2016 = vpop.f32.mrb[0].mxu0
    %2017 = vdwg.mxu0
    %s2018 = scalar_lea.vmem %s17, 96
    %v2019 = vld [vmem:[%s2018] sm:$0xff]
    %v2020 = vld [vmem:[%s2018 + $0x8] sm:$0xff]
    %v2021 = vld [vmem:[%s2018 + $0x10] sm:$0xff]
    %v2022 = vld [vmem:[%s2018 + $0x18] sm:$0xff]
    %v2023 = vld [vmem:[%s2018 + $0x20] sm:$0xff]
    %v2024 = vld [vmem:[%s2018 + $0x28] sm:$0x3]
    %v2026 = vsel %vm1352, %v2010, 0
    %v2029 = vsel %vm1352, %v2015, 0
    %v2032 = vsel %vm1376, %v2024, 0
    %2034 = vmatprep.subr.mxu0 0.0
    %2035 = vmatpush1.msra.mxu0 %v2019
    %2036 = vmatprep.subr.mxu0 0.0
    %2037 = vmatpush1.msra.mxu0 %v2020
    %2038 = vmatprep.subr.mxu0 0.0
    %2039 = vmatpush1.msra.mxu0 %v2021
    %2040 = vmatprep.subr.mxu0 0.0
    %2041 = vmatpush1.msra.mxu0 %v2022
    %2042 = vmatprep.subr.mxu0 0.0
    %2043 = vmatpush1.msra.mxu0 %v2023
    %2044 = vmatprep.subr.mxu0 0.0
    %2045 = vmatpush1.msra.mxu0 %v2032
    %2046 = vmatprep.subr.mxu0 0.0
    %2047 = vmatpush1.msra.mxu0 0.0
    %2048 = vmatprep.subr.mxu0 0.0
    %2049 = vmatpush1.msra.mxu0 0.0
    %2050 = vmatprep.subr.mxu0 0.0
    %2051 = vmatpush1.msra.mxu0 0.0
    %2052 = vmatprep.subr.mxu0 0.0
    %2053 = vmatpush1.msra.mxu0 0.0
    %2054 = vmatprep.subr.mxu0 0.0
    %2055 = vmatpush1.msra.mxu0 0.0
    %2056 = vmatprep.subr.mxu0 0.0
    %2057 = vmatpush1.msra.mxu0 0.0
    %2058 = vmatprep.subr.mxu0 0.0
    %2059 = vmatpush1.msra.mxu0 0.0
    %2060 = vmatprep.subr.mxu0 0.0
    %2061 = vmatpush1.msra.mxu0 0.0
    %2062 = vmatprep.subr.mxu0 0.0
    %2063 = vmatpush1.msra.mxu0 0.0
    %2064 = vmatprep.subr.mxu0 0.0
    %2065 = vmatpush1.msra.mxu0 0.0
    %2066 = vmatprep.subr.mxu0 0.0
    %2067 = vmatpush1.msra.mxu0 0.0
    %2068 = vmatprep.subr.mxu0 0.0
    %2069 = vmatpush1.msra.mxu0 0.0
    %2070 = vmatprep.subr.mxu0 0.0
    %2071 = vmatpush1.msra.mxu0 0.0
    %2072 = vmatprep.subr.mxu0 0.0
    %2073 = vmatpush1.msra.mxu0 0.0
    %2074 = vmatprep.subr.mxu0 0.0
    %2075 = vmatpush1.msra.mxu0 0.0
    %2076 = vmatprep.subr.mxu0 0.0
    %2077 = vmatpush1.msra.mxu0 0.0
    %2078 = vmatprep.subr.mxu0 0.0
    %2079 = vmatpush1.msra.mxu0 0.0
    %2080 = vmatprep.subr.mxu0 0.0
    %2081 = vmatpush1.msra.mxu0 0.0
    %2082 = vmatprep.subr.mxu0 0.0
    %2083 = vmatpush1.msra.mxu0 0.0
    %2084 = vmatprep.subr.mxu0 0.0
    %2085 = vmatpush1.msra.mxu0 0.0
    %2086 = vmatprep.subr.mxu0 0.0
    %2087 = vmatpush1.msra.mxu0 0.0
    %2088 = vmatprep.subr.mxu0 0.0
    %2089 = vmatpush1.msra.mxu0 0.0
    %2090 = vmatprep.subr.mxu0 0.0
    %2091 = vmatpush1.msra.mxu0 0.0
    %2092 = vmatprep.subr.mxu0 0.0
    %2093 = vmatpush1.msra.mxu0 0.0
    %2094 = vmatprep.subr.mxu0 0.0
    %2095 = vmatpush1.msra.mxu0 0.0
    %2096 = vmatprep.subr.mxu0 0.0
    %2097 = vmatpush1.msra.mxu0 0.0
    %2098 = vmatprep.mubr.f32.mxu0 0.0
    %2099 = vmatmul.mubr.f32.gmra.mrb[0].mxu0 %v2026
    %v2100 = vpop.f32.mrb[0].mxu0
    %v2101 = vadd.f32 0.0, %v2100
    %v2102 = vpop.f32.mrb[0].mxu0
    %2103 = vmatprep.mubr.f32.mxu0 0.0
    %2104 = vmatmul.mubr.f32.gmra.mrb[0].mxu0 %v2029
    %v2105 = vpop.f32.mrb[0].mxu0
    %v2106 = vadd.f32 0.0, %v2105
    %v2107 = vpop.f32.mrb[0].mxu0
    %2108 = vdwg.mxu0
    %v2109 = vadd.f32 %v1926, %v2101
    %v2110 = vadd.f32 %v1931, %v2106
    %v2111 = vld [vmem:[#allocation13] sm:$0x1]
    %v2113 = vlaneseq
    %v2114 = vshrl.u32 %v2113, 7
    %v2115 = vsub.s32 0, %v2114
    %v2116 = vrot.slane %v2111, %v2115
    %v2118 = vadd.f32 %v2109, %v2116
    %v2119 = vadd.f32 %v2110, %v2116
    %v2120 = vsel %vm1352, %v2118, 0.0
    %vm2121 = vcmask 340992
    %v2122 = vsel %vm2121, %v2119, 0.0
    %v2123 = vadd.f32 %v2120, %v2122
    %v2124 = vrot.slane %v2123, 4
    %v2125 = vadd.f32 %v2123, %v2124
    %v2126 = vrot.slane %v2125, 2
    %v2127 = vadd.f32 %v2125, %v2126
    %v2128 = vrot.slane %v2127, 1
    %v2129 = vadd.f32 %v2127, %v2128
    %v2130 = vld [vmem:[#allocation14] sm:$0xff]
    %v2131 = vld [vmem:[#allocation14 + $0x8] sm:$0xff]
    %v2132 = vld [vmem:[#allocation14 + $0x10] sm:$0xff]
    %v2133 = vld [vmem:[#allocation14 + $0x18] sm:$0xff]
    %v2134 = vld [vmem:[#allocation14 + $0x20] sm:$0xff]
    %v2135 = vld [vmem:[#allocation14 + $0x28] sm:$0x3]
    %v2137 = vsel %vm1352, %v2129, 0
    %v2140 = vsel %vm1376, %v2135, 0
    %2142 = vmatprep.subr.mxu0 0.0
    %2143 = vmatpush1.msra.mxu0 %v2130
    %2144 = vmatprep.subr.mxu0 0.0
    %2145 = vmatpush1.msra.mxu0 %v2131
    %2146 = vmatprep.subr.mxu0 0.0
    %2147 = vmatpush1.msra.mxu0 %v2132
    %2148 = vmatprep.subr.mxu0 0.0
    %2149 = vmatpush1.msra.mxu0 %v2133
    %2150 = vmatprep.subr.mxu0 0.0
    %2151 = vmatpush1.msra.mxu0 %v2134
    %2152 = vmatprep.subr.mxu0 0.0
    %2153 = vmatpush1.msra.mxu0 %v2140
    %2154 = vmatprep.subr.mxu0 0.0
    %2155 = vmatpush1.msra.mxu0 0.0
    %2156 = vmatprep.subr.mxu0 0.0
    %2157 = vmatpush1.msra.mxu0 0.0
    %2158 = vmatprep.subr.mxu0 0.0
    %2159 = vmatpush1.msra.mxu0 0.0
    %2160 = vmatprep.subr.mxu0 0.0
    %2161 = vmatpush1.msra.mxu0 0.0
    %2162 = vmatprep.subr.mxu0 0.0
    %2163 = vmatpush1.msra.mxu0 0.0
    %2164 = vmatprep.subr.mxu0 0.0
    %2165 = vmatpush1.msra.mxu0 0.0
    %2166 = vmatprep.subr.mxu0 0.0
    %2167 = vmatpush1.msra.mxu0 0.0
    %2168 = vmatprep.subr.mxu0 0.0
    %2169 = vmatpush1.msra.mxu0 0.0
    %2170 = vmatprep.subr.mxu0 0.0
    %2171 = vmatpush1.msra.mxu0 0.0
    %2172 = vmatprep.subr.mxu0 0.0
    %2173 = vmatpush1.msra.mxu0 0.0
    %2174 = vmatprep.subr.mxu0 0.0
    %2175 = vmatpush1.msra.mxu0 0.0
    %2176 = vmatprep.subr.mxu0 0.0
    %2177 = vmatpush1.msra.mxu0 0.0
    %2178 = vmatprep.subr.mxu0 0.0
    %2179 = vmatpush1.msra.mxu0 0.0
    %2180 = vmatprep.subr.mxu0 0.0
    %2181 = vmatpush1.msra.mxu0 0.0
    %2182 = vmatprep.subr.mxu0 0.0
    %2183 = vmatpush1.msra.mxu0 0.0
    %2184 = vmatprep.subr.mxu0 0.0
    %2185 = vmatpush1.msra.mxu0 0.0
    %2186 = vmatprep.subr.mxu0 0.0
    %2187 = vmatpush1.msra.mxu0 0.0
    %2188 = vmatprep.subr.mxu0 0.0
    %2189 = vmatpush1.msra.mxu0 0.0
    %2190 = vmatprep.subr.mxu0 0.0
    %2191 = vmatpush1.msra.mxu0 0.0
    %2192 = vmatprep.subr.mxu0 0.0
    %2193 = vmatpush1.msra.mxu0 0.0
    %2194 = vmatprep.subr.mxu0 0.0
    %2195 = vmatpush1.msra.mxu0 0.0
    %2196 = vmatprep.subr.mxu0 0.0
    %2197 = vmatpush1.msra.mxu0 0.0
    %2198 = vmatprep.subr.mxu0 0.0
    %2199 = vmatpush1.msra.mxu0 0.0
    %2200 = vmatprep.subr.mxu0 0.0
    %2201 = vmatpush1.msra.mxu0 0.0
    %2202 = vmatprep.subr.mxu0 0.0
    %2203 = vmatpush1.msra.mxu0 0.0
    %2204 = vmatprep.subr.mxu0 0.0
    %2205 = vmatpush1.msra.mxu0 0.0
    %2206 = vmatprep.mubr.f32.mxu0 0.0
    %2207 = vmatmul.mubr.f32.gmra.mrb[0].mxu0 %v2137
    %v2208 = vpop.f32.mrb[0].mxu0
    %v2209 = vadd.f32 0.0, %v2208
    %v2210 = vpop.f32.mrb[0].mxu0
    %2211 = vdwg.mxu0
    %v2212 = vlaneseq
    %v2213 = vshrl.u32 %v2212, 7
    %v2214 = vsub.s32 0, %v2213
    %v2215 = vrot.slane %v2209, %v2214
    %v2216 = vsub.f32 %v2118, %v2215
    %v2217 = vsub.f32 %v2119, %v2215
    %v2218 = vmul.f32 %v2216, %v2216
    %v2219 = vmul.f32 %v2217, %v2217
    %v2220 = vsel %vm1352, %v2218, 0.0
    %v2221 = vsel %vm2121, %v2219, 0.0
    %v2222 = vadd.f32 %v2220, %v2221
    %v2223 = vrot.slane %v2222, 4
    %v2224 = vadd.f32 %v2222, %v2223
    %v2225 = vrot.slane %v2224, 2
    %v2226 = vadd.f32 %v2224, %v2225
    %v2227 = vrot.slane %v2226, 1
    %v2228 = vadd.f32 %v2226, %v2227
    %v2230 = vsel %vm1352, %v2228, 0
    %2232 = vmatprep.subr.mxu0 0.0
    %2233 = vmatpush1.msra.mxu0 %v2130
    %2234 = vmatprep.subr.mxu0 0.0
    %2235 = vmatpush1.msra.mxu0 %v2131
    %2236 = vmatprep.subr.mxu0 0.0
    %2237 = vmatpush1.msra.mxu0 %v2132
    %2238 = vmatprep.subr.mxu0 0.0
    %2239 = vmatpush1.msra.mxu0 %v2133
    %2240 = vmatprep.subr.mxu0 0.0
    %2241 = vmatpush1.msra.mxu0 %v2134
    %2242 = vmatprep.subr.mxu0 0.0
    %2243 = vmatpush1.msra.mxu0 %v2140
    %2244 = vmatprep.subr.mxu0 0.0
    %2245 = vmatpush1.msra.mxu0 0.0
    %2246 = vmatprep.subr.mxu0 0.0
    %2247 = vmatpush1.msra.mxu0 0.0
    %2248 = vmatprep.subr.mxu0 0.0
    %2249 = vmatpush1.msra.mxu0 0.0
    %2250 = vmatprep.subr.mxu0 0.0
    %2251 = vmatpush1.msra.mxu0 0.0
    %2252 = vmatprep.subr.mxu0 0.0
    %2253 = vmatpush1.msra.mxu0 0.0
    %2254 = vmatprep.subr.mxu0 0.0
    %2255 = vmatpush1.msra.mxu0 0.0
    %2256 = vmatprep.subr.mxu0 0.0
    %2257 = vmatpush1.msra.mxu0 0.0
    %2258 = vmatprep.subr.mxu0 0.0
    %2259 = vmatpush1.msra.mxu0 0.0
    %2260 = vmatprep.subr.mxu0 0.0
    %2261 = vmatpush1.msra.mxu0 0.0
    %2262 = vmatprep.subr.mxu0 0.0
    %2263 = vmatpush1.msra.mxu0 0.0
    %2264 = vmatprep.subr.mxu0 0.0
    %2265 = vmatpush1.msra.mxu0 0.0
    %2266 = vmatprep.subr.mxu0 0.0
    %2267 = vmatpush1.msra.mxu0 0.0
    %2268 = vmatprep.subr.mxu0 0.0
    %2269 = vmatpush1.msra.mxu0 0.0
    %2270 = vmatprep.subr.mxu0 0.0
    %2271 = vmatpush1.msra.mxu0 0.0
    %2272 = vmatprep.subr.mxu0 0.0
    %2273 = vmatpush1.msra.mxu0 0.0
    %2274 = vmatprep.subr.mxu0 0.0
    %2275 = vmatpush1.msra.mxu0 0.0
    %2276 = vmatprep.subr.mxu0 0.0
    %2277 = vmatpush1.msra.mxu0 0.0
    %2278 = vmatprep.subr.mxu0 0.0
    %2279 = vmatpush1.msra.mxu0 0.0
    %2280 = vmatprep.subr.mxu0 0.0
    %2281 = vmatpush1.msra.mxu0 0.0
    %2282 = vmatprep.subr.mxu0 0.0
    %2283 = vmatpush1.msra.mxu0 0.0
    %2284 = vmatprep.subr.mxu0 0.0
    %2285 = vmatpush1.msra.mxu0 0.0
    %2286 = vmatprep.subr.mxu0 0.0
    %2287 = vmatpush1.msra.mxu0 0.0
    %2288 = vmatprep.subr.mxu0 0.0
    %2289 = vmatpush1.msra.mxu0 0.0
    %2290 = vmatprep.subr.mxu0 0.0
    %2291 = vmatpush1.msra.mxu0 0.0
    %2292 = vmatprep.subr.mxu0 0.0
    %2293 = vmatpush1.msra.mxu0 0.0
    %2294 = vmatprep.subr.mxu0 0.0
    %2295 = vmatpush1.msra.mxu0 0.0
    %2296 = vmatprep.mubr.f32.mxu0 0.0
    %2297 = vmatmul.mubr.f32.gmra.mrb[0].mxu0 %v2230
    %v2298 = vpop.f32.mrb[0].mxu0
    %v2299 = vadd.f32 1e-05, %v2298
    %v2300 = vpop.f32.mrb[0].mxu0
    %2301 = vdwg.mxu0
    %v2302 = vrsqrt.pop %v2299
    %v2303 = vlaneseq
    %v2304 = vshrl.u32 %v2303, 7
    %v2305 = vsub.s32 0, %v2304
    %v2306 = vrot.slane %v2302, %v2305
    %v2307 = vmul.f32 %v2216, %v2306
    %v2308 = vmul.f32 %v2217, %v2306
    %v2309 = vld [vmem:[#allocation16] sm:$0x1]
    %v2311 = vlaneseq
    %v2312 = vshrl.u32 %v2311, 7
    %v2313 = vsub.s32 0, %v2312
    %v2314 = vrot.slane %v2309, %v2313
    %v2316 = vmul.f32 %v2307, %v2314
    %v2317 = vmul.f32 %v2308, %v2314
    %v2318 = vld [vmem:[#allocation17] sm:$0x1]
    %v2320 = vlaneseq
    %v2321 = vshrl.u32 %v2320, 7
    %v2322 = vsub.s32 0, %v2321
    %v2323 = vrot.slane %v2318, %v2322
    %v2325 = vadd.f32 %v2316, %v2323
    %v2326 = vadd.f32 %v2317, %v2323
    %v2327 = vmax.f32 %v2325, 0.0
    %v2328 = vmax.f32 %v2326, 0.0
    %v2329 = vld [vmem:[#allocation19] sm:$0xff]
    %vm2330 = vcmask 113664
    %v2332 = vsel %vm2330, %v2329, 0
    %vm2334 = vcmask 1045504
    %v2336 = vsel %vm2334, %v2328, 0
    %2338 = vmatprep.subr.mxu0 0.0
    %2339 = vmatpush1.msra.mxu0 %v2327
    %2340 = vmatprep.subr.mxu0 0.0
    %2341 = vmatpush1.msra.mxu0 %v2336
    %2342 = vmatprep.subr.mxu0 0.0
    %2343 = vmatpush1.msra.mxu0 0.0
    %2344 = vmatprep.subr.mxu0 0.0
    %2345 = vmatpush1.msra.mxu0 0.0
    %2346 = vmatprep.subr.mxu0 0.0
    %2347 = vmatpush1.msra.mxu0 0.0
    %2348 = vmatprep.subr.mxu0 0.0
    %2349 = vmatpush1.msra.mxu0 0.0
    %2350 = vmatprep.subr.mxu0 0.0
    %2351 = vmatpush1.msra.mxu0 0.0
    %2352 = vmatprep.subr.mxu0 0.0
    %2353 = vmatpush1.msra.mxu0 0.0
    %2354 = vmatprep.subr.mxu0 0.0
    %2355 = vmatpush1.msra.mxu0 0.0
    %2356 = vmatprep.subr.mxu0 0.0
    %2357 = vmatpush1.msra.mxu0 0.0
    %2358 = vmatprep.subr.mxu0 0.0
    %2359 = vmatpush1.msra.mxu0 0.0
    %2360 = vmatprep.subr.mxu0 0.0
    %2361 = vmatpush1.msra.mxu0 0.0
    %2362 = vmatprep.subr.mxu0 0.0
    %2363 = vmatpush1.msra.mxu0 0.0
    %2364 = vmatprep.subr.mxu0 0.0
    %2365 = vmatpush1.msra.mxu0 0.0
    %2366 = vmatprep.subr.mxu0 0.0
    %2367 = vmatpush1.msra.mxu0 0.0
    %2368 = vmatprep.subr.mxu0 0.0
    %2369 = vmatpush1.msra.mxu0 0.0
    %2370 = vmatprep.subr.mxu0 0.0
    %2371 = vmatpush1.msra.mxu0 0.0
    %2372 = vmatprep.subr.mxu0 0.0
    %2373 = vmatpush1.msra.mxu0 0.0
    %2374 = vmatprep.subr.mxu0 0.0
    %2375 = vmatpush1.msra.mxu0 0.0
    %2376 = vmatprep.subr.mxu0 0.0
    %2377 = vmatpush1.msra.mxu0 0.0
    %2378 = vmatprep.subr.mxu0 0.0
    %2379 = vmatpush1.msra.mxu0 0.0
    %2380 = vmatprep.subr.mxu0 0.0
    %2381 = vmatpush1.msra.mxu0 0.0
    %2382 = vmatprep.subr.mxu0 0.0
    %2383 = vmatpush1.msra.mxu0 0.0
    %2384 = vmatprep.subr.mxu0 0.0
    %2385 = vmatpush1.msra.mxu0 0.0
    %2386 = vmatprep.subr.mxu0 0.0
    %2387 = vmatpush1.msra.mxu0 0.0
    %2388 = vmatprep.subr.mxu0 0.0
    %2389 = vmatpush1.msra.mxu0 0.0
    %2390 = vmatprep.subr.mxu0 0.0
    %2391 = vmatpush1.msra.mxu0 0.0
    %2392 = vmatprep.subr.mxu0 0.0
    %2393 = vmatpush1.msra.mxu0 0.0
    %2394 = vmatprep.subr.mxu0 0.0
    %2395 = vmatpush1.msra.mxu0 0.0
    %2396 = vmatprep.subr.mxu0 0.0
    %2397 = vmatpush1.msra.mxu0 0.0
    %2398 = vmatprep.subr.mxu0 0.0
    %2399 = vmatpush1.msra.mxu0 0.0
    %2400 = vmatprep.subr.mxu0 0.0
    %2401 = vmatpush1.msra.mxu0 0.0
    %2402 = vmatprep.mubr.f32.mxu0 0.0
    %2403 = vmatmul.mubr.f32.gmra.mrb[0].mxu0 %v2332
    %v2404 = vpop.f32.mrb[0].mxu0
    %v2405 = vadd.f32 0.0, %v2404
    %v2406 = vpop.f32.mrb[0].mxu0
    %2407 = vdwg.mxu0
    %v2408 = vld [vmem:[%s29] sm:$0xff]
    %v2409 = vld [vmem:[%s29 + $0x8] sm:$0xff]
    %v2410 = vld [vmem:[%s29 + $0x10] sm:$0xff]
    %v2411 = vld [vmem:[%s29 + $0x18] sm:$0xff]
    %v2412 = vld [vmem:[%s29 + $0x20] sm:$0xff]
    %v2413 = vld [vmem:[%s29 + $0x28] sm:$0x3]
    %s2414 = scalar_lea.vmem [#allocation19], 8
    %v2415 = vld [vmem:[%s2414] sm:$0xff]
    %v2417 = vsel %vm2330, %v2415, 0
    %2419 = vmatprep.subr.mxu0 0.0
    %2420 = vmatpush1.msra.mxu0 %v2327
    %2421 = vmatprep.subr.mxu0 0.0
    %2422 = vmatpush1.msra.mxu0 %v2336
    %2423 = vmatprep.subr.mxu0 0.0
    %2424 = vmatpush1.msra.mxu0 0.0
    %2425 = vmatprep.subr.mxu0 0.0
    %2426 = vmatpush1.msra.mxu0 0.0
    %2427 = vmatprep.subr.mxu0 0.0
    %2428 = vmatpush1.msra.mxu0 0.0
    %2429 = vmatprep.subr.mxu0 0.0
    %2430 = vmatpush1.msra.mxu0 0.0
    %2431 = vmatprep.subr.mxu0 0.0
    %2432 = vmatpush1.msra.mxu0 0.0
    %2433 = vmatprep.subr.mxu0 0.0
    %2434 = vmatpush1.msra.mxu0 0.0
    %2435 = vmatprep.subr.mxu0 0.0
    %2436 = vmatpush1.msra.mxu0 0.0
    %2437 = vmatprep.subr.mxu0 0.0
    %2438 = vmatpush1.msra.mxu0 0.0
    %2439 = vmatprep.subr.mxu0 0.0
    %2440 = vmatpush1.msra.mxu0 0.0
    %2441 = vmatprep.subr.mxu0 0.0
    %2442 = vmatpush1.msra.mxu0 0.0
    %2443 = vmatprep.subr.mxu0 0.0
    %2444 = vmatpush1.msra.mxu0 0.0
    %2445 = vmatprep.subr.mxu0 0.0
    %2446 = vmatpush1.msra.mxu0 0.0
    %2447 = vmatprep.subr.mxu0 0.0
    %2448 = vmatpush1.msra.mxu0 0.0
    %2449 = vmatprep.subr.mxu0 0.0
    %2450 = vmatpush1.msra.mxu0 0.0
    %2451 = vmatprep.subr.mxu0 0.0
    %2452 = vmatpush1.msra.mxu0 0.0
    %2453 = vmatprep.subr.mxu0 0.0
    %2454 = vmatpush1.msra.mxu0 0.0
    %2455 = vmatprep.subr.mxu0 0.0
    %2456 = vmatpush1.msra.mxu0 0.0
    %2457 = vmatprep.subr.mxu0 0.0
    %2458 = vmatpush1.msra.mxu0 0.0
    %2459 = vmatprep.subr.mxu0 0.0
    %2460 = vmatpush1.msra.mxu0 0.0
    %2461 = vmatprep.subr.mxu0 0.0
    %2462 = vmatpush1.msra.mxu0 0.0
    %2463 = vmatprep.subr.mxu0 0.0
    %2464 = vmatpush1.msra.mxu0 0.0
    %2465 = vmatprep.subr.mxu0 0.0
    %2466 = vmatpush1.msra.mxu0 0.0
    %2467 = vmatprep.subr.mxu0 0.0
    %2468 = vmatpush1.msra.mxu0 0.0
    %2469 = vmatprep.subr.mxu0 0.0
    %2470 = vmatpush1.msra.mxu0 0.0
    %2471 = vmatprep.subr.mxu0 0.0
    %2472 = vmatpush1.msra.mxu0 0.0
    %2473 = vmatprep.subr.mxu0 0.0
    %2474 = vmatpush1.msra.mxu0 0.0
    %2475 = vmatprep.subr.mxu0 0.0
    %2476 = vmatpush1.msra.mxu0 0.0
    %2477 = vmatprep.subr.mxu0 0.0
    %2478 = vmatpush1.msra.mxu0 0.0
    %2479 = vmatprep.subr.mxu0 0.0
    %2480 = vmatpush1.msra.mxu0 0.0
    %2481 = vmatprep.subr.mxu0 0.0
    %2482 = vmatpush1.msra.mxu0 0.0
    %2483 = vmatprep.mubr.f32.mxu0 0.0
    %2484 = vmatmul.mubr.f32.gmra.mrb[0].mxu0 %v2417
    %v2485 = vpop.f32.mrb[0].mxu0
    %v2486 = vadd.f32 0.0, %v2485
    %v2487 = vpop.f32.mrb[0].mxu0
    %2488 = vdwg.mxu0
    %s2489 = scalar_lea.vmem %s29, 48
    %v2490 = vld [vmem:[%s2489] sm:$0xff]
    %v2491 = vld [vmem:[%s2489 + $0x8] sm:$0xff]
    %v2492 = vld [vmem:[%s2489 + $0x10] sm:$0xff]
    %v2493 = vld [vmem:[%s2489 + $0x18] sm:$0xff]
    %v2494 = vld [vmem:[%s2489 + $0x20] sm:$0xff]
    %v2495 = vld [vmem:[%s2489 + $0x28] sm:$0x3]
    %v2497 = vsel %vm1352, %v2486, 0
    %v2500 = vsel %vm1376, %v2495, 0
    %2502 = vmatprep.subr.mxu0 0.0
    %2503 = vmatpush1.msra.mxu0 %v2490
    %2504 = vmatprep.subr.mxu0 0.0
    %2505 = vmatpush1.msra.mxu0 %v2491
    %2506 = vmatprep.subr.mxu0 0.0
    %2507 = vmatpush1.msra.mxu0 %v2492
    %2508 = vmatprep.subr.mxu0 0.0
    %2509 = vmatpush1.msra.mxu0 %v2493
    %2510 = vmatprep.subr.mxu0 0.0
    %2511 = vmatpush1.msra.mxu0 %v2494
    %2512 = vmatprep.subr.mxu0 0.0
    %2513 = vmatpush1.msra.mxu0 %v2500
    %2514 = vmatprep.subr.mxu0 0.0
    %2515 = vmatpush1.msra.mxu0 0.0
    %2516 = vmatprep.subr.mxu0 0.0
    %2517 = vmatpush1.msra.mxu0 0.0
    %2518 = vmatprep.subr.mxu0 0.0
    %2519 = vmatpush1.msra.mxu0 0.0
    %2520 = vmatprep.subr.mxu0 0.0
    %2521 = vmatpush1.msra.mxu0 0.0
    %2522 = vmatprep.subr.mxu0 0.0
    %2523 = vmatpush1.msra.mxu0 0.0
    %2524 = vmatprep.subr.mxu0 0.0
    %2525 = vmatpush1.msra.mxu0 0.0
    %2526 = vmatprep.subr.mxu0 0.0
    %2527 = vmatpush1.msra.mxu0 0.0
    %2528 = vmatprep.subr.mxu0 0.0
    %2529 = vmatpush1.msra.mxu0 0.0
    %2530 = vmatprep.subr.mxu0 0.0
    %2531 = vmatpush1.msra.mxu0 0.0
    %2532 = vmatprep.subr.mxu0 0.0
    %2533 = vmatpush1.msra.mxu0 0.0
    %2534 = vmatprep.subr.mxu0 0.0
    %2535 = vmatpush1.msra.mxu0 0.0
    %2536 = vmatprep.subr.mxu0 0.0
    %2537 = vmatpush1.msra.mxu0 0.0
    %2538 = vmatprep.subr.mxu0 0.0
    %2539 = vmatpush1.msra.mxu0 0.0
    %2540 = vmatprep.subr.mxu0 0.0
    %2541 = vmatpush1.msra.mxu0 0.0
    %2542 = vmatprep.subr.mxu0 0.0
    %2543 = vmatpush1.msra.mxu0 0.0
    %2544 = vmatprep.subr.mxu0 0.0
    %2545 = vmatpush1.msra.mxu0 0.0
    %2546 = vmatprep.subr.mxu0 0.0
    %2547 = vmatpush1.msra.mxu0 0.0
    %2548 = vmatprep.subr.mxu0 0.0
    %2549 = vmatpush1.msra.mxu0 0.0
    %2550 = vmatprep.subr.mxu0 0.0
    %2551 = vmatpush1.msra.mxu0 0.0
    %2552 = vmatprep.subr.mxu0 0.0
    %2553 = vmatpush1.msra.mxu0 0.0
    %2554 = vmatprep.subr.mxu0 0.0
    %2555 = vmatpush1.msra.mxu0 0.0
    %2556 = vmatprep.subr.mxu0 0.0
    %2557 = vmatpush1.msra.mxu0 0.0
    %2558 = vmatprep.subr.mxu0 0.0
    %2559 = vmatpush1.msra.mxu0 0.0
    %2560 = vmatprep.subr.mxu0 0.0
    %2561 = vmatpush1.msra.mxu0 0.0
    %2562 = vmatprep.subr.mxu0 0.0
    %2563 = vmatpush1.msra.mxu0 0.0
    %2564 = vmatprep.subr.mxu0 0.0
    %2565 = vmatpush1.msra.mxu0 0.0
    %2566 = vmatprep.mubr.f32.mxu0 0.0
    %2567 = vmatmul.mubr.f32.gmra.mrb[0].mxu0 %v2497
    %v2568 = vpop.f32.mrb[0].mxu0
    %v2569 = vadd.f32 0.0, %v2568
    %v2570 = vpop.f32.mrb[0].mxu0
    %2571 = vdwg.mxu0
    %v2573 = vsel %vm1352, %v2405, 0
    %v2576 = vsel %vm1376, %v2413, 0
    %2578 = vmatprep.subr.mxu0 0.0
    %2579 = vmatpush1.msra.mxu0 %v2408
    %2580 = vmatprep.subr.mxu0 0.0
    %2581 = vmatpush1.msra.mxu0 %v2409
    %2582 = vmatprep.subr.mxu0 0.0
    %2583 = vmatpush1.msra.mxu0 %v2410
    %2584 = vmatprep.subr.mxu0 0.0
    %2585 = vmatpush1.msra.mxu0 %v2411
    %2586 = vmatprep.subr.mxu0 0.0
    %2587 = vmatpush1.msra.mxu0 %v2412
    %2588 = vmatprep.subr.mxu0 0.0
    %2589 = vmatpush1.msra.mxu0 %v2576
    %2590 = vmatprep.subr.mxu0 0.0
    %2591 = vmatpush1.msra.mxu0 0.0
    %2592 = vmatprep.subr.mxu0 0.0
    %2593 = vmatpush1.msra.mxu0 0.0
    %2594 = vmatprep.subr.mxu0 0.0
    %2595 = vmatpush1.msra.mxu0 0.0
    %2596 = vmatprep.subr.mxu0 0.0
    %2597 = vmatpush1.msra.mxu0 0.0
    %2598 = vmatprep.subr.mxu0 0.0
    %2599 = vmatpush1.msra.mxu0 0.0
    %2600 = vmatprep.subr.mxu0 0.0
    %2601 = vmatpush1.msra.mxu0 0.0
    %2602 = vmatprep.subr.mxu0 0.0
    %2603 = vmatpush1.msra.mxu0 0.0
    %2604 = vmatprep.subr.mxu0 0.0
    %2605 = vmatpush1.msra.mxu0 0.0
    %2606 = vmatprep.subr.mxu0 0.0
    %2607 = vmatpush1.msra.mxu0 0.0
    %2608 = vmatprep.subr.mxu0 0.0
    %2609 = vmatpush1.msra.mxu0 0.0
    %2610 = vmatprep.subr.mxu0 0.0
    %2611 = vmatpush1.msra.mxu0 0.0
    %2612 = vmatprep.subr.mxu0 0.0
    %2613 = vmatpush1.msra.mxu0 0.0
    %2614 = vmatprep.subr.mxu0 0.0
    %2615 = vmatpush1.msra.mxu0 0.0
    %2616 = vmatprep.subr.mxu0 0.0
    %2617 = vmatpush1.msra.mxu0 0.0
    %2618 = vmatprep.subr.mxu0 0.0
    %2619 = vmatpush1.msra.mxu0 0.0
    %2620 = vmatprep.subr.mxu0 0.0
    %2621 = vmatpush1.msra.mxu0 0.0
    %2622 = vmatprep.subr.mxu0 0.0
    %2623 = vmatpush1.msra.mxu0 0.0
    %2624 = vmatprep.subr.mxu0 0.0
    %2625 = vmatpush1.msra.mxu0 0.0
    %2626 = vmatprep.subr.mxu0 0.0
    %2627 = vmatpush1.msra.mxu0 0.0
    %2628 = vmatprep.subr.mxu0 0.0
    %2629 = vmatpush1.msra.mxu0 0.0
    %2630 = vmatprep.subr.mxu0 0.0
    %2631 = vmatpush1.msra.mxu0 0.0
    %2632 = vmatprep.subr.mxu0 0.0
    %2633 = vmatpush1.msra.mxu0 0.0
    %2634 = vmatprep.subr.mxu0 0.0
    %2635 = vmatpush1.msra.mxu0 0.0
    %2636 = vmatprep.subr.mxu0 0.0
    %2637 = vmatpush1.msra.mxu0 0.0
    %2638 = vmatprep.subr.mxu0 0.0
    %2639 = vmatpush1.msra.mxu0 0.0
    %2640 = vmatprep.subr.mxu0 0.0
    %2641 = vmatpush1.msra.mxu0 0.0
    %2642 = vmatprep.mubr.f32.mxu0 0.0
    %2643 = vmatmul.mubr.f32.gmra.mrb[0].mxu0 %v2573
    %v2644 = vpop.f32.mrb[0].mxu0
    %v2645 = vadd.f32 %v2569, %v2644
    %v2646 = vpop.f32.mrb[0].mxu0
    %2647 = vdwg.mxu0
    %s2648 = scalar_lea.vmem [#allocation19], 16
    %v2649 = vld [vmem:[%s2648] sm:$0xff]
    %v2651 = vsel %vm2330, %v2649, 0
    %2653 = vmatprep.subr.mxu0 0.0
    %2654 = vmatpush1.msra.mxu0 %v2327
    %2655 = vmatprep.subr.mxu0 0.0
    %2656 = vmatpush1.msra.mxu0 %v2336
    %2657 = vmatprep.subr.mxu0 0.0
    %2658 = vmatpush1.msra.mxu0 0.0
    %2659 = vmatprep.subr.mxu0 0.0
    %2660 = vmatpush1.msra.mxu0 0.0
    %2661 = vmatprep.subr.mxu0 0.0
    %2662 = vmatpush1.msra.mxu0 0.0
    %2663 = vmatprep.subr.mxu0 0.0
    %2664 = vmatpush1.msra.mxu0 0.0
    %2665 = vmatprep.subr.mxu0 0.0
    %2666 = vmatpush1.msra.mxu0 0.0
    %2667 = vmatprep.subr.mxu0 0.0
    %2668 = vmatpush1.msra.mxu0 0.0
    %2669 = vmatprep.subr.mxu0 0.0
    %2670 = vmatpush1.msra.mxu0 0.0
    %2671 = vmatprep.subr.mxu0 0.0
    %2672 = vmatpush1.msra.mxu0 0.0
    %2673 = vmatprep.subr.mxu0 0.0
    %2674 = vmatpush1.msra.mxu0 0.0
    %2675 = vmatprep.subr.mxu0 0.0
    %2676 = vmatpush1.msra.mxu0 0.0
    %2677 = vmatprep.subr.mxu0 0.0
    %2678 = vmatpush1.msra.mxu0 0.0
    %2679 = vmatprep.subr.mxu0 0.0
    %2680 = vmatpush1.msra.mxu0 0.0
    %2681 = vmatprep.subr.mxu0 0.0
    %2682 = vmatpush1.msra.mxu0 0.0
    %2683 = vmatprep.subr.mxu0 0.0
    %2684 = vmatpush1.msra.mxu0 0.0
    %2685 = vmatprep.subr.mxu0 0.0
    %2686 = vmatpush1.msra.mxu0 0.0
    %2687 = vmatprep.subr.mxu0 0.0
    %2688 = vmatpush1.msra.mxu0 0.0
    %2689 = vmatprep.subr.mxu0 0.0
    %2690 = vmatpush1.msra.mxu0 0.0
    %2691 = vmatprep.subr.mxu0 0.0
    %2692 = vmatpush1.msra.mxu0 0.0
    %2693 = vmatprep.subr.mxu0 0.0
    %2694 = vmatpush1.msra.mxu0 0.0
    %2695 = vmatprep.subr.mxu0 0.0
    %2696 = vmatpush1.msra.mxu0 0.0
    %2697 = vmatprep.subr.mxu0 0.0
    %2698 = vmatpush1.msra.mxu0 0.0
    %2699 = vmatprep.subr.mxu0 0.0
    %2700 = vmatpush1.msra.mxu0 0.0
    %2701 = vmatprep.subr.mxu0 0.0
    %2702 = vmatpush1.msra.mxu0 0.0
    %2703 = vmatprep.subr.mxu0 0.0
    %2704 = vmatpush1.msra.mxu0 0.0
    %2705 = vmatprep.subr.mxu0 0.0
    %2706 = vmatpush1.msra.mxu0 0.0
    %2707 = vmatprep.subr.mxu0 0.0
    %2708 = vmatpush1.msra.mxu0 0.0
    %2709 = vmatprep.subr.mxu0 0.0
    %2710 = vmatpush1.msra.mxu0 0.0
    %2711 = vmatprep.subr.mxu0 0.0
    %2712 = vmatpush1.msra.mxu0 0.0
    %2713 = vmatprep.subr.mxu0 0.0
    %2714 = vmatpush1.msra.mxu0 0.0
    %2715 = vmatprep.subr.mxu0 0.0
    %2716 = vmatpush1.msra.mxu0 0.0
    %2717 = vmatprep.mubr.f32.mxu0 0.0
    %2718 = vmatmul.mubr.f32.gmra.mrb[0].mxu0 %v2651
    %v2719 = vpop.f32.mrb[0].mxu0
    %v2720 = vadd.f32 0.0, %v2719
    %v2721 = vpop.f32.mrb[0].mxu0
    %2722 = vdwg.mxu0
    %s2723 = scalar_lea.vmem %s29, 96
    %v2724 = vld [vmem:[%s2723] sm:$0xff]
    %v2725 = vld [vmem:[%s2723 + $0x8] sm:$0xff]
    %v2726 = vld [vmem:[%s2723 + $0x10] sm:$0xff]
    %v2727 = vld [vmem:[%s2723 + $0x18] sm:$0xff]
    %v2728 = vld [vmem:[%s2723 + $0x20] sm:$0xff]
    %v2729 = vld [vmem:[%s2723 + $0x28] sm:$0x3]
    %v2731 = vsel %vm1352, %v2720, 0
    %v2734 = vsel %vm1376, %v2729, 0
    %2736 = vmatprep.subr.mxu0 0.0
    %2737 = vmatpush1.msra.mxu0 %v2724
    %2738 = vmatprep.subr.mxu0 0.0
    %2739 = vmatpush1.msra.mxu0 %v2725
    %2740 = vmatprep.subr.mxu0 0.0
    %2741 = vmatpush1.msra.mxu0 %v2726
    %2742 = vmatprep.subr.mxu0 0.0
    %2743 = vmatpush1.msra.mxu0 %v2727
    %2744 = vmatprep.subr.mxu0 0.0
    %2745 = vmatpush1.msra.mxu0 %v2728
    %2746 = vmatprep.subr.mxu0 0.0
    %2747 = vmatpush1.msra.mxu0 %v2734
    %2748 = vmatprep.subr.mxu0 0.0
    %2749 = vmatpush1.msra.mxu0 0.0
    %2750 = vmatprep.subr.mxu0 0.0
    %2751 = vmatpush1.msra.mxu0 0.0
    %2752 = vmatprep.subr.mxu0 0.0
    %2753 = vmatpush1.msra.mxu0 0.0
    %2754 = vmatprep.subr.mxu0 0.0
    %2755 = vmatpush1.msra.mxu0 0.0
    %2756 = vmatprep.subr.mxu0 0.0
    %2757 = vmatpush1.msra.mxu0 0.0
    %2758 = vmatprep.subr.mxu0 0.0
    %2759 = vmatpush1.msra.mxu0 0.0
    %2760 = vmatprep.subr.mxu0 0.0
    %2761 = vmatpush1.msra.mxu0 0.0
    %2762 = vmatprep.subr.mxu0 0.0
    %2763 = vmatpush1.msra.mxu0 0.0
    %2764 = vmatprep.subr.mxu0 0.0
    %2765 = vmatpush1.msra.mxu0 0.0
    %2766 = vmatprep.subr.mxu0 0.0
    %2767 = vmatpush1.msra.mxu0 0.0
    %2768 = vmatprep.subr.mxu0 0.0
    %2769 = vmatpush1.msra.mxu0 0.0
    %2770 = vmatprep.subr.mxu0 0.0
    %2771 = vmatpush1.msra.mxu0 0.0
    %2772 = vmatprep.subr.mxu0 0.0
    %2773 = vmatpush1.msra.mxu0 0.0
    %2774 = vmatprep.subr.mxu0 0.0
    %2775 = vmatpush1.msra.mxu0 0.0
    %2776 = vmatprep.subr.mxu0 0.0
    %2777 = vmatpush1.msra.mxu0 0.0
    %2778 = vmatprep.subr.mxu0 0.0
    %2779 = vmatpush1.msra.mxu0 0.0
    %2780 = vmatprep.subr.mxu0 0.0
    %2781 = vmatpush1.msra.mxu0 0.0
    %2782 = vmatprep.subr.mxu0 0.0
    %2783 = vmatpush1.msra.mxu0 0.0
    %2784 = vmatprep.subr.mxu0 0.0
    %2785 = vmatpush1.msra.mxu0 0.0
    %2786 = vmatprep.subr.mxu0 0.0
    %2787 = vmatpush1.msra.mxu0 0.0
    %2788 = vmatprep.subr.mxu0 0.0
    %2789 = vmatpush1.msra.mxu0 0.0
    %2790 = vmatprep.subr.mxu0 0.0
    %2791 = vmatpush1.msra.mxu0 0.0
    %2792 = vmatprep.subr.mxu0 0.0
    %2793 = vmatpush1.msra.mxu0 0.0
    %2794 = vmatprep.subr.mxu0 0.0
    %2795 = vmatpush1.msra.mxu0 0.0
    %2796 = vmatprep.subr.mxu0 0.0
    %2797 = vmatpush1.msra.mxu0 0.0
    %2798 = vmatprep.subr.mxu0 0.0
    %2799 = vmatpush1.msra.mxu0 0.0
    %2800 = vmatprep.mubr.f32.mxu0 0.0
    %2801 = vmatmul.mubr.f32.gmra.mrb[0].mxu0 %v2731
    %v2802 = vpop.f32.mrb[0].mxu0
    %v2803 = vadd.f32 0.0, %v2802
    %v2804 = vpop.f32.mrb[0].mxu0
    %2805 = vdwg.mxu0
    %v2806 = vadd.f32 %v2645, %v2803
    %v2807 = vld [vmem:[#allocation20] sm:$0x1]
    %v2809 = vlaneseq
    %v2810 = vshrl.u32 %v2809, 7
    %v2811 = vsub.s32 0, %v2810
    %v2812 = vrot.slane %v2807, %v2811
    %v2814 = vadd.f32 %v2806, %v2812
    %vm2815 = vcmask 392192
    %v2816 = vsel %vm2815, %v2814, 0.0
    %v2817 = vrot.slane %v2816, 4
    %v2818 = vadd.f32 %v2816, %v2817
    %v2819 = vrot.slane %v2818, 2
    %v2820 = vadd.f32 %v2818, %v2819
    %v2821 = vrot.slane %v2820, 1
    %v2822 = vadd.f32 %v2820, %v2821
    %v2823 = vld [vmem:[#allocation22] sm:$0xff]
    %v2824 = vld [vmem:[#allocation22 + $0x8] sm:$0xff]
    %v2825 = vld [vmem:[#allocation22 + $0x10] sm:$0xff]
    %v2826 = vld [vmem:[#allocation22 + $0x18] sm:$0xff]
    %v2827 = vld [vmem:[#allocation22 + $0x20] sm:$0xff]
    %v2828 = vld [vmem:[#allocation22 + $0x28] sm:$0xff]
    %v2830 = vsel %vm2815, %v2822, 0
    %2832 = vmatprep.subr.mxu0 0.0
    %2833 = vmatpush1.msra.mxu0 %v2823
    %2834 = vmatprep.subr.mxu0 0.0
    %2835 = vmatpush1.msra.mxu0 %v2824
    %2836 = vmatprep.subr.mxu0 0.0
    %2837 = vmatpush1.msra.mxu0 %v2825
    %2838 = vmatprep.subr.mxu0 0.0
    %2839 = vmatpush1.msra.mxu0 %v2826
    %2840 = vmatprep.subr.mxu0 0.0
    %2841 = vmatpush1.msra.mxu0 %v2827
    %2842 = vmatprep.subr.mxu0 0.0
    %2843 = vmatpush1.msra.mxu0 %v2828
    %2844 = vmatprep.subr.mxu0 0.0
    %2845 = vmatpush1.msra.mxu0 0.0
    %2846 = vmatprep.subr.mxu0 0.0
    %2847 = vmatpush1.msra.mxu0 0.0
    %2848 = vmatprep.subr.mxu0 0.0
    %2849 = vmatpush1.msra.mxu0 0.0
    %2850 = vmatprep.subr.mxu0 0.0
    %2851 = vmatpush1.msra.mxu0 0.0
    %2852 = vmatprep.subr.mxu0 0.0
    %2853 = vmatpush1.msra.mxu0 0.0
    %2854 = vmatprep.subr.mxu0 0.0
    %2855 = vmatpush1.msra.mxu0 0.0
    %2856 = vmatprep.subr.mxu0 0.0
    %2857 = vmatpush1.msra.mxu0 0.0
    %2858 = vmatprep.subr.mxu0 0.0
    %2859 = vmatpush1.msra.mxu0 0.0
    %2860 = vmatprep.subr.mxu0 0.0
    %2861 = vmatpush1.msra.mxu0 0.0
    %2862 = vmatprep.subr.mxu0 0.0
    %2863 = vmatpush1.msra.mxu0 0.0
    %2864 = vmatprep.subr.mxu0 0.0
    %2865 = vmatpush1.msra.mxu0 0.0
    %2866 = vmatprep.subr.mxu0 0.0
    %2867 = vmatpush1.msra.mxu0 0.0
    %2868 = vmatprep.subr.mxu0 0.0
    %2869 = vmatpush1.msra.mxu0 0.0
    %2870 = vmatprep.subr.mxu0 0.0
    %2871 = vmatpush1.msra.mxu0 0.0
    %2872 = vmatprep.subr.mxu0 0.0
    %2873 = vmatpush1.msra.mxu0 0.0
    %2874 = vmatprep.subr.mxu0 0.0
    %2875 = vmatpush1.msra.mxu0 0.0
    %2876 = vmatprep.subr.mxu0 0.0
    %2877 = vmatpush1.msra.mxu0 0.0
    %2878 = vmatprep.subr.mxu0 0.0
    %2879 = vmatpush1.msra.mxu0 0.0
    %2880 = vmatprep.subr.mxu0 0.0
    %2881 = vmatpush1.msra.mxu0 0.0
    %2882 = vmatprep.subr.mxu0 0.0
    %2883 = vmatpush1.msra.mxu0 0.0
    %2884 = vmatprep.subr.mxu0 0.0
    %2885 = vmatpush1.msra.mxu0 0.0
    %2886 = vmatprep.subr.mxu0 0.0
    %2887 = vmatpush1.msra.mxu0 0.0
    %2888 = vmatprep.subr.mxu0 0.0
    %2889 = vmatpush1.msra.mxu0 0.0
    %2890 = vmatprep.subr.mxu0 0.0
    %2891 = vmatpush1.msra.mxu0 0.0
    %2892 = vmatprep.subr.mxu0 0.0
    %2893 = vmatpush1.msra.mxu0 0.0
    %2894 = vmatprep.subr.mxu0 0.0
    %2895 = vmatpush1.msra.mxu0 0.0
    %2896 = vmatprep.mubr.f32.mxu0 0.0
    %2897 = vmatmul.mubr.f32.gmra.mrb[0].mxu0 %v2830
    %v2898 = vpop.f32.mrb[0].mxu0
    %v2899 = vadd.f32 0.0, %v2898
    %v2900 = vpop.f32.mrb[0].mxu0
    %2901 = vdwg.mxu0
    %v2902 = vlaneseq
    %v2903 = vshrl.u32 %v2902, 7
    %v2904 = vsub.s32 0, %v2903
    %v2905 = vrot.slane %v2899, %v2904
    %v2906 = vsub.f32 %v2814, %v2905
    %v2907 = vmul.f32 %v2906, %v2906
    %v2908 = vsel %vm2815, %v2907, 0.0
    %v2909 = vrot.slane %v2908, 4
    %v2910 = vadd.f32 %v2908, %v2909
    %v2911 = vrot.slane %v2910, 2
    %v2912 = vadd.f32 %v2910, %v2911
    %v2913 = vrot.slane %v2912, 1
    %v2914 = vadd.f32 %v2912, %v2913
    %v2916 = vsel %vm2815, %v2914, 0
    %2918 = vmatprep.subr.mxu0 0.0
    %2919 = vmatpush1.msra.mxu0 %v2823
    %2920 = vmatprep.subr.mxu0 0.0
    %2921 = vmatpush1.msra.mxu0 %v2824
    %2922 = vmatprep.subr.mxu0 0.0
    %2923 = vmatpush1.msra.mxu0 %v2825
    %2924 = vmatprep.subr.mxu0 0.0
    %2925 = vmatpush1.msra.mxu0 %v2826
    %2926 = vmatprep.subr.mxu0 0.0
    %2927 = vmatpush1.msra.mxu0 %v2827
    %2928 = vmatprep.subr.mxu0 0.0
    %2929 = vmatpush1.msra.mxu0 %v2828
    %2930 = vmatprep.subr.mxu0 0.0
    %2931 = vmatpush1.msra.mxu0 0.0
    %2932 = vmatprep.subr.mxu0 0.0
    %2933 = vmatpush1.msra.mxu0 0.0
    %2934 = vmatprep.subr.mxu0 0.0
    %2935 = vmatpush1.msra.mxu0 0.0
    %2936 = vmatprep.subr.mxu0 0.0
    %2937 = vmatpush1.msra.mxu0 0.0
    %2938 = vmatprep.subr.mxu0 0.0
    %2939 = vmatpush1.msra.mxu0 0.0
    %2940 = vmatprep.subr.mxu0 0.0
    %2941 = vmatpush1.msra.mxu0 0.0
    %2942 = vmatprep.subr.mxu0 0.0
    %2943 = vmatpush1.msra.mxu0 0.0
    %2944 = vmatprep.subr.mxu0 0.0
    %2945 = vmatpush1.msra.mxu0 0.0
    %2946 = vmatprep.subr.mxu0 0.0
    %2947 = vmatpush1.msra.mxu0 0.0
    %2948 = vmatprep.subr.mxu0 0.0
    %2949 = vmatpush1.msra.mxu0 0.0
    %2950 = vmatprep.subr.mxu0 0.0
    %2951 = vmatpush1.msra.mxu0 0.0
    %2952 = vmatprep.subr.mxu0 0.0
    %2953 = vmatpush1.msra.mxu0 0.0
    %2954 = vmatprep.subr.mxu0 0.0
    %2955 = vmatpush1.msra.mxu0 0.0
    %2956 = vmatprep.subr.mxu0 0.0
    %2957 = vmatpush1.msra.mxu0 0.0
    %2958 = vmatprep.subr.mxu0 0.0
    %2959 = vmatpush1.msra.mxu0 0.0
    %2960 = vmatprep.subr.mxu0 0.0
    %2961 = vmatpush1.msra.mxu0 0.0
    %2962 = vmatprep.subr.mxu0 0.0
    %2963 = vmatpush1.msra.mxu0 0.0
    %2964 = vmatprep.subr.mxu0 0.0
    %2965 = vmatpush1.msra.mxu0 0.0
    %2966 = vmatprep.subr.mxu0 0.0
    %2967 = vmatpush1.msra.mxu0 0.0
    %2968 = vmatprep.subr.mxu0 0.0
    %2969 = vmatpush1.msra.mxu0 0.0
    %2970 = vmatprep.subr.mxu0 0.0
    %2971 = vmatpush1.msra.mxu0 0.0
    %2972 = vmatprep.subr.mxu0 0.0
    %2973 = vmatpush1.msra.mxu0 0.0
    %2974 = vmatprep.subr.mxu0 0.0
    %2975 = vmatpush1.msra.mxu0 0.0
    %2976 = vmatprep.subr.mxu0 0.0
    %2977 = vmatpush1.msra.mxu0 0.0
    %2978 = vmatprep.subr.mxu0 0.0
    %2979 = vmatpush1.msra.mxu0 0.0
    %2980 = vmatprep.subr.mxu0 0.0
    %2981 = vmatpush1.msra.mxu0 0.0
    %2982 = vmatprep.mubr.f32.mxu0 0.0
    %2983 = vmatmul.mubr.f32.gmra.mrb[0].mxu0 %v2916
    %v2984 = vpop.f32.mrb[0].mxu0
    %v2985 = vadd.f32 1e-05, %v2984
    %v2986 = vpop.f32.mrb[0].mxu0
    %2987 = vdwg.mxu0
    %v2988 = vrsqrt.pop %v2985
    %v2989 = vlaneseq
    %v2990 = vshrl.u32 %v2989, 7
    %v2991 = vsub.s32 0, %v2990
    %v2992 = vrot.slane %v2988, %v2991
    %v2993 = vmul.f32 %v2906, %v2992
    %v2994 = vld [vmem:[#allocation23] sm:$0x1]
    %v2996 = vlaneseq
    %v2997 = vshrl.u32 %v2996, 7
    %v2998 = vsub.s32 0, %v2997
    %v2999 = vrot.slane %v2994, %v2998
    %v3001 = vmul.f32 %v2993, %v2999
    %v3002 = vld [vmem:[#allocation25] sm:$0x1]
    %v3004 = vlaneseq
    %v3005 = vshrl.u32 %v3004, 7
    %v3006 = vsub.s32 0, %v3005
    %v3007 = vrot.slane %v3002, %v3006
    %v3009 = vadd.f32 %v3001, %v3007
    %v3010 = vmax.f32 %v3009, 0.0
    %v3011 = vld [vmem:[#allocation26] sm:$0xf]
    %vm3012 = vcmask 64512
    %v3014 = vsel %vm3012, %v3011, 0
    %3016 = vmatprep.subr.mxu0 0.0
    %3017 = vmatpush1.msra.mxu0 %v3010
    %3018 = vmatprep.subr.mxu0 0.0
    %3019 = vmatpush1.msra.mxu0 0.0
    %3020 = vmatprep.subr.mxu0 0.0
    %3021 = vmatpush1.msra.mxu0 0.0
    %3022 = vmatprep.subr.mxu0 0.0
    %3023 = vmatpush1.msra.mxu0 0.0
    %3024 = vmatprep.subr.mxu0 0.0
    %3025 = vmatpush1.msra.mxu0 0.0
    %3026 = vmatprep.subr.mxu0 0.0
    %3027 = vmatpush1.msra.mxu0 0.0
    %3028 = vmatprep.subr.mxu0 0.0
    %3029 = vmatpush1.msra.mxu0 0.0
    %3030 = vmatprep.subr.mxu0 0.0
    %3031 = vmatpush1.msra.mxu0 0.0
    %3032 = vmatprep.subr.mxu0 0.0
    %3033 = vmatpush1.msra.mxu0 0.0
    %3034 = vmatprep.subr.mxu0 0.0
    %3035 = vmatpush1.msra.mxu0 0.0
    %3036 = vmatprep.subr.mxu0 0.0
    %3037 = vmatpush1.msra.mxu0 0.0
    %3038 = vmatprep.subr.mxu0 0.0
    %3039 = vmatpush1.msra.mxu0 0.0
    %3040 = vmatprep.subr.mxu0 0.0
    %3041 = vmatpush1.msra.mxu0 0.0
    %3042 = vmatprep.subr.mxu0 0.0
    %3043 = vmatpush1.msra.mxu0 0.0
    %3044 = vmatprep.subr.mxu0 0.0
    %3045 = vmatpush1.msra.mxu0 0.0
    %3046 = vmatprep.subr.mxu0 0.0
    %3047 = vmatpush1.msra.mxu0 0.0
    %3048 = vmatprep.subr.mxu0 0.0
    %3049 = vmatpush1.msra.mxu0 0.0
    %3050 = vmatprep.subr.mxu0 0.0
    %3051 = vmatpush1.msra.mxu0 0.0
    %3052 = vmatprep.subr.mxu0 0.0
    %3053 = vmatpush1.msra.mxu0 0.0
    %3054 = vmatprep.subr.mxu0 0.0
    %3055 = vmatpush1.msra.mxu0 0.0
    %3056 = vmatprep.subr.mxu0 0.0
    %3057 = vmatpush1.msra.mxu0 0.0
    %3058 = vmatprep.subr.mxu0 0.0
    %3059 = vmatpush1.msra.mxu0 0.0
    %3060 = vmatprep.subr.mxu0 0.0
    %3061 = vmatpush1.msra.mxu0 0.0
    %3062 = vmatprep.subr.mxu0 0.0
    %3063 = vmatpush1.msra.mxu0 0.0
    %3064 = vmatprep.subr.mxu0 0.0
    %3065 = vmatpush1.msra.mxu0 0.0
    %3066 = vmatprep.subr.mxu0 0.0
    %3067 = vmatpush1.msra.mxu0 0.0
    %3068 = vmatprep.subr.mxu0 0.0
    %3069 = vmatpush1.msra.mxu0 0.0
    %3070 = vmatprep.subr.mxu0 0.0
    %3071 = vmatpush1.msra.mxu0 0.0
    %3072 = vmatprep.subr.mxu0 0.0
    %3073 = vmatpush1.msra.mxu0 0.0
    %3074 = vmatprep.subr.mxu0 0.0
    %3075 = vmatpush1.msra.mxu0 0.0
    %3076 = vmatprep.subr.mxu0 0.0
    %3077 = vmatpush1.msra.mxu0 0.0
    %3078 = vmatprep.subr.mxu0 0.0
    %3079 = vmatpush1.msra.mxu0 0.0
    %3080 = vmatprep.mubr.f32.mxu0 0.0
    %3081 = vmatmul.mubr.f32.gmra.mrb[0].mxu0 %v3014
    %v3082 = vpop.f32.mrb[0].mxu0
    %v3083 = vadd.f32 0.0, %v3082
    %v3084 = vpop.f32.mrb[0].mxu0
    %3085 = vdwg.mxu0
    %v3086 = vld [vmem:[%s41] sm:$0xff]
    %v3087 = vld [vmem:[%s41 + $0x8] sm:$0xff]
    %v3088 = vld [vmem:[%s41 + $0x10] sm:$0xff]
    %v3089 = vld [vmem:[%s41 + $0x18] sm:$0xff]
    %v3090 = vld [vmem:[%s41 + $0x20] sm:$0xff]
    %v3091 = vld [vmem:[%s41 + $0x28] sm:$0xff]
    %s3092 = scalar_lea.vmem [#allocation26], 4
    %v3093 = vld [vmem:[%s3092] sm:$0xf]
    %v3095 = vsel %vm3012, %v3093, 0
    %3097 = vmatprep.subr.mxu0 0.0
    %3098 = vmatpush1.msra.mxu0 %v3010
    %3099 = vmatprep.subr.mxu0 0.0
    %3100 = vmatpush1.msra.mxu0 0.0
    %3101 = vmatprep.subr.mxu0 0.0
    %3102 = vmatpush1.msra.mxu0 0.0
    %3103 = vmatprep.subr.mxu0 0.0
    %3104 = vmatpush1.msra.mxu0 0.0
    %3105 = vmatprep.subr.mxu0 0.0
    %3106 = vmatpush1.msra.mxu0 0.0
    %3107 = vmatprep.subr.mxu0 0.0
    %3108 = vmatpush1.msra.mxu0 0.0
    %3109 = vmatprep.subr.mxu0 0.0
    %3110 = vmatpush1.msra.mxu0 0.0
    %3111 = vmatprep.subr.mxu0 0.0
    %3112 = vmatpush1.msra.mxu0 0.0
    %3113 = vmatprep.subr.mxu0 0.0
    %3114 = vmatpush1.msra.mxu0 0.0
    %3115 = vmatprep.subr.mxu0 0.0
    %3116 = vmatpush1.msra.mxu0 0.0
    %3117 = vmatprep.subr.mxu0 0.0
    %3118 = vmatpush1.msra.mxu0 0.0
    %3119 = vmatprep.subr.mxu0 0.0
    %3120 = vmatpush1.msra.mxu0 0.0
    %3121 = vmatprep.subr.mxu0 0.0
    %3122 = vmatpush1.msra.mxu0 0.0
    %3123 = vmatprep.subr.mxu0 0.0
    %3124 = vmatpush1.msra.mxu0 0.0
    %3125 = vmatprep.subr.mxu0 0.0
    %3126 = vmatpush1.msra.mxu0 0.0
    %3127 = vmatprep.subr.mxu0 0.0
    %3128 = vmatpush1.msra.mxu0 0.0
    %3129 = vmatprep.subr.mxu0 0.0
    %3130 = vmatpush1.msra.mxu0 0.0
    %3131 = vmatprep.subr.mxu0 0.0
    %3132 = vmatpush1.msra.mxu0 0.0
    %3133 = vmatprep.subr.mxu0 0.0
    %3134 = vmatpush1.msra.mxu0 0.0
    %3135 = vmatprep.subr.mxu0 0.0
    %3136 = vmatpush1.msra.mxu0 0.0
    %3137 = vmatprep.subr.mxu0 0.0
    %3138 = vmatpush1.msra.mxu0 0.0
    %3139 = vmatprep.subr.mxu0 0.0
    %3140 = vmatpush1.msra.mxu0 0.0
    %3141 = vmatprep.subr.mxu0 0.0
    %3142 = vmatpush1.msra.mxu0 0.0
    %3143 = vmatprep.subr.mxu0 0.0
    %3144 = vmatpush1.msra.mxu0 0.0
    %3145 = vmatprep.subr.mxu0 0.0
    %3146 = vmatpush1.msra.mxu0 0.0
    %3147 = vmatprep.subr.mxu0 0.0
    %3148 = vmatpush1.msra.mxu0 0.0
    %3149 = vmatprep.subr.mxu0 0.0
    %3150 = vmatpush1.msra.mxu0 0.0
    %3151 = vmatprep.subr.mxu0 0.0
    %3152 = vmatpush1.msra.mxu0 0.0
    %3153 = vmatprep.subr.mxu0 0.0
    %3154 = vmatpush1.msra.mxu0 0.0
    %3155 = vmatprep.subr.mxu0 0.0
    %3156 = vmatpush1.msra.mxu0 0.0
    %3157 = vmatprep.subr.mxu0 0.0
    %3158 = vmatpush1.msra.mxu0 0.0
    %3159 = vmatprep.subr.mxu0 0.0
    %3160 = vmatpush1.msra.mxu0 0.0
    %3161 = vmatprep.mubr.f32.mxu0 0.0
    %3162 = vmatmul.mubr.f32.gmra.mrb[0].mxu0 %v3095
    %v3163 = vpop.f32.mrb[0].mxu0
    %v3164 = vadd.f32 0.0, %v3163
    %v3165 = vpop.f32.mrb[0].mxu0
    %3166 = vdwg.mxu0
    %s3167 = scalar_lea.vmem %s41, 48
    %v3168 = vld [vmem:[%s3167] sm:$0xff]
    %v3169 = vld [vmem:[%s3167 + $0x8] sm:$0xff]
    %v3170 = vld [vmem:[%s3167 + $0x10] sm:$0xff]
    %v3171 = vld [vmem:[%s3167 + $0x18] sm:$0xff]
    %v3172 = vld [vmem:[%s3167 + $0x20] sm:$0xff]
    %v3173 = vld [vmem:[%s3167 + $0x28] sm:$0xff]
    %v3175 = vsel %vm2815, %v3164, 0
    %3177 = vmatprep.subr.mxu0 0.0
    %3178 = vmatpush1.msra.mxu0 %v3168
    %3179 = vmatprep.subr.mxu0 0.0
    %3180 = vmatpush1.msra.mxu0 %v3169
    %3181 = vmatprep.subr.mxu0 0.0
    %3182 = vmatpush1.msra.mxu0 %v3170
    %3183 = vmatprep.subr.mxu0 0.0
    %3184 = vmatpush1.msra.mxu0 %v3171
    %3185 = vmatprep.subr.mxu0 0.0
    %3186 = vmatpush1.msra.mxu0 %v3172
    %3187 = vmatprep.subr.mxu0 0.0
    %3188 = vmatpush1.msra.mxu0 %v3173
    %3189 = vmatprep.subr.mxu0 0.0
    %3190 = vmatpush1.msra.mxu0 0.0
    %3191 = vmatprep.subr.mxu0 0.0
    %3192 = vmatpush1.msra.mxu0 0.0
    %3193 = vmatprep.subr.mxu0 0.0
    %3194 = vmatpush1.msra.mxu0 0.0
    %3195 = vmatprep.subr.mxu0 0.0
    %3196 = vmatpush1.msra.mxu0 0.0
    %3197 = vmatprep.subr.mxu0 0.0
    %3198 = vmatpush1.msra.mxu0 0.0
    %3199 = vmatprep.subr.mxu0 0.0
    %3200 = vmatpush1.msra.mxu0 0.0
    %3201 = vmatprep.subr.mxu0 0.0
    %3202 = vmatpush1.msra.mxu0 0.0
    %3203 = vmatprep.subr.mxu0 0.0
    %3204 = vmatpush1.msra.mxu0 0.0
    %3205 = vmatprep.subr.mxu0 0.0
    %3206 = vmatpush1.msra.mxu0 0.0
    %3207 = vmatprep.subr.mxu0 0.0
    %3208 = vmatpush1.msra.mxu0 0.0
    %3209 = vmatprep.subr.mxu0 0.0
    %3210 = vmatpush1.msra.mxu0 0.0
    %3211 = vmatprep.subr.mxu0 0.0
    %3212 = vmatpush1.msra.mxu0 0.0
    %3213 = vmatprep.subr.mxu0 0.0
    %3214 = vmatpush1.msra.mxu0 0.0
    %3215 = vmatprep.subr.mxu0 0.0
    %3216 = vmatpush1.msra.mxu0 0.0
    %3217 = vmatprep.subr.mxu0 0.0
    %3218 = vmatpush1.msra.mxu0 0.0
    %3219 = vmatprep.subr.mxu0 0.0
    %3220 = vmatpush1.msra.mxu0 0.0
    %3221 = vmatprep.subr.mxu0 0.0
    %3222 = vmatpush1.msra.mxu0 0.0
    %3223 = vmatprep.subr.mxu0 0.0
    %3224 = vmatpush1.msra.mxu0 0.0
    %3225 = vmatprep.subr.mxu0 0.0
    %3226 = vmatpush1.msra.mxu0 0.0
    %3227 = vmatprep.subr.mxu0 0.0
    %3228 = vmatpush1.msra.mxu0 0.0
    %3229 = vmatprep.subr.mxu0 0.0
    %3230 = vmatpush1.msra.mxu0 0.0
    %3231 = vmatprep.subr.mxu0 0.0
    %3232 = vmatpush1.msra.mxu0 0.0
    %3233 = vmatprep.subr.mxu0 0.0
    %3234 = vmatpush1.msra.mxu0 0.0
    %3235 = vmatprep.subr.mxu0 0.0
    %3236 = vmatpush1.msra.mxu0 0.0
    %3237 = vmatprep.subr.mxu0 0.0
    %3238 = vmatpush1.msra.mxu0 0.0
    %3239 = vmatprep.subr.mxu0 0.0
    %3240 = vmatpush1.msra.mxu0 0.0
    %3241 = vmatprep.mubr.f32.mxu0 0.0
    %3242 = vmatmul.mubr.f32.gmra.mrb[0].mxu0 %v3175
    %v3243 = vpop.f32.mrb[0].mxu0
    %v3244 = vadd.f32 0.0, %v3243
    %v3245 = vpop.f32.mrb[0].mxu0
    %3246 = vdwg.mxu0
    %v3248 = vsel %vm2815, %v3083, 0
    %3250 = vmatprep.subr.mxu0 0.0
    %3251 = vmatpush1.msra.mxu0 %v3086
    %3252 = vmatprep.subr.mxu0 0.0
    %3253 = vmatpush1.msra.mxu0 %v3087
    %3254 = vmatprep.subr.mxu0 0.0
    %3255 = vmatpush1.msra.mxu0 %v3088
    %3256 = vmatprep.subr.mxu0 0.0
    %3257 = vmatpush1.msra.mxu0 %v3089
    %3258 = vmatprep.subr.mxu0 0.0
    %3259 = vmatpush1.msra.mxu0 %v3090
    %3260 = vmatprep.subr.mxu0 0.0
    %3261 = vmatpush1.msra.mxu0 %v3091
    %3262 = vmatprep.subr.mxu0 0.0
    %3263 = vmatpush1.msra.mxu0 0.0
    %3264 = vmatprep.subr.mxu0 0.0
    %3265 = vmatpush1.msra.mxu0 0.0
    %3266 = vmatprep.subr.mxu0 0.0
    %3267 = vmatpush1.msra.mxu0 0.0
    %3268 = vmatprep.subr.mxu0 0.0
    %3269 = vmatpush1.msra.mxu0 0.0
    %3270 = vmatprep.subr.mxu0 0.0
    %3271 = vmatpush1.msra.mxu0 0.0
    %3272 = vmatprep.subr.mxu0 0.0
    %3273 = vmatpush1.msra.mxu0 0.0
    %3274 = vmatprep.subr.mxu0 0.0
    %3275 = vmatpush1.msra.mxu0 0.0
    %3276 = vmatprep.subr.mxu0 0.0
    %3277 = vmatpush1.msra.mxu0 0.0
    %3278 = vmatprep.subr.mxu0 0.0
    %3279 = vmatpush1.msra.mxu0 0.0
    %3280 = vmatprep.subr.mxu0 0.0
    %3281 = vmatpush1.msra.mxu0 0.0
    %3282 = vmatprep.subr.mxu0 0.0
    %3283 = vmatpush1.msra.mxu0 0.0
    %3284 = vmatprep.subr.mxu0 0.0
    %3285 = vmatpush1.msra.mxu0 0.0
    %3286 = vmatprep.subr.mxu0 0.0
    %3287 = vmatpush1.msra.mxu0 0.0
    %3288 = vmatprep.subr.mxu0 0.0
    %3289 = vmatpush1.msra.mxu0 0.0
    %3290 = vmatprep.subr.mxu0 0.0
    %3291 = vmatpush1.msra.mxu0 0.0
    %3292 = vmatprep.subr.mxu0 0.0
    %3293 = vmatpush1.msra.mxu0 0.0
    %3294 = vmatprep.subr.mxu0 0.0
    %3295 = vmatpush1.msra.mxu0 0.0
    %3296 = vmatprep.subr.mxu0 0.0
    %3297 = vmatpush1.msra.mxu0 0.0
    %3298 = vmatprep.subr.mxu0 0.0
    %3299 = vmatpush1.msra.mxu0 0.0
    %3300 = vmatprep.subr.mxu0 0.0
    %3301 = vmatpush1.msra.mxu0 0.0
    %3302 = vmatprep.subr.mxu0 0.0
    %3303 = vmatpush1.msra.mxu0 0.0
    %3304 = vmatprep.subr.mxu0 0.0
    %3305 = vmatpush1.msra.mxu0 0.0
    %3306 = vmatprep.subr.mxu0 0.0
    %3307 = vmatpush1.msra.mxu0 0.0
    %3308 = vmatprep.subr.mxu0 0.0
    %3309 = vmatpush1.msra.mxu0 0.0
    %3310 = vmatprep.subr.mxu0 0.0
    %3311 = vmatpush1.msra.mxu0 0.0
    %3312 = vmatprep.subr.mxu0 0.0
    %3313 = vmatpush1.msra.mxu0 0.0
    %3314 = vmatprep.mubr.f32.mxu0 0.0
    %3315 = vmatmul.mubr.f32.gmra.mrb[0].mxu0 %v3248
    %v3316 = vpop.f32.mrb[0].mxu0
    %v3317 = vadd.f32 %v3244, %v3316
    %v3318 = vpop.f32.mrb[0].mxu0
    %3319 = vdwg.mxu0
    %s3320 = scalar_lea.vmem [#allocation26], 8
    %v3321 = vld [vmem:[%s3320] sm:$0xf]
    %v3323 = vsel %vm3012, %v3321, 0
    %3325 = vmatprep.subr.mxu0 0.0
    %3326 = vmatpush1.msra.mxu0 %v3010
    %3327 = vmatprep.subr.mxu0 0.0
    %3328 = vmatpush1.msra.mxu0 0.0
    %3329 = vmatprep.subr.mxu0 0.0
    %3330 = vmatpush1.msra.mxu0 0.0
    %3331 = vmatprep.subr.mxu0 0.0
    %3332 = vmatpush1.msra.mxu0 0.0
    %3333 = vmatprep.subr.mxu0 0.0
    %3334 = vmatpush1.msra.mxu0 0.0
    %3335 = vmatprep.subr.mxu0 0.0
    %3336 = vmatpush1.msra.mxu0 0.0
    %3337 = vmatprep.subr.mxu0 0.0
    %3338 = vmatpush1.msra.mxu0 0.0
    %3339 = vmatprep.subr.mxu0 0.0
    %3340 = vmatpush1.msra.mxu0 0.0
    %3341 = vmatprep.subr.mxu0 0.0
    %3342 = vmatpush1.msra.mxu0 0.0
    %3343 = vmatprep.subr.mxu0 0.0
    %3344 = vmatpush1.msra.mxu0 0.0
    %3345 = vmatprep.subr.mxu0 0.0
    %3346 = vmatpush1.msra.mxu0 0.0
    %3347 = vmatprep.subr.mxu0 0.0
    %3348 = vmatpush1.msra.mxu0 0.0
    %3349 = vmatprep.subr.mxu0 0.0
    %3350 = vmatpush1.msra.mxu0 0.0
    %3351 = vmatprep.subr.mxu0 0.0
    %3352 = vmatpush1.msra.mxu0 0.0
    %3353 = vmatprep.subr.mxu0 0.0
    %3354 = vmatpush1.msra.mxu0 0.0
    %3355 = vmatprep.subr.mxu0 0.0
    %3356 = vmatpush1.msra.mxu0 0.0
    %3357 = vmatprep.subr.mxu0 0.0
    %3358 = vmatpush1.msra.mxu0 0.0
    %3359 = vmatprep.subr.mxu0 0.0
    %3360 = vmatpush1.msra.mxu0 0.0
    %3361 = vmatprep.subr.mxu0 0.0
    %3362 = vmatpush1.msra.mxu0 0.0
    %3363 = vmatprep.subr.mxu0 0.0
    %3364 = vmatpush1.msra.mxu0 0.0
    %3365 = vmatprep.subr.mxu0 0.0
    %3366 = vmatpush1.msra.mxu0 0.0
    %3367 = vmatprep.subr.mxu0 0.0
    %3368 = vmatpush1.msra.mxu0 0.0
    %3369 = vmatprep.subr.mxu0 0.0
    %3370 = vmatpush1.msra.mxu0 0.0
    %3371 = vmatprep.subr.mxu0 0.0
    %3372 = vmatpush1.msra.mxu0 0.0
    %3373 = vmatprep.subr.mxu0 0.0
    %3374 = vmatpush1.msra.mxu0 0.0
    %3375 = vmatprep.subr.mxu0 0.0
    %3376 = vmatpush1.msra.mxu0 0.0
    %3377 = vmatprep.subr.mxu0 0.0
    %3378 = vmatpush1.msra.mxu0 0.0
    %3379 = vmatprep.subr.mxu0 0.0
    %3380 = vmatpush1.msra.mxu0 0.0
    %3381 = vmatprep.subr.mxu0 0.0
    %3382 = vmatpush1.msra.mxu0 0.0
    %3383 = vmatprep.subr.mxu0 0.0
    %3384 = vmatpush1.msra.mxu0 0.0
    %3385 = vmatprep.subr.mxu0 0.0
    %3386 = vmatpush1.msra.mxu0 0.0
    %3387 = vmatprep.subr.mxu0 0.0
    %3388 = vmatpush1.msra.mxu0 0.0
    %3389 = vmatprep.mubr.f32.mxu0 0.0
    %3390 = vmatmul.mubr.f32.gmra.mrb[0].mxu0 %v3323
    %v3391 = vpop.f32.mrb[0].mxu0
    %v3392 = vadd.f32 0.0, %v3391
    %v3393 = vpop.f32.mrb[0].mxu0
    %3394 = vdwg.mxu0
    %s3395 = scalar_lea.vmem %s41, 96
    %v3396 = vld [vmem:[%s3395] sm:$0xff]
    %v3397 = vld [vmem:[%s3395 + $0x8] sm:$0xff]
    %v3398 = vld [vmem:[%s3395 + $0x10] sm:$0xff]
    %v3399 = vld [vmem:[%s3395 + $0x18] sm:$0xff]
    %v3400 = vld [vmem:[%s3395 + $0x20] sm:$0xff]
    %v3401 = vld [vmem:[%s3395 + $0x28] sm:$0xff]
    %v3403 = vsel %vm2815, %v3392, 0
    %3405 = vmatprep.subr.mxu0 0.0
    %3406 = vmatpush1.msra.mxu0 %v3396
    %3407 = vmatprep.subr.mxu0 0.0
    %3408 = vmatpush1.msra.mxu0 %v3397
    %3409 = vmatprep.subr.mxu0 0.0
    %3410 = vmatpush1.msra.mxu0 %v3398
    %3411 = vmatprep.subr.mxu0 0.0
    %3412 = vmatpush1.msra.mxu0 %v3399
    %3413 = vmatprep.subr.mxu0 0.0
    %3414 = vmatpush1.msra.mxu0 %v3400
    %3415 = vmatprep.subr.mxu0 0.0
    %3416 = vmatpush1.msra.mxu0 %v3401
    %3417 = vmatprep.subr.mxu0 0.0
    %3418 = vmatpush1.msra.mxu0 0.0
    %3419 = vmatprep.subr.mxu0 0.0
    %3420 = vmatpush1.msra.mxu0 0.0
    %3421 = vmatprep.subr.mxu0 0.0
    %3422 = vmatpush1.msra.mxu0 0.0
    %3423 = vmatprep.subr.mxu0 0.0
    %3424 = vmatpush1.msra.mxu0 0.0
    %3425 = vmatprep.subr.mxu0 0.0
    %3426 = vmatpush1.msra.mxu0 0.0
    %3427 = vmatprep.subr.mxu0 0.0
    %3428 = vmatpush1.msra.mxu0 0.0
    %3429 = vmatprep.subr.mxu0 0.0
    %3430 = vmatpush1.msra.mxu0 0.0
    %3431 = vmatprep.subr.mxu0 0.0
    %3432 = vmatpush1.msra.mxu0 0.0
    %3433 = vmatprep.subr.mxu0 0.0
    %3434 = vmatpush1.msra.mxu0 0.0
    %3435 = vmatprep.subr.mxu0 0.0
    %3436 = vmatpush1.msra.mxu0 0.0
    %3437 = vmatprep.subr.mxu0 0.0
    %3438 = vmatpush1.msra.mxu0 0.0
    %3439 = vmatprep.subr.mxu0 0.0
    %3440 = vmatpush1.msra.mxu0 0.0
    %3441 = vmatprep.subr.mxu0 0.0
    %3442 = vmatpush1.msra.mxu0 0.0
    %3443 = vmatprep.subr.mxu0 0.0
    %3444 = vmatpush1.msra.mxu0 0.0
    %3445 = vmatprep.subr.mxu0 0.0
    %3446 = vmatpush1.msra.mxu0 0.0
    %3447 = vmatprep.subr.mxu0 0.0
    %3448 = vmatpush1.msra.mxu0 0.0
    %3449 = vmatprep.subr.mxu0 0.0
    %3450 = vmatpush1.msra.mxu0 0.0
    %3451 = vmatprep.subr.mxu0 0.0
    %3452 = vmatpush1.msra.mxu0 0.0
    %3453 = vmatprep.subr.mxu0 0.0
    %3454 = vmatpush1.msra.mxu0 0.0
    %3455 = vmatprep.subr.mxu0 0.0
    %3456 = vmatpush1.msra.mxu0 0.0
    %3457 = vmatprep.subr.mxu0 0.0
    %3458 = vmatpush1.msra.mxu0 0.0
    %3459 = vmatprep.subr.mxu0 0.0
    %3460 = vmatpush1.msra.mxu0 0.0
    %3461 = vmatprep.subr.mxu0 0.0
    %3462 = vmatpush1.msra.mxu0 0.0
    %3463 = vmatprep.subr.mxu0 0.0
    %3464 = vmatpush1.msra.mxu0 0.0
    %3465 = vmatprep.subr.mxu0 0.0
    %3466 = vmatpush1.msra.mxu0 0.0
    %3467 = vmatprep.subr.mxu0 0.0
    %3468 = vmatpush1.msra.mxu0 0.0
    %3469 = vmatprep.mubr.f32.mxu0 0.0
    %3470 = vmatmul.mubr.f32.gmra.mrb[0].mxu0 %v3403
    %v3471 = vpop.f32.mrb[0].mxu0
    %v3472 = vadd.f32 0.0, %v3471
    %v3473 = vpop.f32.mrb[0].mxu0
    %3474 = vdwg.mxu0
    %v3475 = vadd.f32 %v3317, %v3472
    %v3476 = vld [vmem:[#allocation28] sm:$0x1]
    %v3478 = vlaneseq
    %v3479 = vshrl.u32 %v3478, 7
    %v3480 = vsub.s32 0, %v3479
    %v3481 = vrot.slane %v3476, %v3480
    %v3483 = vadd.f32 %v3475, %v3481
    %vm3484 = vcmask 388096
    %v3485 = vsel %vm3484, %v3483, 0.0
    %v3486 = vrot.slane %v3485, 4
    %v3487 = vadd.f32 %v3485, %v3486
    %v3488 = vrot.slane %v3487, 2
    %v3489 = vadd.f32 %v3487, %v3488
    %v3490 = vrot.slane %v3489, 1
    %v3491 = vadd.f32 %v3489, %v3490
    %v3492 = vld [vmem:[#allocation29] sm:$0xff]
    %v3493 = vld [vmem:[#allocation29 + $0x8] sm:$0xff]
    %v3494 = vld [vmem:[#allocation29 + $0x10] sm:$0xff]
    %v3495 = vld [vmem:[#allocation29 + $0x18] sm:$0xff]
    %v3496 = vld [vmem:[#allocation29 + $0x20] sm:$0xff]
    %v3497 = vld [vmem:[#allocation29 + $0x28] sm:$0xff]
    %v3499 = vsel %vm2815, %v3491, 0
    %3501 = vmatprep.subr.mxu0 0.0
    %3502 = vmatpush1.msra.mxu0 %v3492
    %3503 = vmatprep.subr.mxu0 0.0
    %3504 = vmatpush1.msra.mxu0 %v3493
    %3505 = vmatprep.subr.mxu0 0.0
    %3506 = vmatpush1.msra.mxu0 %v3494
    %3507 = vmatprep.subr.mxu0 0.0
    %3508 = vmatpush1.msra.mxu0 %v3495
    %3509 = vmatprep.subr.mxu0 0.0
    %3510 = vmatpush1.msra.mxu0 %v3496
    %3511 = vmatprep.subr.mxu0 0.0
    %3512 = vmatpush1.msra.mxu0 %v3497
    %3513 = vmatprep.subr.mxu0 0.0
    %3514 = vmatpush1.msra.mxu0 0.0
    %3515 = vmatprep.subr.mxu0 0.0
    %3516 = vmatpush1.msra.mxu0 0.0
    %3517 = vmatprep.subr.mxu0 0.0
    %3518 = vmatpush1.msra.mxu0 0.0
    %3519 = vmatprep.subr.mxu0 0.0
    %3520 = vmatpush1.msra.mxu0 0.0
    %3521 = vmatprep.subr.mxu0 0.0
    %3522 = vmatpush1.msra.mxu0 0.0
    %3523 = vmatprep.subr.mxu0 0.0
    %3524 = vmatpush1.msra.mxu0 0.0
    %3525 = vmatprep.subr.mxu0 0.0
    %3526 = vmatpush1.msra.mxu0 0.0
    %3527 = vmatprep.subr.mxu0 0.0
    %3528 = vmatpush1.msra.mxu0 0.0
    %3529 = vmatprep.subr.mxu0 0.0
    %3530 = vmatpush1.msra.mxu0 0.0
    %3531 = vmatprep.subr.mxu0 0.0
    %3532 = vmatpush1.msra.mxu0 0.0
    %3533 = vmatprep.subr.mxu0 0.0
    %3534 = vmatpush1.msra.mxu0 0.0
    %3535 = vmatprep.subr.mxu0 0.0
    %3536 = vmatpush1.msra.mxu0 0.0
    %3537 = vmatprep.subr.mxu0 0.0
    %3538 = vmatpush1.msra.mxu0 0.0
    %3539 = vmatprep.subr.mxu0 0.0
    %3540 = vmatpush1.msra.mxu0 0.0
    %3541 = vmatprep.subr.mxu0 0.0
    %3542 = vmatpush1.msra.mxu0 0.0
    %3543 = vmatprep.subr.mxu0 0.0
    %3544 = vmatpush1.msra.mxu0 0.0
    %3545 = vmatprep.subr.mxu0 0.0
    %3546 = vmatpush1.msra.mxu0 0.0
    %3547 = vmatprep.subr.mxu0 0.0
    %3548 = vmatpush1.msra.mxu0 0.0
    %3549 = vmatprep.subr.mxu0 0.0
    %3550 = vmatpush1.msra.mxu0 0.0
    %3551 = vmatprep.subr.mxu0 0.0
    %3552 = vmatpush1.msra.mxu0 0.0
    %3553 = vmatprep.subr.mxu0 0.0
    %3554 = vmatpush1.msra.mxu0 0.0
    %3555 = vmatprep.subr.mxu0 0.0
    %3556 = vmatpush1.msra.mxu0 0.0
    %3557 = vmatprep.subr.mxu0 0.0
    %3558 = vmatpush1.msra.mxu0 0.0
    %3559 = vmatprep.subr.mxu0 0.0
    %3560 = vmatpush1.msra.mxu0 0.0
    %3561 = vmatprep.subr.mxu0 0.0
    %3562 = vmatpush1.msra.mxu0 0.0
    %3563 = vmatprep.subr.mxu0 0.0
    %3564 = vmatpush1.msra.mxu0 0.0
    %3565 = vmatprep.mubr.f32.mxu0 0.0
    %3566 = vmatmul.mubr.f32.gmra.mrb[0].mxu0 %v3499
    %v3567 = vpop.f32.mrb[0].mxu0
    %v3568 = vadd.f32 0.0, %v3567
    %v3569 = vpop.f32.mrb[0].mxu0
    %3570 = vdwg.mxu0
    %v3571 = vlaneseq
    %v3572 = vshrl.u32 %v3571, 7
    %v3573 = vsub.s32 0, %v3572
    %v3574 = vrot.slane %v3568, %v3573
    %v3575 = vsub.f32 %v3483, %v3574
    %v3576 = vmul.f32 %v3575, %v3575
    %v3577 = vsel %vm3484, %v3576, 0.0
    %v3578 = vrot.slane %v3577, 4
    %v3579 = vadd.f32 %v3577, %v3578
    %v3580 = vrot.slane %v3579, 2
    %v3581 = vadd.f32 %v3579, %v3580
    %v3582 = vrot.slane %v3581, 1
    %v3583 = vadd.f32 %v3581, %v3582
    %v3585 = vsel %vm2815, %v3583, 0
    %3587 = vmatprep.subr.mxu0 0.0
    %3588 = vmatpush1.msra.mxu0 %v3492
    %3589 = vmatprep.subr.mxu0 0.0
    %3590 = vmatpush1.msra.mxu0 %v3493
    %3591 = vmatprep.subr.mxu0 0.0
    %3592 = vmatpush1.msra.mxu0 %v3494
    %3593 = vmatprep.subr.mxu0 0.0
    %3594 = vmatpush1.msra.mxu0 %v3495
    %3595 = vmatprep.subr.mxu0 0.0
    %3596 = vmatpush1.msra.mxu0 %v3496
    %3597 = vmatprep.subr.mxu0 0.0
    %3598 = vmatpush1.msra.mxu0 %v3497
    %3599 = vmatprep.subr.mxu0 0.0
    %3600 = vmatpush1.msra.mxu0 0.0
    %3601 = vmatprep.subr.mxu0 0.0
    %3602 = vmatpush1.msra.mxu0 0.0
    %3603 = vmatprep.subr.mxu0 0.0
    %3604 = vmatpush1.msra.mxu0 0.0
    %3605 = vmatprep.subr.mxu0 0.0
    %3606 = vmatpush1.msra.mxu0 0.0
    %3607 = vmatprep.subr.mxu0 0.0
    %3608 = vmatpush1.msra.mxu0 0.0
    %3609 = vmatprep.subr.mxu0 0.0
    %3610 = vmatpush1.msra.mxu0 0.0
    %3611 = vmatprep.subr.mxu0 0.0
    %3612 = vmatpush1.msra.mxu0 0.0
    %3613 = vmatprep.subr.mxu0 0.0
    %3614 = vmatpush1.msra.mxu0 0.0
    %3615 = vmatprep.subr.mxu0 0.0
    %3616 = vmatpush1.msra.mxu0 0.0
    %3617 = vmatprep.subr.mxu0 0.0
    %3618 = vmatpush1.msra.mxu0 0.0
    %3619 = vmatprep.subr.mxu0 0.0
    %3620 = vmatpush1.msra.mxu0 0.0
    %3621 = vmatprep.subr.mxu0 0.0
    %3622 = vmatpush1.msra.mxu0 0.0
    %3623 = vmatprep.subr.mxu0 0.0
    %3624 = vmatpush1.msra.mxu0 0.0
    %3625 = vmatprep.subr.mxu0 0.0
    %3626 = vmatpush1.msra.mxu0 0.0
    %3627 = vmatprep.subr.mxu0 0.0
    %3628 = vmatpush1.msra.mxu0 0.0
    %3629 = vmatprep.subr.mxu0 0.0
    %3630 = vmatpush1.msra.mxu0 0.0
    %3631 = vmatprep.subr.mxu0 0.0
    %3632 = vmatpush1.msra.mxu0 0.0
    %3633 = vmatprep.subr.mxu0 0.0
    %3634 = vmatpush1.msra.mxu0 0.0
    %3635 = vmatprep.subr.mxu0 0.0
    %3636 = vmatpush1.msra.mxu0 0.0
    %3637 = vmatprep.subr.mxu0 0.0
    %3638 = vmatpush1.msra.mxu0 0.0
    %3639 = vmatprep.subr.mxu0 0.0
    %3640 = vmatpush1.msra.mxu0 0.0
    %3641 = vmatprep.subr.mxu0 0.0
    %3642 = vmatpush1.msra.mxu0 0.0
    %3643 = vmatprep.subr.mxu0 0.0
    %3644 = vmatpush1.msra.mxu0 0.0
    %3645 = vmatprep.subr.mxu0 0.0
    %3646 = vmatpush1.msra.mxu0 0.0
    %3647 = vmatprep.subr.mxu0 0.0
    %3648 = vmatpush1.msra.mxu0 0.0
    %3649 = vmatprep.subr.mxu0 0.0
    %3650 = vmatpush1.msra.mxu0 0.0
    %3651 = vmatprep.mubr.f32.mxu0 0.0
    %3652 = vmatmul.mubr.f32.gmra.mrb[0].mxu0 %v3585
    %v3653 = vpop.f32.mrb[0].mxu0
    %v3654 = vadd.f32 1e-05, %v3653
    %v3655 = vpop.f32.mrb[0].mxu0
    %3656 = vdwg.mxu0
    %v3657 = vrsqrt.pop %v3654
    %v3658 = vlaneseq
    %v3659 = vshrl.u32 %v3658, 7
    %v3660 = vsub.s32 0, %v3659
    %v3661 = vrot.slane %v3657, %v3660
    %v3662 = vmul.f32 %v3575, %v3661
    %v3663 = vld [vmem:[#allocation31] sm:$0x1]
    %v3665 = vlaneseq
    %v3666 = vshrl.u32 %v3665, 7
    %v3667 = vsub.s32 0, %v3666
    %v3668 = vrot.slane %v3663, %v3667
    %v3670 = vmul.f32 %v3662, %v3668
    %v3671 = vld [vmem:[#allocation32] sm:$0x1]
    %v3673 = vlaneseq
    %v3674 = vshrl.u32 %v3673, 7
    %v3675 = vsub.s32 0, %v3674
    %v3676 = vrot.slane %v3671, %v3675
    %v3678 = vadd.f32 %v3670, %v3676
    %v3679 = vmax.f32 %v3678, 0.0
    %v3680 = vld [vmem:[%s51] sm:$0x3]
    %vm3681 = vcmask 31744
    %v3683 = vsel %vm3681, %v3680, 0
    %v3686 = vsel %vm941, %v3679, 0
    %3688 = vmatprep.subr.mxu0 0.0
    %3689 = vmatpush1.msra.mxu0 %v3686
    %3690 = vmatprep.subr.mxu0 0.0
    %3691 = vmatpush1.msra.mxu0 0.0
    %3692 = vmatprep.subr.mxu0 0.0
    %3693 = vmatpush1.msra.mxu0 0.0
    %3694 = vmatprep.subr.mxu0 0.0
    %3695 = vmatpush1.msra.mxu0 0.0
    %3696 = vmatprep.subr.mxu0 0.0
    %3697 = vmatpush1.msra.mxu0 0.0
    %3698 = vmatprep.subr.mxu0 0.0
    %3699 = vmatpush1.msra.mxu0 0.0
    %3700 = vmatprep.subr.mxu0 0.0
    %3701 = vmatpush1.msra.mxu0 0.0
    %3702 = vmatprep.subr.mxu0 0.0
    %3703 = vmatpush1.msra.mxu0 0.0
    %3704 = vmatprep.subr.mxu0 0.0
    %3705 = vmatpush1.msra.mxu0 0.0
    %3706 = vmatprep.subr.mxu0 0.0
    %3707 = vmatpush1.msra.mxu0 0.0
    %3708 = vmatprep.subr.mxu0 0.0
    %3709 = vmatpush1.msra.mxu0 0.0
    %3710 = vmatprep.subr.mxu0 0.0
    %3711 = vmatpush1.msra.mxu0 0.0
    %3712 = vmatprep.subr.mxu0 0.0
    %3713 = vmatpush1.msra.mxu0 0.0
    %3714 = vmatprep.subr.mxu0 0.0
    %3715 = vmatpush1.msra.mxu0 0.0
    %3716 = vmatprep.subr.mxu0 0.0
    %3717 = vmatpush1.msra.mxu0 0.0
    %3718 = vmatprep.subr.mxu0 0.0
    %3719 = vmatpush1.msra.mxu0 0.0
    %3720 = vmatprep.subr.mxu0 0.0
    %3721 = vmatpush1.msra.mxu0 0.0
    %3722 = vmatprep.subr.mxu0 0.0
    %3723 = vmatpush1.msra.mxu0 0.0
    %3724 = vmatprep.subr.mxu0 0.0
    %3725 = vmatpush1.msra.mxu0 0.0
    %3726 = vmatprep.subr.mxu0 0.0
    %3727 = vmatpush1.msra.mxu0 0.0
    %3728 = vmatprep.subr.mxu0 0.0
    %3729 = vmatpush1.msra.mxu0 0.0
    %3730 = vmatprep.subr.mxu0 0.0
    %3731 = vmatpush1.msra.mxu0 0.0
    %3732 = vmatprep.subr.mxu0 0.0
    %3733 = vmatpush1.msra.mxu0 0.0
    %3734 = vmatprep.subr.mxu0 0.0
    %3735 = vmatpush1.msra.mxu0 0.0
    %3736 = vmatprep.subr.mxu0 0.0
    %3737 = vmatpush1.msra.mxu0 0.0
    %3738 = vmatprep.subr.mxu0 0.0
    %3739 = vmatpush1.msra.mxu0 0.0
    %3740 = vmatprep.subr.mxu0 0.0
    %3741 = vmatpush1.msra.mxu0 0.0
    %3742 = vmatprep.subr.mxu0 0.0
    %3743 = vmatpush1.msra.mxu0 0.0
    %3744 = vmatprep.subr.mxu0 0.0
    %3745 = vmatpush1.msra.mxu0 0.0
    %3746 = vmatprep.subr.mxu0 0.0
    %3747 = vmatpush1.msra.mxu0 0.0
    %3748 = vmatprep.subr.mxu0 0.0
    %3749 = vmatpush1.msra.mxu0 0.0
    %3750 = vmatprep.subr.mxu0 0.0
    %3751 = vmatpush1.msra.mxu0 0.0
    %3752 = vmatprep.mubr.f32.mxu0 0.0
    %3753 = vmatmul.mubr.f32.gmra.mrb[0].mxu0 %v3683
    %v3754 = vpop.f32.mrb[0].mxu0
    %v3755 = vadd.f32 0.0, %v3754
    %v3756 = vpop.f32.mrb[0].mxu0
    %3757 = vdwg.mxu0
    %v3758 = vld [vmem:[%s53] sm:$0xff]
    %v3759 = vld [vmem:[%s53 + $0x8] sm:$0xff]
    %v3760 = vld [vmem:[%s53 + $0x10] sm:$0xff]
    %v3761 = vld [vmem:[%s53 + $0x18] sm:$0xff]
    %v3762 = vld [vmem:[%s53 + $0x20] sm:$0xff]
    %v3763 = vld [vmem:[%s53 + $0x28] sm:$0xff]
    %s3764 = scalar_lea.vmem %s51, 2
    %v3765 = vld [vmem:[%s3764] sm:$0x3]
    %v3767 = vsel %vm3681, %v3765, 0
    %3769 = vmatprep.subr.mxu0 0.0
    %3770 = vmatpush1.msra.mxu0 %v3686
    %3771 = vmatprep.subr.mxu0 0.0
    %3772 = vmatpush1.msra.mxu0 0.0
    %3773 = vmatprep.subr.mxu0 0.0
    %3774 = vmatpush1.msra.mxu0 0.0
    %3775 = vmatprep.subr.mxu0 0.0
    %3776 = vmatpush1.msra.mxu0 0.0
    %3777 = vmatprep.subr.mxu0 0.0
    %3778 = vmatpush1.msra.mxu0 0.0
    %3779 = vmatprep.subr.mxu0 0.0
    %3780 = vmatpush1.msra.mxu0 0.0
    %3781 = vmatprep.subr.mxu0 0.0
    %3782 = vmatpush1.msra.mxu0 0.0
    %3783 = vmatprep.subr.mxu0 0.0
    %3784 = vmatpush1.msra.mxu0 0.0
    %3785 = vmatprep.subr.mxu0 0.0
    %3786 = vmatpush1.msra.mxu0 0.0
    %3787 = vmatprep.subr.mxu0 0.0
    %3788 = vmatpush1.msra.mxu0 0.0
    %3789 = vmatprep.subr.mxu0 0.0
    %3790 = vmatpush1.msra.mxu0 0.0
    %3791 = vmatprep.subr.mxu0 0.0
    %3792 = vmatpush1.msra.mxu0 0.0
    %3793 = vmatprep.subr.mxu0 0.0
    %3794 = vmatpush1.msra.mxu0 0.0
    %3795 = vmatprep.subr.mxu0 0.0
    %3796 = vmatpush1.msra.mxu0 0.0
    %3797 = vmatprep.subr.mxu0 0.0
    %3798 = vmatpush1.msra.mxu0 0.0
    %3799 = vmatprep.subr.mxu0 0.0
    %3800 = vmatpush1.msra.mxu0 0.0
    %3801 = vmatprep.subr.mxu0 0.0
    %3802 = vmatpush1.msra.mxu0 0.0
    %3803 = vmatprep.subr.mxu0 0.0
    %3804 = vmatpush1.msra.mxu0 0.0
    %3805 = vmatprep.subr.mxu0 0.0
    %3806 = vmatpush1.msra.mxu0 0.0
    %3807 = vmatprep.subr.mxu0 0.0
    %3808 = vmatpush1.msra.mxu0 0.0
    %3809 = vmatprep.subr.mxu0 0.0
    %3810 = vmatpush1.msra.mxu0 0.0
    %3811 = vmatprep.subr.mxu0 0.0
    %3812 = vmatpush1.msra.mxu0 0.0
    %3813 = vmatprep.subr.mxu0 0.0
    %3814 = vmatpush1.msra.mxu0 0.0
    %3815 = vmatprep.subr.mxu0 0.0
    %3816 = vmatpush1.msra.mxu0 0.0
    %3817 = vmatprep.subr.mxu0 0.0
    %3818 = vmatpush1.msra.mxu0 0.0
    %3819 = vmatprep.subr.mxu0 0.0
    %3820 = vmatpush1.msra.mxu0 0.0
    %3821 = vmatprep.subr.mxu0 0.0
    %3822 = vmatpush1.msra.mxu0 0.0
    %3823 = vmatprep.subr.mxu0 0.0
    %3824 = vmatpush1.msra.mxu0 0.0
    %3825 = vmatprep.subr.mxu0 0.0
    %3826 = vmatpush1.msra.mxu0 0.0
    %3827 = vmatprep.subr.mxu0 0.0
    %3828 = vmatpush1.msra.mxu0 0.0
    %3829 = vmatprep.subr.mxu0 0.0
    %3830 = vmatpush1.msra.mxu0 0.0
    %3831 = vmatprep.subr.mxu0 0.0
    %3832 = vmatpush1.msra.mxu0 0.0
    %3833 = vmatprep.mubr.f32.mxu0 0.0
    %3834 = vmatmul.mubr.f32.gmra.mrb[0].mxu0 %v3767
    %v3835 = vpop.f32.mrb[0].mxu0
    %v3836 = vadd.f32 0.0, %v3835
    %v3837 = vpop.f32.mrb[0].mxu0
    %3838 = vdwg.mxu0
    %s3839 = scalar_lea.vmem %s53, 48
    %v3840 = vld [vmem:[%s3839] sm:$0xff]
    %v3841 = vld [vmem:[%s3839 + $0x8] sm:$0xff]
    %v3842 = vld [vmem:[%s3839 + $0x10] sm:$0xff]
    %v3843 = vld [vmem:[%s3839 + $0x18] sm:$0xff]
    %v3844 = vld [vmem:[%s3839 + $0x20] sm:$0xff]
    %v3845 = vld [vmem:[%s3839 + $0x28] sm:$0xff]
    %v3847 = vsel %vm2815, %v3836, 0
    %3849 = vmatprep.subr.mxu0 0.0
    %3850 = vmatpush1.msra.mxu0 %v3840
    %3851 = vmatprep.subr.mxu0 0.0
    %3852 = vmatpush1.msra.mxu0 %v3841
    %3853 = vmatprep.subr.mxu0 0.0
    %3854 = vmatpush1.msra.mxu0 %v3842
    %3855 = vmatprep.subr.mxu0 0.0
    %3856 = vmatpush1.msra.mxu0 %v3843
    %3857 = vmatprep.subr.mxu0 0.0
    %3858 = vmatpush1.msra.mxu0 %v3844
    %3859 = vmatprep.subr.mxu0 0.0
    %3860 = vmatpush1.msra.mxu0 %v3845
    %3861 = vmatprep.subr.mxu0 0.0
    %3862 = vmatpush1.msra.mxu0 0.0
    %3863 = vmatprep.subr.mxu0 0.0
    %3864 = vmatpush1.msra.mxu0 0.0
    %3865 = vmatprep.subr.mxu0 0.0
    %3866 = vmatpush1.msra.mxu0 0.0
    %3867 = vmatprep.subr.mxu0 0.0
    %3868 = vmatpush1.msra.mxu0 0.0
    %3869 = vmatprep.subr.mxu0 0.0
    %3870 = vmatpush1.msra.mxu0 0.0
    %3871 = vmatprep.subr.mxu0 0.0
    %3872 = vmatpush1.msra.mxu0 0.0
    %3873 = vmatprep.subr.mxu0 0.0
    %3874 = vmatpush1.msra.mxu0 0.0
    %3875 = vmatprep.subr.mxu0 0.0
    %3876 = vmatpush1.msra.mxu0 0.0
    %3877 = vmatprep.subr.mxu0 0.0
    %3878 = vmatpush1.msra.mxu0 0.0
    %3879 = vmatprep.subr.mxu0 0.0
    %3880 = vmatpush1.msra.mxu0 0.0
    %3881 = vmatprep.subr.mxu0 0.0
    %3882 = vmatpush1.msra.mxu0 0.0
    %3883 = vmatprep.subr.mxu0 0.0
    %3884 = vmatpush1.msra.mxu0 0.0
    %3885 = vmatprep.subr.mxu0 0.0
    %3886 = vmatpush1.msra.mxu0 0.0
    %3887 = vmatprep.subr.mxu0 0.0
    %3888 = vmatpush1.msra.mxu0 0.0
    %3889 = vmatprep.subr.mxu0 0.0
    %3890 = vmatpush1.msra.mxu0 0.0
    %3891 = vmatprep.subr.mxu0 0.0
    %3892 = vmatpush1.msra.mxu0 0.0
    %3893 = vmatprep.subr.mxu0 0.0
    %3894 = vmatpush1.msra.mxu0 0.0
    %3895 = vmatprep.subr.mxu0 0.0
    %3896 = vmatpush1.msra.mxu0 0.0
    %3897 = vmatprep.subr.mxu0 0.0
    %3898 = vmatpush1.msra.mxu0 0.0
    %3899 = vmatprep.subr.mxu0 0.0
    %3900 = vmatpush1.msra.mxu0 0.0
    %3901 = vmatprep.subr.mxu0 0.0
    %3902 = vmatpush1.msra.mxu0 0.0
    %3903 = vmatprep.subr.mxu0 0.0
    %3904 = vmatpush1.msra.mxu0 0.0
    %3905 = vmatprep.subr.mxu0 0.0
    %3906 = vmatpush1.msra.mxu0 0.0
    %3907 = vmatprep.subr.mxu0 0.0
    %3908 = vmatpush1.msra.mxu0 0.0
    %3909 = vmatprep.subr.mxu0 0.0
    %3910 = vmatpush1.msra.mxu0 0.0
    %3911 = vmatprep.subr.mxu0 0.0
    %3912 = vmatpush1.msra.mxu0 0.0
    %3913 = vmatprep.mubr.f32.mxu0 0.0
    %3914 = vmatmul.mubr.f32.gmra.mrb[0].mxu0 %v3847
    %v3915 = vpop.f32.mrb[0].mxu0
    %v3916 = vadd.f32 0.0, %v3915
    %v3917 = vpop.f32.mrb[0].mxu0
    %3918 = vdwg.mxu0
    %v3920 = vsel %vm2815, %v3755, 0
    %3922 = vmatprep.subr.mxu0 0.0
    %3923 = vmatpush1.msra.mxu0 %v3758
    %3924 = vmatprep.subr.mxu0 0.0
    %3925 = vmatpush1.msra.mxu0 %v3759
    %3926 = vmatprep.subr.mxu0 0.0
    %3927 = vmatpush1.msra.mxu0 %v3760
    %3928 = vmatprep.subr.mxu0 0.0
    %3929 = vmatpush1.msra.mxu0 %v3761
    %3930 = vmatprep.subr.mxu0 0.0
    %3931 = vmatpush1.msra.mxu0 %v3762
    %3932 = vmatprep.subr.mxu0 0.0
    %3933 = vmatpush1.msra.mxu0 %v3763
    %3934 = vmatprep.subr.mxu0 0.0
    %3935 = vmatpush1.msra.mxu0 0.0
    %3936 = vmatprep.subr.mxu0 0.0
    %3937 = vmatpush1.msra.mxu0 0.0
    %3938 = vmatprep.subr.mxu0 0.0
    %3939 = vmatpush1.msra.mxu0 0.0
    %3940 = vmatprep.subr.mxu0 0.0
    %3941 = vmatpush1.msra.mxu0 0.0
    %3942 = vmatprep.subr.mxu0 0.0
    %3943 = vmatpush1.msra.mxu0 0.0
    %3944 = vmatprep.subr.mxu0 0.0
    %3945 = vmatpush1.msra.mxu0 0.0
    %3946 = vmatprep.subr.mxu0 0.0
    %3947 = vmatpush1.msra.mxu0 0.0
    %3948 = vmatprep.subr.mxu0 0.0
    %3949 = vmatpush1.msra.mxu0 0.0
    %3950 = vmatprep.subr.mxu0 0.0
    %3951 = vmatpush1.msra.mxu0 0.0
    %3952 = vmatprep.subr.mxu0 0.0
    %3953 = vmatpush1.msra.mxu0 0.0
    %3954 = vmatprep.subr.mxu0 0.0
    %3955 = vmatpush1.msra.mxu0 0.0
    %3956 = vmatprep.subr.mxu0 0.0
    %3957 = vmatpush1.msra.mxu0 0.0
    %3958 = vmatprep.subr.mxu0 0.0
    %3959 = vmatpush1.msra.mxu0 0.0
    %3960 = vmatprep.subr.mxu0 0.0
    %3961 = vmatpush1.msra.mxu0 0.0
    %3962 = vmatprep.subr.mxu0 0.0
    %3963 = vmatpush1.msra.mxu0 0.0
    %3964 = vmatprep.subr.mxu0 0.0
    %3965 = vmatpush1.msra.mxu0 0.0
    %3966 = vmatprep.subr.mxu0 0.0
    %3967 = vmatpush1.msra.mxu0 0.0
    %3968 = vmatprep.subr.mxu0 0.0
    %3969 = vmatpush1.msra.mxu0 0.0
    %3970 = vmatprep.subr.mxu0 0.0
    %3971 = vmatpush1.msra.mxu0 0.0
    %3972 = vmatprep.subr.mxu0 0.0
    %3973 = vmatpush1.msra.mxu0 0.0
    %3974 = vmatprep.subr.mxu0 0.0
    %3975 = vmatpush1.msra.mxu0 0.0
    %3976 = vmatprep.subr.mxu0 0.0
    %3977 = vmatpush1.msra.mxu0 0.0
    %3978 = vmatprep.subr.mxu0 0.0
    %3979 = vmatpush1.msra.mxu0 0.0
    %3980 = vmatprep.subr.mxu0 0.0
    %3981 = vmatpush1.msra.mxu0 0.0
    %3982 = vmatprep.subr.mxu0 0.0
    %3983 = vmatpush1.msra.mxu0 0.0
    %3984 = vmatprep.subr.mxu0 0.0
    %3985 = vmatpush1.msra.mxu0 0.0
    %3986 = vmatprep.mubr.f32.mxu0 0.0
    %3987 = vmatmul.mubr.f32.gmra.mrb[0].mxu0 %v3920
    %v3988 = vpop.f32.mrb[0].mxu0
    %v3989 = vadd.f32 %v3916, %v3988
    %v3990 = vpop.f32.mrb[0].mxu0
    %3991 = vdwg.mxu0
    %v3992 = vld [vmem:[#allocation34] sm:$0x1]
    %v3994 = vlaneseq
    %v3995 = vshrl.u32 %v3994, 7
    %v3996 = vsub.s32 0, %v3995
    %v3997 = vrot.slane %v3992, %v3996
    %v3999 = vadd.f32 %v3989, %v3997
    %v4000 = vld [vmem:[#allocation35] sm:$0x3]
    %v4001 = vld [vmem:[#allocation37] sm:$0x1]
    %v4003 = vlaneseq
    %v4004 = vshrl.u32 %v4003, 7
    %v4005 = vsub.s32 0, %v4004
    %v4006 = vrot.slane %v4001, %v4005
    %vm4008 = vcmask 15360
    %v4010 = vsel %vm4008, %v3999, 0
    %v4013 = vsel %vm1376, %v4000, 0
    %4015 = vmatprep.subr.mxu0 0.0
    %4016 = vmatpush1.msra.mxu0 %v4013
    %4017 = vmatprep.subr.mxu0 0.0
    %4018 = vmatpush1.msra.mxu0 0.0
    %4019 = vmatprep.subr.mxu0 0.0
    %4020 = vmatpush1.msra.mxu0 0.0
    %4021 = vmatprep.subr.mxu0 0.0
    %4022 = vmatpush1.msra.mxu0 0.0
    %4023 = vmatprep.subr.mxu0 0.0
    %4024 = vmatpush1.msra.mxu0 0.0
    %4025 = vmatprep.subr.mxu0 0.0
    %4026 = vmatpush1.msra.mxu0 0.0
    %4027 = vmatprep.subr.mxu0 0.0
    %4028 = vmatpush1.msra.mxu0 0.0
    %4029 = vmatprep.subr.mxu0 0.0
    %4030 = vmatpush1.msra.mxu0 0.0
    %4031 = vmatprep.subr.mxu0 0.0
    %4032 = vmatpush1.msra.mxu0 0.0
    %4033 = vmatprep.subr.mxu0 0.0
    %4034 = vmatpush1.msra.mxu0 0.0
    %4035 = vmatprep.subr.mxu0 0.0
    %4036 = vmatpush1.msra.mxu0 0.0
    %4037 = vmatprep.subr.mxu0 0.0
    %4038 = vmatpush1.msra.mxu0 0.0
    %4039 = vmatprep.subr.mxu0 0.0
    %4040 = vmatpush1.msra.mxu0 0.0
    %4041 = vmatprep.subr.mxu0 0.0
    %4042 = vmatpush1.msra.mxu0 0.0
    %4043 = vmatprep.subr.mxu0 0.0
    %4044 = vmatpush1.msra.mxu0 0.0
    %4045 = vmatprep.subr.mxu0 0.0
    %4046 = vmatpush1.msra.mxu0 0.0
    %4047 = vmatprep.subr.mxu0 0.0
    %4048 = vmatpush1.msra.mxu0 0.0
    %4049 = vmatprep.subr.mxu0 0.0
    %4050 = vmatpush1.msra.mxu0 0.0
    %4051 = vmatprep.subr.mxu0 0.0
    %4052 = vmatpush1.msra.mxu0 0.0
    %4053 = vmatprep.subr.mxu0 0.0
    %4054 = vmatpush1.msra.mxu0 0.0
    %4055 = vmatprep.subr.mxu0 0.0
    %4056 = vmatpush1.msra.mxu0 0.0
    %4057 = vmatprep.subr.mxu0 0.0
    %4058 = vmatpush1.msra.mxu0 0.0
    %4059 = vmatprep.subr.mxu0 0.0
    %4060 = vmatpush1.msra.mxu0 0.0
    %4061 = vmatprep.subr.mxu0 0.0
    %4062 = vmatpush1.msra.mxu0 0.0
    %4063 = vmatprep.subr.mxu0 0.0
    %4064 = vmatpush1.msra.mxu0 0.0
    %4065 = vmatprep.subr.mxu0 0.0
    %4066 = vmatpush1.msra.mxu0 0.0
    %4067 = vmatprep.subr.mxu0 0.0
    %4068 = vmatpush1.msra.mxu0 0.0
    %4069 = vmatprep.subr.mxu0 0.0
    %4070 = vmatpush1.msra.mxu0 0.0
    %4071 = vmatprep.subr.mxu0 0.0
    %4072 = vmatpush1.msra.mxu0 0.0
    %4073 = vmatprep.subr.mxu0 0.0
    %4074 = vmatpush1.msra.mxu0 0.0
    %4075 = vmatprep.subr.mxu0 0.0
    %4076 = vmatpush1.msra.mxu0 0.0
    %4077 = vmatprep.subr.mxu0 0.0
    %4078 = vmatpush1.msra.mxu0 0.0
    %4079 = vmatprep.mubr.f32.mxu0 0.0
    %4080 = vmatmul.mubr.f32.gmra.mrb[0].mxu0 %v4010
    %v4081 = vpop.f32.mrb[0].mxu0
    %v4082 = vadd.f32 %v4006, %v4081
    %v4083 = vpop.f32.mrb[0].mxu0
    %4084 = vdwg.mxu0
    %vm4085 = vcmask 779264
    %v4086 = vsel %vm4085, %v4082, 0.0
    %v4087 = vrot.slane %v4086, 4
    %v4088 = vadd.f32 %v4086, %v4087
    %v4089 = vrot.slane %v4088, 2
    %v4090 = vadd.f32 %v4088, %v4089
    %v4091 = vrot.slane %v4090, 1
    %v4092 = vadd.f32 %v4090, %v4091
    %v4093 = vrcp.pop 2.0
    %v4094 = vmul.f32 %v4092, %v4093
    %v4095 = vsub.f32 %v4082, %v4094
    %v4096 = vmul.f32 %v4095, %v4095
    %v4097 = vsel %vm4085, %v4096, 0.0
    %v4098 = vrot.slane %v4097, 4
    %v4099 = vadd.f32 %v4097, %v4098
    %v4100 = vrot.slane %v4099, 2
    %v4101 = vadd.f32 %v4099, %v4100
    %v4102 = vrot.slane %v4101, 1
    %v4103 = vadd.f32 %v4101, %v4102
    %v4104 = vmul.f32 %v4103, %v4093
    %v4105 = vadd.f32 %v4104, 1e-05
    %v4106 = vrsqrt.pop %v4105
    %v4107 = vmul.f32 %v4095, %v4106
    %v4108 = vld [vmem:[#allocation38] sm:$0x1]
    %v4110 = vlaneseq
    %v4111 = vshrl.u32 %v4110, 7
    %v4112 = vsub.s32 0, %v4111
    %v4113 = vrot.slane %v4108, %v4112
    %v4115 = vmul.f32 %v4107, %v4113
    %v4116 = vld [vmem:[#allocation40] sm:$0x1]
    %v4118 = vlaneseq
    %v4119 = vshrl.u32 %v4118, 7
    %v4120 = vsub.s32 0, %v4119
    %v4121 = vrot.slane %v4116, %v4120
    %v4123 = vadd.f32 %v4115, %v4121
    %v4124 = vmax.f32 %v4123, 0.0
    %v4125 = vld [vmem:[%s65] sm:$0xf]
    %v4126 = vld [vmem:[%s67] sm:$0xff]
    %v4127 = vld [vmem:[%s67 + $0x8] sm:$0xff]
    %v4128 = vld [vmem:[%s67 + $0x10] sm:$0xff]
    %v4129 = vld [vmem:[%s67 + $0x18] sm:$0xff]
    %v4130 = vld [vmem:[%s67 + $0x20] sm:$0xff]
    %v4131 = vld [vmem:[%s67 + $0x28] sm:$0xff]
    %v4132 = vld [vmem:[%s67 + $0x30] sm:$0xff]
    %v4133 = vld [vmem:[%s67 + $0x38] sm:$0xff]
    %v4134 = vld [vmem:[%s67 + $0x40] sm:$0xff]
    %v4135 = vld [vmem:[%s67 + $0x48] sm:$0xff]
    %v4136 = vld [vmem:[%s67 + $0x50] sm:$0xff]
    %v4137 = vld [vmem:[%s67 + $0x58] sm:$0xff]
    %vm4138 = vcmask 785408
    %v4140 = vsel %vm4138, %v4124, 0
    %4142 = vmatprep.subr.mxu0 0.0
    %4143 = vmatpush1.msra.mxu0 %v4126
    %4144 = vmatprep.subr.mxu0 0.0
    %4145 = vmatpush1.msra.mxu0 %v4127
    %4146 = vmatprep.subr.mxu0 0.0
    %4147 = vmatpush1.msra.mxu0 %v4128
    %4148 = vmatprep.subr.mxu0 0.0
    %4149 = vmatpush1.msra.mxu0 %v4129
    %4150 = vmatprep.subr.mxu0 0.0
    %4151 = vmatpush1.msra.mxu0 %v4130
    %4152 = vmatprep.subr.mxu0 0.0
    %4153 = vmatpush1.msra.mxu0 %v4131
    %4154 = vmatprep.subr.mxu0 0.0
    %4155 = vmatpush1.msra.mxu0 %v4132
    %4156 = vmatprep.subr.mxu0 0.0
    %4157 = vmatpush1.msra.mxu0 %v4133
    %4158 = vmatprep.subr.mxu0 0.0
    %4159 = vmatpush1.msra.mxu0 %v4134
    %4160 = vmatprep.subr.mxu0 0.0
    %4161 = vmatpush1.msra.mxu0 %v4135
    %4162 = vmatprep.subr.mxu0 0.0
    %4163 = vmatpush1.msra.mxu0 %v4136
    %4164 = vmatprep.subr.mxu0 0.0
    %4165 = vmatpush1.msra.mxu0 %v4137
    %4166 = vmatprep.subr.mxu0 0.0
    %4167 = vmatpush1.msra.mxu0 0.0
    %4168 = vmatprep.subr.mxu0 0.0
    %4169 = vmatpush1.msra.mxu0 0.0
    %4170 = vmatprep.subr.mxu0 0.0
    %4171 = vmatpush1.msra.mxu0 0.0
    %4172 = vmatprep.subr.mxu0 0.0
    %4173 = vmatpush1.msra.mxu0 0.0
    %4174 = vmatprep.subr.mxu0 0.0
    %4175 = vmatpush1.msra.mxu0 0.0
    %4176 = vmatprep.subr.mxu0 0.0
    %4177 = vmatpush1.msra.mxu0 0.0
    %4178 = vmatprep.subr.mxu0 0.0
    %4179 = vmatpush1.msra.mxu0 0.0
    %4180 = vmatprep.subr.mxu0 0.0
    %4181 = vmatpush1.msra.mxu0 0.0
    %4182 = vmatprep.subr.mxu0 0.0
    %4183 = vmatpush1.msra.mxu0 0.0
    %4184 = vmatprep.subr.mxu0 0.0
    %4185 = vmatpush1.msra.mxu0 0.0
    %4186 = vmatprep.subr.mxu0 0.0
    %4187 = vmatpush1.msra.mxu0 0.0
    %4188 = vmatprep.subr.mxu0 0.0
    %4189 = vmatpush1.msra.mxu0 0.0
    %4190 = vmatprep.subr.mxu0 0.0
    %4191 = vmatpush1.msra.mxu0 0.0
    %4192 = vmatprep.subr.mxu0 0.0
    %4193 = vmatpush1.msra.mxu0 0.0
    %4194 = vmatprep.subr.mxu0 0.0
    %4195 = vmatpush1.msra.mxu0 0.0
    %4196 = vmatprep.subr.mxu0 0.0
    %4197 = vmatpush1.msra.mxu0 0.0
    %4198 = vmatprep.subr.mxu0 0.0
    %4199 = vmatpush1.msra.mxu0 0.0
    %4200 = vmatprep.subr.mxu0 0.0
    %4201 = vmatpush1.msra.mxu0 0.0
    %4202 = vmatprep.subr.mxu0 0.0
    %4203 = vmatpush1.msra.mxu0 0.0
    %4204 = vmatprep.subr.mxu0 0.0
    %4205 = vmatpush1.msra.mxu0 0.0
    %4206 = vmatprep.mubr.f32.mxu0 0.0
    %4207 = vmatmul.mubr.f32.gmra.mrb[0].mxu0 %v4140
    %v4208 = vpop.f32.mrb[0].mxu0
    %v4209 = vadd.f32 0.0, %v4208
    %v4210 = vpop.f32.mrb[0].mxu0
    %4211 = vdwg.mxu0
    %s4212 = scalar_lea.vmem %s65, 4
    %v4213 = vld [vmem:[%s4212] sm:$0xf]
    %s4214 = scalar_lea.vmem %s67, 96
    %v4215 = vld [vmem:[%s4214] sm:$0xff]
    %v4216 = vld [vmem:[%s4214 + $0x8] sm:$0xff]
    %v4217 = vld [vmem:[%s4214 + $0x10] sm:$0xff]
    %v4218 = vld [vmem:[%s4214 + $0x18] sm:$0xff]
    %v4219 = vld [vmem:[%s4214 + $0x20] sm:$0xff]
    %v4220 = vld [vmem:[%s4214 + $0x28] sm:$0xff]
    %v4221 = vld [vmem:[%s4214 + $0x30] sm:$0xff]
    %v4222 = vld [vmem:[%s4214 + $0x38] sm:$0xff]
    %v4223 = vld [vmem:[%s4214 + $0x40] sm:$0xff]
    %v4224 = vld [vmem:[%s4214 + $0x48] sm:$0xff]
    %v4225 = vld [vmem:[%s4214 + $0x50] sm:$0xff]
    %v4226 = vld [vmem:[%s4214 + $0x58] sm:$0xff]
    %4227 = vmatprep.subr.mxu0 0.0
    %4228 = vmatpush1.msra.mxu0 %v4215
    %4229 = vmatprep.subr.mxu0 0.0
    %4230 = vmatpush1.msra.mxu0 %v4216
    %4231 = vmatprep.subr.mxu0 0.0
    %4232 = vmatpush1.msra.mxu0 %v4217
    %4233 = vmatprep.subr.mxu0 0.0
    %4234 = vmatpush1.msra.mxu0 %v4218
    %4235 = vmatprep.subr.mxu0 0.0
    %4236 = vmatpush1.msra.mxu0 %v4219
    %4237 = vmatprep.subr.mxu0 0.0
    %4238 = vmatpush1.msra.mxu0 %v4220
    %4239 = vmatprep.subr.mxu0 0.0
    %4240 = vmatpush1.msra.mxu0 %v4221
    %4241 = vmatprep.subr.mxu0 0.0
    %4242 = vmatpush1.msra.mxu0 %v4222
    %4243 = vmatprep.subr.mxu0 0.0
    %4244 = vmatpush1.msra.mxu0 %v4223
    %4245 = vmatprep.subr.mxu0 0.0
    %4246 = vmatpush1.msra.mxu0 %v4224
    %4247 = vmatprep.subr.mxu0 0.0
    %4248 = vmatpush1.msra.mxu0 %v4225
    %4249 = vmatprep.subr.mxu0 0.0
    %4250 = vmatpush1.msra.mxu0 %v4226
    %4251 = vmatprep.subr.mxu0 0.0
    %4252 = vmatpush1.msra.mxu0 0.0
    %4253 = vmatprep.subr.mxu0 0.0
    %4254 = vmatpush1.msra.mxu0 0.0
    %4255 = vmatprep.subr.mxu0 0.0
    %4256 = vmatpush1.msra.mxu0 0.0
    %4257 = vmatprep.subr.mxu0 0.0
    %4258 = vmatpush1.msra.mxu0 0.0
    %4259 = vmatprep.subr.mxu0 0.0
    %4260 = vmatpush1.msra.mxu0 0.0
    %4261 = vmatprep.subr.mxu0 0.0
    %4262 = vmatpush1.msra.mxu0 0.0
    %4263 = vmatprep.subr.mxu0 0.0
    %4264 = vmatpush1.msra.mxu0 0.0
    %4265 = vmatprep.subr.mxu0 0.0
    %4266 = vmatpush1.msra.mxu0 0.0
    %4267 = vmatprep.subr.mxu0 0.0
    %4268 = vmatpush1.msra.mxu0 0.0
    %4269 = vmatprep.subr.mxu0 0.0
    %4270 = vmatpush1.msra.mxu0 0.0
    %4271 = vmatprep.subr.mxu0 0.0
    %4272 = vmatpush1.msra.mxu0 0.0
    %4273 = vmatprep.subr.mxu0 0.0
    %4274 = vmatpush1.msra.mxu0 0.0
    %4275 = vmatprep.subr.mxu0 0.0
    %4276 = vmatpush1.msra.mxu0 0.0
    %4277 = vmatprep.subr.mxu0 0.0
    %4278 = vmatpush1.msra.mxu0 0.0
    %4279 = vmatprep.subr.mxu0 0.0
    %4280 = vmatpush1.msra.mxu0 0.0
    %4281 = vmatprep.subr.mxu0 0.0
    %4282 = vmatpush1.msra.mxu0 0.0
    %4283 = vmatprep.subr.mxu0 0.0
    %4284 = vmatpush1.msra.mxu0 0.0
    %4285 = vmatprep.subr.mxu0 0.0
    %4286 = vmatpush1.msra.mxu0 0.0
    %4287 = vmatprep.subr.mxu0 0.0
    %4288 = vmatpush1.msra.mxu0 0.0
    %4289 = vmatprep.subr.mxu0 0.0
    %4290 = vmatpush1.msra.mxu0 0.0
    %4291 = vmatprep.mubr.f32.mxu0 0.0
    %4292 = vmatmul.mubr.f32.gmra.mrb[0].mxu0 %v4140
    %v4293 = vpop.f32.mrb[0].mxu0
    %v4294 = vadd.f32 0.0, %v4293
    %v4295 = vpop.f32.mrb[0].mxu0
    %4296 = vdwg.mxu0
    %v4298 = vsel %vm4008, %v4213, 0
    %v4301 = vsel %vm1376, %v4294, 0
    %4303 = vmatprep.subr.mxu0 0.0
    %4304 = vmatpush1.msra.mxu0 %v4301
    %4305 = vmatprep.subr.mxu0 0.0
    %4306 = vmatpush1.msra.mxu0 0.0
    %4307 = vmatprep.subr.mxu0 0.0
    %4308 = vmatpush1.msra.mxu0 0.0
    %4309 = vmatprep.subr.mxu0 0.0
    %4310 = vmatpush1.msra.mxu0 0.0
    %4311 = vmatprep.subr.mxu0 0.0
    %4312 = vmatpush1.msra.mxu0 0.0
    %4313 = vmatprep.subr.mxu0 0.0
    %4314 = vmatpush1.msra.mxu0 0.0
    %4315 = vmatprep.subr.mxu0 0.0
    %4316 = vmatpush1.msra.mxu0 0.0
    %4317 = vmatprep.subr.mxu0 0.0
    %4318 = vmatpush1.msra.mxu0 0.0
    %4319 = vmatprep.subr.mxu0 0.0
    %4320 = vmatpush1.msra.mxu0 0.0
    %4321 = vmatprep.subr.mxu0 0.0
    %4322 = vmatpush1.msra.mxu0 0.0
    %4323 = vmatprep.subr.mxu0 0.0
    %4324 = vmatpush1.msra.mxu0 0.0
    %4325 = vmatprep.subr.mxu0 0.0
    %4326 = vmatpush1.msra.mxu0 0.0
    %4327 = vmatprep.subr.mxu0 0.0
    %4328 = vmatpush1.msra.mxu0 0.0
    %4329 = vmatprep.subr.mxu0 0.0
    %4330 = vmatpush1.msra.mxu0 0.0
    %4331 = vmatprep.subr.mxu0 0.0
    %4332 = vmatpush1.msra.mxu0 0.0
    %4333 = vmatprep.subr.mxu0 0.0
    %4334 = vmatpush1.msra.mxu0 0.0
    %4335 = vmatprep.subr.mxu0 0.0
    %4336 = vmatpush1.msra.mxu0 0.0
    %4337 = vmatprep.subr.mxu0 0.0
    %4338 = vmatpush1.msra.mxu0 0.0
    %4339 = vmatprep.subr.mxu0 0.0
    %4340 = vmatpush1.msra.mxu0 0.0
    %4341 = vmatprep.subr.mxu0 0.0
    %4342 = vmatpush1.msra.mxu0 0.0
    %4343 = vmatprep.subr.mxu0 0.0
    %4344 = vmatpush1.msra.mxu0 0.0
    %4345 = vmatprep.subr.mxu0 0.0
    %4346 = vmatpush1.msra.mxu0 0.0
    %4347 = vmatprep.subr.mxu0 0.0
    %4348 = vmatpush1.msra.mxu0 0.0
    %4349 = vmatprep.subr.mxu0 0.0
    %4350 = vmatpush1.msra.mxu0 0.0
    %4351 = vmatprep.subr.mxu0 0.0
    %4352 = vmatpush1.msra.mxu0 0.0
    %4353 = vmatprep.subr.mxu0 0.0
    %4354 = vmatpush1.msra.mxu0 0.0
    %4355 = vmatprep.subr.mxu0 0.0
    %4356 = vmatpush1.msra.mxu0 0.0
    %4357 = vmatprep.subr.mxu0 0.0
    %4358 = vmatpush1.msra.mxu0 0.0
    %4359 = vmatprep.subr.mxu0 0.0
    %4360 = vmatpush1.msra.mxu0 0.0
    %4361 = vmatprep.subr.mxu0 0.0
    %4362 = vmatpush1.msra.mxu0 0.0
    %4363 = vmatprep.subr.mxu0 0.0
    %4364 = vmatpush1.msra.mxu0 0.0
    %4365 = vmatprep.subr.mxu0 0.0
    %4366 = vmatpush1.msra.mxu0 0.0
    %4367 = vmatprep.mubr.f32.mxu0 0.0
    %4368 = vmatmul.mubr.f32.gmra.mrb[0].mxu0 %v4298
    %v4369 = vpop.f32.mrb[0].mxu0
    %v4370 = vadd.f32 0.0, %v4369
    %v4371 = vpop.f32.mrb[0].mxu0
    %4372 = vdwg.mxu0
    %v4374 = vsel %vm4008, %v4125, 0
    %v4377 = vsel %vm1376, %v4209, 0
    %4379 = vmatprep.subr.mxu0 0.0
    %4380 = vmatpush1.msra.mxu0 %v4377
    %4381 = vmatprep.subr.mxu0 0.0
    %4382 = vmatpush1.msra.mxu0 0.0
    %4383 = vmatprep.subr.mxu0 0.0
    %4384 = vmatpush1.msra.mxu0 0.0
    %4385 = vmatprep.subr.mxu0 0.0
    %4386 = vmatpush1.msra.mxu0 0.0
    %4387 = vmatprep.subr.mxu0 0.0
    %4388 = vmatpush1.msra.mxu0 0.0
    %4389 = vmatprep.subr.mxu0 0.0
    %4390 = vmatpush1.msra.mxu0 0.0
    %4391 = vmatprep.subr.mxu0 0.0
    %4392 = vmatpush1.msra.mxu0 0.0
    %4393 = vmatprep.subr.mxu0 0.0
    %4394 = vmatpush1.msra.mxu0 0.0
    %4395 = vmatprep.subr.mxu0 0.0
    %4396 = vmatpush1.msra.mxu0 0.0
    %4397 = vmatprep.subr.mxu0 0.0
    %4398 = vmatpush1.msra.mxu0 0.0
    %4399 = vmatprep.subr.mxu0 0.0
    %4400 = vmatpush1.msra.mxu0 0.0
    %4401 = vmatprep.subr.mxu0 0.0
    %4402 = vmatpush1.msra.mxu0 0.0
    %4403 = vmatprep.subr.mxu0 0.0
    %4404 = vmatpush1.msra.mxu0 0.0
    %4405 = vmatprep.subr.mxu0 0.0
    %4406 = vmatpush1.msra.mxu0 0.0
    %4407 = vmatprep.subr.mxu0 0.0
    %4408 = vmatpush1.msra.mxu0 0.0
    %4409 = vmatprep.subr.mxu0 0.0
    %4410 = vmatpush1.msra.mxu0 0.0
    %4411 = vmatprep.subr.mxu0 0.0
    %4412 = vmatpush1.msra.mxu0 0.0
    %4413 = vmatprep.subr.mxu0 0.0
    %4414 = vmatpush1.msra.mxu0 0.0
    %4415 = vmatprep.subr.mxu0 0.0
    %4416 = vmatpush1.msra.mxu0 0.0
    %4417 = vmatprep.subr.mxu0 0.0
    %4418 = vmatpush1.msra.mxu0 0.0
    %4419 = vmatprep.subr.mxu0 0.0
    %4420 = vmatpush1.msra.mxu0 0.0
    %4421 = vmatprep.subr.mxu0 0.0
    %4422 = vmatpush1.msra.mxu0 0.0
    %4423 = vmatprep.subr.mxu0 0.0
    %4424 = vmatpush1.msra.mxu0 0.0
    %4425 = vmatprep.subr.mxu0 0.0
    %4426 = vmatpush1.msra.mxu0 0.0
    %4427 = vmatprep.subr.mxu0 0.0
    %4428 = vmatpush1.msra.mxu0 0.0
    %4429 = vmatprep.subr.mxu0 0.0
    %4430 = vmatpush1.msra.mxu0 0.0
    %4431 = vmatprep.subr.mxu0 0.0
    %4432 = vmatpush1.msra.mxu0 0.0
    %4433 = vmatprep.subr.mxu0 0.0
    %4434 = vmatpush1.msra.mxu0 0.0
    %4435 = vmatprep.subr.mxu0 0.0
    %4436 = vmatpush1.msra.mxu0 0.0
    %4437 = vmatprep.subr.mxu0 0.0
    %4438 = vmatpush1.msra.mxu0 0.0
    %4439 = vmatprep.subr.mxu0 0.0
    %4440 = vmatpush1.msra.mxu0 0.0
    %4441 = vmatprep.subr.mxu0 0.0
    %4442 = vmatpush1.msra.mxu0 0.0
    %4443 = vmatprep.mubr.f32.mxu0 0.0
    %4444 = vmatmul.mubr.f32.gmra.mrb[0].mxu0 %v4374
    %v4445 = vpop.f32.mrb[0].mxu0
    %v4446 = vadd.f32 %v4370, %v4445
    %v4447 = vpop.f32.mrb[0].mxu0
    %4448 = vdwg.mxu0
    %v4449 = vld [vmem:[%s69] sm:$0xff]
    %v4451 = vsel %vm3681, %v4449, 0
    %v4454 = vsel %vm941, %v4446, 0
    %4456 = vmatprep.subr.mxu0 0.0
    %4457 = vmatpush1.msra.mxu0 %v4454
    %4458 = vmatprep.subr.mxu0 0.0
    %4459 = vmatpush1.msra.mxu0 0.0
    %4460 = vmatprep.subr.mxu0 0.0
    %4461 = vmatpush1.msra.mxu0 0.0
    %4462 = vmatprep.subr.mxu0 0.0
    %4463 = vmatpush1.msra.mxu0 0.0
    %4464 = vmatprep.subr.mxu0 0.0
    %4465 = vmatpush1.msra.mxu0 0.0
    %4466 = vmatprep.subr.mxu0 0.0
    %4467 = vmatpush1.msra.mxu0 0.0
    %4468 = vmatprep.subr.mxu0 0.0
    %4469 = vmatpush1.msra.mxu0 0.0
    %4470 = vmatprep.subr.mxu0 0.0
    %4471 = vmatpush1.msra.mxu0 0.0
    %4472 = vmatprep.subr.mxu0 0.0
    %4473 = vmatpush1.msra.mxu0 0.0
    %4474 = vmatprep.subr.mxu0 0.0
    %4475 = vmatpush1.msra.mxu0 0.0
    %4476 = vmatprep.subr.mxu0 0.0
    %4477 = vmatpush1.msra.mxu0 0.0
    %4478 = vmatprep.subr.mxu0 0.0
    %4479 = vmatpush1.msra.mxu0 0.0
    %4480 = vmatprep.subr.mxu0 0.0
    %4481 = vmatpush1.msra.mxu0 0.0
    %4482 = vmatprep.subr.mxu0 0.0
    %4483 = vmatpush1.msra.mxu0 0.0
    %4484 = vmatprep.subr.mxu0 0.0
    %4485 = vmatpush1.msra.mxu0 0.0
    %4486 = vmatprep.subr.mxu0 0.0
    %4487 = vmatpush1.msra.mxu0 0.0
    %4488 = vmatprep.subr.mxu0 0.0
    %4489 = vmatpush1.msra.mxu0 0.0
    %4490 = vmatprep.subr.mxu0 0.0
    %4491 = vmatpush1.msra.mxu0 0.0
    %4492 = vmatprep.subr.mxu0 0.0
    %4493 = vmatpush1.msra.mxu0 0.0
    %4494 = vmatprep.subr.mxu0 0.0
    %4495 = vmatpush1.msra.mxu0 0.0
    %4496 = vmatprep.subr.mxu0 0.0
    %4497 = vmatpush1.msra.mxu0 0.0
    %4498 = vmatprep.subr.mxu0 0.0
    %4499 = vmatpush1.msra.mxu0 0.0
    %4500 = vmatprep.subr.mxu0 0.0
    %4501 = vmatpush1.msra.mxu0 0.0
    %4502 = vmatprep.subr.mxu0 0.0
    %4503 = vmatpush1.msra.mxu0 0.0
    %4504 = vmatprep.subr.mxu0 0.0
    %4505 = vmatpush1.msra.mxu0 0.0
    %4506 = vmatprep.subr.mxu0 0.0
    %4507 = vmatpush1.msra.mxu0 0.0
    %4508 = vmatprep.subr.mxu0 0.0
    %4509 = vmatpush1.msra.mxu0 0.0
    %4510 = vmatprep.subr.mxu0 0.0
    %4511 = vmatpush1.msra.mxu0 0.0
    %4512 = vmatprep.subr.mxu0 0.0
    %4513 = vmatpush1.msra.mxu0 0.0
    %4514 = vmatprep.subr.mxu0 0.0
    %4515 = vmatpush1.msra.mxu0 0.0
    %4516 = vmatprep.subr.mxu0 0.0
    %4517 = vmatpush1.msra.mxu0 0.0
    %4518 = vmatprep.subr.mxu0 0.0
    %4519 = vmatpush1.msra.mxu0 0.0
    %4520 = vmatprep.mubr.f32.mxu0 0.0
    %4521 = vmatmul.mubr.f32.gmra.mrb[0].mxu0 %v4451
    %v4522 = vpop.f32.mrb[0].mxu0
    %v4523 = vadd.f32 0.0, %v4522
    %v4524 = vpop.f32.mrb[0].mxu0
    %4525 = vdwg.mxu0
    %v4526 = vld [vmem:[%s71] sm:$0xff]
    %v4527 = vld [vmem:[%s71 + $0x8] sm:$0xff]
    %v4528 = vld [vmem:[%s71 + $0x10] sm:$0xff]
    %v4529 = vld [vmem:[%s71 + $0x18] sm:$0xff]
    %v4530 = vld [vmem:[%s71 + $0x20] sm:$0xff]
    %v4531 = vld [vmem:[%s71 + $0x28] sm:$0xff]
    %s4532 = scalar_lea.vmem %s69, 8
    %v4533 = vld [vmem:[%s4532] sm:$0xff]
    %v4535 = vsel %vm3681, %v4533, 0
    %4537 = vmatprep.subr.mxu0 0.0
    %4538 = vmatpush1.msra.mxu0 %v4454
    %4539 = vmatprep.subr.mxu0 0.0
    %4540 = vmatpush1.msra.mxu0 0.0
    %4541 = vmatprep.subr.mxu0 0.0
    %4542 = vmatpush1.msra.mxu0 0.0
    %4543 = vmatprep.subr.mxu0 0.0
    %4544 = vmatpush1.msra.mxu0 0.0
    %4545 = vmatprep.subr.mxu0 0.0
    %4546 = vmatpush1.msra.mxu0 0.0
    %4547 = vmatprep.subr.mxu0 0.0
    %4548 = vmatpush1.msra.mxu0 0.0
    %4549 = vmatprep.subr.mxu0 0.0
    %4550 = vmatpush1.msra.mxu0 0.0
    %4551 = vmatprep.subr.mxu0 0.0
    %4552 = vmatpush1.msra.mxu0 0.0
    %4553 = vmatprep.subr.mxu0 0.0
    %4554 = vmatpush1.msra.mxu0 0.0
    %4555 = vmatprep.subr.mxu0 0.0
    %4556 = vmatpush1.msra.mxu0 0.0
    %4557 = vmatprep.subr.mxu0 0.0
    %4558 = vmatpush1.msra.mxu0 0.0
    %4559 = vmatprep.subr.mxu0 0.0
    %4560 = vmatpush1.msra.mxu0 0.0
    %4561 = vmatprep.subr.mxu0 0.0
    %4562 = vmatpush1.msra.mxu0 0.0
    %4563 = vmatprep.subr.mxu0 0.0
    %4564 = vmatpush1.msra.mxu0 0.0
    %4565 = vmatprep.subr.mxu0 0.0
    %4566 = vmatpush1.msra.mxu0 0.0
    %4567 = vmatprep.subr.mxu0 0.0
    %4568 = vmatpush1.msra.mxu0 0.0
    %4569 = vmatprep.subr.mxu0 0.0
    %4570 = vmatpush1.msra.mxu0 0.0
    %4571 = vmatprep.subr.mxu0 0.0
    %4572 = vmatpush1.msra.mxu0 0.0
    %4573 = vmatprep.subr.mxu0 0.0
    %4574 = vmatpush1.msra.mxu0 0.0
    %4575 = vmatprep.subr.mxu0 0.0
    %4576 = vmatpush1.msra.mxu0 0.0
    %4577 = vmatprep.subr.mxu0 0.0
    %4578 = vmatpush1.msra.mxu0 0.0
    %4579 = vmatprep.subr.mxu0 0.0
    %4580 = vmatpush1.msra.mxu0 0.0
    %4581 = vmatprep.subr.mxu0 0.0
    %4582 = vmatpush1.msra.mxu0 0.0
    %4583 = vmatprep.subr.mxu0 0.0
    %4584 = vmatpush1.msra.mxu0 0.0
    %4585 = vmatprep.subr.mxu0 0.0
    %4586 = vmatpush1.msra.mxu0 0.0
    %4587 = vmatprep.subr.mxu0 0.0
    %4588 = vmatpush1.msra.mxu0 0.0
    %4589 = vmatprep.subr.mxu0 0.0
    %4590 = vmatpush1.msra.mxu0 0.0
    %4591 = vmatprep.subr.mxu0 0.0
    %4592 = vmatpush1.msra.mxu0 0.0
    %4593 = vmatprep.subr.mxu0 0.0
    %4594 = vmatpush1.msra.mxu0 0.0
    %4595 = vmatprep.subr.mxu0 0.0
    %4596 = vmatpush1.msra.mxu0 0.0
    %4597 = vmatprep.subr.mxu0 0.0
    %4598 = vmatpush1.msra.mxu0 0.0
    %4599 = vmatprep.subr.mxu0 0.0
    %4600 = vmatpush1.msra.mxu0 0.0
    %4601 = vmatprep.mubr.f32.mxu0 0.0
    %4602 = vmatmul.mubr.f32.gmra.mrb[0].mxu0 %v4535
    %v4603 = vpop.f32.mrb[0].mxu0
    %v4604 = vadd.f32 0.0, %v4603
    %v4605 = vpop.f32.mrb[0].mxu0
    %4606 = vdwg.mxu0
    %s4607 = scalar_lea.vmem %s71, 48
    %v4608 = vld [vmem:[%s4607] sm:$0xff]
    %v4609 = vld [vmem:[%s4607 + $0x8] sm:$0xff]
    %v4610 = vld [vmem:[%s4607 + $0x10] sm:$0xff]
    %v4611 = vld [vmem:[%s4607 + $0x18] sm:$0xff]
    %v4612 = vld [vmem:[%s4607 + $0x20] sm:$0xff]
    %v4613 = vld [vmem:[%s4607 + $0x28] sm:$0xff]
    %v4615 = vsel %vm2815, %v4604, 0
    %4617 = vmatprep.subr.mxu0 0.0
    %4618 = vmatpush1.msra.mxu0 %v4608
    %4619 = vmatprep.subr.mxu0 0.0
    %4620 = vmatpush1.msra.mxu0 %v4609
    %4621 = vmatprep.subr.mxu0 0.0
    %4622 = vmatpush1.msra.mxu0 %v4610
    %4623 = vmatprep.subr.mxu0 0.0
    %4624 = vmatpush1.msra.mxu0 %v4611
    %4625 = vmatprep.subr.mxu0 0.0
    %4626 = vmatpush1.msra.mxu0 %v4612
    %4627 = vmatprep.subr.mxu0 0.0
    %4628 = vmatpush1.msra.mxu0 %v4613
    %4629 = vmatprep.subr.mxu0 0.0
    %4630 = vmatpush1.msra.mxu0 0.0
    %4631 = vmatprep.subr.mxu0 0.0
    %4632 = vmatpush1.msra.mxu0 0.0
    %4633 = vmatprep.subr.mxu0 0.0
    %4634 = vmatpush1.msra.mxu0 0.0
    %4635 = vmatprep.subr.mxu0 0.0
    %4636 = vmatpush1.msra.mxu0 0.0
    %4637 = vmatprep.subr.mxu0 0.0
    %4638 = vmatpush1.msra.mxu0 0.0
    %4639 = vmatprep.subr.mxu0 0.0
    %4640 = vmatpush1.msra.mxu0 0.0
    %4641 = vmatprep.subr.mxu0 0.0
    %4642 = vmatpush1.msra.mxu0 0.0
    %4643 = vmatprep.subr.mxu0 0.0
    %4644 = vmatpush1.msra.mxu0 0.0
    %4645 = vmatprep.subr.mxu0 0.0
    %4646 = vmatpush1.msra.mxu0 0.0
    %4647 = vmatprep.subr.mxu0 0.0
    %4648 = vmatpush1.msra.mxu0 0.0
    %4649 = vmatprep.subr.mxu0 0.0
    %4650 = vmatpush1.msra.mxu0 0.0
    %4651 = vmatprep.subr.mxu0 0.0
    %4652 = vmatpush1.msra.mxu0 0.0
    %4653 = vmatprep.subr.mxu0 0.0
    %4654 = vmatpush1.msra.mxu0 0.0
    %4655 = vmatprep.subr.mxu0 0.0
    %4656 = vmatpush1.msra.mxu0 0.0
    %4657 = vmatprep.subr.mxu0 0.0
    %4658 = vmatpush1.msra.mxu0 0.0
    %4659 = vmatprep.subr.mxu0 0.0
    %4660 = vmatpush1.msra.mxu0 0.0
    %4661 = vmatprep.subr.mxu0 0.0
    %4662 = vmatpush1.msra.mxu0 0.0
    %4663 = vmatprep.subr.mxu0 0.0
    %4664 = vmatpush1.msra.mxu0 0.0
    %4665 = vmatprep.subr.mxu0 0.0
    %4666 = vmatpush1.msra.mxu0 0.0
    %4667 = vmatprep.subr.mxu0 0.0
    %4668 = vmatpush1.msra.mxu0 0.0
    %4669 = vmatprep.subr.mxu0 0.0
    %4670 = vmatpush1.msra.mxu0 0.0
    %4671 = vmatprep.subr.mxu0 0.0
    %4672 = vmatpush1.msra.mxu0 0.0
    %4673 = vmatprep.subr.mxu0 0.0
    %4674 = vmatpush1.msra.mxu0 0.0
    %4675 = vmatprep.subr.mxu0 0.0
    %4676 = vmatpush1.msra.mxu0 0.0
    %4677 = vmatprep.subr.mxu0 0.0
    %4678 = vmatpush1.msra.mxu0 0.0
    %4679 = vmatprep.subr.mxu0 0.0
    %4680 = vmatpush1.msra.mxu0 0.0
    %4681 = vmatprep.mubr.f32.mxu0 0.0
    %4682 = vmatmul.mubr.f32.gmra.mrb[0].mxu0 %v4615
    %v4683 = vpop.f32.mrb[0].mxu0
    %v4684 = vadd.f32 0.0, %v4683
    %v4685 = vpop.f32.mrb[0].mxu0
    %4686 = vdwg.mxu0
    %v4688 = vsel %vm2815, %v4523, 0
    %4690 = vmatprep.subr.mxu0 0.0
    %4691 = vmatpush1.msra.mxu0 %v4526
    %4692 = vmatprep.subr.mxu0 0.0
    %4693 = vmatpush1.msra.mxu0 %v4527
    %4694 = vmatprep.subr.mxu0 0.0
    %4695 = vmatpush1.msra.mxu0 %v4528
    %4696 = vmatprep.subr.mxu0 0.0
    %4697 = vmatpush1.msra.mxu0 %v4529
    %4698 = vmatprep.subr.mxu0 0.0
    %4699 = vmatpush1.msra.mxu0 %v4530
    %4700 = vmatprep.subr.mxu0 0.0
    %4701 = vmatpush1.msra.mxu0 %v4531
    %4702 = vmatprep.subr.mxu0 0.0
    %4703 = vmatpush1.msra.mxu0 0.0
    %4704 = vmatprep.subr.mxu0 0.0
    %4705 = vmatpush1.msra.mxu0 0.0
    %4706 = vmatprep.subr.mxu0 0.0
    %4707 = vmatpush1.msra.mxu0 0.0
    %4708 = vmatprep.subr.mxu0 0.0
    %4709 = vmatpush1.msra.mxu0 0.0
    %4710 = vmatprep.subr.mxu0 0.0
    %4711 = vmatpush1.msra.mxu0 0.0
    %4712 = vmatprep.subr.mxu0 0.0
    %4713 = vmatpush1.msra.mxu0 0.0
    %4714 = vmatprep.subr.mxu0 0.0
    %4715 = vmatpush1.msra.mxu0 0.0
    %4716 = vmatprep.subr.mxu0 0.0
    %4717 = vmatpush1.msra.mxu0 0.0
    %4718 = vmatprep.subr.mxu0 0.0
    %4719 = vmatpush1.msra.mxu0 0.0
    %4720 = vmatprep.subr.mxu0 0.0
    %4721 = vmatpush1.msra.mxu0 0.0
    %4722 = vmatprep.subr.mxu0 0.0
    %4723 = vmatpush1.msra.mxu0 0.0
    %4724 = vmatprep.subr.mxu0 0.0
    %4725 = vmatpush1.msra.mxu0 0.0
    %4726 = vmatprep.subr.mxu0 0.0
    %4727 = vmatpush1.msra.mxu0 0.0
    %4728 = vmatprep.subr.mxu0 0.0
    %4729 = vmatpush1.msra.mxu0 0.0
    %4730 = vmatprep.subr.mxu0 0.0
    %4731 = vmatpush1.msra.mxu0 0.0
    %4732 = vmatprep.subr.mxu0 0.0
    %4733 = vmatpush1.msra.mxu0 0.0
    %4734 = vmatprep.subr.mxu0 0.0
    %4735 = vmatpush1.msra.mxu0 0.0
    %4736 = vmatprep.subr.mxu0 0.0
    %4737 = vmatpush1.msra.mxu0 0.0
    %4738 = vmatprep.subr.mxu0 0.0
    %4739 = vmatpush1.msra.mxu0 0.0
    %4740 = vmatprep.subr.mxu0 0.0
    %4741 = vmatpush1.msra.mxu0 0.0
    %4742 = vmatprep.subr.mxu0 0.0
    %4743 = vmatpush1.msra.mxu0 0.0
    %4744 = vmatprep.subr.mxu0 0.0
    %4745 = vmatpush1.msra.mxu0 0.0
    %4746 = vmatprep.subr.mxu0 0.0
    %4747 = vmatpush1.msra.mxu0 0.0
    %4748 = vmatprep.subr.mxu0 0.0
    %4749 = vmatpush1.msra.mxu0 0.0
    %4750 = vmatprep.subr.mxu0 0.0
    %4751 = vmatpush1.msra.mxu0 0.0
    %4752 = vmatprep.subr.mxu0 0.0
    %4753 = vmatpush1.msra.mxu0 0.0
    %4754 = vmatprep.mubr.f32.mxu0 0.0
    %4755 = vmatmul.mubr.f32.gmra.mrb[0].mxu0 %v4688
    %v4756 = vpop.f32.mrb[0].mxu0
    %v4757 = vadd.f32 %v4684, %v4756
    %v4758 = vpop.f32.mrb[0].mxu0
    %4759 = vdwg.mxu0
    %s4760 = scalar_lea.vmem %s69, 16
    %v4761 = vld [vmem:[%s4760] sm:$0xff]
    %v4763 = vsel %vm3681, %v4761, 0
    %4765 = vmatprep.subr.mxu0 0.0
    %4766 = vmatpush1.msra.mxu0 %v4454
    %4767 = vmatprep.subr.mxu0 0.0
    %4768 = vmatpush1.msra.mxu0 0.0
    %4769 = vmatprep.subr.mxu0 0.0
    %4770 = vmatpush1.msra.mxu0 0.0
    %4771 = vmatprep.subr.mxu0 0.0
    %4772 = vmatpush1.msra.mxu0 0.0
    %4773 = vmatprep.subr.mxu0 0.0
    %4774 = vmatpush1.msra.mxu0 0.0
    %4775 = vmatprep.subr.mxu0 0.0
    %4776 = vmatpush1.msra.mxu0 0.0
    %4777 = vmatprep.subr.mxu0 0.0
    %4778 = vmatpush1.msra.mxu0 0.0
    %4779 = vmatprep.subr.mxu0 0.0
    %4780 = vmatpush1.msra.mxu0 0.0
    %4781 = vmatprep.subr.mxu0 0.0
    %4782 = vmatpush1.msra.mxu0 0.0
    %4783 = vmatprep.subr.mxu0 0.0
    %4784 = vmatpush1.msra.mxu0 0.0
    %4785 = vmatprep.subr.mxu0 0.0
    %4786 = vmatpush1.msra.mxu0 0.0
    %4787 = vmatprep.subr.mxu0 0.0
    %4788 = vmatpush1.msra.mxu0 0.0
    %4789 = vmatprep.subr.mxu0 0.0
    %4790 = vmatpush1.msra.mxu0 0.0
    %4791 = vmatprep.subr.mxu0 0.0
    %4792 = vmatpush1.msra.mxu0 0.0
    %4793 = vmatprep.subr.mxu0 0.0
    %4794 = vmatpush1.msra.mxu0 0.0
    %4795 = vmatprep.subr.mxu0 0.0
    %4796 = vmatpush1.msra.mxu0 0.0
    %4797 = vmatprep.subr.mxu0 0.0
    %4798 = vmatpush1.msra.mxu0 0.0
    %4799 = vmatprep.subr.mxu0 0.0
    %4800 = vmatpush1.msra.mxu0 0.0
    %4801 = vmatprep.subr.mxu0 0.0
    %4802 = vmatpush1.msra.mxu0 0.0
    %4803 = vmatprep.subr.mxu0 0.0
    %4804 = vmatpush1.msra.mxu0 0.0
    %4805 = vmatprep.subr.mxu0 0.0
    %4806 = vmatpush1.msra.mxu0 0.0
    %4807 = vmatprep.subr.mxu0 0.0
    %4808 = vmatpush1.msra.mxu0 0.0
    %4809 = vmatprep.subr.mxu0 0.0
    %4810 = vmatpush1.msra.mxu0 0.0
    %4811 = vmatprep.subr.mxu0 0.0
    %4812 = vmatpush1.msra.mxu0 0.0
    %4813 = vmatprep.subr.mxu0 0.0
    %4814 = vmatpush1.msra.mxu0 0.0
    %4815 = vmatprep.subr.mxu0 0.0
    %4816 = vmatpush1.msra.mxu0 0.0
    %4817 = vmatprep.subr.mxu0 0.0
    %4818 = vmatpush1.msra.mxu0 0.0
    %4819 = vmatprep.subr.mxu0 0.0
    %4820 = vmatpush1.msra.mxu0 0.0
    %4821 = vmatprep.subr.mxu0 0.0
    %4822 = vmatpush1.msra.mxu0 0.0
    %4823 = vmatprep.subr.mxu0 0.0
    %4824 = vmatpush1.msra.mxu0 0.0
    %4825 = vmatprep.subr.mxu0 0.0
    %4826 = vmatpush1.msra.mxu0 0.0
    %4827 = vmatprep.subr.mxu0 0.0
    %4828 = vmatpush1.msra.mxu0 0.0
    %4829 = vmatprep.mubr.f32.mxu0 0.0
    %4830 = vmatmul.mubr.f32.gmra.mrb[0].mxu0 %v4763
    %v4831 = vpop.f32.mrb[0].mxu0
    %v4832 = vadd.f32 0.0, %v4831
    %v4833 = vpop.f32.mrb[0].mxu0
    %4834 = vdwg.mxu0
    %s4835 = scalar_lea.vmem %s71, 96
    %v4836 = vld [vmem:[%s4835] sm:$0xff]
    %v4837 = vld [vmem:[%s4835 + $0x8] sm:$0xff]
    %v4838 = vld [vmem:[%s4835 + $0x10] sm:$0xff]
    %v4839 = vld [vmem:[%s4835 + $0x18] sm:$0xff]
    %v4840 = vld [vmem:[%s4835 + $0x20] sm:$0xff]
    %v4841 = vld [vmem:[%s4835 + $0x28] sm:$0xff]
    %v4843 = vsel %vm2815, %v4832, 0
    %4845 = vmatprep.subr.mxu0 0.0
    %4846 = vmatpush1.msra.mxu0 %v4836
    %4847 = vmatprep.subr.mxu0 0.0
    %4848 = vmatpush1.msra.mxu0 %v4837
    %4849 = vmatprep.subr.mxu0 0.0
    %4850 = vmatpush1.msra.mxu0 %v4838
    %4851 = vmatprep.subr.mxu0 0.0
    %4852 = vmatpush1.msra.mxu0 %v4839
    %4853 = vmatprep.subr.mxu0 0.0
    %4854 = vmatpush1.msra.mxu0 %v4840
    %4855 = vmatprep.subr.mxu0 0.0
    %4856 = vmatpush1.msra.mxu0 %v4841
    %4857 = vmatprep.subr.mxu0 0.0
    %4858 = vmatpush1.msra.mxu0 0.0
    %4859 = vmatprep.subr.mxu0 0.0
    %4860 = vmatpush1.msra.mxu0 0.0
    %4861 = vmatprep.subr.mxu0 0.0
    %4862 = vmatpush1.msra.mxu0 0.0
    %4863 = vmatprep.subr.mxu0 0.0
    %4864 = vmatpush1.msra.mxu0 0.0
    %4865 = vmatprep.subr.mxu0 0.0
    %4866 = vmatpush1.msra.mxu0 0.0
    %4867 = vmatprep.subr.mxu0 0.0
    %4868 = vmatpush1.msra.mxu0 0.0
    %4869 = vmatprep.subr.mxu0 0.0
    %4870 = vmatpush1.msra.mxu0 0.0
    %4871 = vmatprep.subr.mxu0 0.0
    %4872 = vmatpush1.msra.mxu0 0.0
    %4873 = vmatprep.subr.mxu0 0.0
    %4874 = vmatpush1.msra.mxu0 0.0
    %4875 = vmatprep.subr.mxu0 0.0
    %4876 = vmatpush1.msra.mxu0 0.0
    %4877 = vmatprep.subr.mxu0 0.0
    %4878 = vmatpush1.msra.mxu0 0.0
    %4879 = vmatprep.subr.mxu0 0.0
    %4880 = vmatpush1.msra.mxu0 0.0
    %4881 = vmatprep.subr.mxu0 0.0
    %4882 = vmatpush1.msra.mxu0 0.0
    %4883 = vmatprep.subr.mxu0 0.0
    %4884 = vmatpush1.msra.mxu0 0.0
    %4885 = vmatprep.subr.mxu0 0.0
    %4886 = vmatpush1.msra.mxu0 0.0
    %4887 = vmatprep.subr.mxu0 0.0
    %4888 = vmatpush1.msra.mxu0 0.0
    %4889 = vmatprep.subr.mxu0 0.0
    %4890 = vmatpush1.msra.mxu0 0.0
    %4891 = vmatprep.subr.mxu0 0.0
    %4892 = vmatpush1.msra.mxu0 0.0
    %4893 = vmatprep.subr.mxu0 0.0
    %4894 = vmatpush1.msra.mxu0 0.0
    %4895 = vmatprep.subr.mxu0 0.0
    %4896 = vmatpush1.msra.mxu0 0.0
    %4897 = vmatprep.subr.mxu0 0.0
    %4898 = vmatpush1.msra.mxu0 0.0
    %4899 = vmatprep.subr.mxu0 0.0
    %4900 = vmatpush1.msra.mxu0 0.0
    %4901 = vmatprep.subr.mxu0 0.0
    %4902 = vmatpush1.msra.mxu0 0.0
    %4903 = vmatprep.subr.mxu0 0.0
    %4904 = vmatpush1.msra.mxu0 0.0
    %4905 = vmatprep.subr.mxu0 0.0
    %4906 = vmatpush1.msra.mxu0 0.0
    %4907 = vmatprep.subr.mxu0 0.0
    %4908 = vmatpush1.msra.mxu0 0.0
    %4909 = vmatprep.mubr.f32.mxu0 0.0
    %4910 = vmatmul.mubr.f32.gmra.mrb[0].mxu0 %v4843
    %v4911 = vpop.f32.mrb[0].mxu0
    %v4912 = vadd.f32 0.0, %v4911
    %v4913 = vpop.f32.mrb[0].mxu0
    %4914 = vdwg.mxu0
    %v4915 = vadd.f32 %v4757, %v4912
    %v4916 = vld [vmem:[#allocation41] sm:$0x1]
    %v4918 = vlaneseq
    %v4919 = vshrl.u32 %v4918, 7
    %v4920 = vsub.s32 0, %v4919
    %v4921 = vrot.slane %v4916, %v4920
    %v4923 = vadd.f32 %v4915, %v4921
    %v4924 = vsel %vm2815, %v4923, 0.0
    %v4925 = vrot.slane %v4924, 4
    %v4926 = vadd.f32 %v4924, %v4925
    %v4927 = vrot.slane %v4926, 2
    %v4928 = vadd.f32 %v4926, %v4927
    %v4929 = vrot.slane %v4928, 1
    %v4930 = vadd.f32 %v4928, %v4929
    %v4931 = vld [vmem:[#allocation43] sm:$0xff]
    %v4932 = vld [vmem:[#allocation43 + $0x8] sm:$0xff]
    %v4933 = vld [vmem:[#allocation43 + $0x10] sm:$0xff]
    %v4934 = vld [vmem:[#allocation43 + $0x18] sm:$0xff]
    %v4935 = vld [vmem:[#allocation43 + $0x20] sm:$0xff]
    %v4936 = vld [vmem:[#allocation43 + $0x28] sm:$0xff]
    %v4938 = vsel %vm2815, %v4930, 0
    %4940 = vmatprep.subr.mxu0 0.0
    %4941 = vmatpush1.msra.mxu0 %v4931
    %4942 = vmatprep.subr.mxu0 0.0
    %4943 = vmatpush1.msra.mxu0 %v4932
    %4944 = vmatprep.subr.mxu0 0.0
    %4945 = vmatpush1.msra.mxu0 %v4933
    %4946 = vmatprep.subr.mxu0 0.0
    %4947 = vmatpush1.msra.mxu0 %v4934
    %4948 = vmatprep.subr.mxu0 0.0
    %4949 = vmatpush1.msra.mxu0 %v4935
    %4950 = vmatprep.subr.mxu0 0.0
    %4951 = vmatpush1.msra.mxu0 %v4936
    %4952 = vmatprep.subr.mxu0 0.0
    %4953 = vmatpush1.msra.mxu0 0.0
    %4954 = vmatprep.subr.mxu0 0.0
    %4955 = vmatpush1.msra.mxu0 0.0
    %4956 = vmatprep.subr.mxu0 0.0
    %4957 = vmatpush1.msra.mxu0 0.0
    %4958 = vmatprep.subr.mxu0 0.0
    %4959 = vmatpush1.msra.mxu0 0.0
    %4960 = vmatprep.subr.mxu0 0.0
    %4961 = vmatpush1.msra.mxu0 0.0
    %4962 = vmatprep.subr.mxu0 0.0
    %4963 = vmatpush1.msra.mxu0 0.0
    %4964 = vmatprep.subr.mxu0 0.0
    %4965 = vmatpush1.msra.mxu0 0.0
    %4966 = vmatprep.subr.mxu0 0.0
    %4967 = vmatpush1.msra.mxu0 0.0
    %4968 = vmatprep.subr.mxu0 0.0
    %4969 = vmatpush1.msra.mxu0 0.0
    %4970 = vmatprep.subr.mxu0 0.0
    %4971 = vmatpush1.msra.mxu0 0.0
    %4972 = vmatprep.subr.mxu0 0.0
    %4973 = vmatpush1.msra.mxu0 0.0
    %4974 = vmatprep.subr.mxu0 0.0
    %4975 = vmatpush1.msra.mxu0 0.0
    %4976 = vmatprep.subr.mxu0 0.0
    %4977 = vmatpush1.msra.mxu0 0.0
    %4978 = vmatprep.subr.mxu0 0.0
    %4979 = vmatpush1.msra.mxu0 0.0
    %4980 = vmatprep.subr.mxu0 0.0
    %4981 = vmatpush1.msra.mxu0 0.0
    %4982 = vmatprep.subr.mxu0 0.0
    %4983 = vmatpush1.msra.mxu0 0.0
    %4984 = vmatprep.subr.mxu0 0.0
    %4985 = vmatpush1.msra.mxu0 0.0
    %4986 = vmatprep.subr.mxu0 0.0
    %4987 = vmatpush1.msra.mxu0 0.0
    %4988 = vmatprep.subr.mxu0 0.0
    %4989 = vmatpush1.msra.mxu0 0.0
    %4990 = vmatprep.subr.mxu0 0.0
    %4991 = vmatpush1.msra.mxu0 0.0
    %4992 = vmatprep.subr.mxu0 0.0
    %4993 = vmatpush1.msra.mxu0 0.0
    %4994 = vmatprep.subr.mxu0 0.0
    %4995 = vmatpush1.msra.mxu0 0.0
    %4996 = vmatprep.subr.mxu0 0.0
    %4997 = vmatpush1.msra.mxu0 0.0
    %4998 = vmatprep.subr.mxu0 0.0
    %4999 = vmatpush1.msra.mxu0 0.0
    %5000 = vmatprep.subr.mxu0 0.0
    %5001 = vmatpush1.msra.mxu0 0.0
    %5002 = vmatprep.subr.mxu0 0.0
    %5003 = vmatpush1.msra.mxu0 0.0
    %5004 = vmatprep.mubr.f32.mxu0 0.0
    %5005 = vmatmul.mubr.f32.gmra.mrb[0].mxu0 %v4938
    %v5006 = vpop.f32.mrb[0].mxu0
    %v5007 = vadd.f32 0.0, %v5006
    %v5008 = vpop.f32.mrb[0].mxu0
    %5009 = vdwg.mxu0
    %v5010 = vlaneseq
    %v5011 = vshrl.u32 %v5010, 7
    %v5012 = vsub.s32 0, %v5011
    %v5013 = vrot.slane %v5007, %v5012
    %v5014 = vsub.f32 %v4923, %v5013
    %v5015 = vmul.f32 %v5014, %v5014
    %v5016 = vsel %vm2815, %v5015, 0.0
    %v5017 = vrot.slane %v5016, 4
    %v5018 = vadd.f32 %v5016, %v5017
    %v5019 = vrot.slane %v5018, 2
    %v5020 = vadd.f32 %v5018, %v5019
    %v5021 = vrot.slane %v5020, 1
    %v5022 = vadd.f32 %v5020, %v5021
    %v5024 = vsel %vm2815, %v5022, 0
    %5026 = vmatprep.subr.mxu0 0.0
    %5027 = vmatpush1.msra.mxu0 %v4931
    %5028 = vmatprep.subr.mxu0 0.0
    %5029 = vmatpush1.msra.mxu0 %v4932
    %5030 = vmatprep.subr.mxu0 0.0
    %5031 = vmatpush1.msra.mxu0 %v4933
    %5032 = vmatprep.subr.mxu0 0.0
    %5033 = vmatpush1.msra.mxu0 %v4934
    %5034 = vmatprep.subr.mxu0 0.0
    %5035 = vmatpush1.msra.mxu0 %v4935
    %5036 = vmatprep.subr.mxu0 0.0
    %5037 = vmatpush1.msra.mxu0 %v4936
    %5038 = vmatprep.subr.mxu0 0.0
    %5039 = vmatpush1.msra.mxu0 0.0
    %5040 = vmatprep.subr.mxu0 0.0
    %5041 = vmatpush1.msra.mxu0 0.0
    %5042 = vmatprep.subr.mxu0 0.0
    %5043 = vmatpush1.msra.mxu0 0.0
    %5044 = vmatprep.subr.mxu0 0.0
    %5045 = vmatpush1.msra.mxu0 0.0
    %5046 = vmatprep.subr.mxu0 0.0
    %5047 = vmatpush1.msra.mxu0 0.0
    %5048 = vmatprep.subr.mxu0 0.0
    %5049 = vmatpush1.msra.mxu0 0.0
    %5050 = vmatprep.subr.mxu0 0.0
    %5051 = vmatpush1.msra.mxu0 0.0
    %5052 = vmatprep.subr.mxu0 0.0
    %5053 = vmatpush1.msra.mxu0 0.0
    %5054 = vmatprep.subr.mxu0 0.0
    %5055 = vmatpush1.msra.mxu0 0.0
    %5056 = vmatprep.subr.mxu0 0.0
    %5057 = vmatpush1.msra.mxu0 0.0
    %5058 = vmatprep.subr.mxu0 0.0
    %5059 = vmatpush1.msra.mxu0 0.0
    %5060 = vmatprep.subr.mxu0 0.0
    %5061 = vmatpush1.msra.mxu0 0.0
    %5062 = vmatprep.subr.mxu0 0.0
    %5063 = vmatpush1.msra.mxu0 0.0
    %5064 = vmatprep.subr.mxu0 0.0
    %5065 = vmatpush1.msra.mxu0 0.0
    %5066 = vmatprep.subr.mxu0 0.0
    %5067 = vmatpush1.msra.mxu0 0.0
    %5068 = vmatprep.subr.mxu0 0.0
    %5069 = vmatpush1.msra.mxu0 0.0
    %5070 = vmatprep.subr.mxu0 0.0
    %5071 = vmatpush1.msra.mxu0 0.0
    %5072 = vmatprep.subr.mxu0 0.0
    %5073 = vmatpush1.msra.mxu0 0.0
    %5074 = vmatprep.subr.mxu0 0.0
    %5075 = vmatpush1.msra.mxu0 0.0
    %5076 = vmatprep.subr.mxu0 0.0
    %5077 = vmatpush1.msra.mxu0 0.0
    %5078 = vmatprep.subr.mxu0 0.0
    %5079 = vmatpush1.msra.mxu0 0.0
    %5080 = vmatprep.subr.mxu0 0.0
    %5081 = vmatpush1.msra.mxu0 0.0
    %5082 = vmatprep.subr.mxu0 0.0
    %5083 = vmatpush1.msra.mxu0 0.0
    %5084 = vmatprep.subr.mxu0 0.0
    %5085 = vmatpush1.msra.mxu0 0.0
    %5086 = vmatprep.subr.mxu0 0.0
    %5087 = vmatpush1.msra.mxu0 0.0
    %5088 = vmatprep.subr.mxu0 0.0
    %5089 = vmatpush1.msra.mxu0 0.0
    %5090 = vmatprep.mubr.f32.mxu0 0.0
    %5091 = vmatmul.mubr.f32.gmra.mrb[0].mxu0 %v5024
    %v5092 = vpop.f32.mrb[0].mxu0
    %v5093 = vadd.f32 1e-05, %v5092
    %v5094 = vpop.f32.mrb[0].mxu0
    %5095 = vdwg.mxu0
    %v5096 = vrsqrt.pop %v5093
    %v5097 = vlaneseq
    %v5098 = vshrl.u32 %v5097, 7
    %v5099 = vsub.s32 0, %v5098
    %v5100 = vrot.slane %v5096, %v5099
    %v5101 = vmul.f32 %v5014, %v5100
    %v5102 = vld [vmem:[#allocation44] sm:$0x1]
    %v5104 = vlaneseq
    %v5105 = vshrl.u32 %v5104, 7
    %v5106 = vsub.s32 0, %v5105
    %v5107 = vrot.slane %v5102, %v5106
    %v5109 = vmul.f32 %v5101, %v5107
    %v5110 = vld [vmem:[#allocation46] sm:$0x1]
    %v5112 = vlaneseq
    %v5113 = vshrl.u32 %v5112, 7
    %v5114 = vsub.s32 0, %v5113
    %v5115 = vrot.slane %v5110, %v5114
    %v5117 = vadd.f32 %v5109, %v5115
    %v5118 = vmax.f32 %v5117, 0.0
    %v5119 = vld [vmem:[%s81] sm:$0xff]
    %v5120 = vld [vmem:[%s81 + $0x8] sm:$0xff]
    %v5122 = vsel %vm3012, %v5119, 0
    %v5125 = vsel %vm3012, %v5120, 0
    %5127 = vmatprep.subr.mxu0 0.0
    %5128 = vmatpush1.msra.mxu0 %v5118
    %5129 = vmatprep.subr.mxu0 0.0
    %5130 = vmatpush1.msra.mxu0 0.0
    %5131 = vmatprep.subr.mxu0 0.0
    %5132 = vmatpush1.msra.mxu0 0.0
    %5133 = vmatprep.subr.mxu0 0.0
    %5134 = vmatpush1.msra.mxu0 0.0
    %5135 = vmatprep.subr.mxu0 0.0
    %5136 = vmatpush1.msra.mxu0 0.0
    %5137 = vmatprep.subr.mxu0 0.0
    %5138 = vmatpush1.msra.mxu0 0.0
    %5139 = vmatprep.subr.mxu0 0.0
    %5140 = vmatpush1.msra.mxu0 0.0
    %5141 = vmatprep.subr.mxu0 0.0
    %5142 = vmatpush1.msra.mxu0 0.0
    %5143 = vmatprep.subr.mxu0 0.0
    %5144 = vmatpush1.msra.mxu0 0.0
    %5145 = vmatprep.subr.mxu0 0.0
    %5146 = vmatpush1.msra.mxu0 0.0
    %5147 = vmatprep.subr.mxu0 0.0
    %5148 = vmatpush1.msra.mxu0 0.0
    %5149 = vmatprep.subr.mxu0 0.0
    %5150 = vmatpush1.msra.mxu0 0.0
    %5151 = vmatprep.subr.mxu0 0.0
    %5152 = vmatpush1.msra.mxu0 0.0
    %5153 = vmatprep.subr.mxu0 0.0
    %5154 = vmatpush1.msra.mxu0 0.0
    %5155 = vmatprep.subr.mxu0 0.0
    %5156 = vmatpush1.msra.mxu0 0.0
    %5157 = vmatprep.subr.mxu0 0.0
    %5158 = vmatpush1.msra.mxu0 0.0
    %5159 = vmatprep.subr.mxu0 0.0
    %5160 = vmatpush1.msra.mxu0 0.0
    %5161 = vmatprep.subr.mxu0 0.0
    %5162 = vmatpush1.msra.mxu0 0.0
    %5163 = vmatprep.subr.mxu0 0.0
    %5164 = vmatpush1.msra.mxu0 0.0
    %5165 = vmatprep.subr.mxu0 0.0
    %5166 = vmatpush1.msra.mxu0 0.0
    %5167 = vmatprep.subr.mxu0 0.0
    %5168 = vmatpush1.msra.mxu0 0.0
    %5169 = vmatprep.subr.mxu0 0.0
    %5170 = vmatpush1.msra.mxu0 0.0
    %5171 = vmatprep.subr.mxu0 0.0
    %5172 = vmatpush1.msra.mxu0 0.0
    %5173 = vmatprep.subr.mxu0 0.0
    %5174 = vmatpush1.msra.mxu0 0.0
    %5175 = vmatprep.subr.mxu0 0.0
    %5176 = vmatpush1.msra.mxu0 0.0
    %5177 = vmatprep.subr.mxu0 0.0
    %5178 = vmatpush1.msra.mxu0 0.0
    %5179 = vmatprep.subr.mxu0 0.0
    %5180 = vmatpush1.msra.mxu0 0.0
    %5181 = vmatprep.subr.mxu0 0.0
    %5182 = vmatpush1.msra.mxu0 0.0
    %5183 = vmatprep.subr.mxu0 0.0
    %5184 = vmatpush1.msra.mxu0 0.0
    %5185 = vmatprep.subr.mxu0 0.0
    %5186 = vmatpush1.msra.mxu0 0.0
    %5187 = vmatprep.subr.mxu0 0.0
    %5188 = vmatpush1.msra.mxu0 0.0
    %5189 = vmatprep.subr.mxu0 0.0
    %5190 = vmatpush1.msra.mxu0 0.0
    %5191 = vmatprep.mubr.f32.mxu0 0.0
    %5192 = vmatmul.mubr.f32.gmra.mrb[0].mxu0 %v5122
    %v5193 = vpop.f32.mrb[0].mxu0
    %v5194 = vadd.f32 0.0, %v5193
    %v5195 = vpop.f32.mrb[0].mxu0
    %5196 = vmatprep.mubr.f32.mxu0 0.0
    %5197 = vmatmul.mubr.f32.gmra.mrb[0].mxu0 %v5125
    %v5198 = vpop.f32.mrb[0].mxu0
    %v5199 = vadd.f32 0.0, %v5198
    %v5200 = vpop.f32.mrb[0].mxu0
    %5201 = vdwg.mxu0
    %v5202 = vld [vmem:[%s83] sm:$0xff]
    %v5203 = vld [vmem:[%s83 + $0x8] sm:$0xff]
    %v5204 = vld [vmem:[%s83 + $0x10] sm:$0xff]
    %v5205 = vld [vmem:[%s83 + $0x18] sm:$0xff]
    %v5206 = vld [vmem:[%s83 + $0x20] sm:$0xff]
    %v5207 = vld [vmem:[%s83 + $0x28] sm:$0xff]
    %s5208 = scalar_lea.vmem %s81, 16
    %v5209 = vld [vmem:[%s5208] sm:$0xff]
    %v5210 = vld [vmem:[%s5208 + $0x8] sm:$0xff]
    %v5212 = vsel %vm3012, %v5209, 0
    %v5215 = vsel %vm3012, %v5210, 0
    %5217 = vmatprep.subr.mxu0 0.0
    %5218 = vmatpush1.msra.mxu0 %v5118
    %5219 = vmatprep.subr.mxu0 0.0
    %5220 = vmatpush1.msra.mxu0 0.0
    %5221 = vmatprep.subr.mxu0 0.0
    %5222 = vmatpush1.msra.mxu0 0.0
    %5223 = vmatprep.subr.mxu0 0.0
    %5224 = vmatpush1.msra.mxu0 0.0
    %5225 = vmatprep.subr.mxu0 0.0
    %5226 = vmatpush1.msra.mxu0 0.0
    %5227 = vmatprep.subr.mxu0 0.0
    %5228 = vmatpush1.msra.mxu0 0.0
    %5229 = vmatprep.subr.mxu0 0.0
    %5230 = vmatpush1.msra.mxu0 0.0
    %5231 = vmatprep.subr.mxu0 0.0
    %5232 = vmatpush1.msra.mxu0 0.0
    %5233 = vmatprep.subr.mxu0 0.0
    %5234 = vmatpush1.msra.mxu0 0.0
    %5235 = vmatprep.subr.mxu0 0.0
    %5236 = vmatpush1.msra.mxu0 0.0
    %5237 = vmatprep.subr.mxu0 0.0
    %5238 = vmatpush1.msra.mxu0 0.0
    %5239 = vmatprep.subr.mxu0 0.0
    %5240 = vmatpush1.msra.mxu0 0.0
    %5241 = vmatprep.subr.mxu0 0.0
    %5242 = vmatpush1.msra.mxu0 0.0
    %5243 = vmatprep.subr.mxu0 0.0
    %5244 = vmatpush1.msra.mxu0 0.0
    %5245 = vmatprep.subr.mxu0 0.0
    %5246 = vmatpush1.msra.mxu0 0.0
    %5247 = vmatprep.subr.mxu0 0.0
    %5248 = vmatpush1.msra.mxu0 0.0
    %5249 = vmatprep.subr.mxu0 0.0
    %5250 = vmatpush1.msra.mxu0 0.0
    %5251 = vmatprep.subr.mxu0 0.0
    %5252 = vmatpush1.msra.mxu0 0.0
    %5253 = vmatprep.subr.mxu0 0.0
    %5254 = vmatpush1.msra.mxu0 0.0
    %5255 = vmatprep.subr.mxu0 0.0
    %5256 = vmatpush1.msra.mxu0 0.0
    %5257 = vmatprep.subr.mxu0 0.0
    %5258 = vmatpush1.msra.mxu0 0.0
    %5259 = vmatprep.subr.mxu0 0.0
    %5260 = vmatpush1.msra.mxu0 0.0
    %5261 = vmatprep.subr.mxu0 0.0
    %5262 = vmatpush1.msra.mxu0 0.0
    %5263 = vmatprep.subr.mxu0 0.0
    %5264 = vmatpush1.msra.mxu0 0.0
    %5265 = vmatprep.subr.mxu0 0.0
    %5266 = vmatpush1.msra.mxu0 0.0
    %5267 = vmatprep.subr.mxu0 0.0
    %5268 = vmatpush1.msra.mxu0 0.0
    %5269 = vmatprep.subr.mxu0 0.0
    %5270 = vmatpush1.msra.mxu0 0.0
    %5271 = vmatprep.subr.mxu0 0.0
    %5272 = vmatpush1.msra.mxu0 0.0
    %5273 = vmatprep.subr.mxu0 0.0
    %5274 = vmatpush1.msra.mxu0 0.0
    %5275 = vmatprep.subr.mxu0 0.0
    %5276 = vmatpush1.msra.mxu0 0.0
    %5277 = vmatprep.subr.mxu0 0.0
    %5278 = vmatpush1.msra.mxu0 0.0
    %5279 = vmatprep.subr.mxu0 0.0
    %5280 = vmatpush1.msra.mxu0 0.0
    %5281 = vmatprep.mubr.f32.mxu0 0.0
    %5282 = vmatmul.mubr.f32.gmra.mrb[0].mxu0 %v5212
    %v5283 = vpop.f32.mrb[0].mxu0
    %v5284 = vadd.f32 0.0, %v5283
    %v5285 = vpop.f32.mrb[0].mxu0
    %5286 = vmatprep.mubr.f32.mxu0 0.0
    %5287 = vmatmul.mubr.f32.gmra.mrb[0].mxu0 %v5215
    %v5288 = vpop.f32.mrb[0].mxu0
    %v5289 = vadd.f32 0.0, %v5288
    %v5290 = vpop.f32.mrb[0].mxu0
    %5291 = vdwg.mxu0
    %s5292 = scalar_lea.vmem %s83, 48
    %v5293 = vld [vmem:[%s5292] sm:$0xff]
    %v5294 = vld [vmem:[%s5292 + $0x8] sm:$0xff]
    %v5295 = vld [vmem:[%s5292 + $0x10] sm:$0xff]
    %v5296 = vld [vmem:[%s5292 + $0x18] sm:$0xff]
    %v5297 = vld [vmem:[%s5292 + $0x20] sm:$0xff]
    %v5298 = vld [vmem:[%s5292 + $0x28] sm:$0xff]
    %v5300 = vsel %vm2815, %v5284, 0
    %v5303 = vsel %vm2815, %v5289, 0
    %5305 = vmatprep.subr.mxu0 0.0
    %5306 = vmatpush1.msra.mxu0 %v5293
    %5307 = vmatprep.subr.mxu0 0.0
    %5308 = vmatpush1.msra.mxu0 %v5294
    %5309 = vmatprep.subr.mxu0 0.0
    %5310 = vmatpush1.msra.mxu0 %v5295
    %5311 = vmatprep.subr.mxu0 0.0
    %5312 = vmatpush1.msra.mxu0 %v5296
    %5313 = vmatprep.subr.mxu0 0.0
    %5314 = vmatpush1.msra.mxu0 %v5297
    %5315 = vmatprep.subr.mxu0 0.0
    %5316 = vmatpush1.msra.mxu0 %v5298
    %5317 = vmatprep.subr.mxu0 0.0
    %5318 = vmatpush1.msra.mxu0 0.0
    %5319 = vmatprep.subr.mxu0 0.0
    %5320 = vmatpush1.msra.mxu0 0.0
    %5321 = vmatprep.subr.mxu0 0.0
    %5322 = vmatpush1.msra.mxu0 0.0
    %5323 = vmatprep.subr.mxu0 0.0
    %5324 = vmatpush1.msra.mxu0 0.0
    %5325 = vmatprep.subr.mxu0 0.0
    %5326 = vmatpush1.msra.mxu0 0.0
    %5327 = vmatprep.subr.mxu0 0.0
    %5328 = vmatpush1.msra.mxu0 0.0
    %5329 = vmatprep.subr.mxu0 0.0
    %5330 = vmatpush1.msra.mxu0 0.0
    %5331 = vmatprep.subr.mxu0 0.0
    %5332 = vmatpush1.msra.mxu0 0.0
    %5333 = vmatprep.subr.mxu0 0.0
    %5334 = vmatpush1.msra.mxu0 0.0
    %5335 = vmatprep.subr.mxu0 0.0
    %5336 = vmatpush1.msra.mxu0 0.0
    %5337 = vmatprep.subr.mxu0 0.0
    %5338 = vmatpush1.msra.mxu0 0.0
    %5339 = vmatprep.subr.mxu0 0.0
    %5340 = vmatpush1.msra.mxu0 0.0
    %5341 = vmatprep.subr.mxu0 0.0
    %5342 = vmatpush1.msra.mxu0 0.0
    %5343 = vmatprep.subr.mxu0 0.0
    %5344 = vmatpush1.msra.mxu0 0.0
    %5345 = vmatprep.subr.mxu0 0.0
    %5346 = vmatpush1.msra.mxu0 0.0
    %5347 = vmatprep.subr.mxu0 0.0
    %5348 = vmatpush1.msra.mxu0 0.0
    %5349 = vmatprep.subr.mxu0 0.0
    %5350 = vmatpush1.msra.mxu0 0.0
    %5351 = vmatprep.subr.mxu0 0.0
    %5352 = vmatpush1.msra.mxu0 0.0
    %5353 = vmatprep.subr.mxu0 0.0
    %5354 = vmatpush1.msra.mxu0 0.0
    %5355 = vmatprep.subr.mxu0 0.0
    %5356 = vmatpush1.msra.mxu0 0.0
    %5357 = vmatprep.subr.mxu0 0.0
    %5358 = vmatpush1.msra.mxu0 0.0
    %5359 = vmatprep.subr.mxu0 0.0
    %5360 = vmatpush1.msra.mxu0 0.0
    %5361 = vmatprep.subr.mxu0 0.0
    %5362 = vmatpush1.msra.mxu0 0.0
    %5363 = vmatprep.subr.mxu0 0.0
    %5364 = vmatpush1.msra.mxu0 0.0
    %5365 = vmatprep.subr.mxu0 0.0
    %5366 = vmatpush1.msra.mxu0 0.0
    %5367 = vmatprep.subr.mxu0 0.0
    %5368 = vmatpush1.msra.mxu0 0.0
    %5369 = vmatprep.mubr.f32.mxu0 0.0
    %5370 = vmatmul.mubr.f32.gmra.mrb[0].mxu0 %v5300
    %v5371 = vpop.f32.mrb[0].mxu0
    %v5372 = vadd.f32 0.0, %v5371
    %v5373 = vpop.f32.mrb[0].mxu0
    %5374 = vmatprep.mubr.f32.mxu0 0.0
    %5375 = vmatmul.mubr.f32.gmra.mrb[0].mxu0 %v5303
    %v5376 = vpop.f32.mrb[0].mxu0
    %v5377 = vadd.f32 0.0, %v5376
    %v5378 = vpop.f32.mrb[0].mxu0
    %5379 = vdwg.mxu0
    %v5381 = vsel %vm2815, %v5194, 0
    %v5384 = vsel %vm2815, %v5199, 0
    %5386 = vmatprep.subr.mxu0 0.0
    %5387 = vmatpush1.msra.mxu0 %v5202
    %5388 = vmatprep.subr.mxu0 0.0
    %5389 = vmatpush1.msra.mxu0 %v5203
    %5390 = vmatprep.subr.mxu0 0.0
    %5391 = vmatpush1.msra.mxu0 %v5204
    %5392 = vmatprep.subr.mxu0 0.0
    %5393 = vmatpush1.msra.mxu0 %v5205
    %5394 = vmatprep.subr.mxu0 0.0
    %5395 = vmatpush1.msra.mxu0 %v5206
    %5396 = vmatprep.subr.mxu0 0.0
    %5397 = vmatpush1.msra.mxu0 %v5207
    %5398 = vmatprep.subr.mxu0 0.0
    %5399 = vmatpush1.msra.mxu0 0.0
    %5400 = vmatprep.subr.mxu0 0.0
    %5401 = vmatpush1.msra.mxu0 0.0
    %5402 = vmatprep.subr.mxu0 0.0
    %5403 = vmatpush1.msra.mxu0 0.0
    %5404 = vmatprep.subr.mxu0 0.0
    %5405 = vmatpush1.msra.mxu0 0.0
    %5406 = vmatprep.subr.mxu0 0.0
    %5407 = vmatpush1.msra.mxu0 0.0
    %5408 = vmatprep.subr.mxu0 0.0
    %5409 = vmatpush1.msra.mxu0 0.0
    %5410 = vmatprep.subr.mxu0 0.0
    %5411 = vmatpush1.msra.mxu0 0.0
    %5412 = vmatprep.subr.mxu0 0.0
    %5413 = vmatpush1.msra.mxu0 0.0
    %5414 = vmatprep.subr.mxu0 0.0
    %5415 = vmatpush1.msra.mxu0 0.0
    %5416 = vmatprep.subr.mxu0 0.0
    %5417 = vmatpush1.msra.mxu0 0.0
    %5418 = vmatprep.subr.mxu0 0.0
    %5419 = vmatpush1.msra.mxu0 0.0
    %5420 = vmatprep.subr.mxu0 0.0
    %5421 = vmatpush1.msra.mxu0 0.0
    %5422 = vmatprep.subr.mxu0 0.0
    %5423 = vmatpush1.msra.mxu0 0.0
    %5424 = vmatprep.subr.mxu0 0.0
    %5425 = vmatpush1.msra.mxu0 0.0
    %5426 = vmatprep.subr.mxu0 0.0
    %5427 = vmatpush1.msra.mxu0 0.0
    %5428 = vmatprep.subr.mxu0 0.0
    %5429 = vmatpush1.msra.mxu0 0.0
    %5430 = vmatprep.subr.mxu0 0.0
    %5431 = vmatpush1.msra.mxu0 0.0
    %5432 = vmatprep.subr.mxu0 0.0
    %5433 = vmatpush1.msra.mxu0 0.0
    %5434 = vmatprep.subr.mxu0 0.0
    %5435 = vmatpush1.msra.mxu0 0.0
    %5436 = vmatprep.subr.mxu0 0.0
    %5437 = vmatpush1.msra.mxu0 0.0
    %5438 = vmatprep.subr.mxu0 0.0
    %5439 = vmatpush1.msra.mxu0 0.0
    %5440 = vmatprep.subr.mxu0 0.0
    %5441 = vmatpush1.msra.mxu0 0.0
    %5442 = vmatprep.subr.mxu0 0.0
    %5443 = vmatpush1.msra.mxu0 0.0
    %5444 = vmatprep.subr.mxu0 0.0
    %5445 = vmatpush1.msra.mxu0 0.0
    %5446 = vmatprep.subr.mxu0 0.0
    %5447 = vmatpush1.msra.mxu0 0.0
    %5448 = vmatprep.subr.mxu0 0.0
    %5449 = vmatpush1.msra.mxu0 0.0
    %5450 = vmatprep.mubr.f32.mxu0 0.0
    %5451 = vmatmul.mubr.f32.gmra.mrb[0].mxu0 %v5381
    %v5452 = vpop.f32.mrb[0].mxu0
    %v5453 = vadd.f32 %v5372, %v5452
    %v5454 = vpop.f32.mrb[0].mxu0
    %5455 = vmatprep.mubr.f32.mxu0 0.0
    %5456 = vmatmul.mubr.f32.gmra.mrb[0].mxu0 %v5384
    %v5457 = vpop.f32.mrb[0].mxu0
    %v5458 = vadd.f32 %v5377, %v5457
    %v5459 = vpop.f32.mrb[0].mxu0
    %5460 = vdwg.mxu0
    %s5461 = scalar_lea.vmem %s81, 32
    %v5462 = vld [vmem:[%s5461] sm:$0xff]
    %v5463 = vld [vmem:[%s5461 + $0x8] sm:$0xff]
    %v5465 = vsel %vm3012, %v5462, 0
    %v5468 = vsel %vm3012, %v5463, 0
    %5470 = vmatprep.subr.mxu0 0.0
    %5471 = vmatpush1.msra.mxu0 %v5118
    %5472 = vmatprep.subr.mxu0 0.0
    %5473 = vmatpush1.msra.mxu0 0.0
    %5474 = vmatprep.subr.mxu0 0.0
    %5475 = vmatpush1.msra.mxu0 0.0
    %5476 = vmatprep.subr.mxu0 0.0
    %5477 = vmatpush1.msra.mxu0 0.0
    %5478 = vmatprep.subr.mxu0 0.0
    %5479 = vmatpush1.msra.mxu0 0.0
    %5480 = vmatprep.subr.mxu0 0.0
    %5481 = vmatpush1.msra.mxu0 0.0
    %5482 = vmatprep.subr.mxu0 0.0
    %5483 = vmatpush1.msra.mxu0 0.0
    %5484 = vmatprep.subr.mxu0 0.0
    %5485 = vmatpush1.msra.mxu0 0.0
    %5486 = vmatprep.subr.mxu0 0.0
    %5487 = vmatpush1.msra.mxu0 0.0
    %5488 = vmatprep.subr.mxu0 0.0
    %5489 = vmatpush1.msra.mxu0 0.0
    %5490 = vmatprep.subr.mxu0 0.0
    %5491 = vmatpush1.msra.mxu0 0.0
    %5492 = vmatprep.subr.mxu0 0.0
    %5493 = vmatpush1.msra.mxu0 0.0
    %5494 = vmatprep.subr.mxu0 0.0
    %5495 = vmatpush1.msra.mxu0 0.0
    %5496 = vmatprep.subr.mxu0 0.0
    %5497 = vmatpush1.msra.mxu0 0.0
    %5498 = vmatprep.subr.mxu0 0.0
    %5499 = vmatpush1.msra.mxu0 0.0
    %5500 = vmatprep.subr.mxu0 0.0
    %5501 = vmatpush1.msra.mxu0 0.0
    %5502 = vmatprep.subr.mxu0 0.0
    %5503 = vmatpush1.msra.mxu0 0.0
    %5504 = vmatprep.subr.mxu0 0.0
    %5505 = vmatpush1.msra.mxu0 0.0
    %5506 = vmatprep.subr.mxu0 0.0
    %5507 = vmatpush1.msra.mxu0 0.0
    %5508 = vmatprep.subr.mxu0 0.0
    %5509 = vmatpush1.msra.mxu0 0.0
    %5510 = vmatprep.subr.mxu0 0.0
    %5511 = vmatpush1.msra.mxu0 0.0
    %5512 = vmatprep.subr.mxu0 0.0
    %5513 = vmatpush1.msra.mxu0 0.0
    %5514 = vmatprep.subr.mxu0 0.0
    %5515 = vmatpush1.msra.mxu0 0.0
    %5516 = vmatprep.subr.mxu0 0.0
    %5517 = vmatpush1.msra.mxu0 0.0
    %5518 = vmatprep.subr.mxu0 0.0
    %5519 = vmatpush1.msra.mxu0 0.0
    %5520 = vmatprep.subr.mxu0 0.0
    %5521 = vmatpush1.msra.mxu0 0.0
    %5522 = vmatprep.subr.mxu0 0.0
    %5523 = vmatpush1.msra.mxu0 0.0
    %5524 = vmatprep.subr.mxu0 0.0
    %5525 = vmatpush1.msra.mxu0 0.0
    %5526 = vmatprep.subr.mxu0 0.0
    %5527 = vmatpush1.msra.mxu0 0.0
    %5528 = vmatprep.subr.mxu0 0.0
    %5529 = vmatpush1.msra.mxu0 0.0
    %5530 = vmatprep.subr.mxu0 0.0
    %5531 = vmatpush1.msra.mxu0 0.0
    %5532 = vmatprep.subr.mxu0 0.0
    %5533 = vmatpush1.msra.mxu0 0.0
    %5534 = vmatprep.mubr.f32.mxu0 0.0
    %5535 = vmatmul.mubr.f32.gmra.mrb[0].mxu0 %v5465
    %v5536 = vpop.f32.mrb[0].mxu0
    %v5537 = vadd.f32 0.0, %v5536
    %v5538 = vpop.f32.mrb[0].mxu0
    %5539 = vmatprep.mubr.f32.mxu0 0.0
    %5540 = vmatmul.mubr.f32.gmra.mrb[0].mxu0 %v5468
    %v5541 = vpop.f32.mrb[0].mxu0
    %v5542 = vadd.f32 0.0, %v5541
    %v5543 = vpop.f32.mrb[0].mxu0
    %5544 = vdwg.mxu0
    %s5545 = scalar_lea.vmem %s83, 96
    %v5546 = vld [vmem:[%s5545] sm:$0xff]
    %v5547 = vld [vmem:[%s5545 + $0x8] sm:$0xff]
    %v5548 = vld [vmem:[%s5545 + $0x10] sm:$0xff]
    %v5549 = vld [vmem:[%s5545 + $0x18] sm:$0xff]
    %v5550 = vld [vmem:[%s5545 + $0x20] sm:$0xff]
    %v5551 = vld [vmem:[%s5545 + $0x28] sm:$0xff]
    %v5553 = vsel %vm2815, %v5537, 0
    %v5556 = vsel %vm2815, %v5542, 0
    %5558 = vmatprep.subr.mxu0 0.0
    %5559 = vmatpush1.msra.mxu0 %v5546
    %5560 = vmatprep.subr.mxu0 0.0
    %5561 = vmatpush1.msra.mxu0 %v5547
    %5562 = vmatprep.subr.mxu0 0.0
    %5563 = vmatpush1.msra.mxu0 %v5548
    %5564 = vmatprep.subr.mxu0 0.0
    %5565 = vmatpush1.msra.mxu0 %v5549
    %5566 = vmatprep.subr.mxu0 0.0
    %5567 = vmatpush1.msra.mxu0 %v5550
    %5568 = vmatprep.subr.mxu0 0.0
    %5569 = vmatpush1.msra.mxu0 %v5551
    %5570 = vmatprep.subr.mxu0 0.0
    %5571 = vmatpush1.msra.mxu0 0.0
    %5572 = vmatprep.subr.mxu0 0.0
    %5573 = vmatpush1.msra.mxu0 0.0
    %5574 = vmatprep.subr.mxu0 0.0
    %5575 = vmatpush1.msra.mxu0 0.0
    %5576 = vmatprep.subr.mxu0 0.0
    %5577 = vmatpush1.msra.mxu0 0.0
    %5578 = vmatprep.subr.mxu0 0.0
    %5579 = vmatpush1.msra.mxu0 0.0
    %5580 = vmatprep.subr.mxu0 0.0
    %5581 = vmatpush1.msra.mxu0 0.0
    %5582 = vmatprep.subr.mxu0 0.0
    %5583 = vmatpush1.msra.mxu0 0.0
    %5584 = vmatprep.subr.mxu0 0.0
    %5585 = vmatpush1.msra.mxu0 0.0
    %5586 = vmatprep.subr.mxu0 0.0
    %5587 = vmatpush1.msra.mxu0 0.0
    %5588 = vmatprep.subr.mxu0 0.0
    %5589 = vmatpush1.msra.mxu0 0.0
    %5590 = vmatprep.subr.mxu0 0.0
    %5591 = vmatpush1.msra.mxu0 0.0
    %5592 = vmatprep.subr.mxu0 0.0
    %5593 = vmatpush1.msra.mxu0 0.0
    %5594 = vmatprep.subr.mxu0 0.0
    %5595 = vmatpush1.msra.mxu0 0.0
    %5596 = vmatprep.subr.mxu0 0.0
    %5597 = vmatpush1.msra.mxu0 0.0
    %5598 = vmatprep.subr.mxu0 0.0
    %5599 = vmatpush1.msra.mxu0 0.0
    %5600 = vmatprep.subr.mxu0 0.0
    %5601 = vmatpush1.msra.mxu0 0.0
    %5602 = vmatprep.subr.mxu0 0.0
    %5603 = vmatpush1.msra.mxu0 0.0
    %5604 = vmatprep.subr.mxu0 0.0
    %5605 = vmatpush1.msra.mxu0 0.0
    %5606 = vmatprep.subr.mxu0 0.0
    %5607 = vmatpush1.msra.mxu0 0.0
    %5608 = vmatprep.subr.mxu0 0.0
    %5609 = vmatpush1.msra.mxu0 0.0
    %5610 = vmatprep.subr.mxu0 0.0
    %5611 = vmatpush1.msra.mxu0 0.0
    %5612 = vmatprep.subr.mxu0 0.0
    %5613 = vmatpush1.msra.mxu0 0.0
    %5614 = vmatprep.subr.mxu0 0.0
    %5615 = vmatpush1.msra.mxu0 0.0
    %5616 = vmatprep.subr.mxu0 0.0
    %5617 = vmatpush1.msra.mxu0 0.0
    %5618 = vmatprep.subr.mxu0 0.0
    %5619 = vmatpush1.msra.mxu0 0.0
    %5620 = vmatprep.subr.mxu0 0.0
    %5621 = vmatpush1.msra.mxu0 0.0
    %5622 = vmatprep.mubr.f32.mxu0 0.0
    %5623 = vmatmul.mubr.f32.gmra.mrb[0].mxu0 %v5553
    %v5624 = vpop.f32.mrb[0].mxu0
    %v5625 = vadd.f32 0.0, %v5624
    %v5626 = vpop.f32.mrb[0].mxu0
    %5627 = vmatprep.mubr.f32.mxu0 0.0
    %5628 = vmatmul.mubr.f32.gmra.mrb[0].mxu0 %v5556
    %v5629 = vpop.f32.mrb[0].mxu0
    %v5630 = vadd.f32 0.0, %v5629
    %v5631 = vpop.f32.mrb[0].mxu0
    %5632 = vdwg.mxu0
    %v5633 = vadd.f32 %v5453, %v5625
    %v5634 = vadd.f32 %v5458, %v5630
    %v5635 = vld [vmem:[#allocation47] sm:$0x1]
    %v5637 = vlaneseq
    %v5638 = vshrl.u32 %v5637, 7
    %v5639 = vsub.s32 0, %v5638
    %v5640 = vrot.slane %v5635, %v5639
    %v5642 = vadd.f32 %v5633, %v5640
    %v5643 = vadd.f32 %v5634, %v5640
    %v5644 = vsel %vm2815, %v5642, 0.0
    %v5645 = vsel %vm2815, %v5643, 0.0
    %v5646 = vadd.f32 %v5644, %v5645
    %v5647 = vrot.slane %v5646, 4
    %v5648 = vadd.f32 %v5646, %v5647
    %v5649 = vrot.slane %v5648, 2
    %v5650 = vadd.f32 %v5648, %v5649
    %v5651 = vrot.slane %v5650, 1
    %v5652 = vadd.f32 %v5650, %v5651
    %v5653 = vld [vmem:[#allocation49] sm:$0xff]
    %v5654 = vld [vmem:[#allocation49 + $0x8] sm:$0xff]
    %v5655 = vld [vmem:[#allocation49 + $0x10] sm:$0xff]
    %v5656 = vld [vmem:[#allocation49 + $0x18] sm:$0xff]
    %v5657 = vld [vmem:[#allocation49 + $0x20] sm:$0xff]
    %v5658 = vld [vmem:[#allocation49 + $0x28] sm:$0xff]
    %v5660 = vsel %vm2815, %v5652, 0
    %5662 = vmatprep.subr.mxu0 0.0
    %5663 = vmatpush1.msra.mxu0 %v5653
    %5664 = vmatprep.subr.mxu0 0.0
    %5665 = vmatpush1.msra.mxu0 %v5654
    %5666 = vmatprep.subr.mxu0 0.0
    %5667 = vmatpush1.msra.mxu0 %v5655
    %5668 = vmatprep.subr.mxu0 0.0
    %5669 = vmatpush1.msra.mxu0 %v5656
    %5670 = vmatprep.subr.mxu0 0.0
    %5671 = vmatpush1.msra.mxu0 %v5657
    %5672 = vmatprep.subr.mxu0 0.0
    %5673 = vmatpush1.msra.mxu0 %v5658
    %5674 = vmatprep.subr.mxu0 0.0
    %5675 = vmatpush1.msra.mxu0 0.0
    %5676 = vmatprep.subr.mxu0 0.0
    %5677 = vmatpush1.msra.mxu0 0.0
    %5678 = vmatprep.subr.mxu0 0.0
    %5679 = vmatpush1.msra.mxu0 0.0
    %5680 = vmatprep.subr.mxu0 0.0
    %5681 = vmatpush1.msra.mxu0 0.0
    %5682 = vmatprep.subr.mxu0 0.0
    %5683 = vmatpush1.msra.mxu0 0.0
    %5684 = vmatprep.subr.mxu0 0.0
    %5685 = vmatpush1.msra.mxu0 0.0
    %5686 = vmatprep.subr.mxu0 0.0
    %5687 = vmatpush1.msra.mxu0 0.0
    %5688 = vmatprep.subr.mxu0 0.0
    %5689 = vmatpush1.msra.mxu0 0.0
    %5690 = vmatprep.subr.mxu0 0.0
    %5691 = vmatpush1.msra.mxu0 0.0
    %5692 = vmatprep.subr.mxu0 0.0
    %5693 = vmatpush1.msra.mxu0 0.0
    %5694 = vmatprep.subr.mxu0 0.0
    %5695 = vmatpush1.msra.mxu0 0.0
    %5696 = vmatprep.subr.mxu0 0.0
    %5697 = vmatpush1.msra.mxu0 0.0
    %5698 = vmatprep.subr.mxu0 0.0
    %5699 = vmatpush1.msra.mxu0 0.0
    %5700 = vmatprep.subr.mxu0 0.0
    %5701 = vmatpush1.msra.mxu0 0.0
    %5702 = vmatprep.subr.mxu0 0.0
    %5703 = vmatpush1.msra.mxu0 0.0
    %5704 = vmatprep.subr.mxu0 0.0
    %5705 = vmatpush1.msra.mxu0 0.0
    %5706 = vmatprep.subr.mxu0 0.0
    %5707 = vmatpush1.msra.mxu0 0.0
    %5708 = vmatprep.subr.mxu0 0.0
    %5709 = vmatpush1.msra.mxu0 0.0
    %5710 = vmatprep.subr.mxu0 0.0
    %5711 = vmatpush1.msra.mxu0 0.0
    %5712 = vmatprep.subr.mxu0 0.0
    %5713 = vmatpush1.msra.mxu0 0.0
    %5714 = vmatprep.subr.mxu0 0.0
    %5715 = vmatpush1.msra.mxu0 0.0
    %5716 = vmatprep.subr.mxu0 0.0
    %5717 = vmatpush1.msra.mxu0 0.0
    %5718 = vmatprep.subr.mxu0 0.0
    %5719 = vmatpush1.msra.mxu0 0.0
    %5720 = vmatprep.subr.mxu0 0.0
    %5721 = vmatpush1.msra.mxu0 0.0
    %5722 = vmatprep.subr.mxu0 0.0
    %5723 = vmatpush1.msra.mxu0 0.0
    %5724 = vmatprep.subr.mxu0 0.0
    %5725 = vmatpush1.msra.mxu0 0.0
    %5726 = vmatprep.mubr.f32.mxu0 0.0
    %5727 = vmatmul.mubr.f32.gmra.mrb[0].mxu0 %v5660
    %v5728 = vpop.f32.mrb[0].mxu0
    %v5729 = vadd.f32 0.0, %v5728
    %v5730 = vpop.f32.mrb[0].mxu0
    %5731 = vdwg.mxu0
    %v5732 = vlaneseq
    %v5733 = vshrl.u32 %v5732, 7
    %v5734 = vsub.s32 0, %v5733
    %v5735 = vrot.slane %v5729, %v5734
    %v5736 = vsub.f32 %v5642, %v5735
    %v5737 = vsub.f32 %v5643, %v5735
    %v5738 = vmul.f32 %v5736, %v5736
    %v5739 = vmul.f32 %v5737, %v5737
    %v5740 = vsel %vm2815, %v5738, 0.0
    %v5741 = vsel %vm2815, %v5739, 0.0
    %v5742 = vadd.f32 %v5740, %v5741
    %v5743 = vrot.slane %v5742, 4
    %v5744 = vadd.f32 %v5742, %v5743
    %v5745 = vrot.slane %v5744, 2
    %v5746 = vadd.f32 %v5744, %v5745
    %v5747 = vrot.slane %v5746, 1
    %v5748 = vadd.f32 %v5746, %v5747
    %v5750 = vsel %vm2815, %v5748, 0
    %5752 = vmatprep.subr.mxu0 0.0
    %5753 = vmatpush1.msra.mxu0 %v5653
    %5754 = vmatprep.subr.mxu0 0.0
    %5755 = vmatpush1.msra.mxu0 %v5654
    %5756 = vmatprep.subr.mxu0 0.0
    %5757 = vmatpush1.msra.mxu0 %v5655
    %5758 = vmatprep.subr.mxu0 0.0
    %5759 = vmatpush1.msra.mxu0 %v5656
    %5760 = vmatprep.subr.mxu0 0.0
    %5761 = vmatpush1.msra.mxu0 %v5657
    %5762 = vmatprep.subr.mxu0 0.0
    %5763 = vmatpush1.msra.mxu0 %v5658
    %5764 = vmatprep.subr.mxu0 0.0
    %5765 = vmatpush1.msra.mxu0 0.0
    %5766 = vmatprep.subr.mxu0 0.0
    %5767 = vmatpush1.msra.mxu0 0.0
    %5768 = vmatprep.subr.mxu0 0.0
    %5769 = vmatpush1.msra.mxu0 0.0
    %5770 = vmatprep.subr.mxu0 0.0
    %5771 = vmatpush1.msra.mxu0 0.0
    %5772 = vmatprep.subr.mxu0 0.0
    %5773 = vmatpush1.msra.mxu0 0.0
    %5774 = vmatprep.subr.mxu0 0.0
    %5775 = vmatpush1.msra.mxu0 0.0
    %5776 = vmatprep.subr.mxu0 0.0
    %5777 = vmatpush1.msra.mxu0 0.0
    %5778 = vmatprep.subr.mxu0 0.0
    %5779 = vmatpush1.msra.mxu0 0.0
    %5780 = vmatprep.subr.mxu0 0.0
    %5781 = vmatpush1.msra.mxu0 0.0
    %5782 = vmatprep.subr.mxu0 0.0
    %5783 = vmatpush1.msra.mxu0 0.0
    %5784 = vmatprep.subr.mxu0 0.0
    %5785 = vmatpush1.msra.mxu0 0.0
    %5786 = vmatprep.subr.mxu0 0.0
    %5787 = vmatpush1.msra.mxu0 0.0
    %5788 = vmatprep.subr.mxu0 0.0
    %5789 = vmatpush1.msra.mxu0 0.0
    %5790 = vmatprep.subr.mxu0 0.0
    %5791 = vmatpush1.msra.mxu0 0.0
    %5792 = vmatprep.subr.mxu0 0.0
    %5793 = vmatpush1.msra.mxu0 0.0
    %5794 = vmatprep.subr.mxu0 0.0
    %5795 = vmatpush1.msra.mxu0 0.0
    %5796 = vmatprep.subr.mxu0 0.0
    %5797 = vmatpush1.msra.mxu0 0.0
    %5798 = vmatprep.subr.mxu0 0.0
    %5799 = vmatpush1.msra.mxu0 0.0
    %5800 = vmatprep.subr.mxu0 0.0
    %5801 = vmatpush1.msra.mxu0 0.0
    %5802 = vmatprep.subr.mxu0 0.0
    %5803 = vmatpush1.msra.mxu0 0.0
    %5804 = vmatprep.subr.mxu0 0.0
    %5805 = vmatpush1.msra.mxu0 0.0
    %5806 = vmatprep.subr.mxu0 0.0
    %5807 = vmatpush1.msra.mxu0 0.0
    %5808 = vmatprep.subr.mxu0 0.0
    %5809 = vmatpush1.msra.mxu0 0.0
    %5810 = vmatprep.subr.mxu0 0.0
    %5811 = vmatpush1.msra.mxu0 0.0
    %5812 = vmatprep.subr.mxu0 0.0
    %5813 = vmatpush1.msra.mxu0 0.0
    %5814 = vmatprep.subr.mxu0 0.0
    %5815 = vmatpush1.msra.mxu0 0.0
    %5816 = vmatprep.mubr.f32.mxu0 0.0
    %5817 = vmatmul.mubr.f32.gmra.mrb[0].mxu0 %v5750
    %v5818 = vpop.f32.mrb[0].mxu0
    %v5819 = vadd.f32 1e-05, %v5818
    %v5820 = vpop.f32.mrb[0].mxu0
    %5821 = vdwg.mxu0
    %v5822 = vrsqrt.pop %v5819
    %v5823 = vlaneseq
    %v5824 = vshrl.u32 %v5823, 7
    %v5825 = vsub.s32 0, %v5824
    %v5826 = vrot.slane %v5822, %v5825
    %v5827 = vmul.f32 %v5736, %v5826
    %v5828 = vmul.f32 %v5737, %v5826
    %v5829 = vld [vmem:[#allocation50] sm:$0x1]
    %v5831 = vlaneseq
    %v5832 = vshrl.u32 %v5831, 7
    %v5833 = vsub.s32 0, %v5832
    %v5834 = vrot.slane %v5829, %v5833
    %v5836 = vmul.f32 %v5827, %v5834
    %v5837 = vmul.f32 %v5828, %v5834
    %v5838 = vld [vmem:[#allocation52] sm:$0x1]
    %v5840 = vlaneseq
    %v5841 = vshrl.u32 %v5840, 7
    %v5842 = vsub.s32 0, %v5841
    %v5843 = vrot.slane %v5838, %v5842
    %v5845 = vadd.f32 %v5836, %v5843
    %v5846 = vadd.f32 %v5837, %v5843
    %v5847 = vmax.f32 %v5845, 0.0
    %v5848 = vmax.f32 %v5846, 0.0
    %v5849 = vld [vmem:[%s93] sm:$0xff]
    %v5850 = vld [vmem:[%s93 + $0x8] sm:$0xff]
    %v5851 = vld [vmem:[%s93 + $0x10] sm:$0xff]
    %v5852 = vld [vmem:[%s93 + $0x18] sm:$0xff]
    %vm5853 = vcmask 130048
    %v5855 = vsel %vm5853, %v5849, 0
    %v5858 = vsel %vm5853, %v5850, 0
    %v5861 = vsel %vm5853, %v5851, 0
    %v5864 = vsel %vm5853, %v5852, 0
    %5866 = vmatprep.subr.mxu0 0.0
    %5867 = vmatpush1.msra.mxu0 %v5847
    %5868 = vmatprep.subr.mxu0 0.0
    %5869 = vmatpush1.msra.mxu0 %v5848
    %5870 = vmatprep.subr.mxu0 0.0
    %5871 = vmatpush1.msra.mxu0 0.0
    %5872 = vmatprep.subr.mxu0 0.0
    %5873 = vmatpush1.msra.mxu0 0.0
    %5874 = vmatprep.subr.mxu0 0.0
    %5875 = vmatpush1.msra.mxu0 0.0
    %5876 = vmatprep.subr.mxu0 0.0
    %5877 = vmatpush1.msra.mxu0 0.0
    %5878 = vmatprep.subr.mxu0 0.0
    %5879 = vmatpush1.msra.mxu0 0.0
    %5880 = vmatprep.subr.mxu0 0.0
    %5881 = vmatpush1.msra.mxu0 0.0
    %5882 = vmatprep.subr.mxu0 0.0
    %5883 = vmatpush1.msra.mxu0 0.0
    %5884 = vmatprep.subr.mxu0 0.0
    %5885 = vmatpush1.msra.mxu0 0.0
    %5886 = vmatprep.subr.mxu0 0.0
    %5887 = vmatpush1.msra.mxu0 0.0
    %5888 = vmatprep.subr.mxu0 0.0
    %5889 = vmatpush1.msra.mxu0 0.0
    %5890 = vmatprep.subr.mxu0 0.0
    %5891 = vmatpush1.msra.mxu0 0.0
    %5892 = vmatprep.subr.mxu0 0.0
    %5893 = vmatpush1.msra.mxu0 0.0
    %5894 = vmatprep.subr.mxu0 0.0
    %5895 = vmatpush1.msra.mxu0 0.0
    %5896 = vmatprep.subr.mxu0 0.0
    %5897 = vmatpush1.msra.mxu0 0.0
    %5898 = vmatprep.subr.mxu0 0.0
    %5899 = vmatpush1.msra.mxu0 0.0
    %5900 = vmatprep.subr.mxu0 0.0
    %5901 = vmatpush1.msra.mxu0 0.0
    %5902 = vmatprep.subr.mxu0 0.0
    %5903 = vmatpush1.msra.mxu0 0.0
    %5904 = vmatprep.subr.mxu0 0.0
    %5905 = vmatpush1.msra.mxu0 0.0
    %5906 = vmatprep.subr.mxu0 0.0
    %5907 = vmatpush1.msra.mxu0 0.0
    %5908 = vmatprep.subr.mxu0 0.0
    %5909 = vmatpush1.msra.mxu0 0.0
    %5910 = vmatprep.subr.mxu0 0.0
    %5911 = vmatpush1.msra.mxu0 0.0
    %5912 = vmatprep.subr.mxu0 0.0
    %5913 = vmatpush1.msra.mxu0 0.0
    %5914 = vmatprep.subr.mxu0 0.0
    %5915 = vmatpush1.msra.mxu0 0.0
    %5916 = vmatprep.subr.mxu0 0.0
    %5917 = vmatpush1.msra.mxu0 0.0
    %5918 = vmatprep.subr.mxu0 0.0
    %5919 = vmatpush1.msra.mxu0 0.0
    %5920 = vmatprep.subr.mxu0 0.0
    %5921 = vmatpush1.msra.mxu0 0.0
    %5922 = vmatprep.subr.mxu0 0.0
    %5923 = vmatpush1.msra.mxu0 0.0
    %5924 = vmatprep.subr.mxu0 0.0
    %5925 = vmatpush1.msra.mxu0 0.0
    %5926 = vmatprep.subr.mxu0 0.0
    %5927 = vmatpush1.msra.mxu0 0.0
    %5928 = vmatprep.subr.mxu0 0.0
    %5929 = vmatpush1.msra.mxu0 0.0
    %5930 = vmatprep.mubr.f32.mxu0 0.0
    %5931 = vmatmul.mubr.f32.gmra.mrb[0].mxu0 %v5855
    %v5932 = vpop.f32.mrb[0].mxu0
    %v5933 = vadd.f32 0.0, %v5932
    %v5934 = vpop.f32.mrb[0].mxu0
    %5935 = vmatprep.mubr.f32.mxu0 0.0
    %5936 = vmatmul.mubr.f32.gmra.mrb[0].mxu0 %v5858
    %v5937 = vpop.f32.mrb[0].mxu0
    %v5938 = vadd.f32 0.0, %v5937
    %v5939 = vpop.f32.mrb[0].mxu0
    %5940 = vmatprep.mubr.f32.mxu0 0.0
    %5941 = vmatmul.mubr.f32.gmra.mrb[0].mxu0 %v5861
    %v5942 = vpop.f32.mrb[0].mxu0
    %v5943 = vadd.f32 0.0, %v5942
    %v5944 = vpop.f32.mrb[0].mxu0
    %5945 = vmatprep.mubr.f32.mxu0 0.0
    %5946 = vmatmul.mubr.f32.gmra.mrb[0].mxu0 %v5864
    %v5947 = vpop.f32.mrb[0].mxu0
    %v5948 = vadd.f32 0.0, %v5947
    %v5949 = vpop.f32.mrb[0].mxu0
    %5950 = vdwg.mxu0
    %v5951 = vld [vmem:[%s95] sm:$0xff]
    %v5952 = vld [vmem:[%s95 + $0x8] sm:$0xff]
    %v5953 = vld [vmem:[%s95 + $0x10] sm:$0xff]
    %v5954 = vld [vmem:[%s95 + $0x18] sm:$0xff]
    %v5955 = vld [vmem:[%s95 + $0x20] sm:$0xff]
    %v5956 = vld [vmem:[%s95 + $0x28] sm:$0xff]
    %s5957 = scalar_lea.vmem %s93, 32
    %v5958 = vld [vmem:[%s5957] sm:$0xff]
    %v5959 = vld [vmem:[%s5957 + $0x8] sm:$0xff]
    %v5960 = vld [vmem:[%s5957 + $0x10] sm:$0xff]
    %v5961 = vld [vmem:[%s5957 + $0x18] sm:$0xff]
    %v5963 = vsel %vm5853, %v5958, 0
    %v5966 = vsel %vm5853, %v5959, 0
    %v5969 = vsel %vm5853, %v5960, 0
    %v5972 = vsel %vm5853, %v5961, 0
    %5974 = vmatprep.subr.mxu0 0.0
    %5975 = vmatpush1.msra.mxu0 %v5847
    %5976 = vmatprep.subr.mxu0 0.0
    %5977 = vmatpush1.msra.mxu0 %v5848
    %5978 = vmatprep.subr.mxu0 0.0
    %5979 = vmatpush1.msra.mxu0 0.0
    %5980 = vmatprep.subr.mxu0 0.0
    %5981 = vmatpush1.msra.mxu0 0.0
    %5982 = vmatprep.subr.mxu0 0.0
    %5983 = vmatpush1.msra.mxu0 0.0
    %5984 = vmatprep.subr.mxu0 0.0
    %5985 = vmatpush1.msra.mxu0 0.0
    %5986 = vmatprep.subr.mxu0 0.0
    %5987 = vmatpush1.msra.mxu0 0.0
    %5988 = vmatprep.subr.mxu0 0.0
    %5989 = vmatpush1.msra.mxu0 0.0
    %5990 = vmatprep.subr.mxu0 0.0
    %5991 = vmatpush1.msra.mxu0 0.0
    %5992 = vmatprep.subr.mxu0 0.0
    %5993 = vmatpush1.msra.mxu0 0.0
    %5994 = vmatprep.subr.mxu0 0.0
    %5995 = vmatpush1.msra.mxu0 0.0
    %5996 = vmatprep.subr.mxu0 0.0
    %5997 = vmatpush1.msra.mxu0 0.0
    %5998 = vmatprep.subr.mxu0 0.0
    %5999 = vmatpush1.msra.mxu0 0.0
    %6000 = vmatprep.subr.mxu0 0.0
    %6001 = vmatpush1.msra.mxu0 0.0
    %6002 = vmatprep.subr.mxu0 0.0
    %6003 = vmatpush1.msra.mxu0 0.0
    %6004 = vmatprep.subr.mxu0 0.0
    %6005 = vmatpush1.msra.mxu0 0.0
    %6006 = vmatprep.subr.mxu0 0.0
    %6007 = vmatpush1.msra.mxu0 0.0
    %6008 = vmatprep.subr.mxu0 0.0
    %6009 = vmatpush1.msra.mxu0 0.0
    %6010 = vmatprep.subr.mxu0 0.0
    %6011 = vmatpush1.msra.mxu0 0.0
    %6012 = vmatprep.subr.mxu0 0.0
    %6013 = vmatpush1.msra.mxu0 0.0
    %6014 = vmatprep.subr.mxu0 0.0
    %6015 = vmatpush1.msra.mxu0 0.0
    %6016 = vmatprep.subr.mxu0 0.0
    %6017 = vmatpush1.msra.mxu0 0.0
    %6018 = vmatprep.subr.mxu0 0.0
    %6019 = vmatpush1.msra.mxu0 0.0
    %6020 = vmatprep.subr.mxu0 0.0
    %6021 = vmatpush1.msra.mxu0 0.0
    %6022 = vmatprep.subr.mxu0 0.0
    %6023 = vmatpush1.msra.mxu0 0.0
    %6024 = vmatprep.subr.mxu0 0.0
    %6025 = vmatpush1.msra.mxu0 0.0
    %6026 = vmatprep.subr.mxu0 0.0
    %6027 = vmatpush1.msra.mxu0 0.0
    %6028 = vmatprep.subr.mxu0 0.0
    %6029 = vmatpush1.msra.mxu0 0.0
    %6030 = vmatprep.subr.mxu0 0.0
    %6031 = vmatpush1.msra.mxu0 0.0
    %6032 = vmatprep.subr.mxu0 0.0
    %6033 = vmatpush1.msra.mxu0 0.0
    %6034 = vmatprep.subr.mxu0 0.0
    %6035 = vmatpush1.msra.mxu0 0.0
    %6036 = vmatprep.subr.mxu0 0.0
    %6037 = vmatpush1.msra.mxu0 0.0
    %6038 = vmatprep.mubr.f32.mxu0 0.0
    %6039 = vmatmul.mubr.f32.gmra.mrb[0].mxu0 %v5963
    %v6040 = vpop.f32.mrb[0].mxu0
    %v6041 = vadd.f32 0.0, %v6040
    %v6042 = vpop.f32.mrb[0].mxu0
    %6043 = vmatprep.mubr.f32.mxu0 0.0
    %6044 = vmatmul.mubr.f32.gmra.mrb[0].mxu0 %v5966
    %v6045 = vpop.f32.mrb[0].mxu0
    %v6046 = vadd.f32 0.0, %v6045
    %v6047 = vpop.f32.mrb[0].mxu0
    %6048 = vmatprep.mubr.f32.mxu0 0.0
    %6049 = vmatmul.mubr.f32.gmra.mrb[0].mxu0 %v5969
    %v6050 = vpop.f32.mrb[0].mxu0
    %v6051 = vadd.f32 0.0, %v6050
    %v6052 = vpop.f32.mrb[0].mxu0
    %6053 = vmatprep.mubr.f32.mxu0 0.0
    %6054 = vmatmul.mubr.f32.gmra.mrb[0].mxu0 %v5972
    %v6055 = vpop.f32.mrb[0].mxu0
    %v6056 = vadd.f32 0.0, %v6055
    %v6057 = vpop.f32.mrb[0].mxu0
    %6058 = vdwg.mxu0
    %s6059 = scalar_lea.vmem %s95, 48
    %v6060 = vld [vmem:[%s6059] sm:$0xff]
    %v6061 = vld [vmem:[%s6059 + $0x8] sm:$0xff]
    %v6062 = vld [vmem:[%s6059 + $0x10] sm:$0xff]
    %v6063 = vld [vmem:[%s6059 + $0x18] sm:$0xff]
    %v6064 = vld [vmem:[%s6059 + $0x20] sm:$0xff]
    %v6065 = vld [vmem:[%s6059 + $0x28] sm:$0xff]
    %v6067 = vsel %vm2815, %v6041, 0
    %v6070 = vsel %vm2815, %v6046, 0
    %v6073 = vsel %vm2815, %v6051, 0
    %v6076 = vsel %vm2815, %v6056, 0
    %6078 = vmatprep.subr.mxu0 0.0
    %6079 = vmatpush1.msra.mxu0 %v6060
    %6080 = vmatprep.subr.mxu0 0.0
    %6081 = vmatpush1.msra.mxu0 %v6061
    %6082 = vmatprep.subr.mxu0 0.0
    %6083 = vmatpush1.msra.mxu0 %v6062
    %6084 = vmatprep.subr.mxu0 0.0
    %6085 = vmatpush1.msra.mxu0 %v6063
    %6086 = vmatprep.subr.mxu0 0.0
    %6087 = vmatpush1.msra.mxu0 %v6064
    %6088 = vmatprep.subr.mxu0 0.0
    %6089 = vmatpush1.msra.mxu0 %v6065
    %6090 = vmatprep.subr.mxu0 0.0
    %6091 = vmatpush1.msra.mxu0 0.0
    %6092 = vmatprep.subr.mxu0 0.0
    %6093 = vmatpush1.msra.mxu0 0.0
    %6094 = vmatprep.subr.mxu0 0.0
    %6095 = vmatpush1.msra.mxu0 0.0
    %6096 = vmatprep.subr.mxu0 0.0
    %6097 = vmatpush1.msra.mxu0 0.0
    %6098 = vmatprep.subr.mxu0 0.0
    %6099 = vmatpush1.msra.mxu0 0.0
    %6100 = vmatprep.subr.mxu0 0.0
    %6101 = vmatpush1.msra.mxu0 0.0
    %6102 = vmatprep.subr.mxu0 0.0
    %6103 = vmatpush1.msra.mxu0 0.0
    %6104 = vmatprep.subr.mxu0 0.0
    %6105 = vmatpush1.msra.mxu0 0.0
    %6106 = vmatprep.subr.mxu0 0.0
    %6107 = vmatpush1.msra.mxu0 0.0
    %6108 = vmatprep.subr.mxu0 0.0
    %6109 = vmatpush1.msra.mxu0 0.0
    %6110 = vmatprep.subr.mxu0 0.0
    %6111 = vmatpush1.msra.mxu0 0.0
    %6112 = vmatprep.subr.mxu0 0.0
    %6113 = vmatpush1.msra.mxu0 0.0
    %6114 = vmatprep.subr.mxu0 0.0
    %6115 = vmatpush1.msra.mxu0 0.0
    %6116 = vmatprep.subr.mxu0 0.0
    %6117 = vmatpush1.msra.mxu0 0.0
    %6118 = vmatprep.subr.mxu0 0.0
    %6119 = vmatpush1.msra.mxu0 0.0
    %6120 = vmatprep.subr.mxu0 0.0
    %6121 = vmatpush1.msra.mxu0 0.0
    %6122 = vmatprep.subr.mxu0 0.0
    %6123 = vmatpush1.msra.mxu0 0.0
    %6124 = vmatprep.subr.mxu0 0.0
    %6125 = vmatpush1.msra.mxu0 0.0
    %6126 = vmatprep.subr.mxu0 0.0
    %6127 = vmatpush1.msra.mxu0 0.0
    %6128 = vmatprep.subr.mxu0 0.0
    %6129 = vmatpush1.msra.mxu0 0.0
    %6130 = vmatprep.subr.mxu0 0.0
    %6131 = vmatpush1.msra.mxu0 0.0
    %6132 = vmatprep.subr.mxu0 0.0
    %6133 = vmatpush1.msra.mxu0 0.0
    %6134 = vmatprep.subr.mxu0 0.0
    %6135 = vmatpush1.msra.mxu0 0.0
    %6136 = vmatprep.subr.mxu0 0.0
    %6137 = vmatpush1.msra.mxu0 0.0
    %6138 = vmatprep.subr.mxu0 0.0
    %6139 = vmatpush1.msra.mxu0 0.0
    %6140 = vmatprep.subr.mxu0 0.0
    %6141 = vmatpush1.msra.mxu0 0.0
    %6142 = vmatprep.mubr.f32.mxu0 0.0
    %6143 = vmatmul.mubr.f32.gmra.mrb[0].mxu0 %v6067
    %v6144 = vpop.f32.mrb[0].mxu0
    %v6145 = vadd.f32 0.0, %v6144
    %v6146 = vpop.f32.mrb[0].mxu0
    %6147 = vmatprep.mubr.f32.mxu0 0.0
    %6148 = vmatmul.mubr.f32.gmra.mrb[0].mxu0 %v6070
    %v6149 = vpop.f32.mrb[0].mxu0
    %v6150 = vadd.f32 0.0, %v6149
    %v6151 = vpop.f32.mrb[0].mxu0
    %6152 = vmatprep.mubr.f32.mxu0 0.0
    %6153 = vmatmul.mubr.f32.gmra.mrb[0].mxu0 %v6073
    %v6154 = vpop.f32.mrb[0].mxu0
    %v6155 = vadd.f32 0.0, %v6154
    %v6156 = vpop.f32.mrb[0].mxu0
    %6157 = vmatprep.mubr.f32.mxu0 0.0
    %6158 = vmatmul.mubr.f32.gmra.mrb[0].mxu0 %v6076
    %v6159 = vpop.f32.mrb[0].mxu0
    %v6160 = vadd.f32 0.0, %v6159
    %v6161 = vpop.f32.mrb[0].mxu0
    %6162 = vdwg.mxu0
    %v6164 = vsel %vm2815, %v5933, 0
    %v6167 = vsel %vm2815, %v5938, 0
    %v6170 = vsel %vm2815, %v5943, 0
    %v6173 = vsel %vm2815, %v5948, 0
    %6175 = vmatprep.subr.mxu0 0.0
    %6176 = vmatpush1.msra.mxu0 %v5951
    %6177 = vmatprep.subr.mxu0 0.0
    %6178 = vmatpush1.msra.mxu0 %v5952
    %6179 = vmatprep.subr.mxu0 0.0
    %6180 = vmatpush1.msra.mxu0 %v5953
    %6181 = vmatprep.subr.mxu0 0.0
    %6182 = vmatpush1.msra.mxu0 %v5954
    %6183 = vmatprep.subr.mxu0 0.0
    %6184 = vmatpush1.msra.mxu0 %v5955
    %6185 = vmatprep.subr.mxu0 0.0
    %6186 = vmatpush1.msra.mxu0 %v5956
    %6187 = vmatprep.subr.mxu0 0.0
    %6188 = vmatpush1.msra.mxu0 0.0
    %6189 = vmatprep.subr.mxu0 0.0
    %6190 = vmatpush1.msra.mxu0 0.0
    %6191 = vmatprep.subr.mxu0 0.0
    %6192 = vmatpush1.msra.mxu0 0.0
    %6193 = vmatprep.subr.mxu0 0.0
    %6194 = vmatpush1.msra.mxu0 0.0
    %6195 = vmatprep.subr.mxu0 0.0
    %6196 = vmatpush1.msra.mxu0 0.0
    %6197 = vmatprep.subr.mxu0 0.0
    %6198 = vmatpush1.msra.mxu0 0.0
    %6199 = vmatprep.subr.mxu0 0.0
    %6200 = vmatpush1.msra.mxu0 0.0
    %6201 = vmatprep.subr.mxu0 0.0
    %6202 = vmatpush1.msra.mxu0 0.0
    %6203 = vmatprep.subr.mxu0 0.0
    %6204 = vmatpush1.msra.mxu0 0.0
    %6205 = vmatprep.subr.mxu0 0.0
    %6206 = vmatpush1.msra.mxu0 0.0
    %6207 = vmatprep.subr.mxu0 0.0
    %6208 = vmatpush1.msra.mxu0 0.0
    %6209 = vmatprep.subr.mxu0 0.0
    %6210 = vmatpush1.msra.mxu0 0.0
    %6211 = vmatprep.subr.mxu0 0.0
    %6212 = vmatpush1.msra.mxu0 0.0
    %6213 = vmatprep.subr.mxu0 0.0
    %6214 = vmatpush1.msra.mxu0 0.0
    %6215 = vmatprep.subr.mxu0 0.0
    %6216 = vmatpush1.msra.mxu0 0.0
    %6217 = vmatprep.subr.mxu0 0.0
    %6218 = vmatpush1.msra.mxu0 0.0
    %6219 = vmatprep.subr.mxu0 0.0
    %6220 = vmatpush1.msra.mxu0 0.0
    %6221 = vmatprep.subr.mxu0 0.0
    %6222 = vmatpush1.msra.mxu0 0.0
    %6223 = vmatprep.subr.mxu0 0.0
    %6224 = vmatpush1.msra.mxu0 0.0
    %6225 = vmatprep.subr.mxu0 0.0
    %6226 = vmatpush1.msra.mxu0 0.0
    %6227 = vmatprep.subr.mxu0 0.0
    %6228 = vmatpush1.msra.mxu0 0.0
    %6229 = vmatprep.subr.mxu0 0.0
    %6230 = vmatpush1.msra.mxu0 0.0
    %6231 = vmatprep.subr.mxu0 0.0
    %6232 = vmatpush1.msra.mxu0 0.0
    %6233 = vmatprep.subr.mxu0 0.0
    %6234 = vmatpush1.msra.mxu0 0.0
    %6235 = vmatprep.subr.mxu0 0.0
    %6236 = vmatpush1.msra.mxu0 0.0
    %6237 = vmatprep.subr.mxu0 0.0
    %6238 = vmatpush1.msra.mxu0 0.0
    %6239 = vmatprep.mubr.f32.mxu0 0.0
    %6240 = vmatmul.mubr.f32.gmra.mrb[0].mxu0 %v6164
    %v6241 = vpop.f32.mrb[0].mxu0
    %v6242 = vadd.f32 %v6145, %v6241
    %v6243 = vpop.f32.mrb[0].mxu0
    %6244 = vmatprep.mubr.f32.mxu0 0.0
    %6245 = vmatmul.mubr.f32.gmra.mrb[0].mxu0 %v6167
    %v6246 = vpop.f32.mrb[0].mxu0
    %v6247 = vadd.f32 %v6150, %v6246
    %v6248 = vpop.f32.mrb[0].mxu0
    %6249 = vmatprep.mubr.f32.mxu0 0.0
    %6250 = vmatmul.mubr.f32.gmra.mrb[0].mxu0 %v6170
    %v6251 = vpop.f32.mrb[0].mxu0
    %v6252 = vadd.f32 %v6155, %v6251
    %v6253 = vpop.f32.mrb[0].mxu0
    %6254 = vmatprep.mubr.f32.mxu0 0.0
    %6255 = vmatmul.mubr.f32.gmra.mrb[0].mxu0 %v6173
    %v6256 = vpop.f32.mrb[0].mxu0
    %v6257 = vadd.f32 %v6160, %v6256
    %v6258 = vpop.f32.mrb[0].mxu0
    %6259 = vdwg.mxu0
    %s6260 = scalar_lea.vmem %s93, 64
    %v6261 = vld [vmem:[%s6260] sm:$0xff]
    %v6262 = vld [vmem:[%s6260 + $0x8] sm:$0xff]
    %v6263 = vld [vmem:[%s6260 + $0x10] sm:$0xff]
    %v6264 = vld [vmem:[%s6260 + $0x18] sm:$0xff]
    %v6266 = vsel %vm5853, %v6261, 0
    %v6269 = vsel %vm5853, %v6262, 0
    %v6272 = vsel %vm5853, %v6263, 0
    %v6275 = vsel %vm5853, %v6264, 0
    %6277 = vmatprep.subr.mxu0 0.0
    %6278 = vmatpush1.msra.mxu0 %v5847
    %6279 = vmatprep.subr.mxu0 0.0
    %6280 = vmatpush1.msra.mxu0 %v5848
    %6281 = vmatprep.subr.mxu0 0.0
    %6282 = vmatpush1.msra.mxu0 0.0
    %6283 = vmatprep.subr.mxu0 0.0
    %6284 = vmatpush1.msra.mxu0 0.0
    %6285 = vmatprep.subr.mxu0 0.0
    %6286 = vmatpush1.msra.mxu0 0.0
    %6287 = vmatprep.subr.mxu0 0.0
    %6288 = vmatpush1.msra.mxu0 0.0
    %6289 = vmatprep.subr.mxu0 0.0
    %6290 = vmatpush1.msra.mxu0 0.0
    %6291 = vmatprep.subr.mxu0 0.0
    %6292 = vmatpush1.msra.mxu0 0.0
    %6293 = vmatprep.subr.mxu0 0.0
    %6294 = vmatpush1.msra.mxu0 0.0
    %6295 = vmatprep.subr.mxu0 0.0
    %6296 = vmatpush1.msra.mxu0 0.0
    %6297 = vmatprep.subr.mxu0 0.0
    %6298 = vmatpush1.msra.mxu0 0.0
    %6299 = vmatprep.subr.mxu0 0.0
    %6300 = vmatpush1.msra.mxu0 0.0
    %6301 = vmatprep.subr.mxu0 0.0
    %6302 = vmatpush1.msra.mxu0 0.0
    %6303 = vmatprep.subr.mxu0 0.0
    %6304 = vmatpush1.msra.mxu0 0.0
    %6305 = vmatprep.subr.mxu0 0.0
    %6306 = vmatpush1.msra.mxu0 0.0
    %6307 = vmatprep.subr.mxu0 0.0
    %6308 = vmatpush1.msra.mxu0 0.0
    %6309 = vmatprep.subr.mxu0 0.0
    %6310 = vmatpush1.msra.mxu0 0.0
    %6311 = vmatprep.subr.mxu0 0.0
    %6312 = vmatpush1.msra.mxu0 0.0
    %6313 = vmatprep.subr.mxu0 0.0
    %6314 = vmatpush1.msra.mxu0 0.0
    %6315 = vmatprep.subr.mxu0 0.0
    %6316 = vmatpush1.msra.mxu0 0.0
    %6317 = vmatprep.subr.mxu0 0.0
    %6318 = vmatpush1.msra.mxu0 0.0
    %6319 = vmatprep.subr.mxu0 0.0
    %6320 = vmatpush1.msra.mxu0 0.0
    %6321 = vmatprep.subr.mxu0 0.0
    %6322 = vmatpush1.msra.mxu0 0.0
    %6323 = vmatprep.subr.mxu0 0.0
    %6324 = vmatpush1.msra.mxu0 0.0
    %6325 = vmatprep.subr.mxu0 0.0
    %6326 = vmatpush1.msra.mxu0 0.0
    %6327 = vmatprep.subr.mxu0 0.0
    %6328 = vmatpush1.msra.mxu0 0.0
    %6329 = vmatprep.subr.mxu0 0.0
    %6330 = vmatpush1.msra.mxu0 0.0
    %6331 = vmatprep.subr.mxu0 0.0
    %6332 = vmatpush1.msra.mxu0 0.0
    %6333 = vmatprep.subr.mxu0 0.0
    %6334 = vmatpush1.msra.mxu0 0.0
    %6335 = vmatprep.subr.mxu0 0.0
    %6336 = vmatpush1.msra.mxu0 0.0
    %6337 = vmatprep.subr.mxu0 0.0
    %6338 = vmatpush1.msra.mxu0 0.0
    %6339 = vmatprep.subr.mxu0 0.0
    %6340 = vmatpush1.msra.mxu0 0.0
    %6341 = vmatprep.mubr.f32.mxu0 0.0
    %6342 = vmatmul.mubr.f32.gmra.mrb[0].mxu0 %v6266
    %v6343 = vpop.f32.mrb[0].mxu0
    %v6344 = vadd.f32 0.0, %v6343
    %v6345 = vpop.f32.mrb[0].mxu0
    %6346 = vmatprep.mubr.f32.mxu0 0.0
    %6347 = vmatmul.mubr.f32.gmra.mrb[0].mxu0 %v6269
    %v6348 = vpop.f32.mrb[0].mxu0
    %v6349 = vadd.f32 0.0, %v6348
    %v6350 = vpop.f32.mrb[0].mxu0
    %6351 = vmatprep.mubr.f32.mxu0 0.0
    %6352 = vmatmul.mubr.f32.gmra.mrb[0].mxu0 %v6272
    %v6353 = vpop.f32.mrb[0].mxu0
    %v6354 = vadd.f32 0.0, %v6353
    %v6355 = vpop.f32.mrb[0].mxu0
    %6356 = vmatprep.mubr.f32.mxu0 0.0
    %6357 = vmatmul.mubr.f32.gmra.mrb[0].mxu0 %v6275
    %v6358 = vpop.f32.mrb[0].mxu0
    %v6359 = vadd.f32 0.0, %v6358
    %v6360 = vpop.f32.mrb[0].mxu0
    %6361 = vdwg.mxu0
    %s6362 = scalar_lea.vmem %s95, 96
    %v6363 = vld [vmem:[%s6362] sm:$0xff]
    %v6364 = vld [vmem:[%s6362 + $0x8] sm:$0xff]
    %v6365 = vld [vmem:[%s6362 + $0x10] sm:$0xff]
    %v6366 = vld [vmem:[%s6362 + $0x18] sm:$0xff]
    %v6367 = vld [vmem:[%s6362 + $0x20] sm:$0xff]
    %v6368 = vld [vmem:[%s6362 + $0x28] sm:$0xff]
    %v6370 = vsel %vm2815, %v6344, 0
    %v6373 = vsel %vm2815, %v6349, 0
    %v6376 = vsel %vm2815, %v6354, 0
    %v6379 = vsel %vm2815, %v6359, 0
    %6381 = vmatprep.subr.mxu0 0.0
    %6382 = vmatpush1.msra.mxu0 %v6363
    %6383 = vmatprep.subr.mxu0 0.0
    %6384 = vmatpush1.msra.mxu0 %v6364
    %6385 = vmatprep.subr.mxu0 0.0
    %6386 = vmatpush1.msra.mxu0 %v6365
    %6387 = vmatprep.subr.mxu0 0.0
    %6388 = vmatpush1.msra.mxu0 %v6366
    %6389 = vmatprep.subr.mxu0 0.0
    %6390 = vmatpush1.msra.mxu0 %v6367
    %6391 = vmatprep.subr.mxu0 0.0
    %6392 = vmatpush1.msra.mxu0 %v6368
    %6393 = vmatprep.subr.mxu0 0.0
    %6394 = vmatpush1.msra.mxu0 0.0
    %6395 = vmatprep.subr.mxu0 0.0
    %6396 = vmatpush1.msra.mxu0 0.0
    %6397 = vmatprep.subr.mxu0 0.0
    %6398 = vmatpush1.msra.mxu0 0.0
    %6399 = vmatprep.subr.mxu0 0.0
    %6400 = vmatpush1.msra.mxu0 0.0
    %6401 = vmatprep.subr.mxu0 0.0
    %6402 = vmatpush1.msra.mxu0 0.0
    %6403 = vmatprep.subr.mxu0 0.0
    %6404 = vmatpush1.msra.mxu0 0.0
    %6405 = vmatprep.subr.mxu0 0.0
    %6406 = vmatpush1.msra.mxu0 0.0
    %6407 = vmatprep.subr.mxu0 0.0
    %6408 = vmatpush1.msra.mxu0 0.0
    %6409 = vmatprep.subr.mxu0 0.0
    %6410 = vmatpush1.msra.mxu0 0.0
    %6411 = vmatprep.subr.mxu0 0.0
    %6412 = vmatpush1.msra.mxu0 0.0
    %6413 = vmatprep.subr.mxu0 0.0
    %6414 = vmatpush1.msra.mxu0 0.0
    %6415 = vmatprep.subr.mxu0 0.0
    %6416 = vmatpush1.msra.mxu0 0.0
    %6417 = vmatprep.subr.mxu0 0.0
    %6418 = vmatpush1.msra.mxu0 0.0
    %6419 = vmatprep.subr.mxu0 0.0
    %6420 = vmatpush1.msra.mxu0 0.0
    %6421 = vmatprep.subr.mxu0 0.0
    %6422 = vmatpush1.msra.mxu0 0.0
    %6423 = vmatprep.subr.mxu0 0.0
    %6424 = vmatpush1.msra.mxu0 0.0
    %6425 = vmatprep.subr.mxu0 0.0
    %6426 = vmatpush1.msra.mxu0 0.0
    %6427 = vmatprep.subr.mxu0 0.0
    %6428 = vmatpush1.msra.mxu0 0.0
    %6429 = vmatprep.subr.mxu0 0.0
    %6430 = vmatpush1.msra.mxu0 0.0
    %6431 = vmatprep.subr.mxu0 0.0
    %6432 = vmatpush1.msra.mxu0 0.0
    %6433 = vmatprep.subr.mxu0 0.0
    %6434 = vmatpush1.msra.mxu0 0.0
    %6435 = vmatprep.subr.mxu0 0.0
    %6436 = vmatpush1.msra.mxu0 0.0
    %6437 = vmatprep.subr.mxu0 0.0
    %6438 = vmatpush1.msra.mxu0 0.0
    %6439 = vmatprep.subr.mxu0 0.0
    %6440 = vmatpush1.msra.mxu0 0.0
    %6441 = vmatprep.subr.mxu0 0.0
    %6442 = vmatpush1.msra.mxu0 0.0
    %6443 = vmatprep.subr.mxu0 0.0
    %6444 = vmatpush1.msra.mxu0 0.0
    %6445 = vmatprep.mubr.f32.mxu0 0.0
    %6446 = vmatmul.mubr.f32.gmra.mrb[0].mxu0 %v6370
    %v6447 = vpop.f32.mrb[0].mxu0
    %v6448 = vadd.f32 0.0, %v6447
    %v6449 = vpop.f32.mrb[0].mxu0
    %6450 = vmatprep.mubr.f32.mxu0 0.0
    %6451 = vmatmul.mubr.f32.gmra.mrb[0].mxu0 %v6373
    %v6452 = vpop.f32.mrb[0].mxu0
    %v6453 = vadd.f32 0.0, %v6452
    %v6454 = vpop.f32.mrb[0].mxu0
    %6455 = vmatprep.mubr.f32.mxu0 0.0
    %6456 = vmatmul.mubr.f32.gmra.mrb[0].mxu0 %v6376
    %v6457 = vpop.f32.mrb[0].mxu0
    %v6458 = vadd.f32 0.0, %v6457
    %v6459 = vpop.f32.mrb[0].mxu0
    %6460 = vmatprep.mubr.f32.mxu0 0.0
    %6461 = vmatmul.mubr.f32.gmra.mrb[0].mxu0 %v6379
    %v6462 = vpop.f32.mrb[0].mxu0
    %v6463 = vadd.f32 0.0, %v6462
    %v6464 = vpop.f32.mrb[0].mxu0
    %6465 = vdwg.mxu0
    %v6466 = vadd.f32 %v6242, %v6448
    %v6467 = vadd.f32 %v6247, %v6453
    %v6468 = vadd.f32 %v6252, %v6458
    %v6469 = vadd.f32 %v6257, %v6463
    %v6470 = vld [vmem:[#allocation53] sm:$0x1]
    %v6472 = vlaneseq
    %v6473 = vshrl.u32 %v6472, 7
    %v6474 = vsub.s32 0, %v6473
    %v6475 = vrot.slane %v6470, %v6474
    %v6477 = vadd.f32 %v6466, %v6475
    %v6478 = vadd.f32 %v6467, %v6475
    %v6479 = vadd.f32 %v6468, %v6475
    %v6480 = vadd.f32 %v6469, %v6475
    %v6481 = vsel %vm2815, %v6477, 0.0
    %v6482 = vsel %vm2815, %v6478, 0.0
    %v6483 = vadd.f32 %v6481, %v6482
    %v6484 = vsel %vm2815, %v6479, 0.0
    %v6485 = vadd.f32 %v6483, %v6484
    %v6486 = vsel %vm2815, %v6480, 0.0
    %v6487 = vadd.f32 %v6485, %v6486
    %v6488 = vrot.slane %v6487, 4
    %v6489 = vadd.f32 %v6487, %v6488
    %v6490 = vrot.slane %v6489, 2
    %v6491 = vadd.f32 %v6489, %v6490
    %v6492 = vrot.slane %v6491, 1
    %v6493 = vadd.f32 %v6491, %v6492
    %v6494 = vld [vmem:[#allocation55] sm:$0xff]
    %v6495 = vld [vmem:[#allocation55 + $0x8] sm:$0xff]
    %v6496 = vld [vmem:[#allocation55 + $0x10] sm:$0xff]
    %v6497 = vld [vmem:[#allocation55 + $0x18] sm:$0xff]
    %v6498 = vld [vmem:[#allocation55 + $0x20] sm:$0xff]
    %v6499 = vld [vmem:[#allocation55 + $0x28] sm:$0xff]
    %v6501 = vsel %vm2815, %v6493, 0
    %6503 = vmatprep.subr.mxu0 0.0
    %6504 = vmatpush1.msra.mxu0 %v6494
    %6505 = vmatprep.subr.mxu0 0.0
    %6506 = vmatpush1.msra.mxu0 %v6495
    %6507 = vmatprep.subr.mxu0 0.0
    %6508 = vmatpush1.msra.mxu0 %v6496
    %6509 = vmatprep.subr.mxu0 0.0
    %6510 = vmatpush1.msra.mxu0 %v6497
    %6511 = vmatprep.subr.mxu0 0.0
    %6512 = vmatpush1.msra.mxu0 %v6498
    %6513 = vmatprep.subr.mxu0 0.0
    %6514 = vmatpush1.msra.mxu0 %v6499
    %6515 = vmatprep.subr.mxu0 0.0
    %6516 = vmatpush1.msra.mxu0 0.0
    %6517 = vmatprep.subr.mxu0 0.0
    %6518 = vmatpush1.msra.mxu0 0.0
    %6519 = vmatprep.subr.mxu0 0.0
    %6520 = vmatpush1.msra.mxu0 0.0
    %6521 = vmatprep.subr.mxu0 0.0
    %6522 = vmatpush1.msra.mxu0 0.0
    %6523 = vmatprep.subr.mxu0 0.0
    %6524 = vmatpush1.msra.mxu0 0.0
    %6525 = vmatprep.subr.mxu0 0.0
    %6526 = vmatpush1.msra.mxu0 0.0
    %6527 = vmatprep.subr.mxu0 0.0
    %6528 = vmatpush1.msra.mxu0 0.0
    %6529 = vmatprep.subr.mxu0 0.0
    %6530 = vmatpush1.msra.mxu0 0.0
    %6531 = vmatprep.subr.mxu0 0.0
    %6532 = vmatpush1.msra.mxu0 0.0
    %6533 = vmatprep.subr.mxu0 0.0
    %6534 = vmatpush1.msra.mxu0 0.0
    %6535 = vmatprep.subr.mxu0 0.0
    %6536 = vmatpush1.msra.mxu0 0.0
    %6537 = vmatprep.subr.mxu0 0.0
    %6538 = vmatpush1.msra.mxu0 0.0
    %6539 = vmatprep.subr.mxu0 0.0
    %6540 = vmatpush1.msra.mxu0 0.0
    %6541 = vmatprep.subr.mxu0 0.0
    %6542 = vmatpush1.msra.mxu0 0.0
    %6543 = vmatprep.subr.mxu0 0.0
    %6544 = vmatpush1.msra.mxu0 0.0
    %6545 = vmatprep.subr.mxu0 0.0
    %6546 = vmatpush1.msra.mxu0 0.0
    %6547 = vmatprep.subr.mxu0 0.0
    %6548 = vmatpush1.msra.mxu0 0.0
    %6549 = vmatprep.subr.mxu0 0.0
    %6550 = vmatpush1.msra.mxu0 0.0
    %6551 = vmatprep.subr.mxu0 0.0
    %6552 = vmatpush1.msra.mxu0 0.0
    %6553 = vmatprep.subr.mxu0 0.0
    %6554 = vmatpush1.msra.mxu0 0.0
    %6555 = vmatprep.subr.mxu0 0.0
    %6556 = vmatpush1.msra.mxu0 0.0
    %6557 = vmatprep.subr.mxu0 0.0
    %6558 = vmatpush1.msra.mxu0 0.0
    %6559 = vmatprep.subr.mxu0 0.0
    %6560 = vmatpush1.msra.mxu0 0.0
    %6561 = vmatprep.subr.mxu0 0.0
    %6562 = vmatpush1.msra.mxu0 0.0
    %6563 = vmatprep.subr.mxu0 0.0
    %6564 = vmatpush1.msra.mxu0 0.0
    %6565 = vmatprep.subr.mxu0 0.0
    %6566 = vmatpush1.msra.mxu0 0.0
    %6567 = vmatprep.mubr.f32.mxu0 0.0
    %6568 = vmatmul.mubr.f32.gmra.mrb[0].mxu0 %v6501
    %v6569 = vpop.f32.mrb[0].mxu0
    %v6570 = vadd.f32 0.0, %v6569
    %v6571 = vpop.f32.mrb[0].mxu0
    %6572 = vdwg.mxu0
    %v6573 = vlaneseq
    %v6574 = vshrl.u32 %v6573, 7
    %v6575 = vsub.s32 0, %v6574
    %v6576 = vrot.slane %v6570, %v6575
    %v6577 = vsub.f32 %v6477, %v6576
    %v6578 = vsub.f32 %v6478, %v6576
    %v6579 = vsub.f32 %v6479, %v6576
    %v6580 = vsub.f32 %v6480, %v6576
    %v6581 = vmul.f32 %v6577, %v6577
    %v6582 = vmul.f32 %v6578, %v6578
    %v6583 = vmul.f32 %v6579, %v6579
    %v6584 = vmul.f32 %v6580, %v6580
    %v6585 = vsel %vm2815, %v6581, 0.0
    %v6586 = vsel %vm2815, %v6582, 0.0
    %v6587 = vadd.f32 %v6585, %v6586
    %v6588 = vsel %vm2815, %v6583, 0.0
    %v6589 = vadd.f32 %v6587, %v6588
    %v6590 = vsel %vm2815, %v6584, 0.0
    %v6591 = vadd.f32 %v6589, %v6590
    %v6592 = vrot.slane %v6591, 4
    %v6593 = vadd.f32 %v6591, %v6592
    %v6594 = vrot.slane %v6593, 2
    %v6595 = vadd.f32 %v6593, %v6594
    %v6596 = vrot.slane %v6595, 1
    %v6597 = vadd.f32 %v6595, %v6596
    %v6599 = vsel %vm2815, %v6597, 0
    %6601 = vmatprep.subr.mxu0 0.0
    %6602 = vmatpush1.msra.mxu0 %v6494
    %6603 = vmatprep.subr.mxu0 0.0
    %6604 = vmatpush1.msra.mxu0 %v6495
    %6605 = vmatprep.subr.mxu0 0.0
    %6606 = vmatpush1.msra.mxu0 %v6496
    %6607 = vmatprep.subr.mxu0 0.0
    %6608 = vmatpush1.msra.mxu0 %v6497
    %6609 = vmatprep.subr.mxu0 0.0
    %6610 = vmatpush1.msra.mxu0 %v6498
    %6611 = vmatprep.subr.mxu0 0.0
    %6612 = vmatpush1.msra.mxu0 %v6499
    %6613 = vmatprep.subr.mxu0 0.0
    %6614 = vmatpush1.msra.mxu0 0.0
    %6615 = vmatprep.subr.mxu0 0.0
    %6616 = vmatpush1.msra.mxu0 0.0
    %6617 = vmatprep.subr.mxu0 0.0
    %6618 = vmatpush1.msra.mxu0 0.0
    %6619 = vmatprep.subr.mxu0 0.0
    %6620 = vmatpush1.msra.mxu0 0.0
    %6621 = vmatprep.subr.mxu0 0.0
    %6622 = vmatpush1.msra.mxu0 0.0
    %6623 = vmatprep.subr.mxu0 0.0
    %6624 = vmatpush1.msra.mxu0 0.0
    %6625 = vmatprep.subr.mxu0 0.0
    %6626 = vmatpush1.msra.mxu0 0.0
    %6627 = vmatprep.subr.mxu0 0.0
    %6628 = vmatpush1.msra.mxu0 0.0
    %6629 = vmatprep.subr.mxu0 0.0
    %6630 = vmatpush1.msra.mxu0 0.0
    %6631 = vmatprep.subr.mxu0 0.0
    %6632 = vmatpush1.msra.mxu0 0.0
    %6633 = vmatprep.subr.mxu0 0.0
    %6634 = vmatpush1.msra.mxu0 0.0
    %6635 = vmatprep.subr.mxu0 0.0
    %6636 = vmatpush1.msra.mxu0 0.0
    %6637 = vmatprep.subr.mxu0 0.0
    %6638 = vmatpush1.msra.mxu0 0.0
    %6639 = vmatprep.subr.mxu0 0.0
    %6640 = vmatpush1.msra.mxu0 0.0
    %6641 = vmatprep.subr.mxu0 0.0
    %6642 = vmatpush1.msra.mxu0 0.0
    %6643 = vmatprep.subr.mxu0 0.0
    %6644 = vmatpush1.msra.mxu0 0.0
    %6645 = vmatprep.subr.mxu0 0.0
    %6646 = vmatpush1.msra.mxu0 0.0
    %6647 = vmatprep.subr.mxu0 0.0
    %6648 = vmatpush1.msra.mxu0 0.0
    %6649 = vmatprep.subr.mxu0 0.0
    %6650 = vmatpush1.msra.mxu0 0.0
    %6651 = vmatprep.subr.mxu0 0.0
    %6652 = vmatpush1.msra.mxu0 0.0
    %6653 = vmatprep.subr.mxu0 0.0
    %6654 = vmatpush1.msra.mxu0 0.0
    %6655 = vmatprep.subr.mxu0 0.0
    %6656 = vmatpush1.msra.mxu0 0.0
    %6657 = vmatprep.subr.mxu0 0.0
    %6658 = vmatpush1.msra.mxu0 0.0
    %6659 = vmatprep.subr.mxu0 0.0
    %6660 = vmatpush1.msra.mxu0 0.0
    %6661 = vmatprep.subr.mxu0 0.0
    %6662 = vmatpush1.msra.mxu0 0.0
    %6663 = vmatprep.subr.mxu0 0.0
    %6664 = vmatpush1.msra.mxu0 0.0
    %6665 = vmatprep.mubr.f32.mxu0 0.0
    %6666 = vmatmul.mubr.f32.gmra.mrb[0].mxu0 %v6599
    %v6667 = vpop.f32.mrb[0].mxu0
    %v6668 = vadd.f32 1e-05, %v6667
    %v6669 = vpop.f32.mrb[0].mxu0
    %6670 = vdwg.mxu0
    %v6671 = vrsqrt.pop %v6668
    %v6672 = vlaneseq
    %v6673 = vshrl.u32 %v6672, 7
    %v6674 = vsub.s32 0, %v6673
    %v6675 = vrot.slane %v6671, %v6674
    %v6676 = vmul.f32 %v6577, %v6675
    %v6677 = vmul.f32 %v6578, %v6675
    %v6678 = vmul.f32 %v6579, %v6675
    %v6679 = vmul.f32 %v6580, %v6675
    %v6680 = vld [vmem:[#allocation56] sm:$0x1]
    %v6682 = vlaneseq
    %v6683 = vshrl.u32 %v6682, 7
    %v6684 = vsub.s32 0, %v6683
    %v6685 = vrot.slane %v6680, %v6684
    %v6687 = vmul.f32 %v6676, %v6685
    %v6688 = vmul.f32 %v6677, %v6685
    %v6689 = vmul.f32 %v6678, %v6685
    %v6690 = vmul.f32 %v6679, %v6685
    %v6691 = vld [vmem:[#allocation58] sm:$0x1]
    %v6693 = vlaneseq
    %v6694 = vshrl.u32 %v6693, 7
    %v6695 = vsub.s32 0, %v6694
    %v6696 = vrot.slane %v6691, %v6695
    %v6698 = vadd.f32 %v6687, %v6696
    %v6699 = vadd.f32 %v6688, %v6696
    %v6700 = vadd.f32 %v6689, %v6696
    %v6701 = vadd.f32 %v6690, %v6696
    %v6702 = vmax.f32 %v6698, 0.0
    %v6703 = vmax.f32 %v6699, 0.0
    %v6704 = vmax.f32 %v6700, 0.0
    %v6705 = vmax.f32 %v6701, 0.0
    %v6706 = vld [vmem:[%s105] sm:$0xff]
    %v6707 = vld [vmem:[%s105 + $0x8] sm:$0xff]
    %v6708 = vld [vmem:[%s105 + $0x10] sm:$0xff]
    %v6709 = vld [vmem:[%s105 + $0x18] sm:$0xff]
    %v6710 = vld [vmem:[%s105 + $0x20] sm:$0xff]
    %v6711 = vld [vmem:[%s105 + $0x28] sm:$0xff]
    %v6712 = vld [vmem:[%s105 + $0x30] sm:$0xff]
    %v6713 = vld [vmem:[%s105 + $0x38] sm:$0xff]
    %vm6714 = vcmask 261120
    %v6716 = vsel %vm6714, %v6706, 0
    %v6719 = vsel %vm6714, %v6707, 0
    %v6722 = vsel %vm6714, %v6708, 0
    %v6725 = vsel %vm6714, %v6709, 0
    %v6728 = vsel %vm6714, %v6710, 0
    %v6731 = vsel %vm6714, %v6711, 0
    %v6734 = vsel %vm6714, %v6712, 0
    %v6737 = vsel %vm6714, %v6713, 0
    %6739 = vmatprep.subr.mxu0 0.0
    %6740 = vmatpush1.msra.mxu0 %v6702
    %6741 = vmatprep.subr.mxu0 0.0
    %6742 = vmatpush1.msra.mxu0 %v6703
    %6743 = vmatprep.subr.mxu0 0.0
    %6744 = vmatpush1.msra.mxu0 %v6704
    %6745 = vmatprep.subr.mxu0 0.0
    %6746 = vmatpush1.msra.mxu0 %v6705
    %6747 = vmatprep.subr.mxu0 0.0
    %6748 = vmatpush1.msra.mxu0 0.0
    %6749 = vmatprep.subr.mxu0 0.0
    %6750 = vmatpush1.msra.mxu0 0.0
    %6751 = vmatprep.subr.mxu0 0.0
    %6752 = vmatpush1.msra.mxu0 0.0
    %6753 = vmatprep.subr.mxu0 0.0
    %6754 = vmatpush1.msra.mxu0 0.0
    %6755 = vmatprep.subr.mxu0 0.0
    %6756 = vmatpush1.msra.mxu0 0.0
    %6757 = vmatprep.subr.mxu0 0.0
    %6758 = vmatpush1.msra.mxu0 0.0
    %6759 = vmatprep.subr.mxu0 0.0
    %6760 = vmatpush1.msra.mxu0 0.0
    %6761 = vmatprep.subr.mxu0 0.0
    %6762 = vmatpush1.msra.mxu0 0.0
    %6763 = vmatprep.subr.mxu0 0.0
    %6764 = vmatpush1.msra.mxu0 0.0
    %6765 = vmatprep.subr.mxu0 0.0
    %6766 = vmatpush1.msra.mxu0 0.0
    %6767 = vmatprep.subr.mxu0 0.0
    %6768 = vmatpush1.msra.mxu0 0.0
    %6769 = vmatprep.subr.mxu0 0.0
    %6770 = vmatpush1.msra.mxu0 0.0
    %6771 = vmatprep.subr.mxu0 0.0
    %6772 = vmatpush1.msra.mxu0 0.0
    %6773 = vmatprep.subr.mxu0 0.0
    %6774 = vmatpush1.msra.mxu0 0.0
    %6775 = vmatprep.subr.mxu0 0.0
    %6776 = vmatpush1.msra.mxu0 0.0
    %6777 = vmatprep.subr.mxu0 0.0
    %6778 = vmatpush1.msra.mxu0 0.0
    %6779 = vmatprep.subr.mxu0 0.0
    %6780 = vmatpush1.msra.mxu0 0.0
    %6781 = vmatprep.subr.mxu0 0.0
    %6782 = vmatpush1.msra.mxu0 0.0
    %6783 = vmatprep.subr.mxu0 0.0
    %6784 = vmatpush1.msra.mxu0 0.0
    %6785 = vmatprep.subr.mxu0 0.0
    %6786 = vmatpush1.msra.mxu0 0.0
    %6787 = vmatprep.subr.mxu0 0.0
    %6788 = vmatpush1.msra.mxu0 0.0
    %6789 = vmatprep.subr.mxu0 0.0
    %6790 = vmatpush1.msra.mxu0 0.0
    %6791 = vmatprep.subr.mxu0 0.0
    %6792 = vmatpush1.msra.mxu0 0.0
    %6793 = vmatprep.subr.mxu0 0.0
    %6794 = vmatpush1.msra.mxu0 0.0
    %6795 = vmatprep.subr.mxu0 0.0
    %6796 = vmatpush1.msra.mxu0 0.0
    %6797 = vmatprep.subr.mxu0 0.0
    %6798 = vmatpush1.msra.mxu0 0.0
    %6799 = vmatprep.subr.mxu0 0.0
    %6800 = vmatpush1.msra.mxu0 0.0
    %6801 = vmatprep.subr.mxu0 0.0
    %6802 = vmatpush1.msra.mxu0 0.0
    %6803 = vmatprep.mubr.f32.mxu0 0.0
    %6804 = vmatmul.mubr.f32.gmra.mrb[0].mxu0 %v6716
    %v6805 = vpop.f32.mrb[0].mxu0
    %v6806 = vadd.f32 0.0, %v6805
    %v6807 = vpop.f32.mrb[0].mxu0
    %6808 = vmatprep.mubr.f32.mxu0 0.0
    %6809 = vmatmul.mubr.f32.gmra.mrb[0].mxu0 %v6719
    %v6810 = vpop.f32.mrb[0].mxu0
    %v6811 = vadd.f32 0.0, %v6810
    %v6812 = vpop.f32.mrb[0].mxu0
    %6813 = vmatprep.mubr.f32.mxu0 0.0
    %6814 = vmatmul.mubr.f32.gmra.mrb[0].mxu0 %v6722
    %v6815 = vpop.f32.mrb[0].mxu0
    %v6816 = vadd.f32 0.0, %v6815
    %v6817 = vpop.f32.mrb[0].mxu0
    %6818 = vmatprep.mubr.f32.mxu0 0.0
    %6819 = vmatmul.mubr.f32.gmra.mrb[0].mxu0 %v6725
    %v6820 = vpop.f32.mrb[0].mxu0
    %v6821 = vadd.f32 0.0, %v6820
    %v6822 = vpop.f32.mrb[0].mxu0
    %6823 = vmatprep.mubr.f32.mxu0 0.0
    %6824 = vmatmul.mubr.f32.gmra.mrb[0].mxu0 %v6728
    %v6825 = vpop.f32.mrb[0].mxu0
    %v6826 = vadd.f32 0.0, %v6825
    %v6827 = vpop.f32.mrb[0].mxu0
    %6828 = vmatprep.mubr.f32.mxu0 0.0
    %6829 = vmatmul.mubr.f32.gmra.mrb[0].mxu0 %v6731
    %v6830 = vpop.f32.mrb[0].mxu0
    %v6831 = vadd.f32 0.0, %v6830
    %v6832 = vpop.f32.mrb[0].mxu0
    %6833 = vmatprep.mubr.f32.mxu0 0.0
    %6834 = vmatmul.mubr.f32.gmra.mrb[0].mxu0 %v6734
    %v6835 = vpop.f32.mrb[0].mxu0
    %v6836 = vadd.f32 0.0, %v6835
    %v6837 = vpop.f32.mrb[0].mxu0
    %6838 = vmatprep.mubr.f32.mxu0 0.0
    %6839 = vmatmul.mubr.f32.gmra.mrb[0].mxu0 %v6737
    %v6840 = vpop.f32.mrb[0].mxu0
    %v6841 = vadd.f32 0.0, %v6840
    %v6842 = vpop.f32.mrb[0].mxu0
    %6843 = vdwg.mxu0
    %v6844 = vld [vmem:[%s107] sm:$0xff]
    %v6845 = vld [vmem:[%s107 + $0x8] sm:$0xff]
    %v6846 = vld [vmem:[%s107 + $0x10] sm:$0xff]
    %v6847 = vld [vmem:[%s107 + $0x18] sm:$0xff]
    %v6848 = vld [vmem:[%s107 + $0x20] sm:$0xff]
    %v6849 = vld [vmem:[%s107 + $0x28] sm:$0xff]
    %s6850 = scalar_lea.vmem %s105, 64
    %v6851 = vld [vmem:[%s6850] sm:$0xff]
    %v6852 = vld [vmem:[%s6850 + $0x8] sm:$0xff]
    %v6853 = vld [vmem:[%s6850 + $0x10] sm:$0xff]
    %v6854 = vld [vmem:[%s6850 + $0x18] sm:$0xff]
    %v6855 = vld [vmem:[%s6850 + $0x20] sm:$0xff]
    %v6856 = vld [vmem:[%s6850 + $0x28] sm:$0xff]
    %v6857 = vld [vmem:[%s6850 + $0x30] sm:$0xff]
    %v6858 = vld [vmem:[%s6850 + $0x38] sm:$0xff]
    %v6860 = vsel %vm6714, %v6851, 0
    %v6863 = vsel %vm6714, %v6852, 0
    %v6866 = vsel %vm6714, %v6853, 0
    %v6869 = vsel %vm6714, %v6854, 0
    %v6872 = vsel %vm6714, %v6855, 0
    %v6875 = vsel %vm6714, %v6856, 0
    %v6878 = vsel %vm6714, %v6857, 0
    %v6881 = vsel %vm6714, %v6858, 0
    %6883 = vmatprep.subr.mxu0 0.0
    %6884 = vmatpush1.msra.mxu0 %v6702
    %6885 = vmatprep.subr.mxu0 0.0
    %6886 = vmatpush1.msra.mxu0 %v6703
    %6887 = vmatprep.subr.mxu0 0.0
    %6888 = vmatpush1.msra.mxu0 %v6704
    %6889 = vmatprep.subr.mxu0 0.0
    %6890 = vmatpush1.msra.mxu0 %v6705
    %6891 = vmatprep.subr.mxu0 0.0
    %6892 = vmatpush1.msra.mxu0 0.0
    %6893 = vmatprep.subr.mxu0 0.0
    %6894 = vmatpush1.msra.mxu0 0.0
    %6895 = vmatprep.subr.mxu0 0.0
    %6896 = vmatpush1.msra.mxu0 0.0
    %6897 = vmatprep.subr.mxu0 0.0
    %6898 = vmatpush1.msra.mxu0 0.0
    %6899 = vmatprep.subr.mxu0 0.0
    %6900 = vmatpush1.msra.mxu0 0.0
    %6901 = vmatprep.subr.mxu0 0.0
    %6902 = vmatpush1.msra.mxu0 0.0
    %6903 = vmatprep.subr.mxu0 0.0
    %6904 = vmatpush1.msra.mxu0 0.0
    %6905 = vmatprep.subr.mxu0 0.0
    %6906 = vmatpush1.msra.mxu0 0.0
    %6907 = vmatprep.subr.mxu0 0.0
    %6908 = vmatpush1.msra.mxu0 0.0
    %6909 = vmatprep.subr.mxu0 0.0
    %6910 = vmatpush1.msra.mxu0 0.0
    %6911 = vmatprep.subr.mxu0 0.0
    %6912 = vmatpush1.msra.mxu0 0.0
    %6913 = vmatprep.subr.mxu0 0.0
    %6914 = vmatpush1.msra.mxu0 0.0
    %6915 = vmatprep.subr.mxu0 0.0
    %6916 = vmatpush1.msra.mxu0 0.0
    %6917 = vmatprep.subr.mxu0 0.0
    %6918 = vmatpush1.msra.mxu0 0.0
    %6919 = vmatprep.subr.mxu0 0.0
    %6920 = vmatpush1.msra.mxu0 0.0
    %6921 = vmatprep.subr.mxu0 0.0
    %6922 = vmatpush1.msra.mxu0 0.0
    %6923 = vmatprep.subr.mxu0 0.0
    %6924 = vmatpush1.msra.mxu0 0.0
    %6925 = vmatprep.subr.mxu0 0.0
    %6926 = vmatpush1.msra.mxu0 0.0
    %6927 = vmatprep.subr.mxu0 0.0
    %6928 = vmatpush1.msra.mxu0 0.0
    %6929 = vmatprep.subr.mxu0 0.0
    %6930 = vmatpush1.msra.mxu0 0.0
    %6931 = vmatprep.subr.mxu0 0.0
    %6932 = vmatpush1.msra.mxu0 0.0
    %6933 = vmatprep.subr.mxu0 0.0
    %6934 = vmatpush1.msra.mxu0 0.0
    %6935 = vmatprep.subr.mxu0 0.0
    %6936 = vmatpush1.msra.mxu0 0.0
    %6937 = vmatprep.subr.mxu0 0.0
    %6938 = vmatpush1.msra.mxu0 0.0
    %6939 = vmatprep.subr.mxu0 0.0
    %6940 = vmatpush1.msra.mxu0 0.0
    %6941 = vmatprep.subr.mxu0 0.0
    %6942 = vmatpush1.msra.mxu0 0.0
    %6943 = vmatprep.subr.mxu0 0.0
    %6944 = vmatpush1.msra.mxu0 0.0
    %6945 = vmatprep.subr.mxu0 0.0
    %6946 = vmatpush1.msra.mxu0 0.0
    %6947 = vmatprep.mubr.f32.mxu0 0.0
    %6948 = vmatmul.mubr.f32.gmra.mrb[0].mxu0 %v6860
    %v6949 = vpop.f32.mrb[0].mxu0
    %v6950 = vadd.f32 0.0, %v6949
    %v6951 = vpop.f32.mrb[0].mxu0
    %6952 = vmatprep.mubr.f32.mxu0 0.0
    %6953 = vmatmul.mubr.f32.gmra.mrb[0].mxu0 %v6863
    %v6954 = vpop.f32.mrb[0].mxu0
    %v6955 = vadd.f32 0.0, %v6954
    %v6956 = vpop.f32.mrb[0].mxu0
    %6957 = vmatprep.mubr.f32.mxu0 0.0
    %6958 = vmatmul.mubr.f32.gmra.mrb[0].mxu0 %v6866
    %v6959 = vpop.f32.mrb[0].mxu0
    %v6960 = vadd.f32 0.0, %v6959
    %v6961 = vpop.f32.mrb[0].mxu0
    %6962 = vmatprep.mubr.f32.mxu0 0.0
    %6963 = vmatmul.mubr.f32.gmra.mrb[0].mxu0 %v6869
    %v6964 = vpop.f32.mrb[0].mxu0
    %v6965 = vadd.f32 0.0, %v6964
    %v6966 = vpop.f32.mrb[0].mxu0
    %6967 = vmatprep.mubr.f32.mxu0 0.0
    %6968 = vmatmul.mubr.f32.gmra.mrb[0].mxu0 %v6872
    %v6969 = vpop.f32.mrb[0].mxu0
    %v6970 = vadd.f32 0.0, %v6969
    %v6971 = vpop.f32.mrb[0].mxu0
    %6972 = vmatprep.mubr.f32.mxu0 0.0
    %6973 = vmatmul.mubr.f32.gmra.mrb[0].mxu0 %v6875
    %v6974 = vpop.f32.mrb[0].mxu0
    %v6975 = vadd.f32 0.0, %v6974
    %v6976 = vpop.f32.mrb[0].mxu0
    %6977 = vmatprep.mubr.f32.mxu0 0.0
    %6978 = vmatmul.mubr.f32.gmra.mrb[0].mxu0 %v6878
    %v6979 = vpop.f32.mrb[0].mxu0
    %v6980 = vadd.f32 0.0, %v6979
    %v6981 = vpop.f32.mrb[0].mxu0
    %6982 = vmatprep.mubr.f32.mxu0 0.0
    %6983 = vmatmul.mubr.f32.gmra.mrb[0].mxu0 %v6881
    %v6984 = vpop.f32.mrb[0].mxu0
    %v6985 = vadd.f32 0.0, %v6984
    %v6986 = vpop.f32.mrb[0].mxu0
    %6987 = vdwg.mxu0
    %s6988 = scalar_lea.vmem %s107, 48
    %v6989 = vld [vmem:[%s6988] sm:$0xff]
    %v6990 = vld [vmem:[%s6988 + $0x8] sm:$0xff]
    %v6991 = vld [vmem:[%s6988 + $0x10] sm:$0xff]
    %v6992 = vld [vmem:[%s6988 + $0x18] sm:$0xff]
    %v6993 = vld [vmem:[%s6988 + $0x20] sm:$0xff]
    %v6994 = vld [vmem:[%s6988 + $0x28] sm:$0xff]
    %v6996 = vsel %vm2815, %v6950, 0
    %v6999 = vsel %vm2815, %v6955, 0
    %v7002 = vsel %vm2815, %v6960, 0
    %v7005 = vsel %vm2815, %v6965, 0
    %v7008 = vsel %vm2815, %v6970, 0
    %v7011 = vsel %vm2815, %v6975, 0
    %v7014 = vsel %vm2815, %v6980, 0
    %v7017 = vsel %vm2815, %v6985, 0
    %7019 = vmatprep.subr.mxu0 0.0
    %7020 = vmatpush1.msra.mxu0 %v6989
    %7021 = vmatprep.subr.mxu0 0.0
    %7022 = vmatpush1.msra.mxu0 %v6990
    %7023 = vmatprep.subr.mxu0 0.0
    %7024 = vmatpush1.msra.mxu0 %v6991
    %7025 = vmatprep.subr.mxu0 0.0
    %7026 = vmatpush1.msra.mxu0 %v6992
    %7027 = vmatprep.subr.mxu0 0.0
    %7028 = vmatpush1.msra.mxu0 %v6993
    %7029 = vmatprep.subr.mxu0 0.0
    %7030 = vmatpush1.msra.mxu0 %v6994
    %7031 = vmatprep.subr.mxu0 0.0
    %7032 = vmatpush1.msra.mxu0 0.0
    %7033 = vmatprep.subr.mxu0 0.0
    %7034 = vmatpush1.msra.mxu0 0.0
    %7035 = vmatprep.subr.mxu0 0.0
    %7036 = vmatpush1.msra.mxu0 0.0
    %7037 = vmatprep.subr.mxu0 0.0
    %7038 = vmatpush1.msra.mxu0 0.0
    %7039 = vmatprep.subr.mxu0 0.0
    %7040 = vmatpush1.msra.mxu0 0.0
    %7041 = vmatprep.subr.mxu0 0.0
    %7042 = vmatpush1.msra.mxu0 0.0
    %7043 = vmatprep.subr.mxu0 0.0
    %7044 = vmatpush1.msra.mxu0 0.0
    %7045 = vmatprep.subr.mxu0 0.0
    %7046 = vmatpush1.msra.mxu0 0.0
    %7047 = vmatprep.subr.mxu0 0.0
    %7048 = vmatpush1.msra.mxu0 0.0
    %7049 = vmatprep.subr.mxu0 0.0
    %7050 = vmatpush1.msra.mxu0 0.0
    %7051 = vmatprep.subr.mxu0 0.0
    %7052 = vmatpush1.msra.mxu0 0.0
    %7053 = vmatprep.subr.mxu0 0.0
    %7054 = vmatpush1.msra.mxu0 0.0
    %7055 = vmatprep.subr.mxu0 0.0
    %7056 = vmatpush1.msra.mxu0 0.0
    %7057 = vmatprep.subr.mxu0 0.0
    %7058 = vmatpush1.msra.mxu0 0.0
    %7059 = vmatprep.subr.mxu0 0.0
    %7060 = vmatpush1.msra.mxu0 0.0
    %7061 = vmatprep.subr.mxu0 0.0
    %7062 = vmatpush1.msra.mxu0 0.0
    %7063 = vmatprep.subr.mxu0 0.0
    %7064 = vmatpush1.msra.mxu0 0.0
    %7065 = vmatprep.subr.mxu0 0.0
    %7066 = vmatpush1.msra.mxu0 0.0
    %7067 = vmatprep.subr.mxu0 0.0
    %7068 = vmatpush1.msra.mxu0 0.0
    %7069 = vmatprep.subr.mxu0 0.0
    %7070 = vmatpush1.msra.mxu0 0.0
    %7071 = vmatprep.subr.mxu0 0.0
    %7072 = vmatpush1.msra.mxu0 0.0
    %7073 = vmatprep.subr.mxu0 0.0
    %7074 = vmatpush1.msra.mxu0 0.0
    %7075 = vmatprep.subr.mxu0 0.0
    %7076 = vmatpush1.msra.mxu0 0.0
    %7077 = vmatprep.subr.mxu0 0.0
    %7078 = vmatpush1.msra.mxu0 0.0
    %7079 = vmatprep.subr.mxu0 0.0
    %7080 = vmatpush1.msra.mxu0 0.0
    %7081 = vmatprep.subr.mxu0 0.0
    %7082 = vmatpush1.msra.mxu0 0.0
    %7083 = vmatprep.mubr.f32.mxu0 0.0
    %7084 = vmatmul.mubr.f32.gmra.mrb[0].mxu0 %v6996
    %v7085 = vpop.f32.mrb[0].mxu0
    %v7086 = vadd.f32 0.0, %v7085
    %v7087 = vpop.f32.mrb[0].mxu0
    %7088 = vmatprep.mubr.f32.mxu0 0.0
    %7089 = vmatmul.mubr.f32.gmra.mrb[0].mxu0 %v6999
    %v7090 = vpop.f32.mrb[0].mxu0
    %v7091 = vadd.f32 0.0, %v7090
    %v7092 = vpop.f32.mrb[0].mxu0
    %7093 = vmatprep.mubr.f32.mxu0 0.0
    %7094 = vmatmul.mubr.f32.gmra.mrb[0].mxu0 %v7002
    %v7095 = vpop.f32.mrb[0].mxu0
    %v7096 = vadd.f32 0.0, %v7095
    %v7097 = vpop.f32.mrb[0].mxu0
    %7098 = vmatprep.mubr.f32.mxu0 0.0
    %7099 = vmatmul.mubr.f32.gmra.mrb[0].mxu0 %v7005
    %v7100 = vpop.f32.mrb[0].mxu0
    %v7101 = vadd.f32 0.0, %v7100
    %v7102 = vpop.f32.mrb[0].mxu0
    %7103 = vmatprep.mubr.f32.mxu0 0.0
    %7104 = vmatmul.mubr.f32.gmra.mrb[0].mxu0 %v7008
    %v7105 = vpop.f32.mrb[0].mxu0
    %v7106 = vadd.f32 0.0, %v7105
    %v7107 = vpop.f32.mrb[0].mxu0
    %7108 = vmatprep.mubr.f32.mxu0 0.0
    %7109 = vmatmul.mubr.f32.gmra.mrb[0].mxu0 %v7011
    %v7110 = vpop.f32.mrb[0].mxu0
    %v7111 = vadd.f32 0.0, %v7110
    %v7112 = vpop.f32.mrb[0].mxu0
    %7113 = vmatprep.mubr.f32.mxu0 0.0
    %7114 = vmatmul.mubr.f32.gmra.mrb[0].mxu0 %v7014
    %v7115 = vpop.f32.mrb[0].mxu0
    %v7116 = vadd.f32 0.0, %v7115
    %v7117 = vpop.f32.mrb[0].mxu0
    %7118 = vmatprep.mubr.f32.mxu0 0.0
    %7119 = vmatmul.mubr.f32.gmra.mrb[0].mxu0 %v7017
    %v7120 = vpop.f32.mrb[0].mxu0
    %v7121 = vadd.f32 0.0, %v7120
    %v7122 = vpop.f32.mrb[0].mxu0
    %7123 = vdwg.mxu0
    %v7125 = vsel %vm2815, %v6806, 0
    %v7128 = vsel %vm2815, %v6811, 0
    %v7131 = vsel %vm2815, %v6816, 0
    %v7134 = vsel %vm2815, %v6821, 0
    %v7137 = vsel %vm2815, %v6826, 0
    %v7140 = vsel %vm2815, %v6831, 0
    %v7143 = vsel %vm2815, %v6836, 0
    %v7146 = vsel %vm2815, %v6841, 0
    %7148 = vmatprep.subr.mxu0 0.0
    %7149 = vmatpush1.msra.mxu0 %v6844
    %7150 = vmatprep.subr.mxu0 0.0
    %7151 = vmatpush1.msra.mxu0 %v6845
    %7152 = vmatprep.subr.mxu0 0.0
    %7153 = vmatpush1.msra.mxu0 %v6846
    %7154 = vmatprep.subr.mxu0 0.0
    %7155 = vmatpush1.msra.mxu0 %v6847
    %7156 = vmatprep.subr.mxu0 0.0
    %7157 = vmatpush1.msra.mxu0 %v6848
    %7158 = vmatprep.subr.mxu0 0.0
    %7159 = vmatpush1.msra.mxu0 %v6849
    %7160 = vmatprep.subr.mxu0 0.0
    %7161 = vmatpush1.msra.mxu0 0.0
    %7162 = vmatprep.subr.mxu0 0.0
    %7163 = vmatpush1.msra.mxu0 0.0
    %7164 = vmatprep.subr.mxu0 0.0
    %7165 = vmatpush1.msra.mxu0 0.0
    %7166 = vmatprep.subr.mxu0 0.0
    %7167 = vmatpush1.msra.mxu0 0.0
    %7168 = vmatprep.subr.mxu0 0.0
    %7169 = vmatpush1.msra.mxu0 0.0
    %7170 = vmatprep.subr.mxu0 0.0
    %7171 = vmatpush1.msra.mxu0 0.0
    %7172 = vmatprep.subr.mxu0 0.0
    %7173 = vmatpush1.msra.mxu0 0.0
    %7174 = vmatprep.subr.mxu0 0.0
    %7175 = vmatpush1.msra.mxu0 0.0
    %7176 = vmatprep.subr.mxu0 0.0
    %7177 = vmatpush1.msra.mxu0 0.0
    %7178 = vmatprep.subr.mxu0 0.0
    %7179 = vmatpush1.msra.mxu0 0.0
    %7180 = vmatprep.subr.mxu0 0.0
    %7181 = vmatpush1.msra.mxu0 0.0
    %7182 = vmatprep.subr.mxu0 0.0
    %7183 = vmatpush1.msra.mxu0 0.0
    %7184 = vmatprep.subr.mxu0 0.0
    %7185 = vmatpush1.msra.mxu0 0.0
    %7186 = vmatprep.subr.mxu0 0.0
    %7187 = vmatpush1.msra.mxu0 0.0
    %7188 = vmatprep.subr.mxu0 0.0
    %7189 = vmatpush1.msra.mxu0 0.0
    %7190 = vmatprep.subr.mxu0 0.0
    %7191 = vmatpush1.msra.mxu0 0.0
    %7192 = vmatprep.subr.mxu0 0.0
    %7193 = vmatpush1.msra.mxu0 0.0
    %7194 = vmatprep.subr.mxu0 0.0
    %7195 = vmatpush1.msra.mxu0 0.0
    %7196 = vmatprep.subr.mxu0 0.0
    %7197 = vmatpush1.msra.mxu0 0.0
    %7198 = vmatprep.subr.mxu0 0.0
    %7199 = vmatpush1.msra.mxu0 0.0
    %7200 = vmatprep.subr.mxu0 0.0
    %7201 = vmatpush1.msra.mxu0 0.0
    %7202 = vmatprep.subr.mxu0 0.0
    %7203 = vmatpush1.msra.mxu0 0.0
    %7204 = vmatprep.subr.mxu0 0.0
    %7205 = vmatpush1.msra.mxu0 0.0
    %7206 = vmatprep.subr.mxu0 0.0
    %7207 = vmatpush1.msra.mxu0 0.0
    %7208 = vmatprep.subr.mxu0 0.0
    %7209 = vmatpush1.msra.mxu0 0.0
    %7210 = vmatprep.subr.mxu0 0.0
    %7211 = vmatpush1.msra.mxu0 0.0
    %7212 = vmatprep.mubr.f32.mxu0 0.0
    %7213 = vmatmul.mubr.f32.gmra.mrb[0].mxu0 %v7125
    %v7214 = vpop.f32.mrb[0].mxu0
    %v7215 = vadd.f32 %v7086, %v7214
    %v7216 = vpop.f32.mrb[0].mxu0
    %7217 = vmatprep.mubr.f32.mxu0 0.0
    %7218 = vmatmul.mubr.f32.gmra.mrb[0].mxu0 %v7128
    %v7219 = vpop.f32.mrb[0].mxu0
    %v7220 = vadd.f32 %v7091, %v7219
    %v7221 = vpop.f32.mrb[0].mxu0
    %7222 = vmatprep.mubr.f32.mxu0 0.0
    %7223 = vmatmul.mubr.f32.gmra.mrb[0].mxu0 %v7131
    %v7224 = vpop.f32.mrb[0].mxu0
    %v7225 = vadd.f32 %v7096, %v7224
    %v7226 = vpop.f32.mrb[0].mxu0
    %7227 = vmatprep.mubr.f32.mxu0 0.0
    %7228 = vmatmul.mubr.f32.gmra.mrb[0].mxu0 %v7134
    %v7229 = vpop.f32.mrb[0].mxu0
    %v7230 = vadd.f32 %v7101, %v7229
    %v7231 = vpop.f32.mrb[0].mxu0
    %7232 = vmatprep.mubr.f32.mxu0 0.0
    %7233 = vmatmul.mubr.f32.gmra.mrb[0].mxu0 %v7137
    %v7234 = vpop.f32.mrb[0].mxu0
    %v7235 = vadd.f32 %v7106, %v7234
    %v7236 = vpop.f32.mrb[0].mxu0
    %7237 = vmatprep.mubr.f32.mxu0 0.0
    %7238 = vmatmul.mubr.f32.gmra.mrb[0].mxu0 %v7140
    %v7239 = vpop.f32.mrb[0].mxu0
    %v7240 = vadd.f32 %v7111, %v7239
    %v7241 = vpop.f32.mrb[0].mxu0
    %7242 = vmatprep.mubr.f32.mxu0 0.0
    %7243 = vmatmul.mubr.f32.gmra.mrb[0].mxu0 %v7143
    %v7244 = vpop.f32.mrb[0].mxu0
    %v7245 = vadd.f32 %v7116, %v7244
    %v7246 = vpop.f32.mrb[0].mxu0
    %7247 = vmatprep.mubr.f32.mxu0 0.0
    %7248 = vmatmul.mubr.f32.gmra.mrb[0].mxu0 %v7146
    %v7249 = vpop.f32.mrb[0].mxu0
    %v7250 = vadd.f32 %v7121, %v7249
    %v7251 = vpop.f32.mrb[0].mxu0
    %7252 = vdwg.mxu0
    %s7253 = scalar_lea.vmem %s105, 128
    %v7254 = vld [vmem:[%s7253] sm:$0xff]
    %v7255 = vld [vmem:[%s7253 + $0x8] sm:$0xff]
    %v7256 = vld [vmem:[%s7253 + $0x10] sm:$0xff]
    %v7257 = vld [vmem:[%s7253 + $0x18] sm:$0xff]
    %v7258 = vld [vmem:[%s7253 + $0x20] sm:$0xff]
    %v7259 = vld [vmem:[%s7253 + $0x28] sm:$0xff]
    %v7260 = vld [vmem:[%s7253 + $0x30] sm:$0xff]
    %v7261 = vld [vmem:[%s7253 + $0x38] sm:$0xff]
    %v7263 = vsel %vm6714, %v7254, 0
    %v7266 = vsel %vm6714, %v7255, 0
    %v7269 = vsel %vm6714, %v7256, 0
    %v7272 = vsel %vm6714, %v7257, 0
    %v7275 = vsel %vm6714, %v7258, 0
    %v7278 = vsel %vm6714, %v7259, 0
    %v7281 = vsel %vm6714, %v7260, 0
    %v7284 = vsel %vm6714, %v7261, 0
    %7286 = vmatprep.subr.mxu0 0.0
    %7287 = vmatpush1.msra.mxu0 %v6702
    %7288 = vmatprep.subr.mxu0 0.0
    %7289 = vmatpush1.msra.mxu0 %v6703
    %7290 = vmatprep.subr.mxu0 0.0
    %7291 = vmatpush1.msra.mxu0 %v6704
    %7292 = vmatprep.subr.mxu0 0.0
    %7293 = vmatpush1.msra.mxu0 %v6705
    %7294 = vmatprep.subr.mxu0 0.0
    %7295 = vmatpush1.msra.mxu0 0.0
    %7296 = vmatprep.subr.mxu0 0.0
    %7297 = vmatpush1.msra.mxu0 0.0
    %7298 = vmatprep.subr.mxu0 0.0
    %7299 = vmatpush1.msra.mxu0 0.0
    %7300 = vmatprep.subr.mxu0 0.0
    %7301 = vmatpush1.msra.mxu0 0.0
    %7302 = vmatprep.subr.mxu0 0.0
    %7303 = vmatpush1.msra.mxu0 0.0
    %7304 = vmatprep.subr.mxu0 0.0
    %7305 = vmatpush1.msra.mxu0 0.0
    %7306 = vmatprep.subr.mxu0 0.0
    %7307 = vmatpush1.msra.mxu0 0.0
    %7308 = vmatprep.subr.mxu0 0.0
    %7309 = vmatpush1.msra.mxu0 0.0
    %7310 = vmatprep.subr.mxu0 0.0
    %7311 = vmatpush1.msra.mxu0 0.0
    %7312 = vmatprep.subr.mxu0 0.0
    %7313 = vmatpush1.msra.mxu0 0.0
    %7314 = vmatprep.subr.mxu0 0.0
    %7315 = vmatpush1.msra.mxu0 0.0
    %7316 = vmatprep.subr.mxu0 0.0
    %7317 = vmatpush1.msra.mxu0 0.0
    %7318 = vmatprep.subr.mxu0 0.0
    %7319 = vmatpush1.msra.mxu0 0.0
    %7320 = vmatprep.subr.mxu0 0.0
    %7321 = vmatpush1.msra.mxu0 0.0
    %7322 = vmatprep.subr.mxu0 0.0
    %7323 = vmatpush1.msra.mxu0 0.0
    %7324 = vmatprep.subr.mxu0 0.0
    %7325 = vmatpush1.msra.mxu0 0.0
    %7326 = vmatprep.subr.mxu0 0.0
    %7327 = vmatpush1.msra.mxu0 0.0
    %7328 = vmatprep.subr.mxu0 0.0
    %7329 = vmatpush1.msra.mxu0 0.0
    %7330 = vmatprep.subr.mxu0 0.0
    %7331 = vmatpush1.msra.mxu0 0.0
    %7332 = vmatprep.subr.mxu0 0.0
    %7333 = vmatpush1.msra.mxu0 0.0
    %7334 = vmatprep.subr.mxu0 0.0
    %7335 = vmatpush1.msra.mxu0 0.0
    %7336 = vmatprep.subr.mxu0 0.0
    %7337 = vmatpush1.msra.mxu0 0.0
    %7338 = vmatprep.subr.mxu0 0.0
    %7339 = vmatpush1.msra.mxu0 0.0
    %7340 = vmatprep.subr.mxu0 0.0
    %7341 = vmatpush1.msra.mxu0 0.0
    %7342 = vmatprep.subr.mxu0 0.0
    %7343 = vmatpush1.msra.mxu0 0.0
    %7344 = vmatprep.subr.mxu0 0.0
    %7345 = vmatpush1.msra.mxu0 0.0
    %7346 = vmatprep.subr.mxu0 0.0
    %7347 = vmatpush1.msra.mxu0 0.0
    %7348 = vmatprep.subr.mxu0 0.0
    %7349 = vmatpush1.msra.mxu0 0.0
    %7350 = vmatprep.mubr.f32.mxu0 0.0
    %7351 = vmatmul.mubr.f32.gmra.mrb[0].mxu0 %v7263
    %v7352 = vpop.f32.mrb[0].mxu0
    %v7353 = vadd.f32 0.0, %v7352
    %v7354 = vpop.f32.mrb[0].mxu0
    %7355 = vmatprep.mubr.f32.mxu0 0.0
    %7356 = vmatmul.mubr.f32.gmra.mrb[0].mxu0 %v7266
    %v7357 = vpop.f32.mrb[0].mxu0
    %v7358 = vadd.f32 0.0, %v7357
    %v7359 = vpop.f32.mrb[0].mxu0
    %7360 = vmatprep.mubr.f32.mxu0 0.0
    %7361 = vmatmul.mubr.f32.gmra.mrb[0].mxu0 %v7269
    %v7362 = vpop.f32.mrb[0].mxu0
    %v7363 = vadd.f32 0.0, %v7362
    %v7364 = vpop.f32.mrb[0].mxu0
    %7365 = vmatprep.mubr.f32.mxu0 0.0
    %7366 = vmatmul.mubr.f32.gmra.mrb[0].mxu0 %v7272
    %v7367 = vpop.f32.mrb[0].mxu0
    %v7368 = vadd.f32 0.0, %v7367
    %v7369 = vpop.f32.mrb[0].mxu0
    %7370 = vmatprep.mubr.f32.mxu0 0.0
    %7371 = vmatmul.mubr.f32.gmra.mrb[0].mxu0 %v7275
    %v7372 = vpop.f32.mrb[0].mxu0
    %v7373 = vadd.f32 0.0, %v7372
    %v7374 = vpop.f32.mrb[0].mxu0
    %7375 = vmatprep.mubr.f32.mxu0 0.0
    %7376 = vmatmul.mubr.f32.gmra.mrb[0].mxu0 %v7278
    %v7377 = vpop.f32.mrb[0].mxu0
    %v7378 = vadd.f32 0.0, %v7377
    %v7379 = vpop.f32.mrb[0].mxu0
    %7380 = vmatprep.mubr.f32.mxu0 0.0
    %7381 = vmatmul.mubr.f32.gmra.mrb[0].mxu0 %v7281
    %v7382 = vpop.f32.mrb[0].mxu0
    %v7383 = vadd.f32 0.0, %v7382
    %v7384 = vpop.f32.mrb[0].mxu0
    %7385 = vmatprep.mubr.f32.mxu0 0.0
    %7386 = vmatmul.mubr.f32.gmra.mrb[0].mxu0 %v7284
    %v7387 = vpop.f32.mrb[0].mxu0
    %v7388 = vadd.f32 0.0, %v7387
    %v7389 = vpop.f32.mrb[0].mxu0
    %7390 = vdwg.mxu0
    %s7391 = scalar_lea.vmem %s107, 96
    %v7392 = vld [vmem:[%s7391] sm:$0xff]
    %v7393 = vld [vmem:[%s7391 + $0x8] sm:$0xff]
    %v7394 = vld [vmem:[%s7391 + $0x10] sm:$0xff]
    %v7395 = vld [vmem:[%s7391 + $0x18] sm:$0xff]
    %v7396 = vld [vmem:[%s7391 + $0x20] sm:$0xff]
    %v7397 = vld [vmem:[%s7391 + $0x28] sm:$0xff]
    %v7399 = vsel %vm2815, %v7353, 0
    %v7402 = vsel %vm2815, %v7358, 0
    %v7405 = vsel %vm2815, %v7363, 0
    %v7408 = vsel %vm2815, %v7368, 0
    %v7411 = vsel %vm2815, %v7373, 0
    %v7414 = vsel %vm2815, %v7378, 0
    %v7417 = vsel %vm2815, %v7383, 0
    %v7420 = vsel %vm2815, %v7388, 0
    %7422 = vmatprep.subr.mxu0 0.0
    %7423 = vmatpush1.msra.mxu0 %v7392
    %7424 = vmatprep.subr.mxu0 0.0
    %7425 = vmatpush1.msra.mxu0 %v7393
    %7426 = vmatprep.subr.mxu0 0.0
    %7427 = vmatpush1.msra.mxu0 %v7394
    %7428 = vmatprep.subr.mxu0 0.0
    %7429 = vmatpush1.msra.mxu0 %v7395
    %7430 = vmatprep.subr.mxu0 0.0
    %7431 = vmatpush1.msra.mxu0 %v7396
    %7432 = vmatprep.subr.mxu0 0.0
    %7433 = vmatpush1.msra.mxu0 %v7397
    %7434 = vmatprep.subr.mxu0 0.0
    %7435 = vmatpush1.msra.mxu0 0.0
    %7436 = vmatprep.subr.mxu0 0.0
    %7437 = vmatpush1.msra.mxu0 0.0
    %7438 = vmatprep.subr.mxu0 0.0
    %7439 = vmatpush1.msra.mxu0 0.0
    %7440 = vmatprep.subr.mxu0 0.0
    %7441 = vmatpush1.msra.mxu0 0.0
    %7442 = vmatprep.subr.mxu0 0.0
    %7443 = vmatpush1.msra.mxu0 0.0
    %7444 = vmatprep.subr.mxu0 0.0
    %7445 = vmatpush1.msra.mxu0 0.0
    %7446 = vmatprep.subr.mxu0 0.0
    %7447 = vmatpush1.msra.mxu0 0.0
    %7448 = vmatprep.subr.mxu0 0.0
    %7449 = vmatpush1.msra.mxu0 0.0
    %7450 = vmatprep.subr.mxu0 0.0
    %7451 = vmatpush1.msra.mxu0 0.0
    %7452 = vmatprep.subr.mxu0 0.0
    %7453 = vmatpush1.msra.mxu0 0.0
    %7454 = vmatprep.subr.mxu0 0.0
    %7455 = vmatpush1.msra.mxu0 0.0
    %7456 = vmatprep.subr.mxu0 0.0
    %7457 = vmatpush1.msra.mxu0 0.0
    %7458 = vmatprep.subr.mxu0 0.0
    %7459 = vmatpush1.msra.mxu0 0.0
    %7460 = vmatprep.subr.mxu0 0.0
    %7461 = vmatpush1.msra.mxu0 0.0
    %7462 = vmatprep.subr.mxu0 0.0
    %7463 = vmatpush1.msra.mxu0 0.0
    %7464 = vmatprep.subr.mxu0 0.0
    %7465 = vmatpush1.msra.mxu0 0.0
    %7466 = vmatprep.subr.mxu0 0.0
    %7467 = vmatpush1.msra.mxu0 0.0
    %7468 = vmatprep.subr.mxu0 0.0
    %7469 = vmatpush1.msra.mxu0 0.0
    %7470 = vmatprep.subr.mxu0 0.0
    %7471 = vmatpush1.msra.mxu0 0.0
    %7472 = vmatprep.subr.mxu0 0.0
    %7473 = vmatpush1.msra.mxu0 0.0
    %7474 = vmatprep.subr.mxu0 0.0
    %7475 = vmatpush1.msra.mxu0 0.0
    %7476 = vmatprep.subr.mxu0 0.0
    %7477 = vmatpush1.msra.mxu0 0.0
    %7478 = vmatprep.subr.mxu0 0.0
    %7479 = vmatpush1.msra.mxu0 0.0
    %7480 = vmatprep.subr.mxu0 0.0
    %7481 = vmatpush1.msra.mxu0 0.0
    %7482 = vmatprep.subr.mxu0 0.0
    %7483 = vmatpush1.msra.mxu0 0.0
    %7484 = vmatprep.subr.mxu0 0.0
    %7485 = vmatpush1.msra.mxu0 0.0
    %7486 = vmatprep.mubr.f32.mxu0 0.0
    %7487 = vmatmul.mubr.f32.gmra.mrb[0].mxu0 %v7399
    %v7488 = vpop.f32.mrb[0].mxu0
    %v7489 = vadd.f32 0.0, %v7488
    %v7490 = vpop.f32.mrb[0].mxu0
    %7491 = vmatprep.mubr.f32.mxu0 0.0
    %7492 = vmatmul.mubr.f32.gmra.mrb[0].mxu0 %v7402
    %v7493 = vpop.f32.mrb[0].mxu0
    %v7494 = vadd.f32 0.0, %v7493
    %v7495 = vpop.f32.mrb[0].mxu0
    %7496 = vmatprep.mubr.f32.mxu0 0.0
    %7497 = vmatmul.mubr.f32.gmra.mrb[0].mxu0 %v7405
    %v7498 = vpop.f32.mrb[0].mxu0
    %v7499 = vadd.f32 0.0, %v7498
    %v7500 = vpop.f32.mrb[0].mxu0
    %7501 = vmatprep.mubr.f32.mxu0 0.0
    %7502 = vmatmul.mubr.f32.gmra.mrb[0].mxu0 %v7408
    %v7503 = vpop.f32.mrb[0].mxu0
    %v7504 = vadd.f32 0.0, %v7503
    %v7505 = vpop.f32.mrb[0].mxu0
    %7506 = vmatprep.mubr.f32.mxu0 0.0
    %7507 = vmatmul.mubr.f32.gmra.mrb[0].mxu0 %v7411
    %v7508 = vpop.f32.mrb[0].mxu0
    %v7509 = vadd.f32 0.0, %v7508
    %v7510 = vpop.f32.mrb[0].mxu0
    %7511 = vmatprep.mubr.f32.mxu0 0.0
    %7512 = vmatmul.mubr.f32.gmra.mrb[0].mxu0 %v7414
    %v7513 = vpop.f32.mrb[0].mxu0
    %v7514 = vadd.f32 0.0, %v7513
    %v7515 = vpop.f32.mrb[0].mxu0
    %7516 = vmatprep.mubr.f32.mxu0 0.0
    %7517 = vmatmul.mubr.f32.gmra.mrb[0].mxu0 %v7417
    %v7518 = vpop.f32.mrb[0].mxu0
    %v7519 = vadd.f32 0.0, %v7518
    %v7520 = vpop.f32.mrb[0].mxu0
    %7521 = vmatprep.mubr.f32.mxu0 0.0
    %7522 = vmatmul.mubr.f32.gmra.mrb[0].mxu0 %v7420
    %v7523 = vpop.f32.mrb[0].mxu0
    %v7524 = vadd.f32 0.0, %v7523
    %v7525 = vpop.f32.mrb[0].mxu0
    %7526 = vdwg.mxu0
    %v7527 = vadd.f32 %v7215, %v7489
    %v7528 = vadd.f32 %v7220, %v7494
    %v7529 = vadd.f32 %v7225, %v7499
    %v7530 = vadd.f32 %v7230, %v7504
    %v7531 = vadd.f32 %v7235, %v7509
    %v7532 = vadd.f32 %v7240, %v7514
    %v7533 = vadd.f32 %v7245, %v7519
    %v7534 = vadd.f32 %v7250, %v7524
    %v7535 = vld [vmem:[#allocation59] sm:$0x1]
    %v7537 = vlaneseq
    %v7538 = vshrl.u32 %v7537, 7
    %v7539 = vsub.s32 0, %v7538
    %v7540 = vrot.slane %v7535, %v7539
    %v7542 = vadd.f32 %v7527, %v7540
    %v7543 = vadd.f32 %v7528, %v7540
    %v7544 = vadd.f32 %v7529, %v7540
    %v7545 = vadd.f32 %v7530, %v7540
    %v7546 = vadd.f32 %v7531, %v7540
    %v7547 = vadd.f32 %v7532, %v7540
    %v7548 = vadd.f32 %v7533, %v7540
    %v7549 = vadd.f32 %v7534, %v7540
    %v7550 = vxor.u32 %v7542, 2147483648
    %v7551 = vxor.u32 %v7543, 2147483648
    %v7552 = vxor.u32 %v7544, 2147483648
    %v7553 = vxor.u32 %v7545, 2147483648
    %v7554 = vxor.u32 %v7546, 2147483648
    %v7555 = vxor.u32 %v7547, 2147483648
    %v7556 = vxor.u32 %v7548, 2147483648
    %v7557 = vxor.u32 %v7549, 2147483648
    %v7558 = vmul.f32 %v7550, 1.442695
    %v7559 = vpow.pop %v7558
    %v7560 = vmul.f32 %v7551, 1.442695
    %v7561 = vpow.pop %v7560
    %v7562 = vmul.f32 %v7552, 1.442695
    %v7563 = vpow.pop %v7562
    %v7564 = vmul.f32 %v7553, 1.442695
    %v7565 = vpow.pop %v7564
    %v7566 = vmul.f32 %v7554, 1.442695
    %v7567 = vpow.pop %v7566
    %v7568 = vmul.f32 %v7555, 1.442695
    %v7569 = vpow.pop %v7568
    %v7570 = vmul.f32 %v7556, 1.442695
    %v7571 = vpow.pop %v7570
    %v7572 = vmul.f32 %v7557, 1.442695
    %v7573 = vpow.pop %v7572
    %v7574 = vadd.f32 %v7559, 1.0
    %v7575 = vadd.f32 %v7561, 1.0
    %v7576 = vadd.f32 %v7563, 1.0
    %v7577 = vadd.f32 %v7565, 1.0
    %v7578 = vadd.f32 %v7567, 1.0
    %v7579 = vadd.f32 %v7569, 1.0
    %v7580 = vadd.f32 %v7571, 1.0
    %v7581 = vadd.f32 %v7573, 1.0
    %v7582 = vrcp.pop %v7574
    %v7583 = vmul.f32 1.0, %v7582
    %v7584 = vrcp.pop %v7575
    %v7585 = vmul.f32 1.0, %v7584
    %v7586 = vrcp.pop %v7576
    %v7587 = vmul.f32 1.0, %v7586
    %v7588 = vrcp.pop %v7577
    %v7589 = vmul.f32 1.0, %v7588
    %v7590 = vrcp.pop %v7578
    %v7591 = vmul.f32 1.0, %v7590
    %v7592 = vrcp.pop %v7579
    %v7593 = vmul.f32 1.0, %v7592
    %v7594 = vrcp.pop %v7580
    %v7595 = vmul.f32 1.0, %v7594
    %v7596 = vrcp.pop %v7581
    %v7597 = vmul.f32 1.0, %v7596
    %v7598 = vld [vmem:[#allocation61] sm:$0xff]
    %v7599 = vld [vmem:[#allocation61 + $0x8] sm:$0xff]
    %v7600 = vld [vmem:[#allocation61 + $0x10] sm:$0xff]
    %v7601 = vld [vmem:[#allocation61 + $0x18] sm:$0xff]
    %v7602 = vld [vmem:[#allocation61 + $0x20] sm:$0xff]
    %v7603 = vld [vmem:[#allocation61 + $0x28] sm:$0xff]
    %v7604 = vld [vmem:[#allocation61 + $0x30] sm:$0xff]
    %vm7605 = vcmask 523264
    %v7607 = vsel %vm7605, %v7598, 0
    %v7610 = vsel %vm7605, %v7599, 0
    %v7613 = vsel %vm7605, %v7600, 0
    %v7616 = vsel %vm7605, %v7601, 0
    %v7619 = vsel %vm7605, %v7602, 0
    %v7622 = vsel %vm7605, %v7603, 0
    %v7625 = vsel %vm7605, %v7604, 0
    %7627 = vmatprep.subr.mxu0 0.0
    %7628 = vmatpush1.msra.mxu0 %v7583
    %7629 = vmatprep.subr.mxu0 0.0
    %7630 = vmatpush1.msra.mxu0 %v7585
    %7631 = vmatprep.subr.mxu0 0.0
    %7632 = vmatpush1.msra.mxu0 %v7587
    %7633 = vmatprep.subr.mxu0 0.0
    %7634 = vmatpush1.msra.mxu0 %v7589
    %7635 = vmatprep.subr.mxu0 0.0
    %7636 = vmatpush1.msra.mxu0 %v7591
    %7637 = vmatprep.subr.mxu0 0.0
    %7638 = vmatpush1.msra.mxu0 %v7593
    %7639 = vmatprep.subr.mxu0 0.0
    %7640 = vmatpush1.msra.mxu0 %v7595
    %7641 = vmatprep.subr.mxu0 0.0
    %7642 = vmatpush1.msra.mxu0 %v7597
    %7643 = vmatprep.subr.mxu0 0.0
    %7644 = vmatpush1.msra.mxu0 0.0
    %7645 = vmatprep.subr.mxu0 0.0
    %7646 = vmatpush1.msra.mxu0 0.0
    %7647 = vmatprep.subr.mxu0 0.0
    %7648 = vmatpush1.msra.mxu0 0.0
    %7649 = vmatprep.subr.mxu0 0.0
    %7650 = vmatpush1.msra.mxu0 0.0
    %7651 = vmatprep.subr.mxu0 0.0
    %7652 = vmatpush1.msra.mxu0 0.0
    %7653 = vmatprep.subr.mxu0 0.0
    %7654 = vmatpush1.msra.mxu0 0.0
    %7655 = vmatprep.subr.mxu0 0.0
    %7656 = vmatpush1.msra.mxu0 0.0
    %7657 = vmatprep.subr.mxu0 0.0
    %7658 = vmatpush1.msra.mxu0 0.0
    %7659 = vmatprep.subr.mxu0 0.0
    %7660 = vmatpush1.msra.mxu0 0.0
    %7661 = vmatprep.subr.mxu0 0.0
    %7662 = vmatpush1.msra.mxu0 0.0
    %7663 = vmatprep.subr.mxu0 0.0
    %7664 = vmatpush1.msra.mxu0 0.0
    %7665 = vmatprep.subr.mxu0 0.0
    %7666 = vmatpush1.msra.mxu0 0.0
    %7667 = vmatprep.subr.mxu0 0.0
    %7668 = vmatpush1.msra.mxu0 0.0
    %7669 = vmatprep.subr.mxu0 0.0
    %7670 = vmatpush1.msra.mxu0 0.0
    %7671 = vmatprep.subr.mxu0 0.0
    %7672 = vmatpush1.msra.mxu0 0.0
    %7673 = vmatprep.subr.mxu0 0.0
    %7674 = vmatpush1.msra.mxu0 0.0
    %7675 = vmatprep.subr.mxu0 0.0
    %7676 = vmatpush1.msra.mxu0 0.0
    %7677 = vmatprep.subr.mxu0 0.0
    %7678 = vmatpush1.msra.mxu0 0.0
    %7679 = vmatprep.subr.mxu0 0.0
    %7680 = vmatpush1.msra.mxu0 0.0
    %7681 = vmatprep.subr.mxu0 0.0
    %7682 = vmatpush1.msra.mxu0 0.0
    %7683 = vmatprep.subr.mxu0 0.0
    %7684 = vmatpush1.msra.mxu0 0.0
    %7685 = vmatprep.subr.mxu0 0.0
    %7686 = vmatpush1.msra.mxu0 0.0
    %7687 = vmatprep.subr.mxu0 0.0
    %7688 = vmatpush1.msra.mxu0 0.0
    %7689 = vmatprep.subr.mxu0 0.0
    %7690 = vmatpush1.msra.mxu0 0.0
    %7691 = vmatprep.mubr.f32.mxu0 0.0
    %7692 = vmatmul.mubr.f32.gmra.mrb[0].mxu0 %v7607
    %v7693 = vpop.f32.mrb[0].mxu0
    %v7694 = vadd.f32 0.0, %v7693
    %v7695 = vpop.f32.mrb[0].mxu0
    %7696 = vmatprep.mubr.f32.mxu0 0.0
    %7697 = vmatmul.mubr.f32.gmra.mrb[0].mxu0 %v7610
    %v7698 = vpop.f32.mrb[0].mxu0
    %v7699 = vadd.f32 0.0, %v7698
    %v7700 = vpop.f32.mrb[0].mxu0
    %7701 = vmatprep.mubr.f32.mxu0 0.0
    %7702 = vmatmul.mubr.f32.gmra.mrb[0].mxu0 %v7613
    %v7703 = vpop.f32.mrb[0].mxu0
    %v7704 = vadd.f32 0.0, %v7703
    %v7705 = vpop.f32.mrb[0].mxu0
    %7706 = vmatprep.mubr.f32.mxu0 0.0
    %7707 = vmatmul.mubr.f32.gmra.mrb[0].mxu0 %v7616
    %v7708 = vpop.f32.mrb[0].mxu0
    %v7709 = vadd.f32 0.0, %v7708
    %v7710 = vpop.f32.mrb[0].mxu0
    %7711 = vmatprep.mubr.f32.mxu0 0.0
    %7712 = vmatmul.mubr.f32.gmra.mrb[0].mxu0 %v7619
    %v7713 = vpop.f32.mrb[0].mxu0
    %v7714 = vadd.f32 0.0, %v7713
    %v7715 = vpop.f32.mrb[0].mxu0
    %7716 = vmatprep.mubr.f32.mxu0 0.0
    %7717 = vmatmul.mubr.f32.gmra.mrb[0].mxu0 %v7622
    %v7718 = vpop.f32.mrb[0].mxu0
    %v7719 = vadd.f32 0.0, %v7718
    %v7720 = vpop.f32.mrb[0].mxu0
    %7721 = vmatprep.mubr.f32.mxu0 0.0
    %7722 = vmatmul.mubr.f32.gmra.mrb[0].mxu0 %v7625
    %v7723 = vpop.f32.mrb[0].mxu0
    %v7724 = vadd.f32 0.0, %v7723
    %v7725 = vpop.f32.mrb[0].mxu0
    %7726 = vdwg.mxu0
    %v7727 = vld [vmem:[%s113] sm:$0xff]
    %v7728 = vld [vmem:[%s113 + $0x8] sm:$0xff]
    %v7729 = vld [vmem:[%s113 + $0x10] sm:$0xff]
    %v7730 = vld [vmem:[%s113 + $0x18] sm:$0xff]
    %v7732 = vsel %vm6714, %v7694, 0
    %v7735 = vsel %vm6714, %v7699, 0
    %v7738 = vsel %vm6714, %v7704, 0
    %v7741 = vsel %vm6714, %v7709, 0
    %v7744 = vsel %vm6714, %v7714, 0
    %v7747 = vsel %vm6714, %v7719, 0
    %v7750 = vsel %vm6714, %v7724, 0
    %7752 = vmatprep.subr.mxu0 0.0
    %7753 = vmatpush1.msra.mxu0 %v7727
    %7754 = vmatprep.subr.mxu0 0.0
    %7755 = vmatpush1.msra.mxu0 %v7728
    %7756 = vmatprep.subr.mxu0 0.0
    %7757 = vmatpush1.msra.mxu0 %v7729
    %7758 = vmatprep.subr.mxu0 0.0
    %7759 = vmatpush1.msra.mxu0 %v7730
    %7760 = vmatprep.subr.mxu0 0.0
    %7761 = vmatpush1.msra.mxu0 0.0
    %7762 = vmatprep.subr.mxu0 0.0
    %7763 = vmatpush1.msra.mxu0 0.0
    %7764 = vmatprep.subr.mxu0 0.0
    %7765 = vmatpush1.msra.mxu0 0.0
    %7766 = vmatprep.subr.mxu0 0.0
    %7767 = vmatpush1.msra.mxu0 0.0
    %7768 = vmatprep.subr.mxu0 0.0
    %7769 = vmatpush1.msra.mxu0 0.0
    %7770 = vmatprep.subr.mxu0 0.0
    %7771 = vmatpush1.msra.mxu0 0.0
    %7772 = vmatprep.subr.mxu0 0.0
    %7773 = vmatpush1.msra.mxu0 0.0
    %7774 = vmatprep.subr.mxu0 0.0
    %7775 = vmatpush1.msra.mxu0 0.0
    %7776 = vmatprep.subr.mxu0 0.0
    %7777 = vmatpush1.msra.mxu0 0.0
    %7778 = vmatprep.subr.mxu0 0.0
    %7779 = vmatpush1.msra.mxu0 0.0
    %7780 = vmatprep.subr.mxu0 0.0
    %7781 = vmatpush1.msra.mxu0 0.0
    %7782 = vmatprep.subr.mxu0 0.0
    %7783 = vmatpush1.msra.mxu0 0.0
    %7784 = vmatprep.subr.mxu0 0.0
    %7785 = vmatpush1.msra.mxu0 0.0
    %7786 = vmatprep.subr.mxu0 0.0
    %7787 = vmatpush1.msra.mxu0 0.0
    %7788 = vmatprep.subr.mxu0 0.0
    %7789 = vmatpush1.msra.mxu0 0.0
    %7790 = vmatprep.subr.mxu0 0.0
    %7791 = vmatpush1.msra.mxu0 0.0
    %7792 = vmatprep.subr.mxu0 0.0
    %7793 = vmatpush1.msra.mxu0 0.0
    %7794 = vmatprep.subr.mxu0 0.0
    %7795 = vmatpush1.msra.mxu0 0.0
    %7796 = vmatprep.subr.mxu0 0.0
    %7797 = vmatpush1.msra.mxu0 0.0
    %7798 = vmatprep.subr.mxu0 0.0
    %7799 = vmatpush1.msra.mxu0 0.0
    %7800 = vmatprep.subr.mxu0 0.0
    %7801 = vmatpush1.msra.mxu0 0.0
    %7802 = vmatprep.subr.mxu0 0.0
    %7803 = vmatpush1.msra.mxu0 0.0
    %7804 = vmatprep.subr.mxu0 0.0
    %7805 = vmatpush1.msra.mxu0 0.0
    %7806 = vmatprep.subr.mxu0 0.0
    %7807 = vmatpush1.msra.mxu0 0.0
    %7808 = vmatprep.subr.mxu0 0.0
    %7809 = vmatpush1.msra.mxu0 0.0
    %7810 = vmatprep.subr.mxu0 0.0
    %7811 = vmatpush1.msra.mxu0 0.0
    %7812 = vmatprep.subr.mxu0 0.0
    %7813 = vmatpush1.msra.mxu0 0.0
    %7814 = vmatprep.subr.mxu0 0.0
    %7815 = vmatpush1.msra.mxu0 0.0
    %7816 = vmatprep.mubr.f32.mxu0 0.0
    %7817 = vmatmul.mubr.f32.gmra.mrb[0].mxu0 %v7732
    %v7818 = vpop.f32.mrb[0].mxu0
    %v7819 = vadd.f32 0.0, %v7818
    %v7820 = vpop.f32.mrb[0].mxu0
    %7821 = vmatprep.mubr.f32.mxu0 0.0
    %7822 = vmatmul.mubr.f32.gmra.mrb[0].mxu0 %v7735
    %v7823 = vpop.f32.mrb[0].mxu0
    %v7824 = vadd.f32 0.0, %v7823
    %v7825 = vpop.f32.mrb[0].mxu0
    %7826 = vmatprep.mubr.f32.mxu0 0.0
    %7827 = vmatmul.mubr.f32.gmra.mrb[0].mxu0 %v7738
    %v7828 = vpop.f32.mrb[0].mxu0
    %v7829 = vadd.f32 0.0, %v7828
    %v7830 = vpop.f32.mrb[0].mxu0
    %7831 = vmatprep.mubr.f32.mxu0 0.0
    %7832 = vmatmul.mubr.f32.gmra.mrb[0].mxu0 %v7741
    %v7833 = vpop.f32.mrb[0].mxu0
    %v7834 = vadd.f32 0.0, %v7833
    %v7835 = vpop.f32.mrb[0].mxu0
    %7836 = vmatprep.mubr.f32.mxu0 0.0
    %7837 = vmatmul.mubr.f32.gmra.mrb[0].mxu0 %v7744
    %v7838 = vpop.f32.mrb[0].mxu0
    %v7839 = vadd.f32 0.0, %v7838
    %v7840 = vpop.f32.mrb[0].mxu0
    %7841 = vmatprep.mubr.f32.mxu0 0.0
    %7842 = vmatmul.mubr.f32.gmra.mrb[0].mxu0 %v7747
    %v7843 = vpop.f32.mrb[0].mxu0
    %v7844 = vadd.f32 0.0, %v7843
    %v7845 = vpop.f32.mrb[0].mxu0
    %7846 = vmatprep.mubr.f32.mxu0 0.0
    %7847 = vmatmul.mubr.f32.gmra.mrb[0].mxu0 %v7750
    %v7848 = vpop.f32.mrb[0].mxu0
    %v7849 = vadd.f32 0.0, %v7848
    %v7850 = vpop.f32.mrb[0].mxu0
    %7851 = vdwg.mxu0
    %v7852 = vmax.f32 %v7819, 0.0
    %v7853 = vmax.f32 %v7824, 0.0
    %v7854 = vmax.f32 %v7829, 0.0
    %v7855 = vmax.f32 %v7834, 0.0
    %v7856 = vmax.f32 %v7839, 0.0
    %v7857 = vmax.f32 %v7844, 0.0
    %v7858 = vmax.f32 %v7849, 0.0
    %v7859 = vmin.f32 %v7852, 1.0
    %v7860 = vmin.f32 %v7853, 1.0
    %v7861 = vmin.f32 %v7854, 1.0
    %v7862 = vmin.f32 %v7855, 1.0
    %v7863 = vmin.f32 %v7856, 1.0
    %v7864 = vmin.f32 %v7857, 1.0
    %v7865 = vmin.f32 %v7858, 1.0
    %7866 = vst.msk [vmem:[#allocation62] sm:$0xff] %vm928, %v7859
    %7867 = vst.msk [vmem:[#allocation62 + $0x8] sm:$0xff] %vm928, %v7860
    %7868 = vst.msk [vmem:[#allocation62 + $0x10] sm:$0xff] %vm928, %v7861
    %7869 = vst.msk [vmem:[#allocation62 + $0x18] sm:$0xff] %vm928, %v7862
    %7870 = vst.msk [vmem:[#allocation62 + $0x20] sm:$0xff] %vm928, %v7863
    %7871 = vst.msk [vmem:[#allocation62 + $0x28] sm:$0xff] %vm928, %v7864
    %7872 = vst.msk [vmem:[#allocation62 + $0x30] sm:$0xff] %vm928, %v7865
    // Predicated region
    $region386: #{autoencoder_forward.1} parent=1 // pred_check
      _
    $region387: #{autoencoder_forward.1} parent=1 // pred_check_branch
      %7874 = sbr.rel (0) target = $region389
    $region388: #{autoencoder_forward.1} parent=1 // pred_region
      %s7876 = ssub.s32 896, 896
      %7877 = vsyncadd [#allocation4], %s7876
      %s7878 = sshll.u32 [#allocation62], 4
      %s7879 = int_to_ptr.vmem [resolvable:$true] %s7878
      %7884 = dma.vmem_to_hbm [thread:$0]  %s7879, 896, %s115, [#allocation4], 128, 128, 8
    $region389: #{autoencoder_forward.1} parent=1 // pred_fallthru
      _
    // Predicated region
    $region390: #{autoencoder_forward.1} parent=1 // pred_check
      _
    $region391: #{autoencoder_forward.1} parent=1 // pred_check_branch
      %7886 = sbr.rel (0) target = $region393
    $region392: #{autoencoder_forward.1} parent=1 // pred_region
      %7887 = dma.done [#allocation4], 896
    $region393: #{autoencoder_forward.1} parent=1 // pred_fallthru
      _
    %7888 = vsyncpa [#allocation3], 1
    %7889 = vsyncpa [#allocation6], 1
    %7890 = vsyncpa [#allocation9], 1
    %7891 = vsyncpa [#allocation12], 1
    %7892 = vsyncpa [#allocation15], 1
    %7893 = vsyncpa [#allocation18], 1
    %7894 = vsyncpa [#allocation21], 1
    %7895 = vsyncpa [#allocation24], 1
    %7896 = vsyncpa [#allocation27], 1
    %7897 = vsyncpa [#allocation30], 1
    %7898 = vsyncpa [#allocation33], 1
    %7899 = vsyncpa [#allocation36], 1
    %7900 = vsyncpa [#allocation39], 1
    %7901 = vsyncpa [#allocation42], 1
    %7902 = vsyncpa [#allocation45], 1
    %7903 = vsyncpa [#allocation48], 1
    %7904 = vsyncpa [#allocation51], 1
    %7905 = vsyncpa [#allocation54], 1
    %7906 = vsyncpa [#allocation57], 1
    %7907 = vsyncpa [#allocation60], 1
    %7908 = vsyncpa [#allocation4], 1

</llo_original>
